<compile_context>
chip_gen: v7x
topology: tpu7x:2x2x1
jax: 0.10.0
libtpu: 0.0.40
codegen_flags: <defaults>
</compile_context>

<pallas_src>
import jax
import jax.numpy as jnp
import numpy as np
from jax.experimental import pallas as pl
from jax.experimental.pallas import tpu as pltpu

CODE_DIM = 128          # C
T_DIM = 25              # temporal length per subject
Z_DIM = 32              # output latent size
K = 5                   # conv kernel size
BN_EPS = 1e-5
B_SUB = 8               # subjects folded into one output row (reshape(-1, C*8))

PAD1, PAD2 = 1, 2
L1 = T_DIM + 2 * PAD1 - K + 1        # 23  (conv1 out)
LP1 = (L1 - 2) // 2 + 1              # 11  (maxpool)
L2 = LP1 + 2 * PAD2 - K + 1          # 11  (conv2 out)
L3 = L2 + 2 * PAD2 - K + 1           # 11  (conv3 out)
LP2 = (L3 - 2) // 2 + 1              # 5   (maxpool) -> conv4 out length 1


# --------------------------------------------------------------------------
# Fused Pallas kernel (one grid step = one group of 8 subjects = 200 rows)
# --------------------------------------------------------------------------
def fused_forward_kernel(x_ref,
                         fw0_ref, fb0_ref, fw1_ref, fb1_ref, fw2_ref, fb2_ref,
                         cw1_ref, cb1_ref, cw2_ref, cb2_ref,
                         cw3_ref, cb3_ref, cw4_ref, cb4_ref,
                         w3_ref, b3_ref,
                         o_ref,
                         h_scr, x1p_scr, xp_scr, col_scr, flat_scr):
    """Whole LatentSpaceMLP_Conv forward for one group of 8 subjects.

    Conv stage runs in (L, B, C) layout: channels C=128 on the lane axis and
    the 8 subjects on the sublane axis (one (8,128) vreg per temporal pos).
    BN (eval mode) is pre-folded into the weights / biases.
    """
    f32 = jnp.float32
    bf16 = jnp.bfloat16
    B, T, C = B_SUB, T_DIM, CODE_DIM

    # ---- stage 1: three (Linear + folded BN + ReLU) as one M=200 GEMM chain
    h = x_ref[...]
    for w_ref, b_ref in ((fw0_ref, fb0_ref), (fw1_ref, fb1_ref),
                         (fw2_ref, fb2_ref)):
        h = jnp.maximum(
            jnp.dot(h.astype(bf16), w_ref[...], preferred_element_type=f32)
            + b_ref[...],
            0.0)
    h_scr[...] = h                                    # (B*T, C), row = b*T + l

    # ---- relayout (b-major rows -> l-major rows) into conv1's padded input
    zpad1 = jnp.zeros((B, C), f32)
    x1p_scr[pl.ds(0, B), :] = zpad1                   # temporal pad (left)
    x1p_scr[pl.ds((T + 1) * B, B), :] = zpad1         # temporal pad (right)
    for b in range(B):
        for l in range(T):
            x1p_scr[pl.ds((l + 1) * B + b, 1), :] = h_scr[pl.ds(b * T + l, 1), :]

    # ---- Conv1d(k=5) + folded BN + ReLU as a single im2col GEMM -----------
    def conv_gemm(src_ref, l_out, w_ref, b_ref):
        rows = l_out * B
        for k in range(K):                            # build (rows, K*C) im2col
            col_scr[pl.ds(0, rows), pl.ds(k * C, C)] = (
                src_ref[pl.ds(k * B, rows), :].astype(bf16))
        z = jnp.dot(col_scr[pl.ds(0, rows), :], w_ref[...],
                    preferred_element_type=f32) + b_ref[...]
        return jnp.maximum(z, 0.0)                    # (rows, C) f32 value

    # conv1 (pad=1): 25 -> 23
    y1 = conv_gemm(x1p_scr, L1, cw1_ref, cb1_ref)

    # maxpool(2,2): 23 -> 11, written into the zero-padded conv2/conv3 buffer
    zpad2 = jnp.zeros((PAD2 * B, C), f32)
    xp_scr[pl.ds(0, PAD2 * B), :] = zpad2
    xp_scr[pl.ds((PAD2 + LP1) * B, PAD2 * B), :] = zpad2
    for i in range(LP1):
        xp_scr[pl.ds((PAD2 + i) * B, B), :] = jnp.maximum(
            y1[(2 * i) * B:(2 * i + 1) * B, :],
            y1[(2 * i + 1) * B:(2 * i + 2) * B, :])

    # conv2 (pad=2): 11 -> 11
    y2 = conv_gemm(xp_scr, L2, cw2_ref, cb2_ref)
    xp_scr[pl.ds(PAD2 * B, L2 * B), :] = y2           # reuse buffer; pads stay 0

    # conv3 (pad=2): 11 -> 11
    y3 = conv_gemm(xp_scr, L3, cw3_ref, cb3_ref)

    # maxpool(2,2): 11 -> 5, feeding conv4's im2col directly (L_out = 1)
    for i in range(LP2):
        col_scr[pl.ds(0, B), pl.ds(i * C, C)] = jnp.maximum(
            y3[(2 * i) * B:(2 * i + 1) * B, :],
            y3[(2 * i + 1) * B:(2 * i + 2) * B, :]).astype(bf16)
    y4 = jnp.maximum(
        jnp.dot(col_scr[pl.ds(0, B), :], cw4_ref[...],
                preferred_element_type=f32) + cb4_ref[...],
        0.0)                                          # (B, C)

    # ---- flatten 8 subjects into one 1024-vector and apply fc3 ------------
    flat_scr[...] = jnp.zeros_like(flat_scr)
    for j in range(B):
        flat_scr[pl.ds(0, 1), pl.ds(j * C, C)] = y4[j:j + 1, :]
    out = jnp.dot(flat_scr[...].astype(bf16), w3_ref[...],
                  preferred_element_type=f32)         # (8, Z); only row 0 used
    o_ref[...] = out[0:1, :] + b3_ref[...]


# --------------------------------------------------------------------------
# Parameter prep (done ONCE): fold BN, pre-transpose, cast weights to bf16
# --------------------------------------------------------------------------
def prepare_params(params):
    def fold(bn):
        s = bn["gamma"] / jnp.sqrt(bn["var"] + BN_EPS)
        t = bn["beta"] - bn["mean"] * s
        return s, t

    prepped = []
    for fc, bn in (("fc0", "bn0"), ("fc1", "bn1"), ("fc2", "bn2")):
        s, t = fold(params[bn])
        prepped.append((params[fc]["w"].T * s[None, :]).astype(jnp.bfloat16))
        prepped.append((params[fc]["b"] * s + t)
                       .reshape(1, CODE_DIM).astype(jnp.float32))
    for cv, bn in (("conv1", "bn3"), ("conv2", "bn4"),
                   ("conv3", "bn5"), ("conv4", "bn6")):
        s, t = fold(params[bn])
        wc = jnp.transpose(params[cv]["w"], (2, 1, 0)).reshape(K * CODE_DIM,
                                                               CODE_DIM)
        prepped.append((wc * s[None, :]).astype(jnp.bfloat16))
        prepped.append((params[cv]["b"] * s + t)
                       .reshape(1, CODE_DIM).astype(jnp.float32))
    prepped.append(params["fc3"]["w"].T.astype(jnp.bfloat16))
    prepped.append(params["fc3"]["b"].reshape(1, Z_DIM).astype(jnp.float32))
    return tuple(prepped)


# --------------------------------------------------------------------------
# Forward wrapper: single pallas_call over groups of 8 subjects
# --------------------------------------------------------------------------
def latent_mlp_conv_forward(x, prepped):
    rows, c = x.shape
    assert c == CODE_DIM
    assert rows % (B_SUB * T_DIM) == 0, "need a multiple of 8 subjects"
    n_groups = rows // (B_SUB * T_DIM)

    in_specs = [pl.BlockSpec((B_SUB * T_DIM, CODE_DIM), lambda g: (g, 0))]
    # Weights/biases: whole-array blocks, constant index_map -> DMA'd once,
    # VMEM-resident across grid steps.
    in_specs += [pl.BlockSpec(p.shape, lambda g: (0, 0)) for p in prepped]

    return pl.pallas_call(
        fused_forward_kernel,
        out_shape=jax.ShapeDtypeStruct((n_groups, Z_DIM), jnp.float32),
        grid=(n_groups,),
        in_specs=in_specs,
        out_specs=pl.BlockSpec((1, Z_DIM), lambda g: (g, 0)),
        scratch_shapes=[
            pltpu.VMEM((B_SUB * T_DIM, CODE_DIM), jnp.float32),             # stage-1 h
            pltpu.VMEM(((T_DIM + 2 * PAD1) * B_SUB, CODE_DIM), jnp.float32),  # conv1 padded in
            pltpu.VMEM(((LP1 + 2 * PAD2) * B_SUB, CODE_DIM), jnp.float32),    # conv2/3 padded in
            pltpu.VMEM((L1 * B_SUB, K * CODE_DIM), jnp.bfloat16),           # im2col
            pltpu.VMEM((B_SUB, B_SUB * CODE_DIM), jnp.float32),             # fc3 flat
        ],
        compiler_params=pltpu.CompilerParams(
            dimension_semantics=("parallel",)),
    )(x, *prepped)


# --------------------------------------------------------------------------
# Parameter init (deterministic) + pure-JAX reference (f32, HIGHEST precision)
# --------------------------------------------------------------------------
def init_params(key):
    keys = iter(jax.random.split(key, 64))

    def nrm(shape, scale=0.05):
        return scale * jax.random.normal(next(keys), shape, jnp.float32)

    p = {}
    for name in ("fc0", "fc1", "fc2"):
        p[name] = dict(w=nrm((CODE_DIM, CODE_DIM)), b=nrm((CODE_DIM,)))
    for name in ("conv1", "conv2", "conv3", "conv4"):
        p[name] = dict(w=nrm((CODE_DIM, CODE_DIM, K)), b=nrm((CODE_DIM,)))
    p["fc3"] = dict(w=nrm((Z_DIM, CODE_DIM * 8)), b=nrm((Z_DIM,)))
    for i in range(7):
        p[f"bn{i}"] = dict(
            gamma=1.0 + nrm((CODE_DIM,), 0.1),
            beta=nrm((CODE_DIM,), 0.1),
            mean=nrm((CODE_DIM,), 0.1),
            var=1.0 + 0.1 * jax.random.uniform(next(keys), (CODE_DIM,),
                                               jnp.float32),
        )
    return p


def reference_forward(x, params):
    HI = jax.lax.Precision.HIGHEST

    def bn1d(h, p):
        return (h - p["mean"]) / jnp.sqrt(p["var"] + BN_EPS) * p["gamma"] + p["beta"]

    def bn_ncl(h, p):
        m, v = p["mean"][None, :, None], p["var"][None, :, None]
        g, b = p["gamma"][None, :, None], p["beta"][None, :, None]
        return (h - m) / jnp.sqrt(v + BN_EPS) * g + b

    def conv1d(h, p, pad):
        out = jax.lax.conv_general_dilated(
            h, p["w"], window_strides=(1,), padding=[(pad, pad)],
            dimension_numbers=("NCH", "OIH", "NCH"), precision=HI)
        return out + p["b"][None, :, None]

    def maxpool(h):
        return jax.lax.reduce_window(h, -jnp.inf, jax.lax.max,
                                     (1, 1, 2), (1, 1, 2), "VALID")

    h = x
    for fc, b in (("fc0", "bn0"), ("fc1", "bn1"), ("fc2", "bn2")):
        h = jax.nn.relu(bn1d(jnp.dot(h, params[fc]["w"].T, precision=HI)
                             + params[fc]["b"], params[b]))
    B = x.shape[0] // T_DIM
    h = h.reshape(B, T_DIM, CODE_DIM).transpose(0, 2, 1)
    h = maxpool(jax.nn.relu(bn_ncl(conv1d(h, params["conv1"], 1), params["bn3"])))
    h = jax.nn.relu(bn_ncl(conv1d(h, params["conv2"], 2), params["bn4"]))
    h = maxpool(jax.nn.relu(bn_ncl(conv1d(h, params["conv3"], 2), params["bn5"])))
    h = jax.nn.relu(bn_ncl(conv1d(h, params["conv4"], 0), params["bn6"]))
    h = h.reshape(-1, CODE_DIM * 8)
    return jnp.dot(h, params["fc3"]["w"].T, precision=HI) + params["fc3"]["b"]


# --------------------------------------------------------------------------
if __name__ == "__main__":
    key = jax.random.PRNGKey(0)
    kx, kp = jax.random.split(key)
    params = init_params(kp)
    prepped = prepare_params(params)          # BN folding / transposes: once

    n_subjects = 8                            # input rows = n_subjects * t_dim
    x = jax.random.normal(kx, (n_subjects * T_DIM, CODE_DIM), jnp.float32)

    fwd = jax.jit(latent_mlp_conv_forward)
    out = jax.block_until_ready(fwd(x, prepped))
    assert out.shape == (n_subjects // B_SUB, Z_DIM)          # (1, 32)

    ref = reference_forward(x, params)
    # Tolerance sized for bf16 MXU operands (perf-review item); the reference
    # is computed at float32/HIGHEST precision.
    np.testing.assert_allclose(np.asarray(out), np.asarray(ref),
                               rtol=2e-2, atol=2e-2)
    print("KERNEL_OK")
</pallas_src>

<mosaic_0001>
module attributes {stable_mosaic.version = 11 : i64} {
  func.func @fused_forward_kernel(%arg0: i32, %arg1: memref<200x128xf32, #tpu.memory_space<vmem>>, %arg2: memref<128x128xbf16, #tpu.memory_space<vmem>>, %arg3: memref<1x128xf32, #tpu.memory_space<vmem>>, %arg4: memref<128x128xbf16, #tpu.memory_space<vmem>>, %arg5: memref<1x128xf32, #tpu.memory_space<vmem>>, %arg6: memref<128x128xbf16, #tpu.memory_space<vmem>>, %arg7: memref<1x128xf32, #tpu.memory_space<vmem>>, %arg8: memref<640x128xbf16, #tpu.memory_space<vmem>>, %arg9: memref<1x128xf32, #tpu.memory_space<vmem>>, %arg10: memref<640x128xbf16, #tpu.memory_space<vmem>>, %arg11: memref<1x128xf32, #tpu.memory_space<vmem>>, %arg12: memref<640x128xbf16, #tpu.memory_space<vmem>>, %arg13: memref<1x128xf32, #tpu.memory_space<vmem>>, %arg14: memref<640x128xbf16, #tpu.memory_space<vmem>>, %arg15: memref<1x128xf32, #tpu.memory_space<vmem>>, %arg16: memref<1024x32xbf16, #tpu.memory_space<vmem>>, %arg17: memref<1x32xf32, #tpu.memory_space<vmem>>, %arg18: memref<1x32xf32, #tpu.memory_space<vmem>>, %arg19: memref<200x128xf32, #tpu.memory_space<vmem>>, %arg20: memref<216x128xf32, #tpu.memory_space<vmem>>, %arg21: memref<120x128xf32, #tpu.memory_space<vmem>>, %arg22: memref<184x640xbf16, #tpu.memory_space<vmem>>, %arg23: memref<8x1024xf32, #tpu.memory_space<vmem>>) attributes {dimension_semantics = [#tpu.dimension_semantics<parallel>], iteration_bounds = array<i64: 1>, scalar_prefetch = 0 : i64, scratch_operands = 5 : i64, tpu.core_type = #tpu.core_type<tc>, window_params = [{transform_indices = @transform_0, window_bounds = array<i64: 200, 128>}, {pipeline_mode = #tpu.pipeline_mode<synchronous>, transform_indices = @transform_1, window_bounds = array<i64: 128, 128>}, {pipeline_mode = #tpu.pipeline_mode<synchronous>, transform_indices = @transform_2, window_bounds = array<i64: 1, 128>}, {pipeline_mode = #tpu.pipeline_mode<synchronous>, transform_indices = @transform_3, window_bounds = array<i64: 128, 128>}, {pipeline_mode = #tpu.pipeline_mode<synchronous>, transform_indices = @transform_4, window_bounds = array<i64: 1, 128>}, {pipeline_mode = #tpu.pipeline_mode<synchronous>, transform_indices = @transform_5, window_bounds = array<i64: 128, 128>}, {pipeline_mode = #tpu.pipeline_mode<synchronous>, transform_indices = @transform_6, window_bounds = array<i64: 1, 128>}, {pipeline_mode = #tpu.pipeline_mode<synchronous>, transform_indices = @transform_7, window_bounds = array<i64: 640, 128>}, {pipeline_mode = #tpu.pipeline_mode<synchronous>, transform_indices = @transform_8, window_bounds = array<i64: 1, 128>}, {pipeline_mode = #tpu.pipeline_mode<synchronous>, transform_indices = @transform_9, window_bounds = array<i64: 640, 128>}, {pipeline_mode = #tpu.pipeline_mode<synchronous>, transform_indices = @transform_10, window_bounds = array<i64: 1, 128>}, {pipeline_mode = #tpu.pipeline_mode<synchronous>, transform_indices = @transform_11, window_bounds = array<i64: 640, 128>}, {pipeline_mode = #tpu.pipeline_mode<synchronous>, transform_indices = @transform_12, window_bounds = array<i64: 1, 128>}, {pipeline_mode = #tpu.pipeline_mode<synchronous>, transform_indices = @transform_13, window_bounds = array<i64: 640, 128>}, {pipeline_mode = #tpu.pipeline_mode<synchronous>, transform_indices = @transform_14, window_bounds = array<i64: 1, 128>}, {pipeline_mode = #tpu.pipeline_mode<synchronous>, transform_indices = @transform_15, window_bounds = array<i64: 1024, 32>}, {pipeline_mode = #tpu.pipeline_mode<synchronous>, transform_indices = @transform_16, window_bounds = array<i64: 1, 32>}, {transform_indices = @transform_17, window_bounds = array<i64: 1, 32>}]} {
    %c0 = arith.constant 0 : index
    %c0_0 = arith.constant 0 : index
    %0 = vector.load %arg1[%c0, %c0_0] : memref<200x128xf32, #tpu.memory_space<vmem>>, vector<200x128xf32>
    %1 = arith.truncf %0 : vector<200x128xf32> to vector<200x128xbf16>
    %c0_1 = arith.constant 0 : index
    %c0_2 = arith.constant 0 : index
    %2 = vector.load %arg2[%c0_1, %c0_2] : memref<128x128xbf16, #tpu.memory_space<vmem>>, vector<128x128xbf16>
    %cst = arith.constant dense<0.000000e+00> : vector<200x128xf32>
    %3 = tpu.matmul %1, %2, %cst {dimension_numbers = #tpu.dot_dimension_numbers<[1], [0], [0], [1], [0, 0, 1, 1], [], []>} : vector<200x128xbf16>, vector<128x128xbf16>, vector<200x128xf32> -> vector<200x128xf32>
    %c0_3 = arith.constant 0 : index
    %c0_4 = arith.constant 0 : index
    %4 = vector.load %arg3[%c0_3, %c0_4] : memref<1x128xf32, #tpu.memory_space<vmem>>, vector<1x128xf32>
    %5 = vector.broadcast %4 : vector<1x128xf32> to vector<200x128xf32>
    %6 = arith.addf %3, %5 : vector<200x128xf32>
    %cst_5 = arith.constant 0.000000e+00 : f32
    %7 = vector.broadcast %cst_5 : f32 to vector<200x128xf32>
    %8 = arith.maximumf %6, %7 : vector<200x128xf32>
    %9 = arith.truncf %8 : vector<200x128xf32> to vector<200x128xbf16>
    %c0_6 = arith.constant 0 : index
    %c0_7 = arith.constant 0 : index
    %10 = vector.load %arg4[%c0_6, %c0_7] : memref<128x128xbf16, #tpu.memory_space<vmem>>, vector<128x128xbf16>
    %cst_8 = arith.constant dense<0.000000e+00> : vector<200x128xf32>
    %11 = tpu.matmul %9, %10, %cst_8 {dimension_numbers = #tpu.dot_dimension_numbers<[1], [0], [0], [1], [0, 0, 1, 1], [], []>} : vector<200x128xbf16>, vector<128x128xbf16>, vector<200x128xf32> -> vector<200x128xf32>
    %c0_9 = arith.constant 0 : index
    %c0_10 = arith.constant 0 : index
    %12 = vector.load %arg5[%c0_9, %c0_10] : memref<1x128xf32, #tpu.memory_space<vmem>>, vector<1x128xf32>
    %13 = vector.broadcast %12 : vector<1x128xf32> to vector<200x128xf32>
    %14 = arith.addf %11, %13 : vector<200x128xf32>
    %cst_11 = arith.constant 0.000000e+00 : f32
    %15 = vector.broadcast %cst_11 : f32 to vector<200x128xf32>
    %16 = arith.maximumf %14, %15 : vector<200x128xf32>
    %17 = arith.truncf %16 : vector<200x128xf32> to vector<200x128xbf16>
    %c0_12 = arith.constant 0 : index
    %c0_13 = arith.constant 0 : index
    %18 = vector.load %arg6[%c0_12, %c0_13] : memref<128x128xbf16, #tpu.memory_space<vmem>>, vector<128x128xbf16>
    %cst_14 = arith.constant dense<0.000000e+00> : vector<200x128xf32>
    %19 = tpu.matmul %17, %18, %cst_14 {dimension_numbers = #tpu.dot_dimension_numbers<[1], [0], [0], [1], [0, 0, 1, 1], [], []>} : vector<200x128xbf16>, vector<128x128xbf16>, vector<200x128xf32> -> vector<200x128xf32>
    %c0_15 = arith.constant 0 : index
    %c0_16 = arith.constant 0 : index
    %20 = vector.load %arg7[%c0_15, %c0_16] : memref<1x128xf32, #tpu.memory_space<vmem>>, vector<1x128xf32>
    %21 = vector.broadcast %20 : vector<1x128xf32> to vector<200x128xf32>
    %22 = arith.addf %19, %21 : vector<200x128xf32>
    %cst_17 = arith.constant 0.000000e+00 : f32
    %23 = vector.broadcast %cst_17 : f32 to vector<200x128xf32>
    %24 = arith.maximumf %22, %23 : vector<200x128xf32>
    %c0_18 = arith.constant 0 : index
    %c0_19 = arith.constant 0 : index
    %25 = vector.load %arg19[%c0_18, %c0_19] : memref<200x128xf32, #tpu.memory_space<vmem>>, vector<200x128xf32>
    tpu.vector_store %arg19[%c0_18, %c0_19], %24 {strides = array<i32>} : memref<200x128xf32, #tpu.memory_space<vmem>>, vector<200x128xf32>,
    %cst_20 = arith.constant 0.000000e+00 : f32
    %26 = vector.broadcast %cst_20 : f32 to vector<8x128xf32>
    %c0_21 = arith.constant 0 : index
    %c0_22 = arith.constant 0 : index
    %27 = vector.load %arg20[%c0_21, %c0_22] : memref<216x128xf32, #tpu.memory_space<vmem>>, vector<8x128xf32>
    tpu.vector_store %arg20[%c0_21, %c0_22], %26 {strides = array<i32>} : memref<216x128xf32, #tpu.memory_space<vmem>>, vector<8x128xf32>,
    %c208 = arith.constant 208 : index
    %c0_23 = arith.constant 0 : index
    %28 = vector.load %arg20[%c208, %c0_23] : memref<216x128xf32, #tpu.memory_space<vmem>>, vector<8x128xf32>
    tpu.vector_store %arg20[%c208, %c0_23], %26 {strides = array<i32>} : memref<216x128xf32, #tpu.memory_space<vmem>>, vector<8x128xf32>,
    %c0_24 = arith.constant 0 : index
    %c0_25 = arith.constant 0 : index
    %29 = vector.load %arg19[%c0_24, %c0_25] : memref<200x128xf32, #tpu.memory_space<vmem>>, vector<1x128xf32>
    %c8 = arith.constant 8 : index
    %c0_26 = arith.constant 0 : index
    %30 = vector.load %arg20[%c8, %c0_26] : memref<216x128xf32, #tpu.memory_space<vmem>>, vector<1x128xf32>
    tpu.vector_store %arg20[%c8, %c0_26], %29 {strides = array<i32>} : memref<216x128xf32, #tpu.memory_space<vmem>>, vector<1x128xf32>,
    %c1 = arith.constant 1 : index
    %c0_27 = arith.constant 0 : index
    %31 = vector.load %arg19[%c1, %c0_27] : memref<200x128xf32, #tpu.memory_space<vmem>>, vector<1x128xf32>
    %c16 = arith.constant 16 : index
    %c0_28 = arith.constant 0 : index
    %32 = vector.load %arg20[%c16, %c0_28] : memref<216x128xf32, #tpu.memory_space<vmem>>, vector<1x128xf32>
    tpu.vector_store %arg20[%c16, %c0_28], %31 {strides = array<i32>} : memref<216x128xf32, #tpu.memory_space<vmem>>, vector<1x128xf32>,
    %c2 = arith.constant 2 : index
    %c0_29 = arith.constant 0 : index
    %33 = vector.load %arg19[%c2, %c0_29] : memref<200x128xf32, #tpu.memory_space<vmem>>, vector<1x128xf32>
    %c24 = arith.constant 24 : index
    %c0_30 = arith.constant 0 : index
    %34 = vector.load %arg20[%c24, %c0_30] : memref<216x128xf32, #tpu.memory_space<vmem>>, vector<1x128xf32>
    tpu.vector_store %arg20[%c24, %c0_30], %33 {strides = array<i32>} : memref<216x128xf32, #tpu.memory_space<vmem>>, vector<1x128xf32>,
    %c3 = arith.constant 3 : index
    %c0_31 = arith.constant 0 : index
    %35 = vector.load %arg19[%c3, %c0_31] : memref<200x128xf32, #tpu.memory_space<vmem>>, vector<1x128xf32>
    %c32 = arith.constant 32 : index
    %c0_32 = arith.constant 0 : index
    %36 = vector.load %arg20[%c32, %c0_32] : memref<216x128xf32, #tpu.memory_space<vmem>>, vector<1x128xf32>
    tpu.vector_store %arg20[%c32, %c0_32], %35 {strides = array<i32>} : memref<216x128xf32, #tpu.memory_space<vmem>>, vector<1x128xf32>,
    %c4 = arith.constant 4 : index
    %c0_33 = arith.constant 0 : index
    %37 = vector.load %arg19[%c4, %c0_33] : memref<200x128xf32, #tpu.memory_space<vmem>>, vector<1x128xf32>
    %c40 = arith.constant 40 : index
    %c0_34 = arith.constant 0 : index
    %38 = vector.load %arg20[%c40, %c0_34] : memref<216x128xf32, #tpu.memory_space<vmem>>, vector<1x128xf32>
    tpu.vector_store %arg20[%c40, %c0_34], %37 {strides = array<i32>} : memref<216x128xf32, #tpu.memory_space<vmem>>, vector<1x128xf32>,
    %c5 = arith.constant 5 : index
    %c0_35 = arith.constant 0 : index
    %39 = vector.load %arg19[%c5, %c0_35] : memref<200x128xf32, #tpu.memory_space<vmem>>, vector<1x128xf32>
    %c48 = arith.constant 48 : index
    %c0_36 = arith.constant 0 : index
    %40 = vector.load %arg20[%c48, %c0_36] : memref<216x128xf32, #tpu.memory_space<vmem>>, vector<1x128xf32>
    tpu.vector_store %arg20[%c48, %c0_36], %39 {strides = array<i32>} : memref<216x128xf32, #tpu.memory_space<vmem>>, vector<1x128xf32>,
    %c6 = arith.constant 6 : index
    %c0_37 = arith.constant 0 : index
    %41 = vector.load %arg19[%c6, %c0_37] : memref<200x128xf32, #tpu.memory_space<vmem>>, vector<1x128xf32>
    %c56 = arith.constant 56 : index
    %c0_38 = arith.constant 0 : index
    %42 = vector.load %arg20[%c56, %c0_38] : memref<216x128xf32, #tpu.memory_space<vmem>>, vector<1x128xf32>
    tpu.vector_store %arg20[%c56, %c0_38], %41 {strides = array<i32>} : memref<216x128xf32, #tpu.memory_space<vmem>>, vector<1x128xf32>,
    %c7 = arith.constant 7 : index
    %c0_39 = arith.constant 0 : index
    %43 = vector.load %arg19[%c7, %c0_39] : memref<200x128xf32, #tpu.memory_space<vmem>>, vector<1x128xf32>
    %c64 = arith.constant 64 : index
    %c0_40 = arith.constant 0 : index
    %44 = vector.load %arg20[%c64, %c0_40] : memref<216x128xf32, #tpu.memory_space<vmem>>, vector<1x128xf32>
    tpu.vector_store %arg20[%c64, %c0_40], %43 {strides = array<i32>} : memref<216x128xf32, #tpu.memory_space<vmem>>, vector<1x128xf32>,
    %c8_41 = arith.constant 8 : index
    %c0_42 = arith.constant 0 : index
    %45 = vector.load %arg19[%c8_41, %c0_42] : memref<200x128xf32, #tpu.memory_space<vmem>>, vector<1x128xf32>
    %c72 = arith.constant 72 : index
    %c0_43 = arith.constant 0 : index
    %46 = vector.load %arg20[%c72, %c0_43] : memref<216x128xf32, #tpu.memory_space<vmem>>, vector<1x128xf32>
    tpu.vector_store %arg20[%c72, %c0_43], %45 {strides = array<i32>} : memref<216x128xf32, #tpu.memory_space<vmem>>, vector<1x128xf32>,
    %c9 = arith.constant 9 : index
    %c0_44 = arith.constant 0 : index
    %47 = vector.load %arg19[%c9, %c0_44] : memref<200x128xf32, #tpu.memory_space<vmem>>, vector<1x128xf32>
    %c80 = arith.constant 80 : index
    %c0_45 = arith.constant 0 : index
    %48 = vector.load %arg20[%c80, %c0_45] : memref<216x128xf32, #tpu.memory_space<vmem>>, vector<1x128xf32>
    tpu.vector_store %arg20[%c80, %c0_45], %47 {strides = array<i32>} : memref<216x128xf32, #tpu.memory_space<vmem>>, vector<1x128xf32>,
    %c10 = arith.constant 10 : index
    %c0_46 = arith.constant 0 : index
    %49 = vector.load %arg19[%c10, %c0_46] : memref<200x128xf32, #tpu.memory_space<vmem>>, vector<1x128xf32>
    %c88 = arith.constant 88 : index
    %c0_47 = arith.constant 0 : index
    %50 = vector.load %arg20[%c88, %c0_47] : memref<216x128xf32, #tpu.memory_space<vmem>>, vector<1x128xf32>
    tpu.vector_store %arg20[%c88, %c0_47], %49 {strides = array<i32>} : memref<216x128xf32, #tpu.memory_space<vmem>>, vector<1x128xf32>,
    %c11 = arith.constant 11 : index
    %c0_48 = arith.constant 0 : index
    %51 = vector.load %arg19[%c11, %c0_48] : memref<200x128xf32, #tpu.memory_space<vmem>>, vector<1x128xf32>
    %c96 = arith.constant 96 : index
    %c0_49 = arith.constant 0 : index
    %52 = vector.load %arg20[%c96, %c0_49] : memref<216x128xf32, #tpu.memory_space<vmem>>, vector<1x128xf32>
    tpu.vector_store %arg20[%c96, %c0_49], %51 {strides = array<i32>} : memref<216x128xf32, #tpu.memory_space<vmem>>, vector<1x128xf32>,
    %c12 = arith.constant 12 : index
    %c0_50 = arith.constant 0 : index
    %53 = vector.load %arg19[%c12, %c0_50] : memref<200x128xf32, #tpu.memory_space<vmem>>, vector<1x128xf32>
    %c104 = arith.constant 104 : index
    %c0_51 = arith.constant 0 : index
    %54 = vector.load %arg20[%c104, %c0_51] : memref<216x128xf32, #tpu.memory_space<vmem>>, vector<1x128xf32>
    tpu.vector_store %arg20[%c104, %c0_51], %53 {strides = array<i32>} : memref<216x128xf32, #tpu.memory_space<vmem>>, vector<1x128xf32>,
    %c13 = arith.constant 13 : index
    %c0_52 = arith.constant 0 : index
    %55 = vector.load %arg19[%c13, %c0_52] : memref<200x128xf32, #tpu.memory_space<vmem>>, vector<1x128xf32>
    %c112 = arith.constant 112 : index
    %c0_53 = arith.constant 0 : index
    %56 = vector.load %arg20[%c112, %c0_53] : memref<216x128xf32, #tpu.memory_space<vmem>>, vector<1x128xf32>
    tpu.vector_store %arg20[%c112, %c0_53], %55 {strides = array<i32>} : memref<216x128xf32, #tpu.memory_space<vmem>>, vector<1x128xf32>,
    %c14 = arith.constant 14 : index
    %c0_54 = arith.constant 0 : index
    %57 = vector.load %arg19[%c14, %c0_54] : memref<200x128xf32, #tpu.memory_space<vmem>>, vector<1x128xf32>
    %c120 = arith.constant 120 : index
    %c0_55 = arith.constant 0 : index
    %58 = vector.load %arg20[%c120, %c0_55] : memref<216x128xf32, #tpu.memory_space<vmem>>, vector<1x128xf32>
    tpu.vector_store %arg20[%c120, %c0_55], %57 {strides = array<i32>} : memref<216x128xf32, #tpu.memory_space<vmem>>, vector<1x128xf32>,
    %c15 = arith.constant 15 : index
    %c0_56 = arith.constant 0 : index
    %59 = vector.load %arg19[%c15, %c0_56] : memref<200x128xf32, #tpu.memory_space<vmem>>, vector<1x128xf32>
    %c128 = arith.constant 128 : index
    %c0_57 = arith.constant 0 : index
    %60 = vector.load %arg20[%c128, %c0_57] : memref<216x128xf32, #tpu.memory_space<vmem>>, vector<1x128xf32>
    tpu.vector_store %arg20[%c128, %c0_57], %59 {strides = array<i32>} : memref<216x128xf32, #tpu.memory_space<vmem>>, vector<1x128xf32>,
    %c16_58 = arith.constant 16 : index
    %c0_59 = arith.constant 0 : index
    %61 = vector.load %arg19[%c16_58, %c0_59] : memref<200x128xf32, #tpu.memory_space<vmem>>, vector<1x128xf32>
    %c136 = arith.constant 136 : index
    %c0_60 = arith.constant 0 : index
    %62 = vector.load %arg20[%c136, %c0_60] : memref<216x128xf32, #tpu.memory_space<vmem>>, vector<1x128xf32>
    tpu.vector_store %arg20[%c136, %c0_60], %61 {strides = array<i32>} : memref<216x128xf32, #tpu.memory_space<vmem>>, vector<1x128xf32>,
    %c17 = arith.constant 17 : index
    %c0_61 = arith.constant 0 : index
    %63 = vector.load %arg19[%c17, %c0_61] : memref<200x128xf32, #tpu.memory_space<vmem>>, vector<1x128xf32>
    %c144 = arith.constant 144 : index
    %c0_62 = arith.constant 0 : index
    %64 = vector.load %arg20[%c144, %c0_62] : memref<216x128xf32, #tpu.memory_space<vmem>>, vector<1x128xf32>
    tpu.vector_store %arg20[%c144, %c0_62], %63 {strides = array<i32>} : memref<216x128xf32, #tpu.memory_space<vmem>>, vector<1x128xf32>,
    %c18 = arith.constant 18 : index
    %c0_63 = arith.constant 0 : index
    %65 = vector.load %arg19[%c18, %c0_63] : memref<200x128xf32, #tpu.memory_space<vmem>>, vector<1x128xf32>
    %c152 = arith.constant 152 : index
    %c0_64 = arith.constant 0 : index
    %66 = vector.load %arg20[%c152, %c0_64] : memref<216x128xf32, #tpu.memory_space<vmem>>, vector<1x128xf32>
    tpu.vector_store %arg20[%c152, %c0_64], %65 {strides = array<i32>} : memref<216x128xf32, #tpu.memory_space<vmem>>, vector<1x128xf32>,
    %c19 = arith.constant 19 : index
    %c0_65 = arith.constant 0 : index
    %67 = vector.load %arg19[%c19, %c0_65] : memref<200x128xf32, #tpu.memory_space<vmem>>, vector<1x128xf32>
    %c160 = arith.constant 160 : index
    %c0_66 = arith.constant 0 : index
    %68 = vector.load %arg20[%c160, %c0_66] : memref<216x128xf32, #tpu.memory_space<vmem>>, vector<1x128xf32>
    tpu.vector_store %arg20[%c160, %c0_66], %67 {strides = array<i32>} : memref<216x128xf32, #tpu.memory_space<vmem>>, vector<1x128xf32>,
    %c20 = arith.constant 20 : index
    %c0_67 = arith.constant 0 : index
    %69 = vector.load %arg19[%c20, %c0_67] : memref<200x128xf32, #tpu.memory_space<vmem>>, vector<1x128xf32>
    %c168 = arith.constant 168 : index
    %c0_68 = arith.constant 0 : index
    %70 = vector.load %arg20[%c168, %c0_68] : memref<216x128xf32, #tpu.memory_space<vmem>>, vector<1x128xf32>
    tpu.vector_store %arg20[%c168, %c0_68], %69 {strides = array<i32>} : memref<216x128xf32, #tpu.memory_space<vmem>>, vector<1x128xf32>,
    %c21 = arith.constant 21 : index
    %c0_69 = arith.constant 0 : index
    %71 = vector.load %arg19[%c21, %c0_69] : memref<200x128xf32, #tpu.memory_space<vmem>>, vector<1x128xf32>
    %c176 = arith.constant 176 : index
    %c0_70 = arith.constant 0 : index
    %72 = vector.load %arg20[%c176, %c0_70] : memref<216x128xf32, #tpu.memory_space<vmem>>, vector<1x128xf32>
    tpu.vector_store %arg20[%c176, %c0_70], %71 {strides = array<i32>} : memref<216x128xf32, #tpu.memory_space<vmem>>, vector<1x128xf32>,
    %c22 = arith.constant 22 : index
    %c0_71 = arith.constant 0 : index
    %73 = vector.load %arg19[%c22, %c0_71] : memref<200x128xf32, #tpu.memory_space<vmem>>, vector<1x128xf32>
    %c184 = arith.constant 184 : index
    %c0_72 = arith.constant 0 : index
    %74 = vector.load %arg20[%c184, %c0_72] : memref<216x128xf32, #tpu.memory_space<vmem>>, vector<1x128xf32>
    tpu.vector_store %arg20[%c184, %c0_72], %73 {strides = array<i32>} : memref<216x128xf32, #tpu.memory_space<vmem>>, vector<1x128xf32>,
    %c23 = arith.constant 23 : index
    %c0_73 = arith.constant 0 : index
    %75 = vector.load %arg19[%c23, %c0_73] : memref<200x128xf32, #tpu.memory_space<vmem>>, vector<1x128xf32>
    %c192 = arith.constant 192 : index
    %c0_74 = arith.constant 0 : index
    %76 = vector.load %arg20[%c192, %c0_74] : memref<216x128xf32, #tpu.memory_space<vmem>>, vector<1x128xf32>
    tpu.vector_store %arg20[%c192, %c0_74], %75 {strides = array<i32>} : memref<216x128xf32, #tpu.memory_space<vmem>>, vector<1x128xf32>,
    %c24_75 = arith.constant 24 : index
    %c0_76 = arith.constant 0 : index
    %77 = vector.load %arg19[%c24_75, %c0_76] : memref<200x128xf32, #tpu.memory_space<vmem>>, vector<1x128xf32>
    %c200 = arith.constant 200 : index
    %c0_77 = arith.constant 0 : index
    %78 = vector.load %arg20[%c200, %c0_77] : memref<216x128xf32, #tpu.memory_space<vmem>>, vector<1x128xf32>
    tpu.vector_store %arg20[%c200, %c0_77], %77 {strides = array<i32>} : memref<216x128xf32, #tpu.memory_space<vmem>>, vector<1x128xf32>,
    %c25 = arith.constant 25 : index
    %c0_78 = arith.constant 0 : index
    %79 = vector.load %arg19[%c25, %c0_78] : memref<200x128xf32, #tpu.memory_space<vmem>>, vector<1x128xf32>
    %c9_79 = arith.constant 9 : index
    %c0_80 = arith.constant 0 : index
    %80 = vector.load %arg20[%c9_79, %c0_80] : memref<216x128xf32, #tpu.memory_space<vmem>>, vector<1x128xf32>
    tpu.vector_store %arg20[%c9_79, %c0_80], %79 {strides = array<i32>} : memref<216x128xf32, #tpu.memory_space<vmem>>, vector<1x128xf32>,
    %c26 = arith.constant 26 : index
    %c0_81 = arith.constant 0 : index
    %81 = vector.load %arg19[%c26, %c0_81] : memref<200x128xf32, #tpu.memory_space<vmem>>, vector<1x128xf32>
    %c17_82 = arith.constant 17 : index
    %c0_83 = arith.constant 0 : index
    %82 = vector.load %arg20[%c17_82, %c0_83] : memref<216x128xf32, #tpu.memory_space<vmem>>, vector<1x128xf32>
    tpu.vector_store %arg20[%c17_82, %c0_83], %81 {strides = array<i32>} : memref<216x128xf32, #tpu.memory_space<vmem>>, vector<1x128xf32>,
    %c27 = arith.constant 27 : index
    %c0_84 = arith.constant 0 : index
    %83 = vector.load %arg19[%c27, %c0_84] : memref<200x128xf32, #tpu.memory_space<vmem>>, vector<1x128xf32>
    %c25_85 = arith.constant 25 : index
    %c0_86 = arith.constant 0 : index
    %84 = vector.load %arg20[%c25_85, %c0_86] : memref<216x128xf32, #tpu.memory_space<vmem>>, vector<1x128xf32>
    tpu.vector_store %arg20[%c25_85, %c0_86], %83 {strides = array<i32>} : memref<216x128xf32, #tpu.memory_space<vmem>>, vector<1x128xf32>,
    %c28 = arith.constant 28 : index
    %c0_87 = arith.constant 0 : index
    %85 = vector.load %arg19[%c28, %c0_87] : memref<200x128xf32, #tpu.memory_space<vmem>>, vector<1x128xf32>
    %c33 = arith.constant 33 : index
    %c0_88 = arith.constant 0 : index
    %86 = vector.load %arg20[%c33, %c0_88] : memref<216x128xf32, #tpu.memory_space<vmem>>, vector<1x128xf32>
    tpu.vector_store %arg20[%c33, %c0_88], %85 {strides = array<i32>} : memref<216x128xf32, #tpu.memory_space<vmem>>, vector<1x128xf32>,
    %c29 = arith.constant 29 : index
    %c0_89 = arith.constant 0 : index
    %87 = vector.load %arg19[%c29, %c0_89] : memref<200x128xf32, #tpu.memory_space<vmem>>, vector<1x128xf32>
    %c41 = arith.constant 41 : index
    %c0_90 = arith.constant 0 : index
    %88 = vector.load %arg20[%c41, %c0_90] : memref<216x128xf32, #tpu.memory_space<vmem>>, vector<1x128xf32>
    tpu.vector_store %arg20[%c41, %c0_90], %87 {strides = array<i32>} : memref<216x128xf32, #tpu.memory_space<vmem>>, vector<1x128xf32>,
    %c30 = arith.constant 30 : index
    %c0_91 = arith.constant 0 : index
    %89 = vector.load %arg19[%c30, %c0_91] : memref<200x128xf32, #tpu.memory_space<vmem>>, vector<1x128xf32>
    %c49 = arith.constant 49 : index
    %c0_92 = arith.constant 0 : index
    %90 = vector.load %arg20[%c49, %c0_92] : memref<216x128xf32, #tpu.memory_space<vmem>>, vector<1x128xf32>
    tpu.vector_store %arg20[%c49, %c0_92], %89 {strides = array<i32>} : memref<216x128xf32, #tpu.memory_space<vmem>>, vector<1x128xf32>,
    %c31 = arith.constant 31 : index
    %c0_93 = arith.constant 0 : index
    %91 = vector.load %arg19[%c31, %c0_93] : memref<200x128xf32, #tpu.memory_space<vmem>>, vector<1x128xf32>
    %c57 = arith.constant 57 : index
    %c0_94 = arith.constant 0 : index
    %92 = vector.load %arg20[%c57, %c0_94] : memref<216x128xf32, #tpu.memory_space<vmem>>, vector<1x128xf32>
    tpu.vector_store %arg20[%c57, %c0_94], %91 {strides = array<i32>} : memref<216x128xf32, #tpu.memory_space<vmem>>, vector<1x128xf32>,
    %c32_95 = arith.constant 32 : index
    %c0_96 = arith.constant 0 : index
    %93 = vector.load %arg19[%c32_95, %c0_96] : memref<200x128xf32, #tpu.memory_space<vmem>>, vector<1x128xf32>
    %c65 = arith.constant 65 : index
    %c0_97 = arith.constant 0 : index
    %94 = vector.load %arg20[%c65, %c0_97] : memref<216x128xf32, #tpu.memory_space<vmem>>, vector<1x128xf32>
    tpu.vector_store %arg20[%c65, %c0_97], %93 {strides = array<i32>} : memref<216x128xf32, #tpu.memory_space<vmem>>, vector<1x128xf32>,
    %c33_98 = arith.constant 33 : index
    %c0_99 = arith.constant 0 : index
    %95 = vector.load %arg19[%c33_98, %c0_99] : memref<200x128xf32, #tpu.memory_space<vmem>>, vector<1x128xf32>
    %c73 = arith.constant 73 : index
    %c0_100 = arith.constant 0 : index
    %96 = vector.load %arg20[%c73, %c0_100] : memref<216x128xf32, #tpu.memory_space<vmem>>, vector<1x128xf32>
    tpu.vector_store %arg20[%c73, %c0_100], %95 {strides = array<i32>} : memref<216x128xf32, #tpu.memory_space<vmem>>, vector<1x128xf32>,
    %c34 = arith.constant 34 : index
    %c0_101 = arith.constant 0 : index
    %97 = vector.load %arg19[%c34, %c0_101] : memref<200x128xf32, #tpu.memory_space<vmem>>, vector<1x128xf32>
    %c81 = arith.constant 81 : index
    %c0_102 = arith.constant 0 : index
    %98 = vector.load %arg20[%c81, %c0_102] : memref<216x128xf32, #tpu.memory_space<vmem>>, vector<1x128xf32>
    tpu.vector_store %arg20[%c81, %c0_102], %97 {strides = array<i32>} : memref<216x128xf32, #tpu.memory_space<vmem>>, vector<1x128xf32>,
    %c35 = arith.constant 35 : index
    %c0_103 = arith.constant 0 : index
    %99 = vector.load %arg19[%c35, %c0_103] : memref<200x128xf32, #tpu.memory_space<vmem>>, vector<1x128xf32>
    %c89 = arith.constant 89 : index
    %c0_104 = arith.constant 0 : index
    %100 = vector.load %arg20[%c89, %c0_104] : memref<216x128xf32, #tpu.memory_space<vmem>>, vector<1x128xf32>
    tpu.vector_store %arg20[%c89, %c0_104], %99 {strides = array<i32>} : memref<216x128xf32, #tpu.memory_space<vmem>>, vector<1x128xf32>,
    %c36 = arith.constant 36 : index
    %c0_105 = arith.constant 0 : index
    %101 = vector.load %arg19[%c36, %c0_105] : memref<200x128xf32, #tpu.memory_space<vmem>>, vector<1x128xf32>
    %c97 = arith.constant 97 : index
    %c0_106 = arith.constant 0 : index
    %102 = vector.load %arg20[%c97, %c0_106] : memref<216x128xf32, #tpu.memory_space<vmem>>, vector<1x128xf32>
    tpu.vector_store %arg20[%c97, %c0_106], %101 {strides = array<i32>} : memref<216x128xf32, #tpu.memory_space<vmem>>, vector<1x128xf32>,
    %c37 = arith.constant 37 : index
    %c0_107 = arith.constant 0 : index
    %103 = vector.load %arg19[%c37, %c0_107] : memref<200x128xf32, #tpu.memory_space<vmem>>, vector<1x128xf32>
    %c105 = arith.constant 105 : index
    %c0_108 = arith.constant 0 : index
    %104 = vector.load %arg20[%c105, %c0_108] : memref<216x128xf32, #tpu.memory_space<vmem>>, vector<1x128xf32>
    tpu.vector_store %arg20[%c105, %c0_108], %103 {strides = array<i32>} : memref<216x128xf32, #tpu.memory_space<vmem>>, vector<1x128xf32>,
    %c38 = arith.constant 38 : index
    %c0_109 = arith.constant 0 : index
    %105 = vector.load %arg19[%c38, %c0_109] : memref<200x128xf32, #tpu.memory_space<vmem>>, vector<1x128xf32>
    %c113 = arith.constant 113 : index
    %c0_110 = arith.constant 0 : index
    %106 = vector.load %arg20[%c113, %c0_110] : memref<216x128xf32, #tpu.memory_space<vmem>>, vector<1x128xf32>
    tpu.vector_store %arg20[%c113, %c0_110], %105 {strides = array<i32>} : memref<216x128xf32, #tpu.memory_space<vmem>>, vector<1x128xf32>,
    %c39 = arith.constant 39 : index
    %c0_111 = arith.constant 0 : index
    %107 = vector.load %arg19[%c39, %c0_111] : memref<200x128xf32, #tpu.memory_space<vmem>>, vector<1x128xf32>
    %c121 = arith.constant 121 : index
    %c0_112 = arith.constant 0 : index
    %108 = vector.load %arg20[%c121, %c0_112] : memref<216x128xf32, #tpu.memory_space<vmem>>, vector<1x128xf32>
    tpu.vector_store %arg20[%c121, %c0_112], %107 {strides = array<i32>} : memref<216x128xf32, #tpu.memory_space<vmem>>, vector<1x128xf32>,
    %c40_113 = arith.constant 40 : index
    %c0_114 = arith.constant 0 : index
    %109 = vector.load %arg19[%c40_113, %c0_114] : memref<200x128xf32, #tpu.memory_space<vmem>>, vector<1x128xf32>
    %c129 = arith.constant 129 : index
    %c0_115 = arith.constant 0 : index
    %110 = vector.load %arg20[%c129, %c0_115] : memref<216x128xf32, #tpu.memory_space<vmem>>, vector<1x128xf32>
    tpu.vector_store %arg20[%c129, %c0_115], %109 {strides = array<i32>} : memref<216x128xf32, #tpu.memory_space<vmem>>, vector<1x128xf32>,
    %c41_116 = arith.constant 41 : index
    %c0_117 = arith.constant 0 : index
    %111 = vector.load %arg19[%c41_116, %c0_117] : memref<200x128xf32, #tpu.memory_space<vmem>>, vector<1x128xf32>
    %c137 = arith.constant 137 : index
    %c0_118 = arith.constant 0 : index
    %112 = vector.load %arg20[%c137, %c0_118] : memref<216x128xf32, #tpu.memory_space<vmem>>, vector<1x128xf32>
    tpu.vector_store %arg20[%c137, %c0_118], %111 {strides = array<i32>} : memref<216x128xf32, #tpu.memory_space<vmem>>, vector<1x128xf32>,
    %c42 = arith.constant 42 : index
    %c0_119 = arith.constant 0 : index
    %113 = vector.load %arg19[%c42, %c0_119] : memref<200x128xf32, #tpu.memory_space<vmem>>, vector<1x128xf32>
    %c145 = arith.constant 145 : index
    %c0_120 = arith.constant 0 : index
    %114 = vector.load %arg20[%c145, %c0_120] : memref<216x128xf32, #tpu.memory_space<vmem>>, vector<1x128xf32>
    tpu.vector_store %arg20[%c145, %c0_120], %113 {strides = array<i32>} : memref<216x128xf32, #tpu.memory_space<vmem>>, vector<1x128xf32>,
    %c43 = arith.constant 43 : index
    %c0_121 = arith.constant 0 : index
    %115 = vector.load %arg19[%c43, %c0_121] : memref<200x128xf32, #tpu.memory_space<vmem>>, vector<1x128xf32>
    %c153 = arith.constant 153 : index
    %c0_122 = arith.constant 0 : index
    %116 = vector.load %arg20[%c153, %c0_122] : memref<216x128xf32, #tpu.memory_space<vmem>>, vector<1x128xf32>
    tpu.vector_store %arg20[%c153, %c0_122], %115 {strides = array<i32>} : memref<216x128xf32, #tpu.memory_space<vmem>>, vector<1x128xf32>,
    %c44 = arith.constant 44 : index
    %c0_123 = arith.constant 0 : index
    %117 = vector.load %arg19[%c44, %c0_123] : memref<200x128xf32, #tpu.memory_space<vmem>>, vector<1x128xf32>
    %c161 = arith.constant 161 : index
    %c0_124 = arith.constant 0 : index
    %118 = vector.load %arg20[%c161, %c0_124] : memref<216x128xf32, #tpu.memory_space<vmem>>, vector<1x128xf32>
    tpu.vector_store %arg20[%c161, %c0_124], %117 {strides = array<i32>} : memref<216x128xf32, #tpu.memory_space<vmem>>, vector<1x128xf32>,
    %c45 = arith.constant 45 : index
    %c0_125 = arith.constant 0 : index
    %119 = vector.load %arg19[%c45, %c0_125] : memref<200x128xf32, #tpu.memory_space<vmem>>, vector<1x128xf32>
    %c169 = arith.constant 169 : index
    %c0_126 = arith.constant 0 : index
    %120 = vector.load %arg20[%c169, %c0_126] : memref<216x128xf32, #tpu.memory_space<vmem>>, vector<1x128xf32>
    tpu.vector_store %arg20[%c169, %c0_126], %119 {strides = array<i32>} : memref<216x128xf32, #tpu.memory_space<vmem>>, vector<1x128xf32>,
    %c46 = arith.constant 46 : index
    %c0_127 = arith.constant 0 : index
    %121 = vector.load %arg19[%c46, %c0_127] : memref<200x128xf32, #tpu.memory_space<vmem>>, vector<1x128xf32>
    %c177 = arith.constant 177 : index
    %c0_128 = arith.constant 0 : index
    %122 = vector.load %arg20[%c177, %c0_128] : memref<216x128xf32, #tpu.memory_space<vmem>>, vector<1x128xf32>
    tpu.vector_store %arg20[%c177, %c0_128], %121 {strides = array<i32>} : memref<216x128xf32, #tpu.memory_space<vmem>>, vector<1x128xf32>,
    %c47 = arith.constant 47 : index
    %c0_129 = arith.constant 0 : index
    %123 = vector.load %arg19[%c47, %c0_129] : memref<200x128xf32, #tpu.memory_space<vmem>>, vector<1x128xf32>
    %c185 = arith.constant 185 : index
    %c0_130 = arith.constant 0 : index
    %124 = vector.load %arg20[%c185, %c0_130] : memref<216x128xf32, #tpu.memory_space<vmem>>, vector<1x128xf32>
    tpu.vector_store %arg20[%c185, %c0_130], %123 {strides = array<i32>} : memref<216x128xf32, #tpu.memory_space<vmem>>, vector<1x128xf32>,
    %c48_131 = arith.constant 48 : index
    %c0_132 = arith.constant 0 : index
    %125 = vector.load %arg19[%c48_131, %c0_132] : memref<200x128xf32, #tpu.memory_space<vmem>>, vector<1x128xf32>
    %c193 = arith.constant 193 : index
    %c0_133 = arith.constant 0 : index
    %126 = vector.load %arg20[%c193, %c0_133] : memref<216x128xf32, #tpu.memory_space<vmem>>, vector<1x128xf32>
    tpu.vector_store %arg20[%c193, %c0_133], %125 {strides = array<i32>} : memref<216x128xf32, #tpu.memory_space<vmem>>, vector<1x128xf32>,
    %c49_134 = arith.constant 49 : index
    %c0_135 = arith.constant 0 : index
    %127 = vector.load %arg19[%c49_134, %c0_135] : memref<200x128xf32, #tpu.memory_space<vmem>>, vector<1x128xf32>
    %c201 = arith.constant 201 : index
    %c0_136 = arith.constant 0 : index
    %128 = vector.load %arg20[%c201, %c0_136] : memref<216x128xf32, #tpu.memory_space<vmem>>, vector<1x128xf32>
    tpu.vector_store %arg20[%c201, %c0_136], %127 {strides = array<i32>} : memref<216x128xf32, #tpu.memory_space<vmem>>, vector<1x128xf32>,
    %c50 = arith.constant 50 : index
    %c0_137 = arith.constant 0 : index
    %129 = vector.load %arg19[%c50, %c0_137] : memref<200x128xf32, #tpu.memory_space<vmem>>, vector<1x128xf32>
    %c10_138 = arith.constant 10 : index
    %c0_139 = arith.constant 0 : index
    %130 = vector.load %arg20[%c10_138, %c0_139] : memref<216x128xf32, #tpu.memory_space<vmem>>, vector<1x128xf32>
    tpu.vector_store %arg20[%c10_138, %c0_139], %129 {strides = array<i32>} : memref<216x128xf32, #tpu.memory_space<vmem>>, vector<1x128xf32>,
    %c51 = arith.constant 51 : index
    %c0_140 = arith.constant 0 : index
    %131 = vector.load %arg19[%c51, %c0_140] : memref<200x128xf32, #tpu.memory_space<vmem>>, vector<1x128xf32>
    %c18_141 = arith.constant 18 : index
    %c0_142 = arith.constant 0 : index
    %132 = vector.load %arg20[%c18_141, %c0_142] : memref<216x128xf32, #tpu.memory_space<vmem>>, vector<1x128xf32>
    tpu.vector_store %arg20[%c18_141, %c0_142], %131 {strides = array<i32>} : memref<216x128xf32, #tpu.memory_space<vmem>>, vector<1x128xf32>,
    %c52 = arith.constant 52 : index
    %c0_143 = arith.constant 0 : index
    %133 = vector.load %arg19[%c52, %c0_143] : memref<200x128xf32, #tpu.memory_space<vmem>>, vector<1x128xf32>
    %c26_144 = arith.constant 26 : index
    %c0_145 = arith.constant 0 : index
    %134 = vector.load %arg20[%c26_144, %c0_145] : memref<216x128xf32, #tpu.memory_space<vmem>>, vector<1x128xf32>
    tpu.vector_store %arg20[%c26_144, %c0_145], %133 {strides = array<i32>} : memref<216x128xf32, #tpu.memory_space<vmem>>, vector<1x128xf32>,
    %c53 = arith.constant 53 : index
    %c0_146 = arith.constant 0 : index
    %135 = vector.load %arg19[%c53, %c0_146] : memref<200x128xf32, #tpu.memory_space<vmem>>, vector<1x128xf32>
    %c34_147 = arith.constant 34 : index
    %c0_148 = arith.constant 0 : index
    %136 = vector.load %arg20[%c34_147, %c0_148] : memref<216x128xf32, #tpu.memory_space<vmem>>, vector<1x128xf32>
    tpu.vector_store %arg20[%c34_147, %c0_148], %135 {strides = array<i32>} : memref<216x128xf32, #tpu.memory_space<vmem>>, vector<1x128xf32>,
    %c54 = arith.constant 54 : index
    %c0_149 = arith.constant 0 : index
    %137 = vector.load %arg19[%c54, %c0_149] : memref<200x128xf32, #tpu.memory_space<vmem>>, vector<1x128xf32>
    %c42_150 = arith.constant 42 : index
    %c0_151 = arith.constant 0 : index
    %138 = vector.load %arg20[%c42_150, %c0_151] : memref<216x128xf32, #tpu.memory_space<vmem>>, vector<1x128xf32>
    tpu.vector_store %arg20[%c42_150, %c0_151], %137 {strides = array<i32>} : memref<216x128xf32, #tpu.memory_space<vmem>>, vector<1x128xf32>,
    %c55 = arith.constant 55 : index
    %c0_152 = arith.constant 0 : index
    %139 = vector.load %arg19[%c55, %c0_152] : memref<200x128xf32, #tpu.memory_space<vmem>>, vector<1x128xf32>
    %c50_153 = arith.constant 50 : index
    %c0_154 = arith.constant 0 : index
    %140 = vector.load %arg20[%c50_153, %c0_154] : memref<216x128xf32, #tpu.memory_space<vmem>>, vector<1x128xf32>
    tpu.vector_store %arg20[%c50_153, %c0_154], %139 {strides = array<i32>} : memref<216x128xf32, #tpu.memory_space<vmem>>, vector<1x128xf32>,
    %c56_155 = arith.constant 56 : index
    %c0_156 = arith.constant 0 : index
    %141 = vector.load %arg19[%c56_155, %c0_156] : memref<200x128xf32, #tpu.memory_space<vmem>>, vector<1x128xf32>
    %c58 = arith.constant 58 : index
    %c0_157 = arith.constant 0 : index
    %142 = vector.load %arg20[%c58, %c0_157] : memref<216x128xf32, #tpu.memory_space<vmem>>, vector<1x128xf32>
    tpu.vector_store %arg20[%c58, %c0_157], %141 {strides = array<i32>} : memref<216x128xf32, #tpu.memory_space<vmem>>, vector<1x128xf32>,
    %c57_158 = arith.constant 57 : index
    %c0_159 = arith.constant 0 : index
    %143 = vector.load %arg19[%c57_158, %c0_159] : memref<200x128xf32, #tpu.memory_space<vmem>>, vector<1x128xf32>
    %c66 = arith.constant 66 : index
    %c0_160 = arith.constant 0 : index
    %144 = vector.load %arg20[%c66, %c0_160] : memref<216x128xf32, #tpu.memory_space<vmem>>, vector<1x128xf32>
    tpu.vector_store %arg20[%c66, %c0_160], %143 {strides = array<i32>} : memref<216x128xf32, #tpu.memory_space<vmem>>, vector<1x128xf32>,
    %c58_161 = arith.constant 58 : index
    %c0_162 = arith.constant 0 : index
    %145 = vector.load %arg19[%c58_161, %c0_162] : memref<200x128xf32, #tpu.memory_space<vmem>>, vector<1x128xf32>
    %c74 = arith.constant 74 : index
    %c0_163 = arith.constant 0 : index
    %146 = vector.load %arg20[%c74, %c0_163] : memref<216x128xf32, #tpu.memory_space<vmem>>, vector<1x128xf32>
    tpu.vector_store %arg20[%c74, %c0_163], %145 {strides = array<i32>} : memref<216x128xf32, #tpu.memory_space<vmem>>, vector<1x128xf32>,
    %c59 = arith.constant 59 : index
    %c0_164 = arith.constant 0 : index
    %147 = vector.load %arg19[%c59, %c0_164] : memref<200x128xf32, #tpu.memory_space<vmem>>, vector<1x128xf32>
    %c82 = arith.constant 82 : index
    %c0_165 = arith.constant 0 : index
    %148 = vector.load %arg20[%c82, %c0_165] : memref<216x128xf32, #tpu.memory_space<vmem>>, vector<1x128xf32>
    tpu.vector_store %arg20[%c82, %c0_165], %147 {strides = array<i32>} : memref<216x128xf32, #tpu.memory_space<vmem>>, vector<1x128xf32>,
    %c60 = arith.constant 60 : index
    %c0_166 = arith.constant 0 : index
    %149 = vector.load %arg19[%c60, %c0_166] : memref<200x128xf32, #tpu.memory_space<vmem>>, vector<1x128xf32>
    %c90 = arith.constant 90 : index
    %c0_167 = arith.constant 0 : index
    %150 = vector.load %arg20[%c90, %c0_167] : memref<216x128xf32, #tpu.memory_space<vmem>>, vector<1x128xf32>
    tpu.vector_store %arg20[%c90, %c0_167], %149 {strides = array<i32>} : memref<216x128xf32, #tpu.memory_space<vmem>>, vector<1x128xf32>,
    %c61 = arith.constant 61 : index
    %c0_168 = arith.constant 0 : index
    %151 = vector.load %arg19[%c61, %c0_168] : memref<200x128xf32, #tpu.memory_space<vmem>>, vector<1x128xf32>
    %c98 = arith.constant 98 : index
    %c0_169 = arith.constant 0 : index
    %152 = vector.load %arg20[%c98, %c0_169] : memref<216x128xf32, #tpu.memory_space<vmem>>, vector<1x128xf32>
    tpu.vector_store %arg20[%c98, %c0_169], %151 {strides = array<i32>} : memref<216x128xf32, #tpu.memory_space<vmem>>, vector<1x128xf32>,
    %c62 = arith.constant 62 : index
    %c0_170 = arith.constant 0 : index
    %153 = vector.load %arg19[%c62, %c0_170] : memref<200x128xf32, #tpu.memory_space<vmem>>, vector<1x128xf32>
    %c106 = arith.constant 106 : index
    %c0_171 = arith.constant 0 : index
    %154 = vector.load %arg20[%c106, %c0_171] : memref<216x128xf32, #tpu.memory_space<vmem>>, vector<1x128xf32>
    tpu.vector_store %arg20[%c106, %c0_171], %153 {strides = array<i32>} : memref<216x128xf32, #tpu.memory_space<vmem>>, vector<1x128xf32>,
    %c63 = arith.constant 63 : index
    %c0_172 = arith.constant 0 : index
    %155 = vector.load %arg19[%c63, %c0_172] : memref<200x128xf32, #tpu.memory_space<vmem>>, vector<1x128xf32>
    %c114 = arith.constant 114 : index
    %c0_173 = arith.constant 0 : index
    %156 = vector.load %arg20[%c114, %c0_173] : memref<216x128xf32, #tpu.memory_space<vmem>>, vector<1x128xf32>
    tpu.vector_store %arg20[%c114, %c0_173], %155 {strides = array<i32>} : memref<216x128xf32, #tpu.memory_space<vmem>>, vector<1x128xf32>,
    %c64_174 = arith.constant 64 : index
    %c0_175 = arith.constant 0 : index
    %157 = vector.load %arg19[%c64_174, %c0_175] : memref<200x128xf32, #tpu.memory_space<vmem>>, vector<1x128xf32>
    %c122 = arith.constant 122 : index
    %c0_176 = arith.constant 0 : index
    %158 = vector.load %arg20[%c122, %c0_176] : memref<216x128xf32, #tpu.memory_space<vmem>>, vector<1x128xf32>
    tpu.vector_store %arg20[%c122, %c0_176], %157 {strides = array<i32>} : memref<216x128xf32, #tpu.memory_space<vmem>>, vector<1x128xf32>,
    %c65_177 = arith.constant 65 : index
    %c0_178 = arith.constant 0 : index
    %159 = vector.load %arg19[%c65_177, %c0_178] : memref<200x128xf32, #tpu.memory_space<vmem>>, vector<1x128xf32>
    %c130 = arith.constant 130 : index
    %c0_179 = arith.constant 0 : index
    %160 = vector.load %arg20[%c130, %c0_179] : memref<216x128xf32, #tpu.memory_space<vmem>>, vector<1x128xf32>
    tpu.vector_store %arg20[%c130, %c0_179], %159 {strides = array<i32>} : memref<216x128xf32, #tpu.memory_space<vmem>>, vector<1x128xf32>,
    %c66_180 = arith.constant 66 : index
    %c0_181 = arith.constant 0 : index
    %161 = vector.load %arg19[%c66_180, %c0_181] : memref<200x128xf32, #tpu.memory_space<vmem>>, vector<1x128xf32>
    %c138 = arith.constant 138 : index
    %c0_182 = arith.constant 0 : index
    %162 = vector.load %arg20[%c138, %c0_182] : memref<216x128xf32, #tpu.memory_space<vmem>>, vector<1x128xf32>
    tpu.vector_store %arg20[%c138, %c0_182], %161 {strides = array<i32>} : memref<216x128xf32, #tpu.memory_space<vmem>>, vector<1x128xf32>,
    %c67 = arith.constant 67 : index
    %c0_183 = arith.constant 0 : index
    %163 = vector.load %arg19[%c67, %c0_183] : memref<200x128xf32, #tpu.memory_space<vmem>>, vector<1x128xf32>
    %c146 = arith.constant 146 : index
    %c0_184 = arith.constant 0 : index
    %164 = vector.load %arg20[%c146, %c0_184] : memref<216x128xf32, #tpu.memory_space<vmem>>, vector<1x128xf32>
    tpu.vector_store %arg20[%c146, %c0_184], %163 {strides = array<i32>} : memref<216x128xf32, #tpu.memory_space<vmem>>, vector<1x128xf32>,
    %c68 = arith.constant 68 : index
    %c0_185 = arith.constant 0 : index
    %165 = vector.load %arg19[%c68, %c0_185] : memref<200x128xf32, #tpu.memory_space<vmem>>, vector<1x128xf32>
    %c154 = arith.constant 154 : index
    %c0_186 = arith.constant 0 : index
    %166 = vector.load %arg20[%c154, %c0_186] : memref<216x128xf32, #tpu.memory_space<vmem>>, vector<1x128xf32>
    tpu.vector_store %arg20[%c154, %c0_186], %165 {strides = array<i32>} : memref<216x128xf32, #tpu.memory_space<vmem>>, vector<1x128xf32>,
    %c69 = arith.constant 69 : index
    %c0_187 = arith.constant 0 : index
    %167 = vector.load %arg19[%c69, %c0_187] : memref<200x128xf32, #tpu.memory_space<vmem>>, vector<1x128xf32>
    %c162 = arith.constant 162 : index
    %c0_188 = arith.constant 0 : index
    %168 = vector.load %arg20[%c162, %c0_188] : memref<216x128xf32, #tpu.memory_space<vmem>>, vector<1x128xf32>
    tpu.vector_store %arg20[%c162, %c0_188], %167 {strides = array<i32>} : memref<216x128xf32, #tpu.memory_space<vmem>>, vector<1x128xf32>,
    %c70 = arith.constant 70 : index
    %c0_189 = arith.constant 0 : index
    %169 = vector.load %arg19[%c70, %c0_189] : memref<200x128xf32, #tpu.memory_space<vmem>>, vector<1x128xf32>
    %c170 = arith.constant 170 : index
    %c0_190 = arith.constant 0 : index
    %170 = vector.load %arg20[%c170, %c0_190] : memref<216x128xf32, #tpu.memory_space<vmem>>, vector<1x128xf32>
    tpu.vector_store %arg20[%c170, %c0_190], %169 {strides = array<i32>} : memref<216x128xf32, #tpu.memory_space<vmem>>, vector<1x128xf32>,
    %c71 = arith.constant 71 : index
    %c0_191 = arith.constant 0 : index
    %171 = vector.load %arg19[%c71, %c0_191] : memref<200x128xf32, #tpu.memory_space<vmem>>, vector<1x128xf32>
    %c178 = arith.constant 178 : index
    %c0_192 = arith.constant 0 : index
    %172 = vector.load %arg20[%c178, %c0_192] : memref<216x128xf32, #tpu.memory_space<vmem>>, vector<1x128xf32>
    tpu.vector_store %arg20[%c178, %c0_192], %171 {strides = array<i32>} : memref<216x128xf32, #tpu.memory_space<vmem>>, vector<1x128xf32>,
    %c72_193 = arith.constant 72 : index
    %c0_194 = arith.constant 0 : index
    %173 = vector.load %arg19[%c72_193, %c0_194] : memref<200x128xf32, #tpu.memory_space<vmem>>, vector<1x128xf32>
    %c186 = arith.constant 186 : index
    %c0_195 = arith.constant 0 : index
    %174 = vector.load %arg20[%c186, %c0_195] : memref<216x128xf32, #tpu.memory_space<vmem>>, vector<1x128xf32>
    tpu.vector_store %arg20[%c186, %c0_195], %173 {strides = array<i32>} : memref<216x128xf32, #tpu.memory_space<vmem>>, vector<1x128xf32>,
    %c73_196 = arith.constant 73 : index
    %c0_197 = arith.constant 0 : index
    %175 = vector.load %arg19[%c73_196, %c0_197] : memref<200x128xf32, #tpu.memory_space<vmem>>, vector<1x128xf32>
    %c194 = arith.constant 194 : index
    %c0_198 = arith.constant 0 : index
    %176 = vector.load %arg20[%c194, %c0_198] : memref<216x128xf32, #tpu.memory_space<vmem>>, vector<1x128xf32>
    tpu.vector_store %arg20[%c194, %c0_198], %175 {strides = array<i32>} : memref<216x128xf32, #tpu.memory_space<vmem>>, vector<1x128xf32>,
    %c74_199 = arith.constant 74 : index
    %c0_200 = arith.constant 0 : index
    %177 = vector.load %arg19[%c74_199, %c0_200] : memref<200x128xf32, #tpu.memory_space<vmem>>, vector<1x128xf32>
    %c202 = arith.constant 202 : index
    %c0_201 = arith.constant 0 : index
    %178 = vector.load %arg20[%c202, %c0_201] : memref<216x128xf32, #tpu.memory_space<vmem>>, vector<1x128xf32>
    tpu.vector_store %arg20[%c202, %c0_201], %177 {strides = array<i32>} : memref<216x128xf32, #tpu.memory_space<vmem>>, vector<1x128xf32>,
    %c75 = arith.constant 75 : index
    %c0_202 = arith.constant 0 : index
    %179 = vector.load %arg19[%c75, %c0_202] : memref<200x128xf32, #tpu.memory_space<vmem>>, vector<1x128xf32>
    %c11_203 = arith.constant 11 : index
    %c0_204 = arith.constant 0 : index
    %180 = vector.load %arg20[%c11_203, %c0_204] : memref<216x128xf32, #tpu.memory_space<vmem>>, vector<1x128xf32>
    tpu.vector_store %arg20[%c11_203, %c0_204], %179 {strides = array<i32>} : memref<216x128xf32, #tpu.memory_space<vmem>>, vector<1x128xf32>,
    %c76 = arith.constant 76 : index
    %c0_205 = arith.constant 0 : index
    %181 = vector.load %arg19[%c76, %c0_205] : memref<200x128xf32, #tpu.memory_space<vmem>>, vector<1x128xf32>
    %c19_206 = arith.constant 19 : index
    %c0_207 = arith.constant 0 : index
    %182 = vector.load %arg20[%c19_206, %c0_207] : memref<216x128xf32, #tpu.memory_space<vmem>>, vector<1x128xf32>
    tpu.vector_store %arg20[%c19_206, %c0_207], %181 {strides = array<i32>} : memref<216x128xf32, #tpu.memory_space<vmem>>, vector<1x128xf32>,
    %c77 = arith.constant 77 : index
    %c0_208 = arith.constant 0 : index
    %183 = vector.load %arg19[%c77, %c0_208] : memref<200x128xf32, #tpu.memory_space<vmem>>, vector<1x128xf32>
    %c27_209 = arith.constant 27 : index
    %c0_210 = arith.constant 0 : index
    %184 = vector.load %arg20[%c27_209, %c0_210] : memref<216x128xf32, #tpu.memory_space<vmem>>, vector<1x128xf32>
    tpu.vector_store %arg20[%c27_209, %c0_210], %183 {strides = array<i32>} : memref<216x128xf32, #tpu.memory_space<vmem>>, vector<1x128xf32>,
    %c78 = arith.constant 78 : index
    %c0_211 = arith.constant 0 : index
    %185 = vector.load %arg19[%c78, %c0_211] : memref<200x128xf32, #tpu.memory_space<vmem>>, vector<1x128xf32>
    %c35_212 = arith.constant 35 : index
    %c0_213 = arith.constant 0 : index
    %186 = vector.load %arg20[%c35_212, %c0_213] : memref<216x128xf32, #tpu.memory_space<vmem>>, vector<1x128xf32>
    tpu.vector_store %arg20[%c35_212, %c0_213], %185 {strides = array<i32>} : memref<216x128xf32, #tpu.memory_space<vmem>>, vector<1x128xf32>,
    %c79 = arith.constant 79 : index
    %c0_214 = arith.constant 0 : index
    %187 = vector.load %arg19[%c79, %c0_214] : memref<200x128xf32, #tpu.memory_space<vmem>>, vector<1x128xf32>
    %c43_215 = arith.constant 43 : index
    %c0_216 = arith.constant 0 : index
    %188 = vector.load %arg20[%c43_215, %c0_216] : memref<216x128xf32, #tpu.memory_space<vmem>>, vector<1x128xf32>
    tpu.vector_store %arg20[%c43_215, %c0_216], %187 {strides = array<i32>} : memref<216x128xf32, #tpu.memory_space<vmem>>, vector<1x128xf32>,
    %c80_217 = arith.constant 80 : index
    %c0_218 = arith.constant 0 : index
    %189 = vector.load %arg19[%c80_217, %c0_218] : memref<200x128xf32, #tpu.memory_space<vmem>>, vector<1x128xf32>
    %c51_219 = arith.constant 51 : index
    %c0_220 = arith.constant 0 : index
    %190 = vector.load %arg20[%c51_219, %c0_220] : memref<216x128xf32, #tpu.memory_space<vmem>>, vector<1x128xf32>
    tpu.vector_store %arg20[%c51_219, %c0_220], %189 {strides = array<i32>} : memref<216x128xf32, #tpu.memory_space<vmem>>, vector<1x128xf32>,
    %c81_221 = arith.constant 81 : index
    %c0_222 = arith.constant 0 : index
    %191 = vector.load %arg19[%c81_221, %c0_222] : memref<200x128xf32, #tpu.memory_space<vmem>>, vector<1x128xf32>
    %c59_223 = arith.constant 59 : index
    %c0_224 = arith.constant 0 : index
    %192 = vector.load %arg20[%c59_223, %c0_224] : memref<216x128xf32, #tpu.memory_space<vmem>>, vector<1x128xf32>
    tpu.vector_store %arg20[%c59_223, %c0_224], %191 {strides = array<i32>} : memref<216x128xf32, #tpu.memory_space<vmem>>, vector<1x128xf32>,
    %c82_225 = arith.constant 82 : index
    %c0_226 = arith.constant 0 : index
    %193 = vector.load %arg19[%c82_225, %c0_226] : memref<200x128xf32, #tpu.memory_space<vmem>>, vector<1x128xf32>
    %c67_227 = arith.constant 67 : index
    %c0_228 = arith.constant 0 : index
    %194 = vector.load %arg20[%c67_227, %c0_228] : memref<216x128xf32, #tpu.memory_space<vmem>>, vector<1x128xf32>
    tpu.vector_store %arg20[%c67_227, %c0_228], %193 {strides = array<i32>} : memref<216x128xf32, #tpu.memory_space<vmem>>, vector<1x128xf32>,
    %c83 = arith.constant 83 : index
    %c0_229 = arith.constant 0 : index
    %195 = vector.load %arg19[%c83, %c0_229] : memref<200x128xf32, #tpu.memory_space<vmem>>, vector<1x128xf32>
    %c75_230 = arith.constant 75 : index
    %c0_231 = arith.constant 0 : index
    %196 = vector.load %arg20[%c75_230, %c0_231] : memref<216x128xf32, #tpu.memory_space<vmem>>, vector<1x128xf32>
    tpu.vector_store %arg20[%c75_230, %c0_231], %195 {strides = array<i32>} : memref<216x128xf32, #tpu.memory_space<vmem>>, vector<1x128xf32>,
    %c84 = arith.constant 84 : index
    %c0_232 = arith.constant 0 : index
    %197 = vector.load %arg19[%c84, %c0_232] : memref<200x128xf32, #tpu.memory_space<vmem>>, vector<1x128xf32>
    %c83_233 = arith.constant 83 : index
    %c0_234 = arith.constant 0 : index
    %198 = vector.load %arg20[%c83_233, %c0_234] : memref<216x128xf32, #tpu.memory_space<vmem>>, vector<1x128xf32>
    tpu.vector_store %arg20[%c83_233, %c0_234], %197 {strides = array<i32>} : memref<216x128xf32, #tpu.memory_space<vmem>>, vector<1x128xf32>,
    %c85 = arith.constant 85 : index
    %c0_235 = arith.constant 0 : index
    %199 = vector.load %arg19[%c85, %c0_235] : memref<200x128xf32, #tpu.memory_space<vmem>>, vector<1x128xf32>
    %c91 = arith.constant 91 : index
    %c0_236 = arith.constant 0 : index
    %200 = vector.load %arg20[%c91, %c0_236] : memref<216x128xf32, #tpu.memory_space<vmem>>, vector<1x128xf32>
    tpu.vector_store %arg20[%c91, %c0_236], %199 {strides = array<i32>} : memref<216x128xf32, #tpu.memory_space<vmem>>, vector<1x128xf32>,
    %c86 = arith.constant 86 : index
    %c0_237 = arith.constant 0 : index
    %201 = vector.load %arg19[%c86, %c0_237] : memref<200x128xf32, #tpu.memory_space<vmem>>, vector<1x128xf32>
    %c99 = arith.constant 99 : index
    %c0_238 = arith.constant 0 : index
    %202 = vector.load %arg20[%c99, %c0_238] : memref<216x128xf32, #tpu.memory_space<vmem>>, vector<1x128xf32>
    tpu.vector_store %arg20[%c99, %c0_238], %201 {strides = array<i32>} : memref<216x128xf32, #tpu.memory_space<vmem>>, vector<1x128xf32>,
    %c87 = arith.constant 87 : index
    %c0_239 = arith.constant 0 : index
    %203 = vector.load %arg19[%c87, %c0_239] : memref<200x128xf32, #tpu.memory_space<vmem>>, vector<1x128xf32>
    %c107 = arith.constant 107 : index
    %c0_240 = arith.constant 0 : index
    %204 = vector.load %arg20[%c107, %c0_240] : memref<216x128xf32, #tpu.memory_space<vmem>>, vector<1x128xf32>
    tpu.vector_store %arg20[%c107, %c0_240], %203 {strides = array<i32>} : memref<216x128xf32, #tpu.memory_space<vmem>>, vector<1x128xf32>,
    %c88_241 = arith.constant 88 : index
    %c0_242 = arith.constant 0 : index
    %205 = vector.load %arg19[%c88_241, %c0_242] : memref<200x128xf32, #tpu.memory_space<vmem>>, vector<1x128xf32>
    %c115 = arith.constant 115 : index
    %c0_243 = arith.constant 0 : index
    %206 = vector.load %arg20[%c115, %c0_243] : memref<216x128xf32, #tpu.memory_space<vmem>>, vector<1x128xf32>
    tpu.vector_store %arg20[%c115, %c0_243], %205 {strides = array<i32>} : memref<216x128xf32, #tpu.memory_space<vmem>>, vector<1x128xf32>,
    %c89_244 = arith.constant 89 : index
    %c0_245 = arith.constant 0 : index
    %207 = vector.load %arg19[%c89_244, %c0_245] : memref<200x128xf32, #tpu.memory_space<vmem>>, vector<1x128xf32>
    %c123 = arith.constant 123 : index
    %c0_246 = arith.constant 0 : index
    %208 = vector.load %arg20[%c123, %c0_246] : memref<216x128xf32, #tpu.memory_space<vmem>>, vector<1x128xf32>
    tpu.vector_store %arg20[%c123, %c0_246], %207 {strides = array<i32>} : memref<216x128xf32, #tpu.memory_space<vmem>>, vector<1x128xf32>,
    %c90_247 = arith.constant 90 : index
    %c0_248 = arith.constant 0 : index
    %209 = vector.load %arg19[%c90_247, %c0_248] : memref<200x128xf32, #tpu.memory_space<vmem>>, vector<1x128xf32>
    %c131 = arith.constant 131 : index
    %c0_249 = arith.constant 0 : index
    %210 = vector.load %arg20[%c131, %c0_249] : memref<216x128xf32, #tpu.memory_space<vmem>>, vector<1x128xf32>
    tpu.vector_store %arg20[%c131, %c0_249], %209 {strides = array<i32>} : memref<216x128xf32, #tpu.memory_space<vmem>>, vector<1x128xf32>,
    %c91_250 = arith.constant 91 : index
    %c0_251 = arith.constant 0 : index
    %211 = vector.load %arg19[%c91_250, %c0_251] : memref<200x128xf32, #tpu.memory_space<vmem>>, vector<1x128xf32>
    %c139 = arith.constant 139 : index
    %c0_252 = arith.constant 0 : index
    %212 = vector.load %arg20[%c139, %c0_252] : memref<216x128xf32, #tpu.memory_space<vmem>>, vector<1x128xf32>
    tpu.vector_store %arg20[%c139, %c0_252], %211 {strides = array<i32>} : memref<216x128xf32, #tpu.memory_space<vmem>>, vector<1x128xf32>,
    %c92 = arith.constant 92 : index
    %c0_253 = arith.constant 0 : index
    %213 = vector.load %arg19[%c92, %c0_253] : memref<200x128xf32, #tpu.memory_space<vmem>>, vector<1x128xf32>
    %c147 = arith.constant 147 : index
    %c0_254 = arith.constant 0 : index
    %214 = vector.load %arg20[%c147, %c0_254] : memref<216x128xf32, #tpu.memory_space<vmem>>, vector<1x128xf32>
    tpu.vector_store %arg20[%c147, %c0_254], %213 {strides = array<i32>} : memref<216x128xf32, #tpu.memory_space<vmem>>, vector<1x128xf32>,
    %c93 = arith.constant 93 : index
    %c0_255 = arith.constant 0 : index
    %215 = vector.load %arg19[%c93, %c0_255] : memref<200x128xf32, #tpu.memory_space<vmem>>, vector<1x128xf32>
    %c155 = arith.constant 155 : index
    %c0_256 = arith.constant 0 : index
    %216 = vector.load %arg20[%c155, %c0_256] : memref<216x128xf32, #tpu.memory_space<vmem>>, vector<1x128xf32>
    tpu.vector_store %arg20[%c155, %c0_256], %215 {strides = array<i32>} : memref<216x128xf32, #tpu.memory_space<vmem>>, vector<1x128xf32>,
    %c94 = arith.constant 94 : index
    %c0_257 = arith.constant 0 : index
    %217 = vector.load %arg19[%c94, %c0_257] : memref<200x128xf32, #tpu.memory_space<vmem>>, vector<1x128xf32>
    %c163 = arith.constant 163 : index
    %c0_258 = arith.constant 0 : index
    %218 = vector.load %arg20[%c163, %c0_258] : memref<216x128xf32, #tpu.memory_space<vmem>>, vector<1x128xf32>
    tpu.vector_store %arg20[%c163, %c0_258], %217 {strides = array<i32>} : memref<216x128xf32, #tpu.memory_space<vmem>>, vector<1x128xf32>,
    %c95 = arith.constant 95 : index
    %c0_259 = arith.constant 0 : index
    %219 = vector.load %arg19[%c95, %c0_259] : memref<200x128xf32, #tpu.memory_space<vmem>>, vector<1x128xf32>
    %c171 = arith.constant 171 : index
    %c0_260 = arith.constant 0 : index
    %220 = vector.load %arg20[%c171, %c0_260] : memref<216x128xf32, #tpu.memory_space<vmem>>, vector<1x128xf32>
    tpu.vector_store %arg20[%c171, %c0_260], %219 {strides = array<i32>} : memref<216x128xf32, #tpu.memory_space<vmem>>, vector<1x128xf32>,
    %c96_261 = arith.constant 96 : index
    %c0_262 = arith.constant 0 : index
    %221 = vector.load %arg19[%c96_261, %c0_262] : memref<200x128xf32, #tpu.memory_space<vmem>>, vector<1x128xf32>
    %c179 = arith.constant 179 : index
    %c0_263 = arith.constant 0 : index
    %222 = vector.load %arg20[%c179, %c0_263] : memref<216x128xf32, #tpu.memory_space<vmem>>, vector<1x128xf32>
    tpu.vector_store %arg20[%c179, %c0_263], %221 {strides = array<i32>} : memref<216x128xf32, #tpu.memory_space<vmem>>, vector<1x128xf32>,
    %c97_264 = arith.constant 97 : index
    %c0_265 = arith.constant 0 : index
    %223 = vector.load %arg19[%c97_264, %c0_265] : memref<200x128xf32, #tpu.memory_space<vmem>>, vector<1x128xf32>
    %c187 = arith.constant 187 : index
    %c0_266 = arith.constant 0 : index
    %224 = vector.load %arg20[%c187, %c0_266] : memref<216x128xf32, #tpu.memory_space<vmem>>, vector<1x128xf32>
    tpu.vector_store %arg20[%c187, %c0_266], %223 {strides = array<i32>} : memref<216x128xf32, #tpu.memory_space<vmem>>, vector<1x128xf32>,
    %c98_267 = arith.constant 98 : index
    %c0_268 = arith.constant 0 : index
    %225 = vector.load %arg19[%c98_267, %c0_268] : memref<200x128xf32, #tpu.memory_space<vmem>>, vector<1x128xf32>
    %c195 = arith.constant 195 : index
    %c0_269 = arith.constant 0 : index
    %226 = vector.load %arg20[%c195, %c0_269] : memref<216x128xf32, #tpu.memory_space<vmem>>, vector<1x128xf32>
    tpu.vector_store %arg20[%c195, %c0_269], %225 {strides = array<i32>} : memref<216x128xf32, #tpu.memory_space<vmem>>, vector<1x128xf32>,
    %c99_270 = arith.constant 99 : index
    %c0_271 = arith.constant 0 : index
    %227 = vector.load %arg19[%c99_270, %c0_271] : memref<200x128xf32, #tpu.memory_space<vmem>>, vector<1x128xf32>
    %c203 = arith.constant 203 : index
    %c0_272 = arith.constant 0 : index
    %228 = vector.load %arg20[%c203, %c0_272] : memref<216x128xf32, #tpu.memory_space<vmem>>, vector<1x128xf32>
    tpu.vector_store %arg20[%c203, %c0_272], %227 {strides = array<i32>} : memref<216x128xf32, #tpu.memory_space<vmem>>, vector<1x128xf32>,
    %c100 = arith.constant 100 : index
    %c0_273 = arith.constant 0 : index
    %229 = vector.load %arg19[%c100, %c0_273] : memref<200x128xf32, #tpu.memory_space<vmem>>, vector<1x128xf32>
    %c12_274 = arith.constant 12 : index
    %c0_275 = arith.constant 0 : index
    %230 = vector.load %arg20[%c12_274, %c0_275] : memref<216x128xf32, #tpu.memory_space<vmem>>, vector<1x128xf32>
    tpu.vector_store %arg20[%c12_274, %c0_275], %229 {strides = array<i32>} : memref<216x128xf32, #tpu.memory_space<vmem>>, vector<1x128xf32>,
    %c101 = arith.constant 101 : index
    %c0_276 = arith.constant 0 : index
    %231 = vector.load %arg19[%c101, %c0_276] : memref<200x128xf32, #tpu.memory_space<vmem>>, vector<1x128xf32>
    %c20_277 = arith.constant 20 : index
    %c0_278 = arith.constant 0 : index
    %232 = vector.load %arg20[%c20_277, %c0_278] : memref<216x128xf32, #tpu.memory_space<vmem>>, vector<1x128xf32>
    tpu.vector_store %arg20[%c20_277, %c0_278], %231 {strides = array<i32>} : memref<216x128xf32, #tpu.memory_space<vmem>>, vector<1x128xf32>,
    %c102 = arith.constant 102 : index
    %c0_279 = arith.constant 0 : index
    %233 = vector.load %arg19[%c102, %c0_279] : memref<200x128xf32, #tpu.memory_space<vmem>>, vector<1x128xf32>
    %c28_280 = arith.constant 28 : index
    %c0_281 = arith.constant 0 : index
    %234 = vector.load %arg20[%c28_280, %c0_281] : memref<216x128xf32, #tpu.memory_space<vmem>>, vector<1x128xf32>
    tpu.vector_store %arg20[%c28_280, %c0_281], %233 {strides = array<i32>} : memref<216x128xf32, #tpu.memory_space<vmem>>, vector<1x128xf32>,
    %c103 = arith.constant 103 : index
    %c0_282 = arith.constant 0 : index
    %235 = vector.load %arg19[%c103, %c0_282] : memref<200x128xf32, #tpu.memory_space<vmem>>, vector<1x128xf32>
    %c36_283 = arith.constant 36 : index
    %c0_284 = arith.constant 0 : index
    %236 = vector.load %arg20[%c36_283, %c0_284] : memref<216x128xf32, #tpu.memory_space<vmem>>, vector<1x128xf32>
    tpu.vector_store %arg20[%c36_283, %c0_284], %235 {strides = array<i32>} : memref<216x128xf32, #tpu.memory_space<vmem>>, vector<1x128xf32>,
    %c104_285 = arith.constant 104 : index
    %c0_286 = arith.constant 0 : index
    %237 = vector.load %arg19[%c104_285, %c0_286] : memref<200x128xf32, #tpu.memory_space<vmem>>, vector<1x128xf32>
    %c44_287 = arith.constant 44 : index
    %c0_288 = arith.constant 0 : index
    %238 = vector.load %arg20[%c44_287, %c0_288] : memref<216x128xf32, #tpu.memory_space<vmem>>, vector<1x128xf32>
    tpu.vector_store %arg20[%c44_287, %c0_288], %237 {strides = array<i32>} : memref<216x128xf32, #tpu.memory_space<vmem>>, vector<1x128xf32>,
    %c105_289 = arith.constant 105 : index
    %c0_290 = arith.constant 0 : index
    %239 = vector.load %arg19[%c105_289, %c0_290] : memref<200x128xf32, #tpu.memory_space<vmem>>, vector<1x128xf32>
    %c52_291 = arith.constant 52 : index
    %c0_292 = arith.constant 0 : index
    %240 = vector.load %arg20[%c52_291, %c0_292] : memref<216x128xf32, #tpu.memory_space<vmem>>, vector<1x128xf32>
    tpu.vector_store %arg20[%c52_291, %c0_292], %239 {strides = array<i32>} : memref<216x128xf32, #tpu.memory_space<vmem>>, vector<1x128xf32>,
    %c106_293 = arith.constant 106 : index
    %c0_294 = arith.constant 0 : index
    %241 = vector.load %arg19[%c106_293, %c0_294] : memref<200x128xf32, #tpu.memory_space<vmem>>, vector<1x128xf32>
    %c60_295 = arith.constant 60 : index
    %c0_296 = arith.constant 0 : index
    %242 = vector.load %arg20[%c60_295, %c0_296] : memref<216x128xf32, #tpu.memory_space<vmem>>, vector<1x128xf32>
    tpu.vector_store %arg20[%c60_295, %c0_296], %241 {strides = array<i32>} : memref<216x128xf32, #tpu.memory_space<vmem>>, vector<1x128xf32>,
    %c107_297 = arith.constant 107 : index
    %c0_298 = arith.constant 0 : index
    %243 = vector.load %arg19[%c107_297, %c0_298] : memref<200x128xf32, #tpu.memory_space<vmem>>, vector<1x128xf32>
    %c68_299 = arith.constant 68 : index
    %c0_300 = arith.constant 0 : index
    %244 = vector.load %arg20[%c68_299, %c0_300] : memref<216x128xf32, #tpu.memory_space<vmem>>, vector<1x128xf32>
    tpu.vector_store %arg20[%c68_299, %c0_300], %243 {strides = array<i32>} : memref<216x128xf32, #tpu.memory_space<vmem>>, vector<1x128xf32>,
    %c108 = arith.constant 108 : index
    %c0_301 = arith.constant 0 : index
    %245 = vector.load %arg19[%c108, %c0_301] : memref<200x128xf32, #tpu.memory_space<vmem>>, vector<1x128xf32>
    %c76_302 = arith.constant 76 : index
    %c0_303 = arith.constant 0 : index
    %246 = vector.load %arg20[%c76_302, %c0_303] : memref<216x128xf32, #tpu.memory_space<vmem>>, vector<1x128xf32>
    tpu.vector_store %arg20[%c76_302, %c0_303], %245 {strides = array<i32>} : memref<216x128xf32, #tpu.memory_space<vmem>>, vector<1x128xf32>,
    %c109 = arith.constant 109 : index
    %c0_304 = arith.constant 0 : index
    %247 = vector.load %arg19[%c109, %c0_304] : memref<200x128xf32, #tpu.memory_space<vmem>>, vector<1x128xf32>
    %c84_305 = arith.constant 84 : index
    %c0_306 = arith.constant 0 : index
    %248 = vector.load %arg20[%c84_305, %c0_306] : memref<216x128xf32, #tpu.memory_space<vmem>>, vector<1x128xf32>
    tpu.vector_store %arg20[%c84_305, %c0_306], %247 {strides = array<i32>} : memref<216x128xf32, #tpu.memory_space<vmem>>, vector<1x128xf32>,
    %c110 = arith.constant 110 : index
    %c0_307 = arith.constant 0 : index
    %249 = vector.load %arg19[%c110, %c0_307] : memref<200x128xf32, #tpu.memory_space<vmem>>, vector<1x128xf32>
    %c92_308 = arith.constant 92 : index
    %c0_309 = arith.constant 0 : index
    %250 = vector.load %arg20[%c92_308, %c0_309] : memref<216x128xf32, #tpu.memory_space<vmem>>, vector<1x128xf32>
    tpu.vector_store %arg20[%c92_308, %c0_309], %249 {strides = array<i32>} : memref<216x128xf32, #tpu.memory_space<vmem>>, vector<1x128xf32>,
    %c111 = arith.constant 111 : index
    %c0_310 = arith.constant 0 : index
    %251 = vector.load %arg19[%c111, %c0_310] : memref<200x128xf32, #tpu.memory_space<vmem>>, vector<1x128xf32>
    %c100_311 = arith.constant 100 : index
    %c0_312 = arith.constant 0 : index
    %252 = vector.load %arg20[%c100_311, %c0_312] : memref<216x128xf32, #tpu.memory_space<vmem>>, vector<1x128xf32>
    tpu.vector_store %arg20[%c100_311, %c0_312], %251 {strides = array<i32>} : memref<216x128xf32, #tpu.memory_space<vmem>>, vector<1x128xf32>,
    %c112_313 = arith.constant 112 : index
    %c0_314 = arith.constant 0 : index
    %253 = vector.load %arg19[%c112_313, %c0_314] : memref<200x128xf32, #tpu.memory_space<vmem>>, vector<1x128xf32>
    %c108_315 = arith.constant 108 : index
    %c0_316 = arith.constant 0 : index
    %254 = vector.load %arg20[%c108_315, %c0_316] : memref<216x128xf32, #tpu.memory_space<vmem>>, vector<1x128xf32>
    tpu.vector_store %arg20[%c108_315, %c0_316], %253 {strides = array<i32>} : memref<216x128xf32, #tpu.memory_space<vmem>>, vector<1x128xf32>,
    %c113_317 = arith.constant 113 : index
    %c0_318 = arith.constant 0 : index
    %255 = vector.load %arg19[%c113_317, %c0_318] : memref<200x128xf32, #tpu.memory_space<vmem>>, vector<1x128xf32>
    %c116 = arith.constant 116 : index
    %c0_319 = arith.constant 0 : index
    %256 = vector.load %arg20[%c116, %c0_319] : memref<216x128xf32, #tpu.memory_space<vmem>>, vector<1x128xf32>
    tpu.vector_store %arg20[%c116, %c0_319], %255 {strides = array<i32>} : memref<216x128xf32, #tpu.memory_space<vmem>>, vector<1x128xf32>,
    %c114_320 = arith.constant 114 : index
    %c0_321 = arith.constant 0 : index
    %257 = vector.load %arg19[%c114_320, %c0_321] : memref<200x128xf32, #tpu.memory_space<vmem>>, vector<1x128xf32>
    %c124 = arith.constant 124 : index
    %c0_322 = arith.constant 0 : index
    %258 = vector.load %arg20[%c124, %c0_322] : memref<216x128xf32, #tpu.memory_space<vmem>>, vector<1x128xf32>
    tpu.vector_store %arg20[%c124, %c0_322], %257 {strides = array<i32>} : memref<216x128xf32, #tpu.memory_space<vmem>>, vector<1x128xf32>,
    %c115_323 = arith.constant 115 : index
    %c0_324 = arith.constant 0 : index
    %259 = vector.load %arg19[%c115_323, %c0_324] : memref<200x128xf32, #tpu.memory_space<vmem>>, vector<1x128xf32>
    %c132 = arith.constant 132 : index
    %c0_325 = arith.constant 0 : index
    %260 = vector.load %arg20[%c132, %c0_325] : memref<216x128xf32, #tpu.memory_space<vmem>>, vector<1x128xf32>
    tpu.vector_store %arg20[%c132, %c0_325], %259 {strides = array<i32>} : memref<216x128xf32, #tpu.memory_space<vmem>>, vector<1x128xf32>,
    %c116_326 = arith.constant 116 : index
    %c0_327 = arith.constant 0 : index
    %261 = vector.load %arg19[%c116_326, %c0_327] : memref<200x128xf32, #tpu.memory_space<vmem>>, vector<1x128xf32>
    %c140 = arith.constant 140 : index
    %c0_328 = arith.constant 0 : index
    %262 = vector.load %arg20[%c140, %c0_328] : memref<216x128xf32, #tpu.memory_space<vmem>>, vector<1x128xf32>
    tpu.vector_store %arg20[%c140, %c0_328], %261 {strides = array<i32>} : memref<216x128xf32, #tpu.memory_space<vmem>>, vector<1x128xf32>,
    %c117 = arith.constant 117 : index
    %c0_329 = arith.constant 0 : index
    %263 = vector.load %arg19[%c117, %c0_329] : memref<200x128xf32, #tpu.memory_space<vmem>>, vector<1x128xf32>
    %c148 = arith.constant 148 : index
    %c0_330 = arith.constant 0 : index
    %264 = vector.load %arg20[%c148, %c0_330] : memref<216x128xf32, #tpu.memory_space<vmem>>, vector<1x128xf32>
    tpu.vector_store %arg20[%c148, %c0_330], %263 {strides = array<i32>} : memref<216x128xf32, #tpu.memory_space<vmem>>, vector<1x128xf32>,
    %c118 = arith.constant 118 : index
    %c0_331 = arith.constant 0 : index
    %265 = vector.load %arg19[%c118, %c0_331] : memref<200x128xf32, #tpu.memory_space<vmem>>, vector<1x128xf32>
    %c156 = arith.constant 156 : index
    %c0_332 = arith.constant 0 : index
    %266 = vector.load %arg20[%c156, %c0_332] : memref<216x128xf32, #tpu.memory_space<vmem>>, vector<1x128xf32>
    tpu.vector_store %arg20[%c156, %c0_332], %265 {strides = array<i32>} : memref<216x128xf32, #tpu.memory_space<vmem>>, vector<1x128xf32>,
    %c119 = arith.constant 119 : index
    %c0_333 = arith.constant 0 : index
    %267 = vector.load %arg19[%c119, %c0_333] : memref<200x128xf32, #tpu.memory_space<vmem>>, vector<1x128xf32>
    %c164 = arith.constant 164 : index
    %c0_334 = arith.constant 0 : index
    %268 = vector.load %arg20[%c164, %c0_334] : memref<216x128xf32, #tpu.memory_space<vmem>>, vector<1x128xf32>
    tpu.vector_store %arg20[%c164, %c0_334], %267 {strides = array<i32>} : memref<216x128xf32, #tpu.memory_space<vmem>>, vector<1x128xf32>,
    %c120_335 = arith.constant 120 : index
    %c0_336 = arith.constant 0 : index
    %269 = vector.load %arg19[%c120_335, %c0_336] : memref<200x128xf32, #tpu.memory_space<vmem>>, vector<1x128xf32>
    %c172 = arith.constant 172 : index
    %c0_337 = arith.constant 0 : index
    %270 = vector.load %arg20[%c172, %c0_337] : memref<216x128xf32, #tpu.memory_space<vmem>>, vector<1x128xf32>
    tpu.vector_store %arg20[%c172, %c0_337], %269 {strides = array<i32>} : memref<216x128xf32, #tpu.memory_space<vmem>>, vector<1x128xf32>,
    %c121_338 = arith.constant 121 : index
    %c0_339 = arith.constant 0 : index
    %271 = vector.load %arg19[%c121_338, %c0_339] : memref<200x128xf32, #tpu.memory_space<vmem>>, vector<1x128xf32>
    %c180 = arith.constant 180 : index
    %c0_340 = arith.constant 0 : index
    %272 = vector.load %arg20[%c180, %c0_340] : memref<216x128xf32, #tpu.memory_space<vmem>>, vector<1x128xf32>
    tpu.vector_store %arg20[%c180, %c0_340], %271 {strides = array<i32>} : memref<216x128xf32, #tpu.memory_space<vmem>>, vector<1x128xf32>,
    %c122_341 = arith.constant 122 : index
    %c0_342 = arith.constant 0 : index
    %273 = vector.load %arg19[%c122_341, %c0_342] : memref<200x128xf32, #tpu.memory_space<vmem>>, vector<1x128xf32>
    %c188 = arith.constant 188 : index
    %c0_343 = arith.constant 0 : index
    %274 = vector.load %arg20[%c188, %c0_343] : memref<216x128xf32, #tpu.memory_space<vmem>>, vector<1x128xf32>
    tpu.vector_store %arg20[%c188, %c0_343], %273 {strides = array<i32>} : memref<216x128xf32, #tpu.memory_space<vmem>>, vector<1x128xf32>,
    %c123_344 = arith.constant 123 : index
    %c0_345 = arith.constant 0 : index
    %275 = vector.load %arg19[%c123_344, %c0_345] : memref<200x128xf32, #tpu.memory_space<vmem>>, vector<1x128xf32>
    %c196 = arith.constant 196 : index
    %c0_346 = arith.constant 0 : index
    %276 = vector.load %arg20[%c196, %c0_346] : memref<216x128xf32, #tpu.memory_space<vmem>>, vector<1x128xf32>
    tpu.vector_store %arg20[%c196, %c0_346], %275 {strides = array<i32>} : memref<216x128xf32, #tpu.memory_space<vmem>>, vector<1x128xf32>,
    %c124_347 = arith.constant 124 : index
    %c0_348 = arith.constant 0 : index
    %277 = vector.load %arg19[%c124_347, %c0_348] : memref<200x128xf32, #tpu.memory_space<vmem>>, vector<1x128xf32>
    %c204 = arith.constant 204 : index
    %c0_349 = arith.constant 0 : index
    %278 = vector.load %arg20[%c204, %c0_349] : memref<216x128xf32, #tpu.memory_space<vmem>>, vector<1x128xf32>
    tpu.vector_store %arg20[%c204, %c0_349], %277 {strides = array<i32>} : memref<216x128xf32, #tpu.memory_space<vmem>>, vector<1x128xf32>,
    %c125 = arith.constant 125 : index
    %c0_350 = arith.constant 0 : index
    %279 = vector.load %arg19[%c125, %c0_350] : memref<200x128xf32, #tpu.memory_space<vmem>>, vector<1x128xf32>
    %c13_351 = arith.constant 13 : index
    %c0_352 = arith.constant 0 : index
    %280 = vector.load %arg20[%c13_351, %c0_352] : memref<216x128xf32, #tpu.memory_space<vmem>>, vector<1x128xf32>
    tpu.vector_store %arg20[%c13_351, %c0_352], %279 {strides = array<i32>} : memref<216x128xf32, #tpu.memory_space<vmem>>, vector<1x128xf32>,
    %c126 = arith.constant 126 : index
    %c0_353 = arith.constant 0 : index
    %281 = vector.load %arg19[%c126, %c0_353] : memref<200x128xf32, #tpu.memory_space<vmem>>, vector<1x128xf32>
    %c21_354 = arith.constant 21 : index
    %c0_355 = arith.constant 0 : index
    %282 = vector.load %arg20[%c21_354, %c0_355] : memref<216x128xf32, #tpu.memory_space<vmem>>, vector<1x128xf32>
    tpu.vector_store %arg20[%c21_354, %c0_355], %281 {strides = array<i32>} : memref<216x128xf32, #tpu.memory_space<vmem>>, vector<1x128xf32>,
    %c127 = arith.constant 127 : index
    %c0_356 = arith.constant 0 : index
    %283 = vector.load %arg19[%c127, %c0_356] : memref<200x128xf32, #tpu.memory_space<vmem>>, vector<1x128xf32>
    %c29_357 = arith.constant 29 : index
    %c0_358 = arith.constant 0 : index
    %284 = vector.load %arg20[%c29_357, %c0_358] : memref<216x128xf32, #tpu.memory_space<vmem>>, vector<1x128xf32>
    tpu.vector_store %arg20[%c29_357, %c0_358], %283 {strides = array<i32>} : memref<216x128xf32, #tpu.memory_space<vmem>>, vector<1x128xf32>,
    %c128_359 = arith.constant 128 : index
    %c0_360 = arith.constant 0 : index
    %285 = vector.load %arg19[%c128_359, %c0_360] : memref<200x128xf32, #tpu.memory_space<vmem>>, vector<1x128xf32>
    %c37_361 = arith.constant 37 : index
    %c0_362 = arith.constant 0 : index
    %286 = vector.load %arg20[%c37_361, %c0_362] : memref<216x128xf32, #tpu.memory_space<vmem>>, vector<1x128xf32>
    tpu.vector_store %arg20[%c37_361, %c0_362], %285 {strides = array<i32>} : memref<216x128xf32, #tpu.memory_space<vmem>>, vector<1x128xf32>,
    %c129_363 = arith.constant 129 : index
    %c0_364 = arith.constant 0 : index
    %287 = vector.load %arg19[%c129_363, %c0_364] : memref<200x128xf32, #tpu.memory_space<vmem>>, vector<1x128xf32>
    %c45_365 = arith.constant 45 : index
    %c0_366 = arith.constant 0 : index
    %288 = vector.load %arg20[%c45_365, %c0_366] : memref<216x128xf32, #tpu.memory_space<vmem>>, vector<1x128xf32>
    tpu.vector_store %arg20[%c45_365, %c0_366], %287 {strides = array<i32>} : memref<216x128xf32, #tpu.memory_space<vmem>>, vector<1x128xf32>,
    %c130_367 = arith.constant 130 : index
    %c0_368 = arith.constant 0 : index
    %289 = vector.load %arg19[%c130_367, %c0_368] : memref<200x128xf32, #tpu.memory_space<vmem>>, vector<1x128xf32>
    %c53_369 = arith.constant 53 : index
    %c0_370 = arith.constant 0 : index
    %290 = vector.load %arg20[%c53_369, %c0_370] : memref<216x128xf32, #tpu.memory_space<vmem>>, vector<1x128xf32>
    tpu.vector_store %arg20[%c53_369, %c0_370], %289 {strides = array<i32>} : memref<216x128xf32, #tpu.memory_space<vmem>>, vector<1x128xf32>,
    %c131_371 = arith.constant 131 : index
    %c0_372 = arith.constant 0 : index
    %291 = vector.load %arg19[%c131_371, %c0_372] : memref<200x128xf32, #tpu.memory_space<vmem>>, vector<1x128xf32>
    %c61_373 = arith.constant 61 : index
    %c0_374 = arith.constant 0 : index
    %292 = vector.load %arg20[%c61_373, %c0_374] : memref<216x128xf32, #tpu.memory_space<vmem>>, vector<1x128xf32>
    tpu.vector_store %arg20[%c61_373, %c0_374], %291 {strides = array<i32>} : memref<216x128xf32, #tpu.memory_space<vmem>>, vector<1x128xf32>,
    %c132_375 = arith.constant 132 : index
    %c0_376 = arith.constant 0 : index
    %293 = vector.load %arg19[%c132_375, %c0_376] : memref<200x128xf32, #tpu.memory_space<vmem>>, vector<1x128xf32>
    %c69_377 = arith.constant 69 : index
    %c0_378 = arith.constant 0 : index
    %294 = vector.load %arg20[%c69_377, %c0_378] : memref<216x128xf32, #tpu.memory_space<vmem>>, vector<1x128xf32>
    tpu.vector_store %arg20[%c69_377, %c0_378], %293 {strides = array<i32>} : memref<216x128xf32, #tpu.memory_space<vmem>>, vector<1x128xf32>,
    %c133 = arith.constant 133 : index
    %c0_379 = arith.constant 0 : index
    %295 = vector.load %arg19[%c133, %c0_379] : memref<200x128xf32, #tpu.memory_space<vmem>>, vector<1x128xf32>
    %c77_380 = arith.constant 77 : index
    %c0_381 = arith.constant 0 : index
    %296 = vector.load %arg20[%c77_380, %c0_381] : memref<216x128xf32, #tpu.memory_space<vmem>>, vector<1x128xf32>
    tpu.vector_store %arg20[%c77_380, %c0_381], %295 {strides = array<i32>} : memref<216x128xf32, #tpu.memory_space<vmem>>, vector<1x128xf32>,
    %c134 = arith.constant 134 : index
    %c0_382 = arith.constant 0 : index
    %297 = vector.load %arg19[%c134, %c0_382] : memref<200x128xf32, #tpu.memory_space<vmem>>, vector<1x128xf32>
    %c85_383 = arith.constant 85 : index
    %c0_384 = arith.constant 0 : index
    %298 = vector.load %arg20[%c85_383, %c0_384] : memref<216x128xf32, #tpu.memory_space<vmem>>, vector<1x128xf32>
    tpu.vector_store %arg20[%c85_383, %c0_384], %297 {strides = array<i32>} : memref<216x128xf32, #tpu.memory_space<vmem>>, vector<1x128xf32>,
    %c135 = arith.constant 135 : index
    %c0_385 = arith.constant 0 : index
    %299 = vector.load %arg19[%c135, %c0_385] : memref<200x128xf32, #tpu.memory_space<vmem>>, vector<1x128xf32>
    %c93_386 = arith.constant 93 : index
    %c0_387 = arith.constant 0 : index
    %300 = vector.load %arg20[%c93_386, %c0_387] : memref<216x128xf32, #tpu.memory_space<vmem>>, vector<1x128xf32>
    tpu.vector_store %arg20[%c93_386, %c0_387], %299 {strides = array<i32>} : memref<216x128xf32, #tpu.memory_space<vmem>>, vector<1x128xf32>,
    %c136_388 = arith.constant 136 : index
    %c0_389 = arith.constant 0 : index
    %301 = vector.load %arg19[%c136_388, %c0_389] : memref<200x128xf32, #tpu.memory_space<vmem>>, vector<1x128xf32>
    %c101_390 = arith.constant 101 : index
    %c0_391 = arith.constant 0 : index
    %302 = vector.load %arg20[%c101_390, %c0_391] : memref<216x128xf32, #tpu.memory_space<vmem>>, vector<1x128xf32>
    tpu.vector_store %arg20[%c101_390, %c0_391], %301 {strides = array<i32>} : memref<216x128xf32, #tpu.memory_space<vmem>>, vector<1x128xf32>,
    %c137_392 = arith.constant 137 : index
    %c0_393 = arith.constant 0 : index
    %303 = vector.load %arg19[%c137_392, %c0_393] : memref<200x128xf32, #tpu.memory_space<vmem>>, vector<1x128xf32>
    %c109_394 = arith.constant 109 : index
    %c0_395 = arith.constant 0 : index
    %304 = vector.load %arg20[%c109_394, %c0_395] : memref<216x128xf32, #tpu.memory_space<vmem>>, vector<1x128xf32>
    tpu.vector_store %arg20[%c109_394, %c0_395], %303 {strides = array<i32>} : memref<216x128xf32, #tpu.memory_space<vmem>>, vector<1x128xf32>,
    %c138_396 = arith.constant 138 : index
    %c0_397 = arith.constant 0 : index
    %305 = vector.load %arg19[%c138_396, %c0_397] : memref<200x128xf32, #tpu.memory_space<vmem>>, vector<1x128xf32>
    %c117_398 = arith.constant 117 : index
    %c0_399 = arith.constant 0 : index
    %306 = vector.load %arg20[%c117_398, %c0_399] : memref<216x128xf32, #tpu.memory_space<vmem>>, vector<1x128xf32>
    tpu.vector_store %arg20[%c117_398, %c0_399], %305 {strides = array<i32>} : memref<216x128xf32, #tpu.memory_space<vmem>>, vector<1x128xf32>,
    %c139_400 = arith.constant 139 : index
    %c0_401 = arith.constant 0 : index
    %307 = vector.load %arg19[%c139_400, %c0_401] : memref<200x128xf32, #tpu.memory_space<vmem>>, vector<1x128xf32>
    %c125_402 = arith.constant 125 : index
    %c0_403 = arith.constant 0 : index
    %308 = vector.load %arg20[%c125_402, %c0_403] : memref<216x128xf32, #tpu.memory_space<vmem>>, vector<1x128xf32>
    tpu.vector_store %arg20[%c125_402, %c0_403], %307 {strides = array<i32>} : memref<216x128xf32, #tpu.memory_space<vmem>>, vector<1x128xf32>,
    %c140_404 = arith.constant 140 : index
    %c0_405 = arith.constant 0 : index
    %309 = vector.load %arg19[%c140_404, %c0_405] : memref<200x128xf32, #tpu.memory_space<vmem>>, vector<1x128xf32>
    %c133_406 = arith.constant 133 : index
    %c0_407 = arith.constant 0 : index
    %310 = vector.load %arg20[%c133_406, %c0_407] : memref<216x128xf32, #tpu.memory_space<vmem>>, vector<1x128xf32>
    tpu.vector_store %arg20[%c133_406, %c0_407], %309 {strides = array<i32>} : memref<216x128xf32, #tpu.memory_space<vmem>>, vector<1x128xf32>,
    %c141 = arith.constant 141 : index
    %c0_408 = arith.constant 0 : index
    %311 = vector.load %arg19[%c141, %c0_408] : memref<200x128xf32, #tpu.memory_space<vmem>>, vector<1x128xf32>
    %c141_409 = arith.constant 141 : index
    %c0_410 = arith.constant 0 : index
    %312 = vector.load %arg20[%c141_409, %c0_410] : memref<216x128xf32, #tpu.memory_space<vmem>>, vector<1x128xf32>
    tpu.vector_store %arg20[%c141_409, %c0_410], %311 {strides = array<i32>} : memref<216x128xf32, #tpu.memory_space<vmem>>, vector<1x128xf32>,
    %c142 = arith.constant 142 : index
    %c0_411 = arith.constant 0 : index
    %313 = vector.load %arg19[%c142, %c0_411] : memref<200x128xf32, #tpu.memory_space<vmem>>, vector<1x128xf32>
    %c149 = arith.constant 149 : index
    %c0_412 = arith.constant 0 : index
    %314 = vector.load %arg20[%c149, %c0_412] : memref<216x128xf32, #tpu.memory_space<vmem>>, vector<1x128xf32>
    tpu.vector_store %arg20[%c149, %c0_412], %313 {strides = array<i32>} : memref<216x128xf32, #tpu.memory_space<vmem>>, vector<1x128xf32>,
    %c143 = arith.constant 143 : index
    %c0_413 = arith.constant 0 : index
    %315 = vector.load %arg19[%c143, %c0_413] : memref<200x128xf32, #tpu.memory_space<vmem>>, vector<1x128xf32>
    %c157 = arith.constant 157 : index
    %c0_414 = arith.constant 0 : index
    %316 = vector.load %arg20[%c157, %c0_414] : memref<216x128xf32, #tpu.memory_space<vmem>>, vector<1x128xf32>
    tpu.vector_store %arg20[%c157, %c0_414], %315 {strides = array<i32>} : memref<216x128xf32, #tpu.memory_space<vmem>>, vector<1x128xf32>,
    %c144_415 = arith.constant 144 : index
    %c0_416 = arith.constant 0 : index
    %317 = vector.load %arg19[%c144_415, %c0_416] : memref<200x128xf32, #tpu.memory_space<vmem>>, vector<1x128xf32>
    %c165 = arith.constant 165 : index
    %c0_417 = arith.constant 0 : index
    %318 = vector.load %arg20[%c165, %c0_417] : memref<216x128xf32, #tpu.memory_space<vmem>>, vector<1x128xf32>
    tpu.vector_store %arg20[%c165, %c0_417], %317 {strides = array<i32>} : memref<216x128xf32, #tpu.memory_space<vmem>>, vector<1x128xf32>,
    %c145_418 = arith.constant 145 : index
    %c0_419 = arith.constant 0 : index
    %319 = vector.load %arg19[%c145_418, %c0_419] : memref<200x128xf32, #tpu.memory_space<vmem>>, vector<1x128xf32>
    %c173 = arith.constant 173 : index
    %c0_420 = arith.constant 0 : index
    %320 = vector.load %arg20[%c173, %c0_420] : memref<216x128xf32, #tpu.memory_space<vmem>>, vector<1x128xf32>
    tpu.vector_store %arg20[%c173, %c0_420], %319 {strides = array<i32>} : memref<216x128xf32, #tpu.memory_space<vmem>>, vector<1x128xf32>,
    %c146_421 = arith.constant 146 : index
    %c0_422 = arith.constant 0 : index
    %321 = vector.load %arg19[%c146_421, %c0_422] : memref<200x128xf32, #tpu.memory_space<vmem>>, vector<1x128xf32>
    %c181 = arith.constant 181 : index
    %c0_423 = arith.constant 0 : index
    %322 = vector.load %arg20[%c181, %c0_423] : memref<216x128xf32, #tpu.memory_space<vmem>>, vector<1x128xf32>
    tpu.vector_store %arg20[%c181, %c0_423], %321 {strides = array<i32>} : memref<216x128xf32, #tpu.memory_space<vmem>>, vector<1x128xf32>,
    %c147_424 = arith.constant 147 : index
    %c0_425 = arith.constant 0 : index
    %323 = vector.load %arg19[%c147_424, %c0_425] : memref<200x128xf32, #tpu.memory_space<vmem>>, vector<1x128xf32>
    %c189 = arith.constant 189 : index
    %c0_426 = arith.constant 0 : index
    %324 = vector.load %arg20[%c189, %c0_426] : memref<216x128xf32, #tpu.memory_space<vmem>>, vector<1x128xf32>
    tpu.vector_store %arg20[%c189, %c0_426], %323 {strides = array<i32>} : memref<216x128xf32, #tpu.memory_space<vmem>>, vector<1x128xf32>,
    %c148_427 = arith.constant 148 : index
    %c0_428 = arith.constant 0 : index
    %325 = vector.load %arg19[%c148_427, %c0_428] : memref<200x128xf32, #tpu.memory_space<vmem>>, vector<1x128xf32>
    %c197 = arith.constant 197 : index
    %c0_429 = arith.constant 0 : index
    %326 = vector.load %arg20[%c197, %c0_429] : memref<216x128xf32, #tpu.memory_space<vmem>>, vector<1x128xf32>
    tpu.vector_store %arg20[%c197, %c0_429], %325 {strides = array<i32>} : memref<216x128xf32, #tpu.memory_space<vmem>>, vector<1x128xf32>,
    %c149_430 = arith.constant 149 : index
    %c0_431 = arith.constant 0 : index
    %327 = vector.load %arg19[%c149_430, %c0_431] : memref<200x128xf32, #tpu.memory_space<vmem>>, vector<1x128xf32>
    %c205 = arith.constant 205 : index
    %c0_432 = arith.constant 0 : index
    %328 = vector.load %arg20[%c205, %c0_432] : memref<216x128xf32, #tpu.memory_space<vmem>>, vector<1x128xf32>
    tpu.vector_store %arg20[%c205, %c0_432], %327 {strides = array<i32>} : memref<216x128xf32, #tpu.memory_space<vmem>>, vector<1x128xf32>,
    %c150 = arith.constant 150 : index
    %c0_433 = arith.constant 0 : index
    %329 = vector.load %arg19[%c150, %c0_433] : memref<200x128xf32, #tpu.memory_space<vmem>>, vector<1x128xf32>
    %c14_434 = arith.constant 14 : index
    %c0_435 = arith.constant 0 : index
    %330 = vector.load %arg20[%c14_434, %c0_435] : memref<216x128xf32, #tpu.memory_space<vmem>>, vector<1x128xf32>
    tpu.vector_store %arg20[%c14_434, %c0_435], %329 {strides = array<i32>} : memref<216x128xf32, #tpu.memory_space<vmem>>, vector<1x128xf32>,
    %c151 = arith.constant 151 : index
    %c0_436 = arith.constant 0 : index
    %331 = vector.load %arg19[%c151, %c0_436] : memref<200x128xf32, #tpu.memory_space<vmem>>, vector<1x128xf32>
    %c22_437 = arith.constant 22 : index
    %c0_438 = arith.constant 0 : index
    %332 = vector.load %arg20[%c22_437, %c0_438] : memref<216x128xf32, #tpu.memory_space<vmem>>, vector<1x128xf32>
    tpu.vector_store %arg20[%c22_437, %c0_438], %331 {strides = array<i32>} : memref<216x128xf32, #tpu.memory_space<vmem>>, vector<1x128xf32>,
    %c152_439 = arith.constant 152 : index
    %c0_440 = arith.constant 0 : index
    %333 = vector.load %arg19[%c152_439, %c0_440] : memref<200x128xf32, #tpu.memory_space<vmem>>, vector<1x128xf32>
    %c30_441 = arith.constant 30 : index
    %c0_442 = arith.constant 0 : index
    %334 = vector.load %arg20[%c30_441, %c0_442] : memref<216x128xf32, #tpu.memory_space<vmem>>, vector<1x128xf32>
    tpu.vector_store %arg20[%c30_441, %c0_442], %333 {strides = array<i32>} : memref<216x128xf32, #tpu.memory_space<vmem>>, vector<1x128xf32>,
    %c153_443 = arith.constant 153 : index
    %c0_444 = arith.constant 0 : index
    %335 = vector.load %arg19[%c153_443, %c0_444] : memref<200x128xf32, #tpu.memory_space<vmem>>, vector<1x128xf32>
    %c38_445 = arith.constant 38 : index
    %c0_446 = arith.constant 0 : index
    %336 = vector.load %arg20[%c38_445, %c0_446] : memref<216x128xf32, #tpu.memory_space<vmem>>, vector<1x128xf32>
    tpu.vector_store %arg20[%c38_445, %c0_446], %335 {strides = array<i32>} : memref<216x128xf32, #tpu.memory_space<vmem>>, vector<1x128xf32>,
    %c154_447 = arith.constant 154 : index
    %c0_448 = arith.constant 0 : index
    %337 = vector.load %arg19[%c154_447, %c0_448] : memref<200x128xf32, #tpu.memory_space<vmem>>, vector<1x128xf32>
    %c46_449 = arith.constant 46 : index
    %c0_450 = arith.constant 0 : index
    %338 = vector.load %arg20[%c46_449, %c0_450] : memref<216x128xf32, #tpu.memory_space<vmem>>, vector<1x128xf32>
    tpu.vector_store %arg20[%c46_449, %c0_450], %337 {strides = array<i32>} : memref<216x128xf32, #tpu.memory_space<vmem>>, vector<1x128xf32>,
    %c155_451 = arith.constant 155 : index
    %c0_452 = arith.constant 0 : index
    %339 = vector.load %arg19[%c155_451, %c0_452] : memref<200x128xf32, #tpu.memory_space<vmem>>, vector<1x128xf32>
    %c54_453 = arith.constant 54 : index
    %c0_454 = arith.constant 0 : index
    %340 = vector.load %arg20[%c54_453, %c0_454] : memref<216x128xf32, #tpu.memory_space<vmem>>, vector<1x128xf32>
    tpu.vector_store %arg20[%c54_453, %c0_454], %339 {strides = array<i32>} : memref<216x128xf32, #tpu.memory_space<vmem>>, vector<1x128xf32>,
    %c156_455 = arith.constant 156 : index
    %c0_456 = arith.constant 0 : index
    %341 = vector.load %arg19[%c156_455, %c0_456] : memref<200x128xf32, #tpu.memory_space<vmem>>, vector<1x128xf32>
    %c62_457 = arith.constant 62 : index
    %c0_458 = arith.constant 0 : index
    %342 = vector.load %arg20[%c62_457, %c0_458] : memref<216x128xf32, #tpu.memory_space<vmem>>, vector<1x128xf32>
    tpu.vector_store %arg20[%c62_457, %c0_458], %341 {strides = array<i32>} : memref<216x128xf32, #tpu.memory_space<vmem>>, vector<1x128xf32>,
    %c157_459 = arith.constant 157 : index
    %c0_460 = arith.constant 0 : index
    %343 = vector.load %arg19[%c157_459, %c0_460] : memref<200x128xf32, #tpu.memory_space<vmem>>, vector<1x128xf32>
    %c70_461 = arith.constant 70 : index
    %c0_462 = arith.constant 0 : index
    %344 = vector.load %arg20[%c70_461, %c0_462] : memref<216x128xf32, #tpu.memory_space<vmem>>, vector<1x128xf32>
    tpu.vector_store %arg20[%c70_461, %c0_462], %343 {strides = array<i32>} : memref<216x128xf32, #tpu.memory_space<vmem>>, vector<1x128xf32>,
    %c158 = arith.constant 158 : index
    %c0_463 = arith.constant 0 : index
    %345 = vector.load %arg19[%c158, %c0_463] : memref<200x128xf32, #tpu.memory_space<vmem>>, vector<1x128xf32>
    %c78_464 = arith.constant 78 : index
    %c0_465 = arith.constant 0 : index
    %346 = vector.load %arg20[%c78_464, %c0_465] : memref<216x128xf32, #tpu.memory_space<vmem>>, vector<1x128xf32>
    tpu.vector_store %arg20[%c78_464, %c0_465], %345 {strides = array<i32>} : memref<216x128xf32, #tpu.memory_space<vmem>>, vector<1x128xf32>,
    %c159 = arith.constant 159 : index
    %c0_466 = arith.constant 0 : index
    %347 = vector.load %arg19[%c159, %c0_466] : memref<200x128xf32, #tpu.memory_space<vmem>>, vector<1x128xf32>
    %c86_467 = arith.constant 86 : index
    %c0_468 = arith.constant 0 : index
    %348 = vector.load %arg20[%c86_467, %c0_468] : memref<216x128xf32, #tpu.memory_space<vmem>>, vector<1x128xf32>
    tpu.vector_store %arg20[%c86_467, %c0_468], %347 {strides = array<i32>} : memref<216x128xf32, #tpu.memory_space<vmem>>, vector<1x128xf32>,
    %c160_469 = arith.constant 160 : index
    %c0_470 = arith.constant 0 : index
    %349 = vector.load %arg19[%c160_469, %c0_470] : memref<200x128xf32, #tpu.memory_space<vmem>>, vector<1x128xf32>
    %c94_471 = arith.constant 94 : index
    %c0_472 = arith.constant 0 : index
    %350 = vector.load %arg20[%c94_471, %c0_472] : memref<216x128xf32, #tpu.memory_space<vmem>>, vector<1x128xf32>
    tpu.vector_store %arg20[%c94_471, %c0_472], %349 {strides = array<i32>} : memref<216x128xf32, #tpu.memory_space<vmem>>, vector<1x128xf32>,
    %c161_473 = arith.constant 161 : index
    %c0_474 = arith.constant 0 : index
    %351 = vector.load %arg19[%c161_473, %c0_474] : memref<200x128xf32, #tpu.memory_space<vmem>>, vector<1x128xf32>
    %c102_475 = arith.constant 102 : index
    %c0_476 = arith.constant 0 : index
    %352 = vector.load %arg20[%c102_475, %c0_476] : memref<216x128xf32, #tpu.memory_space<vmem>>, vector<1x128xf32>
    tpu.vector_store %arg20[%c102_475, %c0_476], %351 {strides = array<i32>} : memref<216x128xf32, #tpu.memory_space<vmem>>, vector<1x128xf32>,
    %c162_477 = arith.constant 162 : index
    %c0_478 = arith.constant 0 : index
    %353 = vector.load %arg19[%c162_477, %c0_478] : memref<200x128xf32, #tpu.memory_space<vmem>>, vector<1x128xf32>
    %c110_479 = arith.constant 110 : index
    %c0_480 = arith.constant 0 : index
    %354 = vector.load %arg20[%c110_479, %c0_480] : memref<216x128xf32, #tpu.memory_space<vmem>>, vector<1x128xf32>
    tpu.vector_store %arg20[%c110_479, %c0_480], %353 {strides = array<i32>} : memref<216x128xf32, #tpu.memory_space<vmem>>, vector<1x128xf32>,
    %c163_481 = arith.constant 163 : index
    %c0_482 = arith.constant 0 : index
    %355 = vector.load %arg19[%c163_481, %c0_482] : memref<200x128xf32, #tpu.memory_space<vmem>>, vector<1x128xf32>
    %c118_483 = arith.constant 118 : index
    %c0_484 = arith.constant 0 : index
    %356 = vector.load %arg20[%c118_483, %c0_484] : memref<216x128xf32, #tpu.memory_space<vmem>>, vector<1x128xf32>
    tpu.vector_store %arg20[%c118_483, %c0_484], %355 {strides = array<i32>} : memref<216x128xf32, #tpu.memory_space<vmem>>, vector<1x128xf32>,
    %c164_485 = arith.constant 164 : index
    %c0_486 = arith.constant 0 : index
    %357 = vector.load %arg19[%c164_485, %c0_486] : memref<200x128xf32, #tpu.memory_space<vmem>>, vector<1x128xf32>
    %c126_487 = arith.constant 126 : index
    %c0_488 = arith.constant 0 : index
    %358 = vector.load %arg20[%c126_487, %c0_488] : memref<216x128xf32, #tpu.memory_space<vmem>>, vector<1x128xf32>
    tpu.vector_store %arg20[%c126_487, %c0_488], %357 {strides = array<i32>} : memref<216x128xf32, #tpu.memory_space<vmem>>, vector<1x128xf32>,
    %c165_489 = arith.constant 165 : index
    %c0_490 = arith.constant 0 : index
    %359 = vector.load %arg19[%c165_489, %c0_490] : memref<200x128xf32, #tpu.memory_space<vmem>>, vector<1x128xf32>
    %c134_491 = arith.constant 134 : index
    %c0_492 = arith.constant 0 : index
    %360 = vector.load %arg20[%c134_491, %c0_492] : memref<216x128xf32, #tpu.memory_space<vmem>>, vector<1x128xf32>
    tpu.vector_store %arg20[%c134_491, %c0_492], %359 {strides = array<i32>} : memref<216x128xf32, #tpu.memory_space<vmem>>, vector<1x128xf32>,
    %c166 = arith.constant 166 : index
    %c0_493 = arith.constant 0 : index
    %361 = vector.load %arg19[%c166, %c0_493] : memref<200x128xf32, #tpu.memory_space<vmem>>, vector<1x128xf32>
    %c142_494 = arith.constant 142 : index
    %c0_495 = arith.constant 0 : index
    %362 = vector.load %arg20[%c142_494, %c0_495] : memref<216x128xf32, #tpu.memory_space<vmem>>, vector<1x128xf32>
    tpu.vector_store %arg20[%c142_494, %c0_495], %361 {strides = array<i32>} : memref<216x128xf32, #tpu.memory_space<vmem>>, vector<1x128xf32>,
    %c167 = arith.constant 167 : index
    %c0_496 = arith.constant 0 : index
    %363 = vector.load %arg19[%c167, %c0_496] : memref<200x128xf32, #tpu.memory_space<vmem>>, vector<1x128xf32>
    %c150_497 = arith.constant 150 : index
    %c0_498 = arith.constant 0 : index
    %364 = vector.load %arg20[%c150_497, %c0_498] : memref<216x128xf32, #tpu.memory_space<vmem>>, vector<1x128xf32>
    tpu.vector_store %arg20[%c150_497, %c0_498], %363 {strides = array<i32>} : memref<216x128xf32, #tpu.memory_space<vmem>>, vector<1x128xf32>,
    %c168_499 = arith.constant 168 : index
    %c0_500 = arith.constant 0 : index
    %365 = vector.load %arg19[%c168_499, %c0_500] : memref<200x128xf32, #tpu.memory_space<vmem>>, vector<1x128xf32>
    %c158_501 = arith.constant 158 : index
    %c0_502 = arith.constant 0 : index
    %366 = vector.load %arg20[%c158_501, %c0_502] : memref<216x128xf32, #tpu.memory_space<vmem>>, vector<1x128xf32>
    tpu.vector_store %arg20[%c158_501, %c0_502], %365 {strides = array<i32>} : memref<216x128xf32, #tpu.memory_space<vmem>>, vector<1x128xf32>,
    %c169_503 = arith.constant 169 : index
    %c0_504 = arith.constant 0 : index
    %367 = vector.load %arg19[%c169_503, %c0_504] : memref<200x128xf32, #tpu.memory_space<vmem>>, vector<1x128xf32>
    %c166_505 = arith.constant 166 : index
    %c0_506 = arith.constant 0 : index
    %368 = vector.load %arg20[%c166_505, %c0_506] : memref<216x128xf32, #tpu.memory_space<vmem>>, vector<1x128xf32>
    tpu.vector_store %arg20[%c166_505, %c0_506], %367 {strides = array<i32>} : memref<216x128xf32, #tpu.memory_space<vmem>>, vector<1x128xf32>,
    %c170_507 = arith.constant 170 : index
    %c0_508 = arith.constant 0 : index
    %369 = vector.load %arg19[%c170_507, %c0_508] : memref<200x128xf32, #tpu.memory_space<vmem>>, vector<1x128xf32>
    %c174 = arith.constant 174 : index
    %c0_509 = arith.constant 0 : index
    %370 = vector.load %arg20[%c174, %c0_509] : memref<216x128xf32, #tpu.memory_space<vmem>>, vector<1x128xf32>
    tpu.vector_store %arg20[%c174, %c0_509], %369 {strides = array<i32>} : memref<216x128xf32, #tpu.memory_space<vmem>>, vector<1x128xf32>,
    %c171_510 = arith.constant 171 : index
    %c0_511 = arith.constant 0 : index
    %371 = vector.load %arg19[%c171_510, %c0_511] : memref<200x128xf32, #tpu.memory_space<vmem>>, vector<1x128xf32>
    %c182 = arith.constant 182 : index
    %c0_512 = arith.constant 0 : index
    %372 = vector.load %arg20[%c182, %c0_512] : memref<216x128xf32, #tpu.memory_space<vmem>>, vector<1x128xf32>
    tpu.vector_store %arg20[%c182, %c0_512], %371 {strides = array<i32>} : memref<216x128xf32, #tpu.memory_space<vmem>>, vector<1x128xf32>,
    %c172_513 = arith.constant 172 : index
    %c0_514 = arith.constant 0 : index
    %373 = vector.load %arg19[%c172_513, %c0_514] : memref<200x128xf32, #tpu.memory_space<vmem>>, vector<1x128xf32>
    %c190 = arith.constant 190 : index
    %c0_515 = arith.constant 0 : index
    %374 = vector.load %arg20[%c190, %c0_515] : memref<216x128xf32, #tpu.memory_space<vmem>>, vector<1x128xf32>
    tpu.vector_store %arg20[%c190, %c0_515], %373 {strides = array<i32>} : memref<216x128xf32, #tpu.memory_space<vmem>>, vector<1x128xf32>,
    %c173_516 = arith.constant 173 : index
    %c0_517 = arith.constant 0 : index
    %375 = vector.load %arg19[%c173_516, %c0_517] : memref<200x128xf32, #tpu.memory_space<vmem>>, vector<1x128xf32>
    %c198 = arith.constant 198 : index
    %c0_518 = arith.constant 0 : index
    %376 = vector.load %arg20[%c198, %c0_518] : memref<216x128xf32, #tpu.memory_space<vmem>>, vector<1x128xf32>
    tpu.vector_store %arg20[%c198, %c0_518], %375 {strides = array<i32>} : memref<216x128xf32, #tpu.memory_space<vmem>>, vector<1x128xf32>,
    %c174_519 = arith.constant 174 : index
    %c0_520 = arith.constant 0 : index
    %377 = vector.load %arg19[%c174_519, %c0_520] : memref<200x128xf32, #tpu.memory_space<vmem>>, vector<1x128xf32>
    %c206 = arith.constant 206 : index
    %c0_521 = arith.constant 0 : index
    %378 = vector.load %arg20[%c206, %c0_521] : memref<216x128xf32, #tpu.memory_space<vmem>>, vector<1x128xf32>
    tpu.vector_store %arg20[%c206, %c0_521], %377 {strides = array<i32>} : memref<216x128xf32, #tpu.memory_space<vmem>>, vector<1x128xf32>,
    %c175 = arith.constant 175 : index
    %c0_522 = arith.constant 0 : index
    %379 = vector.load %arg19[%c175, %c0_522] : memref<200x128xf32, #tpu.memory_space<vmem>>, vector<1x128xf32>
    %c15_523 = arith.constant 15 : index
    %c0_524 = arith.constant 0 : index
    %380 = vector.load %arg20[%c15_523, %c0_524] : memref<216x128xf32, #tpu.memory_space<vmem>>, vector<1x128xf32>
    tpu.vector_store %arg20[%c15_523, %c0_524], %379 {strides = array<i32>} : memref<216x128xf32, #tpu.memory_space<vmem>>, vector<1x128xf32>,
    %c176_525 = arith.constant 176 : index
    %c0_526 = arith.constant 0 : index
    %381 = vector.load %arg19[%c176_525, %c0_526] : memref<200x128xf32, #tpu.memory_space<vmem>>, vector<1x128xf32>
    %c23_527 = arith.constant 23 : index
    %c0_528 = arith.constant 0 : index
    %382 = vector.load %arg20[%c23_527, %c0_528] : memref<216x128xf32, #tpu.memory_space<vmem>>, vector<1x128xf32>
    tpu.vector_store %arg20[%c23_527, %c0_528], %381 {strides = array<i32>} : memref<216x128xf32, #tpu.memory_space<vmem>>, vector<1x128xf32>,
    %c177_529 = arith.constant 177 : index
    %c0_530 = arith.constant 0 : index
    %383 = vector.load %arg19[%c177_529, %c0_530] : memref<200x128xf32, #tpu.memory_space<vmem>>, vector<1x128xf32>
    %c31_531 = arith.constant 31 : index
    %c0_532 = arith.constant 0 : index
    %384 = vector.load %arg20[%c31_531, %c0_532] : memref<216x128xf32, #tpu.memory_space<vmem>>, vector<1x128xf32>
    tpu.vector_store %arg20[%c31_531, %c0_532], %383 {strides = array<i32>} : memref<216x128xf32, #tpu.memory_space<vmem>>, vector<1x128xf32>,
    %c178_533 = arith.constant 178 : index
    %c0_534 = arith.constant 0 : index
    %385 = vector.load %arg19[%c178_533, %c0_534] : memref<200x128xf32, #tpu.memory_space<vmem>>, vector<1x128xf32>
    %c39_535 = arith.constant 39 : index
    %c0_536 = arith.constant 0 : index
    %386 = vector.load %arg20[%c39_535, %c0_536] : memref<216x128xf32, #tpu.memory_space<vmem>>, vector<1x128xf32>
    tpu.vector_store %arg20[%c39_535, %c0_536], %385 {strides = array<i32>} : memref<216x128xf32, #tpu.memory_space<vmem>>, vector<1x128xf32>,
    %c179_537 = arith.constant 179 : index
    %c0_538 = arith.constant 0 : index
    %387 = vector.load %arg19[%c179_537, %c0_538] : memref<200x128xf32, #tpu.memory_space<vmem>>, vector<1x128xf32>
    %c47_539 = arith.constant 47 : index
    %c0_540 = arith.constant 0 : index
    %388 = vector.load %arg20[%c47_539, %c0_540] : memref<216x128xf32, #tpu.memory_space<vmem>>, vector<1x128xf32>
    tpu.vector_store %arg20[%c47_539, %c0_540], %387 {strides = array<i32>} : memref<216x128xf32, #tpu.memory_space<vmem>>, vector<1x128xf32>,
    %c180_541 = arith.constant 180 : index
    %c0_542 = arith.constant 0 : index
    %389 = vector.load %arg19[%c180_541, %c0_542] : memref<200x128xf32, #tpu.memory_space<vmem>>, vector<1x128xf32>
    %c55_543 = arith.constant 55 : index
    %c0_544 = arith.constant 0 : index
    %390 = vector.load %arg20[%c55_543, %c0_544] : memref<216x128xf32, #tpu.memory_space<vmem>>, vector<1x128xf32>
    tpu.vector_store %arg20[%c55_543, %c0_544], %389 {strides = array<i32>} : memref<216x128xf32, #tpu.memory_space<vmem>>, vector<1x128xf32>,
    %c181_545 = arith.constant 181 : index
    %c0_546 = arith.constant 0 : index
    %391 = vector.load %arg19[%c181_545, %c0_546] : memref<200x128xf32, #tpu.memory_space<vmem>>, vector<1x128xf32>
    %c63_547 = arith.constant 63 : index
    %c0_548 = arith.constant 0 : index
    %392 = vector.load %arg20[%c63_547, %c0_548] : memref<216x128xf32, #tpu.memory_space<vmem>>, vector<1x128xf32>
    tpu.vector_store %arg20[%c63_547, %c0_548], %391 {strides = array<i32>} : memref<216x128xf32, #tpu.memory_space<vmem>>, vector<1x128xf32>,
    %c182_549 = arith.constant 182 : index
    %c0_550 = arith.constant 0 : index
    %393 = vector.load %arg19[%c182_549, %c0_550] : memref<200x128xf32, #tpu.memory_space<vmem>>, vector<1x128xf32>
    %c71_551 = arith.constant 71 : index
    %c0_552 = arith.constant 0 : index
    %394 = vector.load %arg20[%c71_551, %c0_552] : memref<216x128xf32, #tpu.memory_space<vmem>>, vector<1x128xf32>
    tpu.vector_store %arg20[%c71_551, %c0_552], %393 {strides = array<i32>} : memref<216x128xf32, #tpu.memory_space<vmem>>, vector<1x128xf32>,
    %c183 = arith.constant 183 : index
    %c0_553 = arith.constant 0 : index
    %395 = vector.load %arg19[%c183, %c0_553] : memref<200x128xf32, #tpu.memory_space<vmem>>, vector<1x128xf32>
    %c79_554 = arith.constant 79 : index
    %c0_555 = arith.constant 0 : index
    %396 = vector.load %arg20[%c79_554, %c0_555] : memref<216x128xf32, #tpu.memory_space<vmem>>, vector<1x128xf32>
    tpu.vector_store %arg20[%c79_554, %c0_555], %395 {strides = array<i32>} : memref<216x128xf32, #tpu.memory_space<vmem>>, vector<1x128xf32>,
    %c184_556 = arith.constant 184 : index
    %c0_557 = arith.constant 0 : index
    %397 = vector.load %arg19[%c184_556, %c0_557] : memref<200x128xf32, #tpu.memory_space<vmem>>, vector<1x128xf32>
    %c87_558 = arith.constant 87 : index
    %c0_559 = arith.constant 0 : index
    %398 = vector.load %arg20[%c87_558, %c0_559] : memref<216x128xf32, #tpu.memory_space<vmem>>, vector<1x128xf32>
    tpu.vector_store %arg20[%c87_558, %c0_559], %397 {strides = array<i32>} : memref<216x128xf32, #tpu.memory_space<vmem>>, vector<1x128xf32>,
    %c185_560 = arith.constant 185 : index
    %c0_561 = arith.constant 0 : index
    %399 = vector.load %arg19[%c185_560, %c0_561] : memref<200x128xf32, #tpu.memory_space<vmem>>, vector<1x128xf32>
    %c95_562 = arith.constant 95 : index
    %c0_563 = arith.constant 0 : index
    %400 = vector.load %arg20[%c95_562, %c0_563] : memref<216x128xf32, #tpu.memory_space<vmem>>, vector<1x128xf32>
    tpu.vector_store %arg20[%c95_562, %c0_563], %399 {strides = array<i32>} : memref<216x128xf32, #tpu.memory_space<vmem>>, vector<1x128xf32>,
    %c186_564 = arith.constant 186 : index
    %c0_565 = arith.constant 0 : index
    %401 = vector.load %arg19[%c186_564, %c0_565] : memref<200x128xf32, #tpu.memory_space<vmem>>, vector<1x128xf32>
    %c103_566 = arith.constant 103 : index
    %c0_567 = arith.constant 0 : index
    %402 = vector.load %arg20[%c103_566, %c0_567] : memref<216x128xf32, #tpu.memory_space<vmem>>, vector<1x128xf32>
    tpu.vector_store %arg20[%c103_566, %c0_567], %401 {strides = array<i32>} : memref<216x128xf32, #tpu.memory_space<vmem>>, vector<1x128xf32>,
    %c187_568 = arith.constant 187 : index
    %c0_569 = arith.constant 0 : index
    %403 = vector.load %arg19[%c187_568, %c0_569] : memref<200x128xf32, #tpu.memory_space<vmem>>, vector<1x128xf32>
    %c111_570 = arith.constant 111 : index
    %c0_571 = arith.constant 0 : index
    %404 = vector.load %arg20[%c111_570, %c0_571] : memref<216x128xf32, #tpu.memory_space<vmem>>, vector<1x128xf32>
    tpu.vector_store %arg20[%c111_570, %c0_571], %403 {strides = array<i32>} : memref<216x128xf32, #tpu.memory_space<vmem>>, vector<1x128xf32>,
    %c188_572 = arith.constant 188 : index
    %c0_573 = arith.constant 0 : index
    %405 = vector.load %arg19[%c188_572, %c0_573] : memref<200x128xf32, #tpu.memory_space<vmem>>, vector<1x128xf32>
    %c119_574 = arith.constant 119 : index
    %c0_575 = arith.constant 0 : index
    %406 = vector.load %arg20[%c119_574, %c0_575] : memref<216x128xf32, #tpu.memory_space<vmem>>, vector<1x128xf32>
    tpu.vector_store %arg20[%c119_574, %c0_575], %405 {strides = array<i32>} : memref<216x128xf32, #tpu.memory_space<vmem>>, vector<1x128xf32>,
    %c189_576 = arith.constant 189 : index
    %c0_577 = arith.constant 0 : index
    %407 = vector.load %arg19[%c189_576, %c0_577] : memref<200x128xf32, #tpu.memory_space<vmem>>, vector<1x128xf32>
    %c127_578 = arith.constant 127 : index
    %c0_579 = arith.constant 0 : index
    %408 = vector.load %arg20[%c127_578, %c0_579] : memref<216x128xf32, #tpu.memory_space<vmem>>, vector<1x128xf32>
    tpu.vector_store %arg20[%c127_578, %c0_579], %407 {strides = array<i32>} : memref<216x128xf32, #tpu.memory_space<vmem>>, vector<1x128xf32>,
    %c190_580 = arith.constant 190 : index
    %c0_581 = arith.constant 0 : index
    %409 = vector.load %arg19[%c190_580, %c0_581] : memref<200x128xf32, #tpu.memory_space<vmem>>, vector<1x128xf32>
    %c135_582 = arith.constant 135 : index
    %c0_583 = arith.constant 0 : index
    %410 = vector.load %arg20[%c135_582, %c0_583] : memref<216x128xf32, #tpu.memory_space<vmem>>, vector<1x128xf32>
    tpu.vector_store %arg20[%c135_582, %c0_583], %409 {strides = array<i32>} : memref<216x128xf32, #tpu.memory_space<vmem>>, vector<1x128xf32>,
    %c191 = arith.constant 191 : index
    %c0_584 = arith.constant 0 : index
    %411 = vector.load %arg19[%c191, %c0_584] : memref<200x128xf32, #tpu.memory_space<vmem>>, vector<1x128xf32>
    %c143_585 = arith.constant 143 : index
    %c0_586 = arith.constant 0 : index
    %412 = vector.load %arg20[%c143_585, %c0_586] : memref<216x128xf32, #tpu.memory_space<vmem>>, vector<1x128xf32>
    tpu.vector_store %arg20[%c143_585, %c0_586], %411 {strides = array<i32>} : memref<216x128xf32, #tpu.memory_space<vmem>>, vector<1x128xf32>,
    %c192_587 = arith.constant 192 : index
    %c0_588 = arith.constant 0 : index
    %413 = vector.load %arg19[%c192_587, %c0_588] : memref<200x128xf32, #tpu.memory_space<vmem>>, vector<1x128xf32>
    %c151_589 = arith.constant 151 : index
    %c0_590 = arith.constant 0 : index
    %414 = vector.load %arg20[%c151_589, %c0_590] : memref<216x128xf32, #tpu.memory_space<vmem>>, vector<1x128xf32>
    tpu.vector_store %arg20[%c151_589, %c0_590], %413 {strides = array<i32>} : memref<216x128xf32, #tpu.memory_space<vmem>>, vector<1x128xf32>,
    %c193_591 = arith.constant 193 : index
    %c0_592 = arith.constant 0 : index
    %415 = vector.load %arg19[%c193_591, %c0_592] : memref<200x128xf32, #tpu.memory_space<vmem>>, vector<1x128xf32>
    %c159_593 = arith.constant 159 : index
    %c0_594 = arith.constant 0 : index
    %416 = vector.load %arg20[%c159_593, %c0_594] : memref<216x128xf32, #tpu.memory_space<vmem>>, vector<1x128xf32>
    tpu.vector_store %arg20[%c159_593, %c0_594], %415 {strides = array<i32>} : memref<216x128xf32, #tpu.memory_space<vmem>>, vector<1x128xf32>,
    %c194_595 = arith.constant 194 : index
    %c0_596 = arith.constant 0 : index
    %417 = vector.load %arg19[%c194_595, %c0_596] : memref<200x128xf32, #tpu.memory_space<vmem>>, vector<1x128xf32>
    %c167_597 = arith.constant 167 : index
    %c0_598 = arith.constant 0 : index
    %418 = vector.load %arg20[%c167_597, %c0_598] : memref<216x128xf32, #tpu.memory_space<vmem>>, vector<1x128xf32>
    tpu.vector_store %arg20[%c167_597, %c0_598], %417 {strides = array<i32>} : memref<216x128xf32, #tpu.memory_space<vmem>>, vector<1x128xf32>,
    %c195_599 = arith.constant 195 : index
    %c0_600 = arith.constant 0 : index
    %419 = vector.load %arg19[%c195_599, %c0_600] : memref<200x128xf32, #tpu.memory_space<vmem>>, vector<1x128xf32>
    %c175_601 = arith.constant 175 : index
    %c0_602 = arith.constant 0 : index
    %420 = vector.load %arg20[%c175_601, %c0_602] : memref<216x128xf32, #tpu.memory_space<vmem>>, vector<1x128xf32>
    tpu.vector_store %arg20[%c175_601, %c0_602], %419 {strides = array<i32>} : memref<216x128xf32, #tpu.memory_space<vmem>>, vector<1x128xf32>,
    %c196_603 = arith.constant 196 : index
    %c0_604 = arith.constant 0 : index
    %421 = vector.load %arg19[%c196_603, %c0_604] : memref<200x128xf32, #tpu.memory_space<vmem>>, vector<1x128xf32>
    %c183_605 = arith.constant 183 : index
    %c0_606 = arith.constant 0 : index
    %422 = vector.load %arg20[%c183_605, %c0_606] : memref<216x128xf32, #tpu.memory_space<vmem>>, vector<1x128xf32>
    tpu.vector_store %arg20[%c183_605, %c0_606], %421 {strides = array<i32>} : memref<216x128xf32, #tpu.memory_space<vmem>>, vector<1x128xf32>,
    %c197_607 = arith.constant 197 : index
    %c0_608 = arith.constant 0 : index
    %423 = vector.load %arg19[%c197_607, %c0_608] : memref<200x128xf32, #tpu.memory_space<vmem>>, vector<1x128xf32>
    %c191_609 = arith.constant 191 : index
    %c0_610 = arith.constant 0 : index
    %424 = vector.load %arg20[%c191_609, %c0_610] : memref<216x128xf32, #tpu.memory_space<vmem>>, vector<1x128xf32>
    tpu.vector_store %arg20[%c191_609, %c0_610], %423 {strides = array<i32>} : memref<216x128xf32, #tpu.memory_space<vmem>>, vector<1x128xf32>,
    %c198_611 = arith.constant 198 : index
    %c0_612 = arith.constant 0 : index
    %425 = vector.load %arg19[%c198_611, %c0_612] : memref<200x128xf32, #tpu.memory_space<vmem>>, vector<1x128xf32>
    %c199 = arith.constant 199 : index
    %c0_613 = arith.constant 0 : index
    %426 = vector.load %arg20[%c199, %c0_613] : memref<216x128xf32, #tpu.memory_space<vmem>>, vector<1x128xf32>
    tpu.vector_store %arg20[%c199, %c0_613], %425 {strides = array<i32>} : memref<216x128xf32, #tpu.memory_space<vmem>>, vector<1x128xf32>,
    %c199_614 = arith.constant 199 : index
    %c0_615 = arith.constant 0 : index
    %427 = vector.load %arg19[%c199_614, %c0_615] : memref<200x128xf32, #tpu.memory_space<vmem>>, vector<1x128xf32>
    %c207 = arith.constant 207 : index
    %c0_616 = arith.constant 0 : index
    %428 = vector.load %arg20[%c207, %c0_616] : memref<216x128xf32, #tpu.memory_space<vmem>>, vector<1x128xf32>
    tpu.vector_store %arg20[%c207, %c0_616], %427 {strides = array<i32>} : memref<216x128xf32, #tpu.memory_space<vmem>>, vector<1x128xf32>,
    %c0_617 = arith.constant 0 : index
    %c0_618 = arith.constant 0 : index
    %429 = vector.load %arg20[%c0_617, %c0_618] : memref<216x128xf32, #tpu.memory_space<vmem>>, vector<184x128xf32>
    %430 = arith.truncf %429 : vector<184x128xf32> to vector<184x128xbf16>
    %c0_619 = arith.constant 0 : index
    %c0_620 = arith.constant 0 : index
    %431 = vector.load %arg22[%c0_619, %c0_620] : memref<184x640xbf16, #tpu.memory_space<vmem>>, vector<184x128xbf16>
    tpu.vector_store %arg22[%c0_619, %c0_620], %430 {strides = array<i32>} : memref<184x640xbf16, #tpu.memory_space<vmem>>, vector<184x128xbf16>,
    %c8_621 = arith.constant 8 : index
    %c0_622 = arith.constant 0 : index
    %432 = vector.load %arg20[%c8_621, %c0_622] : memref<216x128xf32, #tpu.memory_space<vmem>>, vector<184x128xf32>
    %433 = arith.truncf %432 : vector<184x128xf32> to vector<184x128xbf16>
    %c0_623 = arith.constant 0 : index
    %c128_624 = arith.constant 128 : index
    %434 = vector.load %arg22[%c0_623, %c128_624] : memref<184x640xbf16, #tpu.memory_space<vmem>>, vector<184x128xbf16>
    tpu.vector_store %arg22[%c0_623, %c128_624], %433 {strides = array<i32>} : memref<184x640xbf16, #tpu.memory_space<vmem>>, vector<184x128xbf16>,
    %c16_625 = arith.constant 16 : index
    %c0_626 = arith.constant 0 : index
    %435 = vector.load %arg20[%c16_625, %c0_626] : memref<216x128xf32, #tpu.memory_space<vmem>>, vector<184x128xf32>
    %436 = arith.truncf %435 : vector<184x128xf32> to vector<184x128xbf16>
    %c0_627 = arith.constant 0 : index
    %c256 = arith.constant 256 : index
    %437 = vector.load %arg22[%c0_627, %c256] : memref<184x640xbf16, #tpu.memory_space<vmem>>, vector<184x128xbf16>
    tpu.vector_store %arg22[%c0_627, %c256], %436 {strides = array<i32>} : memref<184x640xbf16, #tpu.memory_space<vmem>>, vector<184x128xbf16>,
    %c24_628 = arith.constant 24 : index
    %c0_629 = arith.constant 0 : index
    %438 = vector.load %arg20[%c24_628, %c0_629] : memref<216x128xf32, #tpu.memory_space<vmem>>, vector<184x128xf32>
    %439 = arith.truncf %438 : vector<184x128xf32> to vector<184x128xbf16>
    %c0_630 = arith.constant 0 : index
    %c384 = arith.constant 384 : index
    %440 = vector.load %arg22[%c0_630, %c384] : memref<184x640xbf16, #tpu.memory_space<vmem>>, vector<184x128xbf16>
    tpu.vector_store %arg22[%c0_630, %c384], %439 {strides = array<i32>} : memref<184x640xbf16, #tpu.memory_space<vmem>>, vector<184x128xbf16>,
    %c32_631 = arith.constant 32 : index
    %c0_632 = arith.constant 0 : index
    %441 = vector.load %arg20[%c32_631, %c0_632] : memref<216x128xf32, #tpu.memory_space<vmem>>, vector<184x128xf32>
    %442 = arith.truncf %441 : vector<184x128xf32> to vector<184x128xbf16>
    %c0_633 = arith.constant 0 : index
    %c512 = arith.constant 512 : index
    %443 = vector.load %arg22[%c0_633, %c512] : memref<184x640xbf16, #tpu.memory_space<vmem>>, vector<184x128xbf16>
    tpu.vector_store %arg22[%c0_633, %c512], %442 {strides = array<i32>} : memref<184x640xbf16, #tpu.memory_space<vmem>>, vector<184x128xbf16>,
    %c0_634 = arith.constant 0 : index
    %c0_635 = arith.constant 0 : index
    %444 = vector.load %arg22[%c0_634, %c0_635] : memref<184x640xbf16, #tpu.memory_space<vmem>>, vector<184x640xbf16>
    %c0_636 = arith.constant 0 : index
    %c0_637 = arith.constant 0 : index
    %445 = vector.load %arg8[%c0_636, %c0_637] : memref<640x128xbf16, #tpu.memory_space<vmem>>, vector<640x128xbf16>
    %cst_638 = arith.constant dense<0.000000e+00> : vector<184x128xf32>
    %446 = tpu.matmul %444, %445, %cst_638 {dimension_numbers = #tpu.dot_dimension_numbers<[1], [0], [0], [1], [0, 0, 1, 1], [], []>} : vector<184x640xbf16>, vector<640x128xbf16>, vector<184x128xf32> -> vector<184x128xf32>
    %c0_639 = arith.constant 0 : index
    %c0_640 = arith.constant 0 : index
    %447 = vector.load %arg9[%c0_639, %c0_640] : memref<1x128xf32, #tpu.memory_space<vmem>>, vector<1x128xf32>
    %448 = vector.broadcast %447 : vector<1x128xf32> to vector<184x128xf32>
    %449 = arith.addf %446, %448 : vector<184x128xf32>
    %cst_641 = arith.constant 0.000000e+00 : f32
    %450 = vector.broadcast %cst_641 : f32 to vector<184x128xf32>
    %451 = arith.maximumf %449, %450 : vector<184x128xf32>
    %cst_642 = arith.constant 0.000000e+00 : f32
    %452 = vector.broadcast %cst_642 : f32 to vector<16x128xf32>
    %c0_643 = arith.constant 0 : index
    %c0_644 = arith.constant 0 : index
    %453 = vector.load %arg21[%c0_643, %c0_644] : memref<120x128xf32, #tpu.memory_space<vmem>>, vector<16x128xf32>
    tpu.vector_store %arg21[%c0_643, %c0_644], %452 {strides = array<i32>} : memref<120x128xf32, #tpu.memory_space<vmem>>, vector<16x128xf32>,
    %c104_645 = arith.constant 104 : index
    %c0_646 = arith.constant 0 : index
    %454 = vector.load %arg21[%c104_645, %c0_646] : memref<120x128xf32, #tpu.memory_space<vmem>>, vector<16x128xf32>
    tpu.vector_store %arg21[%c104_645, %c0_646], %452 {strides = array<i32>} : memref<120x128xf32, #tpu.memory_space<vmem>>, vector<16x128xf32>,
    %455 = vector.extract_strided_slice %451 {offsets = [0, 0], sizes = [8, 128], strides = [1, 1]} : vector<184x128xf32> to vector<8x128xf32>
    %456 = vector.extract_strided_slice %451 {offsets = [8, 0], sizes = [8, 128], strides = [1, 1]} : vector<184x128xf32> to vector<8x128xf32>
    %457 = arith.maximumf %455, %456 : vector<8x128xf32>
    %c16_647 = arith.constant 16 : index
    %c0_648 = arith.constant 0 : index
    %458 = vector.load %arg21[%c16_647, %c0_648] : memref<120x128xf32, #tpu.memory_space<vmem>>, vector<8x128xf32>
    tpu.vector_store %arg21[%c16_647, %c0_648], %457 {strides = array<i32>} : memref<120x128xf32, #tpu.memory_space<vmem>>, vector<8x128xf32>,
    %459 = vector.extract_strided_slice %451 {offsets = [16, 0], sizes = [8, 128], strides = [1, 1]} : vector<184x128xf32> to vector<8x128xf32>
    %460 = vector.extract_strided_slice %451 {offsets = [24, 0], sizes = [8, 128], strides = [1, 1]} : vector<184x128xf32> to vector<8x128xf32>
    %461 = arith.maximumf %459, %460 : vector<8x128xf32>
    %c24_649 = arith.constant 24 : index
    %c0_650 = arith.constant 0 : index
    %462 = vector.load %arg21[%c24_649, %c0_650] : memref<120x128xf32, #tpu.memory_space<vmem>>, vector<8x128xf32>
    tpu.vector_store %arg21[%c24_649, %c0_650], %461 {strides = array<i32>} : memref<120x128xf32, #tpu.memory_space<vmem>>, vector<8x128xf32>,
    %463 = vector.extract_strided_slice %451 {offsets = [32, 0], sizes = [8, 128], strides = [1, 1]} : vector<184x128xf32> to vector<8x128xf32>
    %464 = vector.extract_strided_slice %451 {offsets = [40, 0], sizes = [8, 128], strides = [1, 1]} : vector<184x128xf32> to vector<8x128xf32>
    %465 = arith.maximumf %463, %464 : vector<8x128xf32>
    %c32_651 = arith.constant 32 : index
    %c0_652 = arith.constant 0 : index
    %466 = vector.load %arg21[%c32_651, %c0_652] : memref<120x128xf32, #tpu.memory_space<vmem>>, vector<8x128xf32>
    tpu.vector_store %arg21[%c32_651, %c0_652], %465 {strides = array<i32>} : memref<120x128xf32, #tpu.memory_space<vmem>>, vector<8x128xf32>,
    %467 = vector.extract_strided_slice %451 {offsets = [48, 0], sizes = [8, 128], strides = [1, 1]} : vector<184x128xf32> to vector<8x128xf32>
    %468 = vector.extract_strided_slice %451 {offsets = [56, 0], sizes = [8, 128], strides = [1, 1]} : vector<184x128xf32> to vector<8x128xf32>
    %469 = arith.maximumf %467, %468 : vector<8x128xf32>
    %c40_653 = arith.constant 40 : index
    %c0_654 = arith.constant 0 : index
    %470 = vector.load %arg21[%c40_653, %c0_654] : memref<120x128xf32, #tpu.memory_space<vmem>>, vector<8x128xf32>
    tpu.vector_store %arg21[%c40_653, %c0_654], %469 {strides = array<i32>} : memref<120x128xf32, #tpu.memory_space<vmem>>, vector<8x128xf32>,
    %471 = vector.extract_strided_slice %451 {offsets = [64, 0], sizes = [8, 128], strides = [1, 1]} : vector<184x128xf32> to vector<8x128xf32>
    %472 = vector.extract_strided_slice %451 {offsets = [72, 0], sizes = [8, 128], strides = [1, 1]} : vector<184x128xf32> to vector<8x128xf32>
    %473 = arith.maximumf %471, %472 : vector<8x128xf32>
    %c48_655 = arith.constant 48 : index
    %c0_656 = arith.constant 0 : index
    %474 = vector.load %arg21[%c48_655, %c0_656] : memref<120x128xf32, #tpu.memory_space<vmem>>, vector<8x128xf32>
    tpu.vector_store %arg21[%c48_655, %c0_656], %473 {strides = array<i32>} : memref<120x128xf32, #tpu.memory_space<vmem>>, vector<8x128xf32>,
    %475 = vector.extract_strided_slice %451 {offsets = [80, 0], sizes = [8, 128], strides = [1, 1]} : vector<184x128xf32> to vector<8x128xf32>
    %476 = vector.extract_strided_slice %451 {offsets = [88, 0], sizes = [8, 128], strides = [1, 1]} : vector<184x128xf32> to vector<8x128xf32>
    %477 = arith.maximumf %475, %476 : vector<8x128xf32>
    %c56_657 = arith.constant 56 : index
    %c0_658 = arith.constant 0 : index
    %478 = vector.load %arg21[%c56_657, %c0_658] : memref<120x128xf32, #tpu.memory_space<vmem>>, vector<8x128xf32>
    tpu.vector_store %arg21[%c56_657, %c0_658], %477 {strides = array<i32>} : memref<120x128xf32, #tpu.memory_space<vmem>>, vector<8x128xf32>,
    %479 = vector.extract_strided_slice %451 {offsets = [96, 0], sizes = [8, 128], strides = [1, 1]} : vector<184x128xf32> to vector<8x128xf32>
    %480 = vector.extract_strided_slice %451 {offsets = [104, 0], sizes = [8, 128], strides = [1, 1]} : vector<184x128xf32> to vector<8x128xf32>
    %481 = arith.maximumf %479, %480 : vector<8x128xf32>
    %c64_659 = arith.constant 64 : index
    %c0_660 = arith.constant 0 : index
    %482 = vector.load %arg21[%c64_659, %c0_660] : memref<120x128xf32, #tpu.memory_space<vmem>>, vector<8x128xf32>
    tpu.vector_store %arg21[%c64_659, %c0_660], %481 {strides = array<i32>} : memref<120x128xf32, #tpu.memory_space<vmem>>, vector<8x128xf32>,
    %483 = vector.extract_strided_slice %451 {offsets = [112, 0], sizes = [8, 128], strides = [1, 1]} : vector<184x128xf32> to vector<8x128xf32>
    %484 = vector.extract_strided_slice %451 {offsets = [120, 0], sizes = [8, 128], strides = [1, 1]} : vector<184x128xf32> to vector<8x128xf32>
    %485 = arith.maximumf %483, %484 : vector<8x128xf32>
    %c72_661 = arith.constant 72 : index
    %c0_662 = arith.constant 0 : index
    %486 = vector.load %arg21[%c72_661, %c0_662] : memref<120x128xf32, #tpu.memory_space<vmem>>, vector<8x128xf32>
    tpu.vector_store %arg21[%c72_661, %c0_662], %485 {strides = array<i32>} : memref<120x128xf32, #tpu.memory_space<vmem>>, vector<8x128xf32>,
    %487 = vector.extract_strided_slice %451 {offsets = [128, 0], sizes = [8, 128], strides = [1, 1]} : vector<184x128xf32> to vector<8x128xf32>
    %488 = vector.extract_strided_slice %451 {offsets = [136, 0], sizes = [8, 128], strides = [1, 1]} : vector<184x128xf32> to vector<8x128xf32>
    %489 = arith.maximumf %487, %488 : vector<8x128xf32>
    %c80_663 = arith.constant 80 : index
    %c0_664 = arith.constant 0 : index
    %490 = vector.load %arg21[%c80_663, %c0_664] : memref<120x128xf32, #tpu.memory_space<vmem>>, vector<8x128xf32>
    tpu.vector_store %arg21[%c80_663, %c0_664], %489 {strides = array<i32>} : memref<120x128xf32, #tpu.memory_space<vmem>>, vector<8x128xf32>,
    %491 = vector.extract_strided_slice %451 {offsets = [144, 0], sizes = [8, 128], strides = [1, 1]} : vector<184x128xf32> to vector<8x128xf32>
    %492 = vector.extract_strided_slice %451 {offsets = [152, 0], sizes = [8, 128], strides = [1, 1]} : vector<184x128xf32> to vector<8x128xf32>
    %493 = arith.maximumf %491, %492 : vector<8x128xf32>
    %c88_665 = arith.constant 88 : index
    %c0_666 = arith.constant 0 : index
    %494 = vector.load %arg21[%c88_665, %c0_666] : memref<120x128xf32, #tpu.memory_space<vmem>>, vector<8x128xf32>
    tpu.vector_store %arg21[%c88_665, %c0_666], %493 {strides = array<i32>} : memref<120x128xf32, #tpu.memory_space<vmem>>, vector<8x128xf32>,
    %495 = vector.extract_strided_slice %451 {offsets = [160, 0], sizes = [8, 128], strides = [1, 1]} : vector<184x128xf32> to vector<8x128xf32>
    %496 = vector.extract_strided_slice %451 {offsets = [168, 0], sizes = [8, 128], strides = [1, 1]} : vector<184x128xf32> to vector<8x128xf32>
    %497 = arith.maximumf %495, %496 : vector<8x128xf32>
    %c96_667 = arith.constant 96 : index
    %c0_668 = arith.constant 0 : index
    %498 = vector.load %arg21[%c96_667, %c0_668] : memref<120x128xf32, #tpu.memory_space<vmem>>, vector<8x128xf32>
    tpu.vector_store %arg21[%c96_667, %c0_668], %497 {strides = array<i32>} : memref<120x128xf32, #tpu.memory_space<vmem>>, vector<8x128xf32>,
    %c0_669 = arith.constant 0 : index
    %c0_670 = arith.constant 0 : index
    %499 = vector.load %arg21[%c0_669, %c0_670] : memref<120x128xf32, #tpu.memory_space<vmem>>, vector<88x128xf32>
    %500 = arith.truncf %499 : vector<88x128xf32> to vector<88x128xbf16>
    %c0_671 = arith.constant 0 : index
    %c0_672 = arith.constant 0 : index
    %501 = vector.load %arg22[%c0_671, %c0_672] : memref<184x640xbf16, #tpu.memory_space<vmem>>, vector<88x128xbf16>
    tpu.vector_store %arg22[%c0_671, %c0_672], %500 {strides = array<i32>} : memref<184x640xbf16, #tpu.memory_space<vmem>>, vector<88x128xbf16>,
    %c8_673 = arith.constant 8 : index
    %c0_674 = arith.constant 0 : index
    %502 = vector.load %arg21[%c8_673, %c0_674] : memref<120x128xf32, #tpu.memory_space<vmem>>, vector<88x128xf32>
    %503 = arith.truncf %502 : vector<88x128xf32> to vector<88x128xbf16>
    %c0_675 = arith.constant 0 : index
    %c128_676 = arith.constant 128 : index
    %504 = vector.load %arg22[%c0_675, %c128_676] : memref<184x640xbf16, #tpu.memory_space<vmem>>, vector<88x128xbf16>
    tpu.vector_store %arg22[%c0_675, %c128_676], %503 {strides = array<i32>} : memref<184x640xbf16, #tpu.memory_space<vmem>>, vector<88x128xbf16>,
    %c16_677 = arith.constant 16 : index
    %c0_678 = arith.constant 0 : index
    %505 = vector.load %arg21[%c16_677, %c0_678] : memref<120x128xf32, #tpu.memory_space<vmem>>, vector<88x128xf32>
    %506 = arith.truncf %505 : vector<88x128xf32> to vector<88x128xbf16>
    %c0_679 = arith.constant 0 : index
    %c256_680 = arith.constant 256 : index
    %507 = vector.load %arg22[%c0_679, %c256_680] : memref<184x640xbf16, #tpu.memory_space<vmem>>, vector<88x128xbf16>
    tpu.vector_store %arg22[%c0_679, %c256_680], %506 {strides = array<i32>} : memref<184x640xbf16, #tpu.memory_space<vmem>>, vector<88x128xbf16>,
    %c24_681 = arith.constant 24 : index
    %c0_682 = arith.constant 0 : index
    %508 = vector.load %arg21[%c24_681, %c0_682] : memref<120x128xf32, #tpu.memory_space<vmem>>, vector<88x128xf32>
    %509 = arith.truncf %508 : vector<88x128xf32> to vector<88x128xbf16>
    %c0_683 = arith.constant 0 : index
    %c384_684 = arith.constant 384 : index
    %510 = vector.load %arg22[%c0_683, %c384_684] : memref<184x640xbf16, #tpu.memory_space<vmem>>, vector<88x128xbf16>
    tpu.vector_store %arg22[%c0_683, %c384_684], %509 {strides = array<i32>} : memref<184x640xbf16, #tpu.memory_space<vmem>>, vector<88x128xbf16>,
    %c32_685 = arith.constant 32 : index
    %c0_686 = arith.constant 0 : index
    %511 = vector.load %arg21[%c32_685, %c0_686] : memref<120x128xf32, #tpu.memory_space<vmem>>, vector<88x128xf32>
    %512 = arith.truncf %511 : vector<88x128xf32> to vector<88x128xbf16>
    %c0_687 = arith.constant 0 : index
    %c512_688 = arith.constant 512 : index
    %513 = vector.load %arg22[%c0_687, %c512_688] : memref<184x640xbf16, #tpu.memory_space<vmem>>, vector<88x128xbf16>
    tpu.vector_store %arg22[%c0_687, %c512_688], %512 {strides = array<i32>} : memref<184x640xbf16, #tpu.memory_space<vmem>>, vector<88x128xbf16>,
    %c0_689 = arith.constant 0 : index
    %c0_690 = arith.constant 0 : index
    %514 = vector.load %arg22[%c0_689, %c0_690] : memref<184x640xbf16, #tpu.memory_space<vmem>>, vector<88x640xbf16>
    %c0_691 = arith.constant 0 : index
    %c0_692 = arith.constant 0 : index
    %515 = vector.load %arg10[%c0_691, %c0_692] : memref<640x128xbf16, #tpu.memory_space<vmem>>, vector<640x128xbf16>
    %cst_693 = arith.constant dense<0.000000e+00> : vector<88x128xf32>
    %516 = tpu.matmul %514, %515, %cst_693 {dimension_numbers = #tpu.dot_dimension_numbers<[1], [0], [0], [1], [0, 0, 1, 1], [], []>} : vector<88x640xbf16>, vector<640x128xbf16>, vector<88x128xf32> -> vector<88x128xf32>
    %c0_694 = arith.constant 0 : index
    %c0_695 = arith.constant 0 : index
    %517 = vector.load %arg11[%c0_694, %c0_695] : memref<1x128xf32, #tpu.memory_space<vmem>>, vector<1x128xf32>
    %518 = vector.broadcast %517 : vector<1x128xf32> to vector<88x128xf32>
    %519 = arith.addf %516, %518 : vector<88x128xf32>
    %cst_696 = arith.constant 0.000000e+00 : f32
    %520 = vector.broadcast %cst_696 : f32 to vector<88x128xf32>
    %521 = arith.maximumf %519, %520 : vector<88x128xf32>
    %c16_697 = arith.constant 16 : index
    %c0_698 = arith.constant 0 : index
    %522 = vector.load %arg21[%c16_697, %c0_698] : memref<120x128xf32, #tpu.memory_space<vmem>>, vector<88x128xf32>
    tpu.vector_store %arg21[%c16_697, %c0_698], %521 {strides = array<i32>} : memref<120x128xf32, #tpu.memory_space<vmem>>, vector<88x128xf32>,
    %c0_699 = arith.constant 0 : index
    %c0_700 = arith.constant 0 : index
    %523 = vector.load %arg21[%c0_699, %c0_700] : memref<120x128xf32, #tpu.memory_space<vmem>>, vector<88x128xf32>
    %524 = arith.truncf %523 : vector<88x128xf32> to vector<88x128xbf16>
    %c0_701 = arith.constant 0 : index
    %c0_702 = arith.constant 0 : index
    %525 = vector.load %arg22[%c0_701, %c0_702] : memref<184x640xbf16, #tpu.memory_space<vmem>>, vector<88x128xbf16>
    tpu.vector_store %arg22[%c0_701, %c0_702], %524 {strides = array<i32>} : memref<184x640xbf16, #tpu.memory_space<vmem>>, vector<88x128xbf16>,
    %c8_703 = arith.constant 8 : index
    %c0_704 = arith.constant 0 : index
    %526 = vector.load %arg21[%c8_703, %c0_704] : memref<120x128xf32, #tpu.memory_space<vmem>>, vector<88x128xf32>
    %527 = arith.truncf %526 : vector<88x128xf32> to vector<88x128xbf16>
    %c0_705 = arith.constant 0 : index
    %c128_706 = arith.constant 128 : index
    %528 = vector.load %arg22[%c0_705, %c128_706] : memref<184x640xbf16, #tpu.memory_space<vmem>>, vector<88x128xbf16>
    tpu.vector_store %arg22[%c0_705, %c128_706], %527 {strides = array<i32>} : memref<184x640xbf16, #tpu.memory_space<vmem>>, vector<88x128xbf16>,
    %c16_707 = arith.constant 16 : index
    %c0_708 = arith.constant 0 : index
    %529 = vector.load %arg21[%c16_707, %c0_708] : memref<120x128xf32, #tpu.memory_space<vmem>>, vector<88x128xf32>
    %530 = arith.truncf %529 : vector<88x128xf32> to vector<88x128xbf16>
    %c0_709 = arith.constant 0 : index
    %c256_710 = arith.constant 256 : index
    %531 = vector.load %arg22[%c0_709, %c256_710] : memref<184x640xbf16, #tpu.memory_space<vmem>>, vector<88x128xbf16>
    tpu.vector_store %arg22[%c0_709, %c256_710], %530 {strides = array<i32>} : memref<184x640xbf16, #tpu.memory_space<vmem>>, vector<88x128xbf16>,
    %c24_711 = arith.constant 24 : index
    %c0_712 = arith.constant 0 : index
    %532 = vector.load %arg21[%c24_711, %c0_712] : memref<120x128xf32, #tpu.memory_space<vmem>>, vector<88x128xf32>
    %533 = arith.truncf %532 : vector<88x128xf32> to vector<88x128xbf16>
    %c0_713 = arith.constant 0 : index
    %c384_714 = arith.constant 384 : index
    %534 = vector.load %arg22[%c0_713, %c384_714] : memref<184x640xbf16, #tpu.memory_space<vmem>>, vector<88x128xbf16>
    tpu.vector_store %arg22[%c0_713, %c384_714], %533 {strides = array<i32>} : memref<184x640xbf16, #tpu.memory_space<vmem>>, vector<88x128xbf16>,
    %c32_715 = arith.constant 32 : index
    %c0_716 = arith.constant 0 : index
    %535 = vector.load %arg21[%c32_715, %c0_716] : memref<120x128xf32, #tpu.memory_space<vmem>>, vector<88x128xf32>
    %536 = arith.truncf %535 : vector<88x128xf32> to vector<88x128xbf16>
    %c0_717 = arith.constant 0 : index
    %c512_718 = arith.constant 512 : index
    %537 = vector.load %arg22[%c0_717, %c512_718] : memref<184x640xbf16, #tpu.memory_space<vmem>>, vector<88x128xbf16>
    tpu.vector_store %arg22[%c0_717, %c512_718], %536 {strides = array<i32>} : memref<184x640xbf16, #tpu.memory_space<vmem>>, vector<88x128xbf16>,
    %c0_719 = arith.constant 0 : index
    %c0_720 = arith.constant 0 : index
    %538 = vector.load %arg22[%c0_719, %c0_720] : memref<184x640xbf16, #tpu.memory_space<vmem>>, vector<88x640xbf16>
    %c0_721 = arith.constant 0 : index
    %c0_722 = arith.constant 0 : index
    %539 = vector.load %arg12[%c0_721, %c0_722] : memref<640x128xbf16, #tpu.memory_space<vmem>>, vector<640x128xbf16>
    %cst_723 = arith.constant dense<0.000000e+00> : vector<88x128xf32>
    %540 = tpu.matmul %538, %539, %cst_723 {dimension_numbers = #tpu.dot_dimension_numbers<[1], [0], [0], [1], [0, 0, 1, 1], [], []>} : vector<88x640xbf16>, vector<640x128xbf16>, vector<88x128xf32> -> vector<88x128xf32>
    %c0_724 = arith.constant 0 : index
    %c0_725 = arith.constant 0 : index
    %541 = vector.load %arg13[%c0_724, %c0_725] : memref<1x128xf32, #tpu.memory_space<vmem>>, vector<1x128xf32>
    %542 = vector.broadcast %541 : vector<1x128xf32> to vector<88x128xf32>
    %543 = arith.addf %540, %542 : vector<88x128xf32>
    %cst_726 = arith.constant 0.000000e+00 : f32
    %544 = vector.broadcast %cst_726 : f32 to vector<88x128xf32>
    %545 = arith.maximumf %543, %544 : vector<88x128xf32>
    %546 = vector.extract_strided_slice %545 {offsets = [0, 0], sizes = [8, 128], strides = [1, 1]} : vector<88x128xf32> to vector<8x128xf32>
    %547 = vector.extract_strided_slice %545 {offsets = [8, 0], sizes = [8, 128], strides = [1, 1]} : vector<88x128xf32> to vector<8x128xf32>
    %548 = arith.maximumf %546, %547 : vector<8x128xf32>
    %549 = arith.truncf %548 : vector<8x128xf32> to vector<8x128xbf16>
    %c0_727 = arith.constant 0 : index
    %c0_728 = arith.constant 0 : index
    %550 = vector.load %arg22[%c0_727, %c0_728] : memref<184x640xbf16, #tpu.memory_space<vmem>>, vector<8x128xbf16>
    tpu.vector_store %arg22[%c0_727, %c0_728], %549 {strides = array<i32>} : memref<184x640xbf16, #tpu.memory_space<vmem>>, vector<8x128xbf16>,
    %551 = vector.extract_strided_slice %545 {offsets = [16, 0], sizes = [8, 128], strides = [1, 1]} : vector<88x128xf32> to vector<8x128xf32>
    %552 = vector.extract_strided_slice %545 {offsets = [24, 0], sizes = [8, 128], strides = [1, 1]} : vector<88x128xf32> to vector<8x128xf32>
    %553 = arith.maximumf %551, %552 : vector<8x128xf32>
    %554 = arith.truncf %553 : vector<8x128xf32> to vector<8x128xbf16>
    %c0_729 = arith.constant 0 : index
    %c128_730 = arith.constant 128 : index
    %555 = vector.load %arg22[%c0_729, %c128_730] : memref<184x640xbf16, #tpu.memory_space<vmem>>, vector<8x128xbf16>
    tpu.vector_store %arg22[%c0_729, %c128_730], %554 {strides = array<i32>} : memref<184x640xbf16, #tpu.memory_space<vmem>>, vector<8x128xbf16>,
    %556 = vector.extract_strided_slice %545 {offsets = [32, 0], sizes = [8, 128], strides = [1, 1]} : vector<88x128xf32> to vector<8x128xf32>
    %557 = vector.extract_strided_slice %545 {offsets = [40, 0], sizes = [8, 128], strides = [1, 1]} : vector<88x128xf32> to vector<8x128xf32>
    %558 = arith.maximumf %556, %557 : vector<8x128xf32>
    %559 = arith.truncf %558 : vector<8x128xf32> to vector<8x128xbf16>
    %c0_731 = arith.constant 0 : index
    %c256_732 = arith.constant 256 : index
    %560 = vector.load %arg22[%c0_731, %c256_732] : memref<184x640xbf16, #tpu.memory_space<vmem>>, vector<8x128xbf16>
    tpu.vector_store %arg22[%c0_731, %c256_732], %559 {strides = array<i32>} : memref<184x640xbf16, #tpu.memory_space<vmem>>, vector<8x128xbf16>,
    %561 = vector.extract_strided_slice %545 {offsets = [48, 0], sizes = [8, 128], strides = [1, 1]} : vector<88x128xf32> to vector<8x128xf32>
    %562 = vector.extract_strided_slice %545 {offsets = [56, 0], sizes = [8, 128], strides = [1, 1]} : vector<88x128xf32> to vector<8x128xf32>
    %563 = arith.maximumf %561, %562 : vector<8x128xf32>
    %564 = arith.truncf %563 : vector<8x128xf32> to vector<8x128xbf16>
    %c0_733 = arith.constant 0 : index
    %c384_734 = arith.constant 384 : index
    %565 = vector.load %arg22[%c0_733, %c384_734] : memref<184x640xbf16, #tpu.memory_space<vmem>>, vector<8x128xbf16>
    tpu.vector_store %arg22[%c0_733, %c384_734], %564 {strides = array<i32>} : memref<184x640xbf16, #tpu.memory_space<vmem>>, vector<8x128xbf16>,
    %566 = vector.extract_strided_slice %545 {offsets = [64, 0], sizes = [8, 128], strides = [1, 1]} : vector<88x128xf32> to vector<8x128xf32>
    %567 = vector.extract_strided_slice %545 {offsets = [72, 0], sizes = [8, 128], strides = [1, 1]} : vector<88x128xf32> to vector<8x128xf32>
    %568 = arith.maximumf %566, %567 : vector<8x128xf32>
    %569 = arith.truncf %568 : vector<8x128xf32> to vector<8x128xbf16>
    %c0_735 = arith.constant 0 : index
    %c512_736 = arith.constant 512 : index
    %570 = vector.load %arg22[%c0_735, %c512_736] : memref<184x640xbf16, #tpu.memory_space<vmem>>, vector<8x128xbf16>
    tpu.vector_store %arg22[%c0_735, %c512_736], %569 {strides = array<i32>} : memref<184x640xbf16, #tpu.memory_space<vmem>>, vector<8x128xbf16>,
    %c0_737 = arith.constant 0 : index
    %c0_738 = arith.constant 0 : index
    %571 = vector.load %arg22[%c0_737, %c0_738] : memref<184x640xbf16, #tpu.memory_space<vmem>>, vector<8x640xbf16>
    %c0_739 = arith.constant 0 : index
    %c0_740 = arith.constant 0 : index
    %572 = vector.load %arg14[%c0_739, %c0_740] : memref<640x128xbf16, #tpu.memory_space<vmem>>, vector<640x128xbf16>
    %cst_741 = arith.constant dense<0.000000e+00> : vector<8x128xf32>
    %573 = tpu.matmul %571, %572, %cst_741 {dimension_numbers = #tpu.dot_dimension_numbers<[1], [0], [0], [1], [0, 0, 1, 1], [], []>} : vector<8x640xbf16>, vector<640x128xbf16>, vector<8x128xf32> -> vector<8x128xf32>
    %c0_742 = arith.constant 0 : index
    %c0_743 = arith.constant 0 : index
    %574 = vector.load %arg15[%c0_742, %c0_743] : memref<1x128xf32, #tpu.memory_space<vmem>>, vector<1x128xf32>
    %575 = vector.broadcast %574 : vector<1x128xf32> to vector<8x128xf32>
    %576 = arith.addf %573, %575 : vector<8x128xf32>
    %cst_744 = arith.constant 0.000000e+00 : f32
    %577 = vector.broadcast %cst_744 : f32 to vector<8x128xf32>
    %578 = arith.maximumf %576, %577 : vector<8x128xf32>
    %cst_745 = arith.constant 0.000000e+00 : f32
    %579 = vector.broadcast %cst_745 : f32 to vector<8x1024xf32>
    %c0_746 = arith.constant 0 : index
    %c0_747 = arith.constant 0 : index
    %580 = vector.load %arg23[%c0_746, %c0_747] : memref<8x1024xf32, #tpu.memory_space<vmem>>, vector<8x1024xf32>
    tpu.vector_store %arg23[%c0_746, %c0_747], %579 {strides = array<i32>} : memref<8x1024xf32, #tpu.memory_space<vmem>>, vector<8x1024xf32>,
    %581 = vector.extract_strided_slice %578 {offsets = [0, 0], sizes = [1, 128], strides = [1, 1]} : vector<8x128xf32> to vector<1x128xf32>
    %c0_748 = arith.constant 0 : index
    %c0_749 = arith.constant 0 : index
    %582 = vector.load %arg23[%c0_748, %c0_749] : memref<8x1024xf32, #tpu.memory_space<vmem>>, vector<1x128xf32>
    tpu.vector_store %arg23[%c0_748, %c0_749], %581 {strides = array<i32>} : memref<8x1024xf32, #tpu.memory_space<vmem>>, vector<1x128xf32>,
    %583 = vector.extract_strided_slice %578 {offsets = [1, 0], sizes = [1, 128], strides = [1, 1]} : vector<8x128xf32> to vector<1x128xf32>
    %c0_750 = arith.constant 0 : index
    %c128_751 = arith.constant 128 : index
    %584 = vector.load %arg23[%c0_750, %c128_751] : memref<8x1024xf32, #tpu.memory_space<vmem>>, vector<1x128xf32>
    tpu.vector_store %arg23[%c0_750, %c128_751], %583 {strides = array<i32>} : memref<8x1024xf32, #tpu.memory_space<vmem>>, vector<1x128xf32>,
    %585 = vector.extract_strided_slice %578 {offsets = [2, 0], sizes = [1, 128], strides = [1, 1]} : vector<8x128xf32> to vector<1x128xf32>
    %c0_752 = arith.constant 0 : index
    %c256_753 = arith.constant 256 : index
    %586 = vector.load %arg23[%c0_752, %c256_753] : memref<8x1024xf32, #tpu.memory_space<vmem>>, vector<1x128xf32>
    tpu.vector_store %arg23[%c0_752, %c256_753], %585 {strides = array<i32>} : memref<8x1024xf32, #tpu.memory_space<vmem>>, vector<1x128xf32>,
    %587 = vector.extract_strided_slice %578 {offsets = [3, 0], sizes = [1, 128], strides = [1, 1]} : vector<8x128xf32> to vector<1x128xf32>
    %c0_754 = arith.constant 0 : index
    %c384_755 = arith.constant 384 : index
    %588 = vector.load %arg23[%c0_754, %c384_755] : memref<8x1024xf32, #tpu.memory_space<vmem>>, vector<1x128xf32>
    tpu.vector_store %arg23[%c0_754, %c384_755], %587 {strides = array<i32>} : memref<8x1024xf32, #tpu.memory_space<vmem>>, vector<1x128xf32>,
    %589 = vector.extract_strided_slice %578 {offsets = [4, 0], sizes = [1, 128], strides = [1, 1]} : vector<8x128xf32> to vector<1x128xf32>
    %c0_756 = arith.constant 0 : index
    %c512_757 = arith.constant 512 : index
    %590 = vector.load %arg23[%c0_756, %c512_757] : memref<8x1024xf32, #tpu.memory_space<vmem>>, vector<1x128xf32>
    tpu.vector_store %arg23[%c0_756, %c512_757], %589 {strides = array<i32>} : memref<8x1024xf32, #tpu.memory_space<vmem>>, vector<1x128xf32>,
    %591 = vector.extract_strided_slice %578 {offsets = [5, 0], sizes = [1, 128], strides = [1, 1]} : vector<8x128xf32> to vector<1x128xf32>
    %c0_758 = arith.constant 0 : index
    %c640 = arith.constant 640 : index
    %592 = vector.load %arg23[%c0_758, %c640] : memref<8x1024xf32, #tpu.memory_space<vmem>>, vector<1x128xf32>
    tpu.vector_store %arg23[%c0_758, %c640], %591 {strides = array<i32>} : memref<8x1024xf32, #tpu.memory_space<vmem>>, vector<1x128xf32>,
    %593 = vector.extract_strided_slice %578 {offsets = [6, 0], sizes = [1, 128], strides = [1, 1]} : vector<8x128xf32> to vector<1x128xf32>
    %c0_759 = arith.constant 0 : index
    %c768 = arith.constant 768 : index
    %594 = vector.load %arg23[%c0_759, %c768] : memref<8x1024xf32, #tpu.memory_space<vmem>>, vector<1x128xf32>
    tpu.vector_store %arg23[%c0_759, %c768], %593 {strides = array<i32>} : memref<8x1024xf32, #tpu.memory_space<vmem>>, vector<1x128xf32>,
    %595 = vector.extract_strided_slice %578 {offsets = [7, 0], sizes = [1, 128], strides = [1, 1]} : vector<8x128xf32> to vector<1x128xf32>
    %c0_760 = arith.constant 0 : index
    %c896 = arith.constant 896 : index
    %596 = vector.load %arg23[%c0_760, %c896] : memref<8x1024xf32, #tpu.memory_space<vmem>>, vector<1x128xf32>
    tpu.vector_store %arg23[%c0_760, %c896], %595 {strides = array<i32>} : memref<8x1024xf32, #tpu.memory_space<vmem>>, vector<1x128xf32>,
    %c0_761 = arith.constant 0 : index
    %c0_762 = arith.constant 0 : index
    %597 = vector.load %arg23[%c0_761, %c0_762] : memref<8x1024xf32, #tpu.memory_space<vmem>>, vector<8x1024xf32>
    %598 = arith.truncf %597 : vector<8x1024xf32> to vector<8x1024xbf16>
    %c0_763 = arith.constant 0 : index
    %c0_764 = arith.constant 0 : index
    %599 = vector.load %arg16[%c0_763, %c0_764] : memref<1024x32xbf16, #tpu.memory_space<vmem>>, vector<1024x32xbf16>
    %cst_765 = arith.constant dense<0.000000e+00> : vector<8x32xf32>
    %600 = tpu.matmul %598, %599, %cst_765 {dimension_numbers = #tpu.dot_dimension_numbers<[1], [0], [0], [1], [0, 0, 1, 1], [], []>} : vector<8x1024xbf16>, vector<1024x32xbf16>, vector<8x32xf32> -> vector<8x32xf32>
    %601 = vector.extract_strided_slice %600 {offsets = [0, 0], sizes = [1, 32], strides = [1, 1]} : vector<8x32xf32> to vector<1x32xf32>
    %c0_766 = arith.constant 0 : index
    %c0_767 = arith.constant 0 : index
    %602 = vector.load %arg17[%c0_766, %c0_767] : memref<1x32xf32, #tpu.memory_space<vmem>>, vector<1x32xf32>
    %603 = arith.addf %601, %602 : vector<1x32xf32>
    %c0_768 = arith.constant 0 : index
    %c0_769 = arith.constant 0 : index
    %604 = vector.load %arg18[%c0_768, %c0_769] : memref<1x32xf32, #tpu.memory_space<vmem>>, vector<1x32xf32>
    tpu.vector_store %arg18[%c0_768, %c0_769], %603 {strides = array<i32>} : memref<1x32xf32, #tpu.memory_space<vmem>>, vector<1x32xf32>,
    return
  }
  func.func @transform_0(%arg0: i32) -> (i32, i32) {
    %c0_i32 = arith.constant 0 : i32
    %c0_i32_0 = arith.constant 0 : i32
    return %arg0, %c0_i32 : i32, i32
  }
  func.func @transform_1(%arg0: i32) -> (i32, i32) {
    %c0_i32 = arith.constant 0 : i32
    %c0_i32_0 = arith.constant 0 : i32
    %c0_i32_1 = arith.constant 0 : i32
    return %c0_i32, %c0_i32_0 : i32, i32
  }
  func.func @transform_2(%arg0: i32) -> (i32, i32) {
    %c0_i32 = arith.constant 0 : i32
    %c0_i32_0 = arith.constant 0 : i32
    %c0_i32_1 = arith.constant 0 : i32
    return %c0_i32, %c0_i32_0 : i32, i32
  }
  func.func @transform_3(%arg0: i32) -> (i32, i32) {
    %c0_i32 = arith.constant 0 : i32
    %c0_i32_0 = arith.constant 0 : i32
    %c0_i32_1 = arith.constant 0 : i32
    return %c0_i32, %c0_i32_0 : i32, i32
  }
  func.func @transform_4(%arg0: i32) -> (i32, i32) {
    %c0_i32 = arith.constant 0 : i32
    %c0_i32_0 = arith.constant 0 : i32
    %c0_i32_1 = arith.constant 0 : i32
    return %c0_i32, %c0_i32_0 : i32, i32
  }
  func.func @transform_5(%arg0: i32) -> (i32, i32) {
    %c0_i32 = arith.constant 0 : i32
    %c0_i32_0 = arith.constant 0 : i32
    %c0_i32_1 = arith.constant 0 : i32
    return %c0_i32, %c0_i32_0 : i32, i32
  }
  func.func @transform_6(%arg0: i32) -> (i32, i32) {
    %c0_i32 = arith.constant 0 : i32
    %c0_i32_0 = arith.constant 0 : i32
    %c0_i32_1 = arith.constant 0 : i32
    return %c0_i32, %c0_i32_0 : i32, i32
  }
  func.func @transform_7(%arg0: i32) -> (i32, i32) {
    %c0_i32 = arith.constant 0 : i32
    %c0_i32_0 = arith.constant 0 : i32
    %c0_i32_1 = arith.constant 0 : i32
    return %c0_i32, %c0_i32_0 : i32, i32
  }
  func.func @transform_8(%arg0: i32) -> (i32, i32) {
    %c0_i32 = arith.constant 0 : i32
    %c0_i32_0 = arith.constant 0 : i32
    %c0_i32_1 = arith.constant 0 : i32
    return %c0_i32, %c0_i32_0 : i32, i32
  }
  func.func @transform_9(%arg0: i32) -> (i32, i32) {
    %c0_i32 = arith.constant 0 : i32
    %c0_i32_0 = arith.constant 0 : i32
    %c0_i32_1 = arith.constant 0 : i32
    return %c0_i32, %c0_i32_0 : i32, i32
  }
  func.func @transform_10(%arg0: i32) -> (i32, i32) {
    %c0_i32 = arith.constant 0 : i32
    %c0_i32_0 = arith.constant 0 : i32
    %c0_i32_1 = arith.constant 0 : i32
    return %c0_i32, %c0_i32_0 : i32, i32
  }
  func.func @transform_11(%arg0: i32) -> (i32, i32) {
    %c0_i32 = arith.constant 0 : i32
    %c0_i32_0 = arith.constant 0 : i32
    %c0_i32_1 = arith.constant 0 : i32
    return %c0_i32, %c0_i32_0 : i32, i32
  }
  func.func @transform_12(%arg0: i32) -> (i32, i32) {
    %c0_i32 = arith.constant 0 : i32
    %c0_i32_0 = arith.constant 0 : i32
    %c0_i32_1 = arith.constant 0 : i32
    return %c0_i32, %c0_i32_0 : i32, i32
  }
  func.func @transform_13(%arg0: i32) -> (i32, i32) {
    %c0_i32 = arith.constant 0 : i32
    %c0_i32_0 = arith.constant 0 : i32
    %c0_i32_1 = arith.constant 0 : i32
    return %c0_i32, %c0_i32_0 : i32, i32
  }
  func.func @transform_14(%arg0: i32) -> (i32, i32) {
    %c0_i32 = arith.constant 0 : i32
    %c0_i32_0 = arith.constant 0 : i32
    %c0_i32_1 = arith.constant 0 : i32
    return %c0_i32, %c0_i32_0 : i32, i32
  }
  func.func @transform_15(%arg0: i32) -> (i32, i32) {
    %c0_i32 = arith.constant 0 : i32
    %c0_i32_0 = arith.constant 0 : i32
    %c0_i32_1 = arith.constant 0 : i32
    return %c0_i32, %c0_i32_0 : i32, i32
  }
  func.func @transform_16(%arg0: i32) -> (i32, i32) {
    %c0_i32 = arith.constant 0 : i32
    %c0_i32_0 = arith.constant 0 : i32
    %c0_i32_1 = arith.constant 0 : i32
    return %c0_i32, %c0_i32_0 : i32, i32
  }
  func.func @transform_17(%arg0: i32) -> (i32, i32) {
    %c0_i32 = arith.constant 0 : i32
    %c0_i32_0 = arith.constant 0 : i32
    return %arg0, %c0_i32 : i32, i32
  }
}

</mosaic_0001>

<llo_original>
// kernel: latent_mlp_conv_forward.1
$region0: #{latent_mlp_conv_forward.1}
  #allocation0 [shape = 'u32[]', space=smem, size = 0x4, offset = 0x4, fixed_abs, tag = 'smem constant byte address 0x4 - core index']
  #allocation1 [shape = 'u32[144,128]{1,0:T(1,128)}', space=vmem, size = 0x12000, scoped, tag = 'internal scratch']
  #allocation2 [shape = 'f32[200,128]{1,0:T(8,128)}', space=vmem, size = 0x19000, scoped, tag = 'scratch operand']
  #allocation3 [shape = 'f32[216,128]{1,0:T(8,128)}', space=vmem, size = 0x1b000, scoped, tag = 'scratch operand']
  #allocation4 [shape = 'f32[120,128]{1,0:T(8,128)}', space=vmem, size = 0xf000, scoped, tag = 'scratch operand']
  #allocation5 [shape = 'bf16[184,640]{1,0:T(8,128)(2,1)}', space=vmem, size = 0x39800, scoped, tag = 'scratch operand']
  #allocation6 [shape = 'f32[8,1024]{1,0:T(8,128)}', space=vmem, size = 0x8000, scoped, tag = 'scratch operand']
  %s0 = inlined_call_operand.hbm [shape: f32[200,128], index: 0, kind: input, shape index: {}]
  %s1 = inlined_call_operand.hbm [shape: bf16[128,128], index: 1, kind: input, shape index: {}]
  %s2 = inlined_call_operand.vmem [shape: f32[1,128], index: 2, kind: input, shape index: {}]
  %s3 = inlined_call_operand.hbm [shape: bf16[128,128], index: 3, kind: input, shape index: {}]
  %s4 = inlined_call_operand.vmem [shape: f32[1,128], index: 4, kind: input, shape index: {}]
  %s5 = inlined_call_operand.hbm [shape: bf16[128,128], index: 5, kind: input, shape index: {}]
  %s6 = inlined_call_operand.vmem [shape: f32[1,128], index: 6, kind: input, shape index: {}]
  %s7 = inlined_call_operand.vmem [shape: bf16[640,128], index: 7, kind: input, shape index: {}]
  %s8 = inlined_call_operand.vmem [shape: f32[1,128], index: 8, kind: input, shape index: {}]
  %s9 = inlined_call_operand.vmem [shape: bf16[640,128], index: 9, kind: input, shape index: {}]
  %s10 = inlined_call_operand.vmem [shape: f32[1,128], index: 10, kind: input, shape index: {}]
  %s11 = inlined_call_operand.hbm [shape: bf16[640,128], index: 11, kind: input, shape index: {}]
  %s12 = inlined_call_operand.vmem [shape: f32[1,128], index: 12, kind: input, shape index: {}]
  %s13 = inlined_call_operand.hbm [shape: bf16[640,128], index: 13, kind: input, shape index: {}]
  %s14 = inlined_call_operand.vmem [shape: f32[1,128], index: 14, kind: input, shape index: {}]
  %s15 = inlined_call_operand.vmem [shape: bf16[1024,32], index: 15, kind: input, shape index: {}]
  %s16 = inlined_call_operand.vmem [shape: f32[1,32], index: 16, kind: input, shape index: {}]
  %s17 = inlined_call_operand.hbm [shape: f32[1,32], index: 17, kind: output, shape index: {}]
  %s18 = sld [smem:[#allocation0]]
  $region102: #{latent_mlp_conv_forward.1} parent=0
    _
  %s20 = ssub.s32 1, %s18
  %s21 = scalar_select 0, %s20, %s18
  $region1: #{latent_mlp_conv_forward.1} parent=0
    #allocation7 [shape = 'u8[102400]{0}', space=vmem, size = 0x19000, scoped, tag = 'input window, operand 0, single buffered']
    #allocation8 [shape = 's32[1]{0}', space=sflag, size = 0x4, scoped, tag = 'scoped memory for latent_mlp_conv_forward.1']
    #allocation9 [shape = 's32[1]{0}', space=sflag, size = 0x4, scoped, tag = 'scoped memory for latent_mlp_conv_forward.1']
    #allocation10 [shape = 'u8[32768]{0}', space=vmem, size = 0x8000, scoped, tag = 'input window, operand 1, single buffered']
    #allocation11 [shape = 's32[1]{0}', space=sflag, size = 0x4, scoped, tag = 'scoped memory for latent_mlp_conv_forward.1']
    #allocation12 [shape = 'u8[32768]{0}', space=vmem, size = 0x8000, scoped, tag = 'input window, operand 3, single buffered']
    #allocation13 [shape = 'u8[32768]{0}', space=vmem, size = 0x8000, scoped, tag = 'input window, operand 5, single buffered']
    #allocation14 [shape = 's32[1]{0}', space=sflag, size = 0x4, scoped, tag = 'scoped memory for latent_mlp_conv_forward.1']
    #allocation15 [shape = 'u8[163840]{0}', space=vmem, size = 0x28000, scoped, tag = 'input window, operand 11, single buffered']
    #allocation16 [shape = 'u8[163840]{0}', space=vmem, size = 0x28000, scoped, tag = 'input window, operand 13, single buffered']
    #allocation17 [shape = 's32[1]{0}', space=sflag, size = 0x4, scoped, tag = 'scoped memory for latent_mlp_conv_forward.1']
    #allocation18 [shape = 'u8[512]{0}', space=vmem, size = 0x400, scoped, tag = 'output window, operand 0, single buffered']
    %22 = vsyncpa [#allocation8], 0
    %23 = vsyncpa [#allocation11], 0
    %24 = vsyncpa [#allocation14], 0
    %25 = vsyncpa [#allocation17], 0
    %26 = vsyncpa [#allocation9], 0
    // Predicated region
    $region2: #{latent_mlp_conv_forward.1} parent=1 // pred_check
      _
    $region3: #{latent_mlp_conv_forward.1} parent=1 // pred_check_branch
      %28 = sbr.rel (0) target = $region5
    $region4: #{latent_mlp_conv_forward.1} parent=1 // pred_region
      %s30 = ssub.s32 3200, 3200
      %31 = vsyncadd [#allocation8], %s30
      %s32 = sshll.u32 [#allocation7], 4
      %s33 = int_to_ptr.vmem [resolvable:$true] %s32
      %38 = dma.hbm_to_vmem [thread:$0]  %s0, 3200, %s33, [#allocation8], 128, 128, 8
    $region5: #{latent_mlp_conv_forward.1} parent=1 // pred_fallthru
      _
    // Predicated region
    $region6: #{latent_mlp_conv_forward.1} parent=1 // pred_check
      _
    $region7: #{latent_mlp_conv_forward.1} parent=1 // pred_check_branch
      %40 = sbr.rel (0) target = $region9
    $region8: #{latent_mlp_conv_forward.1} parent=1 // pred_region
      %s42 = ssub.s32 1024, 1024
      %43 = vsyncadd [#allocation11], %s42
      %s44 = sshll.u32 [#allocation10], 4
      %s45 = int_to_ptr.vmem [resolvable:$true] %s44
      %50 = dma.hbm_to_vmem [thread:$0]  %s1, 1024, %s45, [#allocation11], 64, 64, 4
    $region9: #{latent_mlp_conv_forward.1} parent=1 // pred_fallthru
      _
    // Predicated region
    $region10: #{latent_mlp_conv_forward.1} parent=1 // pred_check
      _
    $region11: #{latent_mlp_conv_forward.1} parent=1 // pred_check_branch
      %52 = sbr.rel (0) target = $region13
    $region12: #{latent_mlp_conv_forward.1} parent=1 // pred_region
      _
    $region13: #{latent_mlp_conv_forward.1} parent=1 // pred_fallthru
      _
    // Predicated region
    $region14: #{latent_mlp_conv_forward.1} parent=1 // pred_check
      _
    $region15: #{latent_mlp_conv_forward.1} parent=1 // pred_check_branch
      %54 = sbr.rel (0) target = $region17
    $region16: #{latent_mlp_conv_forward.1} parent=1 // pred_region
      %s56 = ssub.s32 1024, 1024
      %57 = vsyncadd [#allocation11], %s56
      %s58 = sshll.u32 [#allocation12], 4
      %s59 = int_to_ptr.vmem [resolvable:$true] %s58
      %64 = dma.hbm_to_vmem [thread:$0]  %s3, 1024, %s59, [#allocation11], 64, 64, 4
    $region17: #{latent_mlp_conv_forward.1} parent=1 // pred_fallthru
      _
    // Predicated region
    $region18: #{latent_mlp_conv_forward.1} parent=1 // pred_check
      _
    $region19: #{latent_mlp_conv_forward.1} parent=1 // pred_check_branch
      %66 = sbr.rel (0) target = $region21
    $region20: #{latent_mlp_conv_forward.1} parent=1 // pred_region
      _
    $region21: #{latent_mlp_conv_forward.1} parent=1 // pred_fallthru
      _
    // Predicated region
    $region22: #{latent_mlp_conv_forward.1} parent=1 // pred_check
      _
    $region23: #{latent_mlp_conv_forward.1} parent=1 // pred_check_branch
      %68 = sbr.rel (0) target = $region25
    $region24: #{latent_mlp_conv_forward.1} parent=1 // pred_region
      %s70 = ssub.s32 1024, 1024
      %71 = vsyncadd [#allocation14], %s70
      %s72 = sshll.u32 [#allocation13], 4
      %s73 = int_to_ptr.vmem [resolvable:$true] %s72
      %78 = dma.hbm_to_vmem [thread:$0]  %s5, 1024, %s73, [#allocation14], 64, 64, 4
    $region25: #{latent_mlp_conv_forward.1} parent=1 // pred_fallthru
      _
    // Predicated region
    $region26: #{latent_mlp_conv_forward.1} parent=1 // pred_check
      _
    $region27: #{latent_mlp_conv_forward.1} parent=1 // pred_check_branch
      %80 = sbr.rel (0) target = $region29
    $region28: #{latent_mlp_conv_forward.1} parent=1 // pred_region
      _
    $region29: #{latent_mlp_conv_forward.1} parent=1 // pred_fallthru
      _
    // Predicated region
    $region30: #{latent_mlp_conv_forward.1} parent=1 // pred_check
      _
    $region31: #{latent_mlp_conv_forward.1} parent=1 // pred_check_branch
      %82 = sbr.rel (0) target = $region33
    $region32: #{latent_mlp_conv_forward.1} parent=1 // pred_region
      _
    $region33: #{latent_mlp_conv_forward.1} parent=1 // pred_fallthru
      _
    // Predicated region
    $region34: #{latent_mlp_conv_forward.1} parent=1 // pred_check
      _
    $region35: #{latent_mlp_conv_forward.1} parent=1 // pred_check_branch
      %84 = sbr.rel (0) target = $region37
    $region36: #{latent_mlp_conv_forward.1} parent=1 // pred_region
      _
    $region37: #{latent_mlp_conv_forward.1} parent=1 // pred_fallthru
      _
    // Predicated region
    $region38: #{latent_mlp_conv_forward.1} parent=1 // pred_check
      _
    $region39: #{latent_mlp_conv_forward.1} parent=1 // pred_check_branch
      %86 = sbr.rel (0) target = $region41
    $region40: #{latent_mlp_conv_forward.1} parent=1 // pred_region
      _
    $region41: #{latent_mlp_conv_forward.1} parent=1 // pred_fallthru
      _
    // Predicated region
    $region42: #{latent_mlp_conv_forward.1} parent=1 // pred_check
      _
    $region43: #{latent_mlp_conv_forward.1} parent=1 // pred_check_branch
      %88 = sbr.rel (0) target = $region45
    $region44: #{latent_mlp_conv_forward.1} parent=1 // pred_region
      _
    $region45: #{latent_mlp_conv_forward.1} parent=1 // pred_fallthru
      _
    // Predicated region
    $region46: #{latent_mlp_conv_forward.1} parent=1 // pred_check
      _
    $region47: #{latent_mlp_conv_forward.1} parent=1 // pred_check_branch
      %90 = sbr.rel (0) target = $region49
    $region48: #{latent_mlp_conv_forward.1} parent=1 // pred_region
      %s92 = ssub.s32 5120, 5120
      %93 = vsyncadd [#allocation14], %s92
      %s94 = sshll.u32 [#allocation15], 4
      %s95 = int_to_ptr.vmem [resolvable:$true] %s94
      %100 = dma.hbm_to_vmem [thread:$0]  %s11, 5120, %s95, [#allocation14], 64, 64, 4
    $region49: #{latent_mlp_conv_forward.1} parent=1 // pred_fallthru
      _
    // Predicated region
    $region50: #{latent_mlp_conv_forward.1} parent=1 // pred_check
      _
    $region51: #{latent_mlp_conv_forward.1} parent=1 // pred_check_branch
      %102 = sbr.rel (0) target = $region53
    $region52: #{latent_mlp_conv_forward.1} parent=1 // pred_region
      _
    $region53: #{latent_mlp_conv_forward.1} parent=1 // pred_fallthru
      _
    // Predicated region
    $region54: #{latent_mlp_conv_forward.1} parent=1 // pred_check
      _
    $region55: #{latent_mlp_conv_forward.1} parent=1 // pred_check_branch
      %104 = sbr.rel (0) target = $region57
    $region56: #{latent_mlp_conv_forward.1} parent=1 // pred_region
      %s106 = ssub.s32 5120, 5120
      %107 = vsyncadd [#allocation17], %s106
      %s108 = sshll.u32 [#allocation16], 4
      %s109 = int_to_ptr.vmem [resolvable:$true] %s108
      %114 = dma.hbm_to_vmem [thread:$0]  %s13, 5120, %s109, [#allocation17], 64, 64, 4
    $region57: #{latent_mlp_conv_forward.1} parent=1 // pred_fallthru
      _
    // Predicated region
    $region58: #{latent_mlp_conv_forward.1} parent=1 // pred_check
      _
    $region59: #{latent_mlp_conv_forward.1} parent=1 // pred_check_branch
      %116 = sbr.rel (0) target = $region61
    $region60: #{latent_mlp_conv_forward.1} parent=1 // pred_region
      _
    $region61: #{latent_mlp_conv_forward.1} parent=1 // pred_fallthru
      _
    // Predicated region
    $region62: #{latent_mlp_conv_forward.1} parent=1 // pred_check
      _
    $region63: #{latent_mlp_conv_forward.1} parent=1 // pred_check_branch
      %118 = sbr.rel (0) target = $region65
    $region64: #{latent_mlp_conv_forward.1} parent=1 // pred_region
      _
    $region65: #{latent_mlp_conv_forward.1} parent=1 // pred_fallthru
      _
    // Predicated region
    $region66: #{latent_mlp_conv_forward.1} parent=1 // pred_check
      _
    $region67: #{latent_mlp_conv_forward.1} parent=1 // pred_check_branch
      %120 = sbr.rel (0) target = $region69
    $region68: #{latent_mlp_conv_forward.1} parent=1 // pred_region
      _
    $region69: #{latent_mlp_conv_forward.1} parent=1 // pred_fallthru
      _
    // Predicated region
    $region70: #{latent_mlp_conv_forward.1} parent=1 // pred_check
      _
    $region71: #{latent_mlp_conv_forward.1} parent=1 // pred_check_branch
      %122 = sbr.rel (0) target = $region73
    $region72: #{latent_mlp_conv_forward.1} parent=1 // pred_region
      %123 = dma.done [#allocation8], 3200
    $region73: #{latent_mlp_conv_forward.1} parent=1 // pred_fallthru
      _
    // Predicated region
    $region74: #{latent_mlp_conv_forward.1} parent=1 // pred_check
      _
    $region75: #{latent_mlp_conv_forward.1} parent=1 // pred_check_branch
      %125 = sbr.rel (0) target = $region77
    $region76: #{latent_mlp_conv_forward.1} parent=1 // pred_region
      %126 = dma.done [#allocation11], 1024
    $region77: #{latent_mlp_conv_forward.1} parent=1 // pred_fallthru
      _
    // Predicated region
    $region78: #{latent_mlp_conv_forward.1} parent=1 // pred_check
      _
    $region79: #{latent_mlp_conv_forward.1} parent=1 // pred_check_branch
      %128 = sbr.rel (0) target = $region81
    $region80: #{latent_mlp_conv_forward.1} parent=1 // pred_region
      %129 = dma.done [#allocation11], 1024
    $region81: #{latent_mlp_conv_forward.1} parent=1 // pred_fallthru
      _
    // Predicated region
    $region82: #{latent_mlp_conv_forward.1} parent=1 // pred_check
      _
    $region83: #{latent_mlp_conv_forward.1} parent=1 // pred_check_branch
      %131 = sbr.rel (0) target = $region85
    $region84: #{latent_mlp_conv_forward.1} parent=1 // pred_region
      %132 = dma.done [#allocation14], 1024
    $region85: #{latent_mlp_conv_forward.1} parent=1 // pred_fallthru
      _
    // Predicated region
    $region86: #{latent_mlp_conv_forward.1} parent=1 // pred_check
      _
    $region87: #{latent_mlp_conv_forward.1} parent=1 // pred_check_branch
      %134 = sbr.rel (0) target = $region89
    $region88: #{latent_mlp_conv_forward.1} parent=1 // pred_region
      %135 = dma.done [#allocation14], 5120
    $region89: #{latent_mlp_conv_forward.1} parent=1 // pred_fallthru
      _
    // Predicated region
    $region90: #{latent_mlp_conv_forward.1} parent=1 // pred_check
      _
    $region91: #{latent_mlp_conv_forward.1} parent=1 // pred_check_branch
      %137 = sbr.rel (0) target = $region93
    $region92: #{latent_mlp_conv_forward.1} parent=1 // pred_region
      %138 = dma.done [#allocation17], 5120
    $region93: #{latent_mlp_conv_forward.1} parent=1 // pred_fallthru
      _
    %v140 = vld [vmem:[#allocation7] sm:$0xff]
    %v141 = vld [vmem:[#allocation7 + $0x8] sm:$0xff]
    %v142 = vld [vmem:[#allocation7 + $0x10] sm:$0xff]
    %v143 = vld [vmem:[#allocation7 + $0x18] sm:$0xff]
    %v144 = vld [vmem:[#allocation7 + $0x20] sm:$0xff]
    %v145 = vld [vmem:[#allocation7 + $0x28] sm:$0xff]
    %v146 = vld [vmem:[#allocation7 + $0x30] sm:$0xff]
    %v147 = vld [vmem:[#allocation7 + $0x38] sm:$0xff]
    %v148 = vld [vmem:[#allocation7 + $0x40] sm:$0xff]
    %v149 = vld [vmem:[#allocation7 + $0x48] sm:$0xff]
    %v150 = vld [vmem:[#allocation7 + $0x50] sm:$0xff]
    %v151 = vld [vmem:[#allocation7 + $0x58] sm:$0xff]
    %v152 = vld [vmem:[#allocation7 + $0x60] sm:$0xff]
    %v153 = vld [vmem:[#allocation7 + $0x68] sm:$0xff]
    %v154 = vld [vmem:[#allocation7 + $0x70] sm:$0xff]
    %v155 = vld [vmem:[#allocation7 + $0x78] sm:$0xff]
    %v156 = vld [vmem:[#allocation7 + $0x80] sm:$0xff]
    %v157 = vld [vmem:[#allocation7 + $0x88] sm:$0xff]
    %v158 = vld [vmem:[#allocation7 + $0x90] sm:$0xff]
    %v159 = vld [vmem:[#allocation7 + $0x98] sm:$0xff]
    %v160 = vld [vmem:[#allocation7 + $0xa0] sm:$0xff]
    %v161 = vld [vmem:[#allocation7 + $0xa8] sm:$0xff]
    %v162 = vld [vmem:[#allocation7 + $0xb0] sm:$0xff]
    %v163 = vld [vmem:[#allocation7 + $0xb8] sm:$0xff]
    %v164 = vld [vmem:[#allocation7 + $0xc0] sm:$0xff]
    %v165 = vpack.c.bf16 %v141, %v140
    %v166 = vpack.c.bf16 %v143, %v142
    %v167 = vpack.c.bf16 %v145, %v144
    %v168 = vpack.c.bf16 %v147, %v146
    %v169 = vpack.c.bf16 %v149, %v148
    %v170 = vpack.c.bf16 %v151, %v150
    %v171 = vpack.c.bf16 %v153, %v152
    %v172 = vpack.c.bf16 %v155, %v154
    %v173 = vpack.c.bf16 %v157, %v156
    %v174 = vpack.c.bf16 %v159, %v158
    %v175 = vpack.c.bf16 %v161, %v160
    %v176 = vpack.c.bf16 %v163, %v162
    %v177 = vpack.c.bf16 %v164, %v164
    %v178 = vld [vmem:[#allocation10] sm:$0xf]
    %v179 = vld [vmem:[#allocation10 + $0x4] sm:$0xf]
    %v180 = vld [vmem:[#allocation10 + $0x8] sm:$0xf]
    %v181 = vld [vmem:[#allocation10 + $0xc] sm:$0xf]
    %v182 = vld [vmem:[#allocation10 + $0x10] sm:$0xf]
    %v183 = vld [vmem:[#allocation10 + $0x14] sm:$0xf]
    %v184 = vld [vmem:[#allocation10 + $0x18] sm:$0xf]
    %v185 = vld [vmem:[#allocation10 + $0x1c] sm:$0xf]
    %v186 = vld [vmem:[#allocation10 + $0x20] sm:$0xf]
    %v187 = vld [vmem:[#allocation10 + $0x24] sm:$0xf]
    %v188 = vld [vmem:[#allocation10 + $0x28] sm:$0xf]
    %v189 = vld [vmem:[#allocation10 + $0x2c] sm:$0xf]
    %v190 = vld [vmem:[#allocation10 + $0x30] sm:$0xf]
    %v191 = vld [vmem:[#allocation10 + $0x34] sm:$0xf]
    %v192 = vld [vmem:[#allocation10 + $0x38] sm:$0xf]
    %v193 = vld [vmem:[#allocation10 + $0x3c] sm:$0xf]
    %v194 = vld [vmem:[%s2] sm:$0x1]
    %v196 = vlaneseq
    %v197 = vshrl.u32 %v196, 7
    %v198 = vsub.s32 0, %v197
    %v199 = vrot.slane %v194, %v198
    %v217 = vunpack.c.l.b16 %v178
    %v218 = vunpack.c.l.b16 %v179
    %v219 = vunpack.c.l.b16 %v180
    %v220 = vunpack.c.l.b16 %v181
    %v221 = vunpack.c.l.b16 %v182
    %v222 = vunpack.c.l.b16 %v183
    %v223 = vunpack.c.l.b16 %v184
    %v224 = vunpack.c.l.b16 %v185
    %v225 = vunpack.c.l.b16 %v186
    %v226 = vunpack.c.l.b16 %v187
    %v227 = vunpack.c.l.b16 %v188
    %v228 = vunpack.c.l.b16 %v189
    %v229 = vunpack.c.l.b16 %v190
    %v230 = vunpack.c.l.b16 %v191
    %v231 = vunpack.c.l.b16 %v192
    %v232 = vunpack.c.l.b16 %v193
    %v233 = vpack.c.b16 %v218, %v217
    %v234 = vpack.c.b16 %v220, %v219
    %v235 = vpack.c.b16 %v222, %v221
    %v236 = vpack.c.b16 %v224, %v223
    %v237 = vpack.c.b16 %v226, %v225
    %v238 = vpack.c.b16 %v228, %v227
    %v239 = vpack.c.b16 %v230, %v229
    %v240 = vpack.c.b16 %v232, %v231
    %249 = vmatprep.subr.bf16.mxu0 0
    %250 = vmatpush1.bf16.msra.mxu0 %v233
    %251 = vmatprep.subr.bf16.mxu0 0
    %252 = vmatpush1.bf16.msra.mxu0 %v234
    %253 = vmatprep.subr.bf16.mxu0 0
    %254 = vmatpush1.bf16.msra.mxu0 %v235
    %255 = vmatprep.subr.bf16.mxu0 0
    %256 = vmatpush1.bf16.msra.mxu0 %v236
    %257 = vmatprep.subr.bf16.mxu0 0
    %258 = vmatpush1.bf16.msra.mxu0 %v237
    %259 = vmatprep.subr.bf16.mxu0 0
    %260 = vmatpush1.bf16.msra.mxu0 %v238
    %261 = vmatprep.subr.bf16.mxu0 0
    %262 = vmatpush1.bf16.msra.mxu0 %v239
    %263 = vmatprep.subr.bf16.mxu0 0
    %264 = vmatpush1.bf16.msra.mxu0 %v240
    %265 = vmatprep.subr.bf16.mxu0 0
    %266 = vmatpush1.bf16.msra.mxu0 0
    %267 = vmatprep.subr.bf16.mxu0 0
    %268 = vmatpush1.bf16.msra.mxu0 0
    %269 = vmatprep.subr.bf16.mxu0 0
    %270 = vmatpush1.bf16.msra.mxu0 0
    %271 = vmatprep.subr.bf16.mxu0 0
    %272 = vmatpush1.bf16.msra.mxu0 0
    %273 = vmatprep.subr.bf16.mxu0 0
    %274 = vmatpush1.bf16.msra.mxu0 0
    %275 = vmatprep.subr.bf16.mxu0 0
    %276 = vmatpush1.bf16.msra.mxu0 0
    %277 = vmatprep.subr.bf16.mxu0 0
    %278 = vmatpush1.bf16.msra.mxu0 0
    %279 = vmatprep.subr.bf16.mxu0 0
    %280 = vmatpush1.bf16.msra.mxu0 0
    %281 = vmatprep.mubr.bf16.mxu0 0
    %282 = vmatmul.mubr.bf16.gmra.mrb[0].mxu0 %v165
    %v283 = vpop.f32.mrb[0].mxu0
    %v284 = vadd.f32 %v199, %v283
    %v285 = vpop.f32.mrb[0].mxu0
    %v286 = vpop.f32.mrb[0].mxu0
    %v287 = vadd.f32 %v199, %v286
    %v288 = vpop.f32.mrb[0].mxu0
    %289 = vmatprep.mubr.bf16.mxu0 0
    %290 = vmatmul.mubr.bf16.gmra.mrb[0].mxu0 %v166
    %v291 = vpop.f32.mrb[0].mxu0
    %v292 = vadd.f32 %v199, %v291
    %v293 = vpop.f32.mrb[0].mxu0
    %v294 = vpop.f32.mrb[0].mxu0
    %v295 = vadd.f32 %v199, %v294
    %v296 = vpop.f32.mrb[0].mxu0
    %297 = vmatprep.mubr.bf16.mxu0 0
    %298 = vmatmul.mubr.bf16.gmra.mrb[0].mxu0 %v167
    %v299 = vpop.f32.mrb[0].mxu0
    %v300 = vadd.f32 %v199, %v299
    %v301 = vpop.f32.mrb[0].mxu0
    %v302 = vpop.f32.mrb[0].mxu0
    %v303 = vadd.f32 %v199, %v302
    %v304 = vpop.f32.mrb[0].mxu0
    %305 = vmatprep.mubr.bf16.mxu0 0
    %306 = vmatmul.mubr.bf16.gmra.mrb[0].mxu0 %v168
    %v307 = vpop.f32.mrb[0].mxu0
    %v308 = vadd.f32 %v199, %v307
    %v309 = vpop.f32.mrb[0].mxu0
    %v310 = vpop.f32.mrb[0].mxu0
    %v311 = vadd.f32 %v199, %v310
    %v312 = vpop.f32.mrb[0].mxu0
    %313 = vmatprep.mubr.bf16.mxu0 0
    %314 = vmatmul.mubr.bf16.gmra.mrb[0].mxu0 %v169
    %v315 = vpop.f32.mrb[0].mxu0
    %v316 = vadd.f32 %v199, %v315
    %v317 = vpop.f32.mrb[0].mxu0
    %v318 = vpop.f32.mrb[0].mxu0
    %v319 = vadd.f32 %v199, %v318
    %v320 = vpop.f32.mrb[0].mxu0
    %321 = vmatprep.mubr.bf16.mxu0 0
    %322 = vmatmul.mubr.bf16.gmra.mrb[0].mxu0 %v170
    %v323 = vpop.f32.mrb[0].mxu0
    %v324 = vadd.f32 %v199, %v323
    %v325 = vpop.f32.mrb[0].mxu0
    %v326 = vpop.f32.mrb[0].mxu0
    %v327 = vadd.f32 %v199, %v326
    %v328 = vpop.f32.mrb[0].mxu0
    %329 = vmatprep.mubr.bf16.mxu0 0
    %330 = vmatmul.mubr.bf16.gmra.mrb[0].mxu0 %v171
    %v331 = vpop.f32.mrb[0].mxu0
    %v332 = vadd.f32 %v199, %v331
    %v333 = vpop.f32.mrb[0].mxu0
    %v334 = vpop.f32.mrb[0].mxu0
    %v335 = vadd.f32 %v199, %v334
    %v336 = vpop.f32.mrb[0].mxu0
    %337 = vmatprep.mubr.bf16.mxu0 0
    %338 = vmatmul.mubr.bf16.gmra.mrb[0].mxu0 %v172
    %v339 = vpop.f32.mrb[0].mxu0
    %v340 = vadd.f32 %v199, %v339
    %v341 = vpop.f32.mrb[0].mxu0
    %v342 = vpop.f32.mrb[0].mxu0
    %v343 = vadd.f32 %v199, %v342
    %v344 = vpop.f32.mrb[0].mxu0
    %345 = vmatprep.mubr.bf16.mxu0 0
    %346 = vmatmul.mubr.bf16.gmra.mrb[0].mxu0 %v173
    %v347 = vpop.f32.mrb[0].mxu0
    %v348 = vadd.f32 %v199, %v347
    %v349 = vpop.f32.mrb[0].mxu0
    %v350 = vpop.f32.mrb[0].mxu0
    %v351 = vadd.f32 %v199, %v350
    %v352 = vpop.f32.mrb[0].mxu0
    %353 = vmatprep.mubr.bf16.mxu0 0
    %354 = vmatmul.mubr.bf16.gmra.mrb[0].mxu0 %v174
    %v355 = vpop.f32.mrb[0].mxu0
    %v356 = vadd.f32 %v199, %v355
    %v357 = vpop.f32.mrb[0].mxu0
    %v358 = vpop.f32.mrb[0].mxu0
    %v359 = vadd.f32 %v199, %v358
    %v360 = vpop.f32.mrb[0].mxu0
    %361 = vmatprep.mubr.bf16.mxu0 0
    %362 = vmatmul.mubr.bf16.gmra.mrb[0].mxu0 %v175
    %v363 = vpop.f32.mrb[0].mxu0
    %v364 = vadd.f32 %v199, %v363
    %v365 = vpop.f32.mrb[0].mxu0
    %v366 = vpop.f32.mrb[0].mxu0
    %v367 = vadd.f32 %v199, %v366
    %v368 = vpop.f32.mrb[0].mxu0
    %369 = vmatprep.mubr.bf16.mxu0 0
    %370 = vmatmul.mubr.bf16.gmra.mrb[0].mxu0 %v176
    %v371 = vpop.f32.mrb[0].mxu0
    %v372 = vadd.f32 %v199, %v371
    %v373 = vpop.f32.mrb[0].mxu0
    %v374 = vpop.f32.mrb[0].mxu0
    %v375 = vadd.f32 %v199, %v374
    %v376 = vpop.f32.mrb[0].mxu0
    %377 = vmatprep.mubr.bf16.mxu0 0
    %378 = vmatmul.mubr.bf16.gmra.mrb[0].mxu0 %v177
    %v379 = vpop.f32.mrb[0].mxu0
    %v380 = vadd.f32 %v199, %v379
    %v381 = vpop.f32.mrb[0].mxu0
    %v382 = vpop.f32.mrb[0].mxu0
    %v383 = vpop.f32.mrb[0].mxu0
    %384 = vdwg.mxu0
    %v385 = vmax.f32 %v284, 0.0
    %v386 = vmax.f32 %v287, 0.0
    %v387 = vmax.f32 %v292, 0.0
    %v388 = vmax.f32 %v295, 0.0
    %v389 = vmax.f32 %v300, 0.0
    %v390 = vmax.f32 %v303, 0.0
    %v391 = vmax.f32 %v308, 0.0
    %v392 = vmax.f32 %v311, 0.0
    %v393 = vmax.f32 %v316, 0.0
    %v394 = vmax.f32 %v319, 0.0
    %v395 = vmax.f32 %v324, 0.0
    %v396 = vmax.f32 %v327, 0.0
    %v397 = vmax.f32 %v332, 0.0
    %v398 = vmax.f32 %v335, 0.0
    %v399 = vmax.f32 %v340, 0.0
    %v400 = vmax.f32 %v343, 0.0
    %v401 = vmax.f32 %v348, 0.0
    %v402 = vmax.f32 %v351, 0.0
    %v403 = vmax.f32 %v356, 0.0
    %v404 = vmax.f32 %v359, 0.0
    %v405 = vmax.f32 %v364, 0.0
    %v406 = vmax.f32 %v367, 0.0
    %v407 = vmax.f32 %v372, 0.0
    %v408 = vmax.f32 %v375, 0.0
    %v409 = vmax.f32 %v380, 0.0
    %v410 = vpack.c.bf16 %v386, %v385
    %v411 = vpack.c.bf16 %v388, %v387
    %v412 = vpack.c.bf16 %v390, %v389
    %v413 = vpack.c.bf16 %v392, %v391
    %v414 = vpack.c.bf16 %v394, %v393
    %v415 = vpack.c.bf16 %v396, %v395
    %v416 = vpack.c.bf16 %v398, %v397
    %v417 = vpack.c.bf16 %v400, %v399
    %v418 = vpack.c.bf16 %v402, %v401
    %v419 = vpack.c.bf16 %v404, %v403
    %v420 = vpack.c.bf16 %v406, %v405
    %v421 = vpack.c.bf16 %v408, %v407
    %v422 = vpack.c.bf16 %v409, %v409
    %v423 = vld [vmem:[#allocation12] sm:$0xf]
    %v424 = vld [vmem:[#allocation12 + $0x4] sm:$0xf]
    %v425 = vld [vmem:[#allocation12 + $0x8] sm:$0xf]
    %v426 = vld [vmem:[#allocation12 + $0xc] sm:$0xf]
    %v427 = vld [vmem:[#allocation12 + $0x10] sm:$0xf]
    %v428 = vld [vmem:[#allocation12 + $0x14] sm:$0xf]
    %v429 = vld [vmem:[#allocation12 + $0x18] sm:$0xf]
    %v430 = vld [vmem:[#allocation12 + $0x1c] sm:$0xf]
    %v431 = vld [vmem:[#allocation12 + $0x20] sm:$0xf]
    %v432 = vld [vmem:[#allocation12 + $0x24] sm:$0xf]
    %v433 = vld [vmem:[#allocation12 + $0x28] sm:$0xf]
    %v434 = vld [vmem:[#allocation12 + $0x2c] sm:$0xf]
    %v435 = vld [vmem:[#allocation12 + $0x30] sm:$0xf]
    %v436 = vld [vmem:[#allocation12 + $0x34] sm:$0xf]
    %v437 = vld [vmem:[#allocation12 + $0x38] sm:$0xf]
    %v438 = vld [vmem:[#allocation12 + $0x3c] sm:$0xf]
    %v439 = vld [vmem:[%s4] sm:$0x1]
    %v441 = vlaneseq
    %v442 = vshrl.u32 %v441, 7
    %v443 = vsub.s32 0, %v442
    %v444 = vrot.slane %v439, %v443
    %v462 = vunpack.c.l.b16 %v423
    %v463 = vunpack.c.l.b16 %v424
    %v464 = vunpack.c.l.b16 %v425
    %v465 = vunpack.c.l.b16 %v426
    %v466 = vunpack.c.l.b16 %v427
    %v467 = vunpack.c.l.b16 %v428
    %v468 = vunpack.c.l.b16 %v429
    %v469 = vunpack.c.l.b16 %v430
    %v470 = vunpack.c.l.b16 %v431
    %v471 = vunpack.c.l.b16 %v432
    %v472 = vunpack.c.l.b16 %v433
    %v473 = vunpack.c.l.b16 %v434
    %v474 = vunpack.c.l.b16 %v435
    %v475 = vunpack.c.l.b16 %v436
    %v476 = vunpack.c.l.b16 %v437
    %v477 = vunpack.c.l.b16 %v438
    %v478 = vpack.c.b16 %v463, %v462
    %v479 = vpack.c.b16 %v465, %v464
    %v480 = vpack.c.b16 %v467, %v466
    %v481 = vpack.c.b16 %v469, %v468
    %v482 = vpack.c.b16 %v471, %v470
    %v483 = vpack.c.b16 %v473, %v472
    %v484 = vpack.c.b16 %v475, %v474
    %v485 = vpack.c.b16 %v477, %v476
    %494 = vmatprep.subr.bf16.mxu0 0
    %495 = vmatpush1.bf16.msra.mxu0 %v478
    %496 = vmatprep.subr.bf16.mxu0 0
    %497 = vmatpush1.bf16.msra.mxu0 %v479
    %498 = vmatprep.subr.bf16.mxu0 0
    %499 = vmatpush1.bf16.msra.mxu0 %v480
    %500 = vmatprep.subr.bf16.mxu0 0
    %501 = vmatpush1.bf16.msra.mxu0 %v481
    %502 = vmatprep.subr.bf16.mxu0 0
    %503 = vmatpush1.bf16.msra.mxu0 %v482
    %504 = vmatprep.subr.bf16.mxu0 0
    %505 = vmatpush1.bf16.msra.mxu0 %v483
    %506 = vmatprep.subr.bf16.mxu0 0
    %507 = vmatpush1.bf16.msra.mxu0 %v484
    %508 = vmatprep.subr.bf16.mxu0 0
    %509 = vmatpush1.bf16.msra.mxu0 %v485
    %510 = vmatprep.subr.bf16.mxu0 0
    %511 = vmatpush1.bf16.msra.mxu0 0
    %512 = vmatprep.subr.bf16.mxu0 0
    %513 = vmatpush1.bf16.msra.mxu0 0
    %514 = vmatprep.subr.bf16.mxu0 0
    %515 = vmatpush1.bf16.msra.mxu0 0
    %516 = vmatprep.subr.bf16.mxu0 0
    %517 = vmatpush1.bf16.msra.mxu0 0
    %518 = vmatprep.subr.bf16.mxu0 0
    %519 = vmatpush1.bf16.msra.mxu0 0
    %520 = vmatprep.subr.bf16.mxu0 0
    %521 = vmatpush1.bf16.msra.mxu0 0
    %522 = vmatprep.subr.bf16.mxu0 0
    %523 = vmatpush1.bf16.msra.mxu0 0
    %524 = vmatprep.subr.bf16.mxu0 0
    %525 = vmatpush1.bf16.msra.mxu0 0
    %526 = vmatprep.mubr.bf16.mxu0 0
    %527 = vmatmul.mubr.bf16.gmra.mrb[0].mxu0 %v410
    %v528 = vpop.f32.mrb[0].mxu0
    %v529 = vadd.f32 %v444, %v528
    %v530 = vpop.f32.mrb[0].mxu0
    %v531 = vpop.f32.mrb[0].mxu0
    %v532 = vadd.f32 %v444, %v531
    %v533 = vpop.f32.mrb[0].mxu0
    %534 = vmatprep.mubr.bf16.mxu0 0
    %535 = vmatmul.mubr.bf16.gmra.mrb[0].mxu0 %v411
    %v536 = vpop.f32.mrb[0].mxu0
    %v537 = vadd.f32 %v444, %v536
    %v538 = vpop.f32.mrb[0].mxu0
    %v539 = vpop.f32.mrb[0].mxu0
    %v540 = vadd.f32 %v444, %v539
    %v541 = vpop.f32.mrb[0].mxu0
    %542 = vmatprep.mubr.bf16.mxu0 0
    %543 = vmatmul.mubr.bf16.gmra.mrb[0].mxu0 %v412
    %v544 = vpop.f32.mrb[0].mxu0
    %v545 = vadd.f32 %v444, %v544
    %v546 = vpop.f32.mrb[0].mxu0
    %v547 = vpop.f32.mrb[0].mxu0
    %v548 = vadd.f32 %v444, %v547
    %v549 = vpop.f32.mrb[0].mxu0
    %550 = vmatprep.mubr.bf16.mxu0 0
    %551 = vmatmul.mubr.bf16.gmra.mrb[0].mxu0 %v413
    %v552 = vpop.f32.mrb[0].mxu0
    %v553 = vadd.f32 %v444, %v552
    %v554 = vpop.f32.mrb[0].mxu0
    %v555 = vpop.f32.mrb[0].mxu0
    %v556 = vadd.f32 %v444, %v555
    %v557 = vpop.f32.mrb[0].mxu0
    %558 = vmatprep.mubr.bf16.mxu0 0
    %559 = vmatmul.mubr.bf16.gmra.mrb[0].mxu0 %v414
    %v560 = vpop.f32.mrb[0].mxu0
    %v561 = vadd.f32 %v444, %v560
    %v562 = vpop.f32.mrb[0].mxu0
    %v563 = vpop.f32.mrb[0].mxu0
    %v564 = vadd.f32 %v444, %v563
    %v565 = vpop.f32.mrb[0].mxu0
    %566 = vmatprep.mubr.bf16.mxu0 0
    %567 = vmatmul.mubr.bf16.gmra.mrb[0].mxu0 %v415
    %v568 = vpop.f32.mrb[0].mxu0
    %v569 = vadd.f32 %v444, %v568
    %v570 = vpop.f32.mrb[0].mxu0
    %v571 = vpop.f32.mrb[0].mxu0
    %v572 = vadd.f32 %v444, %v571
    %v573 = vpop.f32.mrb[0].mxu0
    %574 = vmatprep.mubr.bf16.mxu0 0
    %575 = vmatmul.mubr.bf16.gmra.mrb[0].mxu0 %v416
    %v576 = vpop.f32.mrb[0].mxu0
    %v577 = vadd.f32 %v444, %v576
    %v578 = vpop.f32.mrb[0].mxu0
    %v579 = vpop.f32.mrb[0].mxu0
    %v580 = vadd.f32 %v444, %v579
    %v581 = vpop.f32.mrb[0].mxu0
    %582 = vmatprep.mubr.bf16.mxu0 0
    %583 = vmatmul.mubr.bf16.gmra.mrb[0].mxu0 %v417
    %v584 = vpop.f32.mrb[0].mxu0
    %v585 = vadd.f32 %v444, %v584
    %v586 = vpop.f32.mrb[0].mxu0
    %v587 = vpop.f32.mrb[0].mxu0
    %v588 = vadd.f32 %v444, %v587
    %v589 = vpop.f32.mrb[0].mxu0
    %590 = vmatprep.mubr.bf16.mxu0 0
    %591 = vmatmul.mubr.bf16.gmra.mrb[0].mxu0 %v418
    %v592 = vpop.f32.mrb[0].mxu0
    %v593 = vadd.f32 %v444, %v592
    %v594 = vpop.f32.mrb[0].mxu0
    %v595 = vpop.f32.mrb[0].mxu0
    %v596 = vadd.f32 %v444, %v595
    %v597 = vpop.f32.mrb[0].mxu0
    %598 = vmatprep.mubr.bf16.mxu0 0
    %599 = vmatmul.mubr.bf16.gmra.mrb[0].mxu0 %v419
    %v600 = vpop.f32.mrb[0].mxu0
    %v601 = vadd.f32 %v444, %v600
    %v602 = vpop.f32.mrb[0].mxu0
    %v603 = vpop.f32.mrb[0].mxu0
    %v604 = vadd.f32 %v444, %v603
    %v605 = vpop.f32.mrb[0].mxu0
    %606 = vmatprep.mubr.bf16.mxu0 0
    %607 = vmatmul.mubr.bf16.gmra.mrb[0].mxu0 %v420
    %v608 = vpop.f32.mrb[0].mxu0
    %v609 = vadd.f32 %v444, %v608
    %v610 = vpop.f32.mrb[0].mxu0
    %v611 = vpop.f32.mrb[0].mxu0
    %v612 = vadd.f32 %v444, %v611
    %v613 = vpop.f32.mrb[0].mxu0
    %614 = vmatprep.mubr.bf16.mxu0 0
    %615 = vmatmul.mubr.bf16.gmra.mrb[0].mxu0 %v421
    %v616 = vpop.f32.mrb[0].mxu0
    %v617 = vadd.f32 %v444, %v616
    %v618 = vpop.f32.mrb[0].mxu0
    %v619 = vpop.f32.mrb[0].mxu0
    %v620 = vadd.f32 %v444, %v619
    %v621 = vpop.f32.mrb[0].mxu0
    %622 = vmatprep.mubr.bf16.mxu0 0
    %623 = vmatmul.mubr.bf16.gmra.mrb[0].mxu0 %v422
    %v624 = vpop.f32.mrb[0].mxu0
    %v625 = vadd.f32 %v444, %v624
    %v626 = vpop.f32.mrb[0].mxu0
    %v627 = vpop.f32.mrb[0].mxu0
    %v628 = vpop.f32.mrb[0].mxu0
    %629 = vdwg.mxu0
    %v630 = vmax.f32 %v529, 0.0
    %v631 = vmax.f32 %v532, 0.0
    %v632 = vmax.f32 %v537, 0.0
    %v633 = vmax.f32 %v540, 0.0
    %v634 = vmax.f32 %v545, 0.0
    %v635 = vmax.f32 %v548, 0.0
    %v636 = vmax.f32 %v553, 0.0
    %v637 = vmax.f32 %v556, 0.0
    %v638 = vmax.f32 %v561, 0.0
    %v639 = vmax.f32 %v564, 0.0
    %v640 = vmax.f32 %v569, 0.0
    %v641 = vmax.f32 %v572, 0.0
    %v642 = vmax.f32 %v577, 0.0
    %v643 = vmax.f32 %v580, 0.0
    %v644 = vmax.f32 %v585, 0.0
    %v645 = vmax.f32 %v588, 0.0
    %v646 = vmax.f32 %v593, 0.0
    %v647 = vmax.f32 %v596, 0.0
    %v648 = vmax.f32 %v601, 0.0
    %v649 = vmax.f32 %v604, 0.0
    %v650 = vmax.f32 %v609, 0.0
    %v651 = vmax.f32 %v612, 0.0
    %v652 = vmax.f32 %v617, 0.0
    %v653 = vmax.f32 %v620, 0.0
    %v654 = vmax.f32 %v625, 0.0
    %v655 = vpack.c.bf16 %v631, %v630
    %v656 = vpack.c.bf16 %v633, %v632
    %v657 = vpack.c.bf16 %v635, %v634
    %v658 = vpack.c.bf16 %v637, %v636
    %v659 = vpack.c.bf16 %v639, %v638
    %v660 = vpack.c.bf16 %v641, %v640
    %v661 = vpack.c.bf16 %v643, %v642
    %v662 = vpack.c.bf16 %v645, %v644
    %v663 = vpack.c.bf16 %v647, %v646
    %v664 = vpack.c.bf16 %v649, %v648
    %v665 = vpack.c.bf16 %v651, %v650
    %v666 = vpack.c.bf16 %v653, %v652
    %v667 = vpack.c.bf16 %v654, %v654
    %v668 = vld [vmem:[#allocation13] sm:$0xf]
    %v669 = vld [vmem:[#allocation13 + $0x4] sm:$0xf]
    %v670 = vld [vmem:[#allocation13 + $0x8] sm:$0xf]
    %v671 = vld [vmem:[#allocation13 + $0xc] sm:$0xf]
    %v672 = vld [vmem:[#allocation13 + $0x10] sm:$0xf]
    %v673 = vld [vmem:[#allocation13 + $0x14] sm:$0xf]
    %v674 = vld [vmem:[#allocation13 + $0x18] sm:$0xf]
    %v675 = vld [vmem:[#allocation13 + $0x1c] sm:$0xf]
    %v676 = vld [vmem:[#allocation13 + $0x20] sm:$0xf]
    %v677 = vld [vmem:[#allocation13 + $0x24] sm:$0xf]
    %v678 = vld [vmem:[#allocation13 + $0x28] sm:$0xf]
    %v679 = vld [vmem:[#allocation13 + $0x2c] sm:$0xf]
    %v680 = vld [vmem:[#allocation13 + $0x30] sm:$0xf]
    %v681 = vld [vmem:[#allocation13 + $0x34] sm:$0xf]
    %v682 = vld [vmem:[#allocation13 + $0x38] sm:$0xf]
    %v683 = vld [vmem:[#allocation13 + $0x3c] sm:$0xf]
    %v684 = vld [vmem:[%s6] sm:$0x1]
    %v686 = vlaneseq
    %v687 = vshrl.u32 %v686, 7
    %v688 = vsub.s32 0, %v687
    %v689 = vrot.slane %v684, %v688
    %v707 = vunpack.c.l.b16 %v668
    %v708 = vunpack.c.l.b16 %v669
    %v709 = vunpack.c.l.b16 %v670
    %v710 = vunpack.c.l.b16 %v671
    %v711 = vunpack.c.l.b16 %v672
    %v712 = vunpack.c.l.b16 %v673
    %v713 = vunpack.c.l.b16 %v674
    %v714 = vunpack.c.l.b16 %v675
    %v715 = vunpack.c.l.b16 %v676
    %v716 = vunpack.c.l.b16 %v677
    %v717 = vunpack.c.l.b16 %v678
    %v718 = vunpack.c.l.b16 %v679
    %v719 = vunpack.c.l.b16 %v680
    %v720 = vunpack.c.l.b16 %v681
    %v721 = vunpack.c.l.b16 %v682
    %v722 = vunpack.c.l.b16 %v683
    %v723 = vpack.c.b16 %v708, %v707
    %v724 = vpack.c.b16 %v710, %v709
    %v725 = vpack.c.b16 %v712, %v711
    %v726 = vpack.c.b16 %v714, %v713
    %v727 = vpack.c.b16 %v716, %v715
    %v728 = vpack.c.b16 %v718, %v717
    %v729 = vpack.c.b16 %v720, %v719
    %v730 = vpack.c.b16 %v722, %v721
    %739 = vmatprep.subr.bf16.mxu0 0
    %740 = vmatpush1.bf16.msra.mxu0 %v723
    %741 = vmatprep.subr.bf16.mxu0 0
    %742 = vmatpush1.bf16.msra.mxu0 %v724
    %743 = vmatprep.subr.bf16.mxu0 0
    %744 = vmatpush1.bf16.msra.mxu0 %v725
    %745 = vmatprep.subr.bf16.mxu0 0
    %746 = vmatpush1.bf16.msra.mxu0 %v726
    %747 = vmatprep.subr.bf16.mxu0 0
    %748 = vmatpush1.bf16.msra.mxu0 %v727
    %749 = vmatprep.subr.bf16.mxu0 0
    %750 = vmatpush1.bf16.msra.mxu0 %v728
    %751 = vmatprep.subr.bf16.mxu0 0
    %752 = vmatpush1.bf16.msra.mxu0 %v729
    %753 = vmatprep.subr.bf16.mxu0 0
    %754 = vmatpush1.bf16.msra.mxu0 %v730
    %755 = vmatprep.subr.bf16.mxu0 0
    %756 = vmatpush1.bf16.msra.mxu0 0
    %757 = vmatprep.subr.bf16.mxu0 0
    %758 = vmatpush1.bf16.msra.mxu0 0
    %759 = vmatprep.subr.bf16.mxu0 0
    %760 = vmatpush1.bf16.msra.mxu0 0
    %761 = vmatprep.subr.bf16.mxu0 0
    %762 = vmatpush1.bf16.msra.mxu0 0
    %763 = vmatprep.subr.bf16.mxu0 0
    %764 = vmatpush1.bf16.msra.mxu0 0
    %765 = vmatprep.subr.bf16.mxu0 0
    %766 = vmatpush1.bf16.msra.mxu0 0
    %767 = vmatprep.subr.bf16.mxu0 0
    %768 = vmatpush1.bf16.msra.mxu0 0
    %769 = vmatprep.subr.bf16.mxu0 0
    %770 = vmatpush1.bf16.msra.mxu0 0
    %771 = vmatprep.mubr.bf16.mxu0 0
    %772 = vmatmul.mubr.bf16.gmra.mrb[0].mxu0 %v655
    %v773 = vpop.f32.mrb[0].mxu0
    %v774 = vadd.f32 %v689, %v773
    %v775 = vpop.f32.mrb[0].mxu0
    %v776 = vpop.f32.mrb[0].mxu0
    %v777 = vadd.f32 %v689, %v776
    %v778 = vpop.f32.mrb[0].mxu0
    %779 = vmatprep.mubr.bf16.mxu0 0
    %780 = vmatmul.mubr.bf16.gmra.mrb[0].mxu0 %v656
    %v781 = vpop.f32.mrb[0].mxu0
    %v782 = vadd.f32 %v689, %v781
    %v783 = vpop.f32.mrb[0].mxu0
    %v784 = vpop.f32.mrb[0].mxu0
    %v785 = vadd.f32 %v689, %v784
    %v786 = vpop.f32.mrb[0].mxu0
    %787 = vmatprep.mubr.bf16.mxu0 0
    %788 = vmatmul.mubr.bf16.gmra.mrb[0].mxu0 %v657
    %v789 = vpop.f32.mrb[0].mxu0
    %v790 = vadd.f32 %v689, %v789
    %v791 = vpop.f32.mrb[0].mxu0
    %v792 = vpop.f32.mrb[0].mxu0
    %v793 = vadd.f32 %v689, %v792
    %v794 = vpop.f32.mrb[0].mxu0
    %795 = vmatprep.mubr.bf16.mxu0 0
    %796 = vmatmul.mubr.bf16.gmra.mrb[0].mxu0 %v658
    %v797 = vpop.f32.mrb[0].mxu0
    %v798 = vadd.f32 %v689, %v797
    %v799 = vpop.f32.mrb[0].mxu0
    %v800 = vpop.f32.mrb[0].mxu0
    %v801 = vadd.f32 %v689, %v800
    %v802 = vpop.f32.mrb[0].mxu0
    %803 = vmatprep.mubr.bf16.mxu0 0
    %804 = vmatmul.mubr.bf16.gmra.mrb[0].mxu0 %v659
    %v805 = vpop.f32.mrb[0].mxu0
    %v806 = vadd.f32 %v689, %v805
    %v807 = vpop.f32.mrb[0].mxu0
    %v808 = vpop.f32.mrb[0].mxu0
    %v809 = vadd.f32 %v689, %v808
    %v810 = vpop.f32.mrb[0].mxu0
    %811 = vmatprep.mubr.bf16.mxu0 0
    %812 = vmatmul.mubr.bf16.gmra.mrb[0].mxu0 %v660
    %v813 = vpop.f32.mrb[0].mxu0
    %v814 = vadd.f32 %v689, %v813
    %v815 = vpop.f32.mrb[0].mxu0
    %v816 = vpop.f32.mrb[0].mxu0
    %v817 = vadd.f32 %v689, %v816
    %v818 = vpop.f32.mrb[0].mxu0
    %819 = vmatprep.mubr.bf16.mxu0 0
    %820 = vmatmul.mubr.bf16.gmra.mrb[0].mxu0 %v661
    %v821 = vpop.f32.mrb[0].mxu0
    %v822 = vadd.f32 %v689, %v821
    %v823 = vpop.f32.mrb[0].mxu0
    %v824 = vpop.f32.mrb[0].mxu0
    %v825 = vadd.f32 %v689, %v824
    %v826 = vpop.f32.mrb[0].mxu0
    %827 = vmatprep.mubr.bf16.mxu0 0
    %828 = vmatmul.mubr.bf16.gmra.mrb[0].mxu0 %v662
    %v829 = vpop.f32.mrb[0].mxu0
    %v830 = vadd.f32 %v689, %v829
    %v831 = vpop.f32.mrb[0].mxu0
    %v832 = vpop.f32.mrb[0].mxu0
    %v833 = vadd.f32 %v689, %v832
    %v834 = vpop.f32.mrb[0].mxu0
    %835 = vmatprep.mubr.bf16.mxu0 0
    %836 = vmatmul.mubr.bf16.gmra.mrb[0].mxu0 %v663
    %v837 = vpop.f32.mrb[0].mxu0
    %v838 = vadd.f32 %v689, %v837
    %v839 = vpop.f32.mrb[0].mxu0
    %v840 = vpop.f32.mrb[0].mxu0
    %v841 = vadd.f32 %v689, %v840
    %v842 = vpop.f32.mrb[0].mxu0
    %843 = vmatprep.mubr.bf16.mxu0 0
    %844 = vmatmul.mubr.bf16.gmra.mrb[0].mxu0 %v664
    %v845 = vpop.f32.mrb[0].mxu0
    %v846 = vadd.f32 %v689, %v845
    %v847 = vpop.f32.mrb[0].mxu0
    %v848 = vpop.f32.mrb[0].mxu0
    %v849 = vadd.f32 %v689, %v848
    %v850 = vpop.f32.mrb[0].mxu0
    %851 = vmatprep.mubr.bf16.mxu0 0
    %852 = vmatmul.mubr.bf16.gmra.mrb[0].mxu0 %v665
    %v853 = vpop.f32.mrb[0].mxu0
    %v854 = vadd.f32 %v689, %v853
    %v855 = vpop.f32.mrb[0].mxu0
    %v856 = vpop.f32.mrb[0].mxu0
    %v857 = vadd.f32 %v689, %v856
    %v858 = vpop.f32.mrb[0].mxu0
    %859 = vmatprep.mubr.bf16.mxu0 0
    %860 = vmatmul.mubr.bf16.gmra.mrb[0].mxu0 %v666
    %v861 = vpop.f32.mrb[0].mxu0
    %v862 = vadd.f32 %v689, %v861
    %v863 = vpop.f32.mrb[0].mxu0
    %v864 = vpop.f32.mrb[0].mxu0
    %v865 = vadd.f32 %v689, %v864
    %v866 = vpop.f32.mrb[0].mxu0
    %867 = vmatprep.mubr.bf16.mxu0 0
    %868 = vmatmul.mubr.bf16.gmra.mrb[0].mxu0 %v667
    %v869 = vpop.f32.mrb[0].mxu0
    %v870 = vadd.f32 %v689, %v869
    %v871 = vpop.f32.mrb[0].mxu0
    %v872 = vpop.f32.mrb[0].mxu0
    %v873 = vpop.f32.mrb[0].mxu0
    %874 = vdwg.mxu0
    %v875 = vmax.f32 %v774, 0.0
    %v876 = vmax.f32 %v777, 0.0
    %v877 = vmax.f32 %v782, 0.0
    %v878 = vmax.f32 %v785, 0.0
    %v879 = vmax.f32 %v790, 0.0
    %v880 = vmax.f32 %v793, 0.0
    %v881 = vmax.f32 %v798, 0.0
    %v882 = vmax.f32 %v801, 0.0
    %v883 = vmax.f32 %v806, 0.0
    %v884 = vmax.f32 %v809, 0.0
    %v885 = vmax.f32 %v814, 0.0
    %v886 = vmax.f32 %v817, 0.0
    %v887 = vmax.f32 %v822, 0.0
    %v888 = vmax.f32 %v825, 0.0
    %v889 = vmax.f32 %v830, 0.0
    %v890 = vmax.f32 %v833, 0.0
    %v891 = vmax.f32 %v838, 0.0
    %v892 = vmax.f32 %v841, 0.0
    %v893 = vmax.f32 %v846, 0.0
    %v894 = vmax.f32 %v849, 0.0
    %v895 = vmax.f32 %v854, 0.0
    %v896 = vmax.f32 %v857, 0.0
    %v897 = vmax.f32 %v862, 0.0
    %v898 = vmax.f32 %v865, 0.0
    %v899 = vmax.f32 %v870, 0.0
    %900 = vst [vmem:[#allocation2] sm:$0xff] %v875
    %901 = vst [vmem:[#allocation2 + $0x8] sm:$0xff] %v876
    %902 = vst [vmem:[#allocation2 + $0x10] sm:$0xff] %v877
    %903 = vst [vmem:[#allocation2 + $0x18] sm:$0xff] %v878
    %904 = vst [vmem:[#allocation2 + $0x20] sm:$0xff] %v879
    %905 = vst [vmem:[#allocation2 + $0x28] sm:$0xff] %v880
    %906 = vst [vmem:[#allocation2 + $0x30] sm:$0xff] %v881
    %907 = vst [vmem:[#allocation2 + $0x38] sm:$0xff] %v882
    %908 = vst [vmem:[#allocation2 + $0x40] sm:$0xff] %v883
    %909 = vst [vmem:[#allocation2 + $0x48] sm:$0xff] %v884
    %910 = vst [vmem:[#allocation2 + $0x50] sm:$0xff] %v885
    %911 = vst [vmem:[#allocation2 + $0x58] sm:$0xff] %v886
    %912 = vst [vmem:[#allocation2 + $0x60] sm:$0xff] %v887
    %913 = vst [vmem:[#allocation2 + $0x68] sm:$0xff] %v888
    %914 = vst [vmem:[#allocation2 + $0x70] sm:$0xff] %v889
    %915 = vst [vmem:[#allocation2 + $0x78] sm:$0xff] %v890
    %916 = vst [vmem:[#allocation2 + $0x80] sm:$0xff] %v891
    %917 = vst [vmem:[#allocation2 + $0x88] sm:$0xff] %v892
    %918 = vst [vmem:[#allocation2 + $0x90] sm:$0xff] %v893
    %919 = vst [vmem:[#allocation2 + $0x98] sm:$0xff] %v894
    %920 = vst [vmem:[#allocation2 + $0xa0] sm:$0xff] %v895
    %921 = vst [vmem:[#allocation2 + $0xa8] sm:$0xff] %v896
    %922 = vst [vmem:[#allocation2 + $0xb0] sm:$0xff] %v897
    %923 = vst [vmem:[#allocation2 + $0xb8] sm:$0xff] %v898
    %924 = vst [vmem:[#allocation2 + $0xc0] sm:$0xff] %v899
    %925 = vst [vmem:[#allocation3] sm:$0xff] 0.0
    %926 = vst [vmem:[#allocation3 + $0xd0] sm:$0xff] 0.0
    %v927 = vld [vmem:[#allocation2] sm:$0x1]
    %928 = vst [vmem:[#allocation3 + $0x8] sm:$0x1] %v927
    %v929 = vld [vmem:[#allocation2 + $0x1] sm:$0x1]
    %930 = vst [vmem:[#allocation3 + $0x10] sm:$0x1] %v929
    %v931 = vld [vmem:[#allocation2 + $0x2] sm:$0x1]
    %932 = vst [vmem:[#allocation3 + $0x18] sm:$0x1] %v931
    %v933 = vld [vmem:[#allocation2 + $0x3] sm:$0x1]
    %934 = vst [vmem:[#allocation3 + $0x20] sm:$0x1] %v933
    %v935 = vld [vmem:[#allocation2 + $0x4] sm:$0x1]
    %936 = vst [vmem:[#allocation3 + $0x28] sm:$0x1] %v935
    %v937 = vld [vmem:[#allocation2 + $0x5] sm:$0x1]
    %938 = vst [vmem:[#allocation3 + $0x30] sm:$0x1] %v937
    %v939 = vld [vmem:[#allocation2 + $0x6] sm:$0x1]
    %940 = vst [vmem:[#allocation3 + $0x38] sm:$0x1] %v939
    %v941 = vld [vmem:[#allocation2 + $0x7] sm:$0x1]
    %942 = vst [vmem:[#allocation3 + $0x40] sm:$0x1] %v941
    %v943 = vld [vmem:[#allocation2 + $0x8] sm:$0x1]
    %944 = vst [vmem:[#allocation3 + $0x48] sm:$0x1] %v943
    %v945 = vld [vmem:[#allocation2 + $0x9] sm:$0x1]
    %946 = vst [vmem:[#allocation3 + $0x50] sm:$0x1] %v945
    %v947 = vld [vmem:[#allocation2 + $0xa] sm:$0x1]
    %948 = vst [vmem:[#allocation3 + $0x58] sm:$0x1] %v947
    %v949 = vld [vmem:[#allocation2 + $0xb] sm:$0x1]
    %950 = vst [vmem:[#allocation3 + $0x60] sm:$0x1] %v949
    %v951 = vld [vmem:[#allocation2 + $0xc] sm:$0x1]
    %952 = vst [vmem:[#allocation3 + $0x68] sm:$0x1] %v951
    %v953 = vld [vmem:[#allocation2 + $0xd] sm:$0x1]
    %954 = vst [vmem:[#allocation3 + $0x70] sm:$0x1] %v953
    %v955 = vld [vmem:[#allocation2 + $0xe] sm:$0x1]
    %956 = vst [vmem:[#allocation3 + $0x78] sm:$0x1] %v955
    %v957 = vld [vmem:[#allocation2 + $0xf] sm:$0x1]
    %958 = vst [vmem:[#allocation3 + $0x80] sm:$0x1] %v957
    %v959 = vld [vmem:[#allocation2 + $0x10] sm:$0x1]
    %960 = vst [vmem:[#allocation3 + $0x88] sm:$0x1] %v959
    %v961 = vld [vmem:[#allocation2 + $0x11] sm:$0x1]
    %962 = vst [vmem:[#allocation3 + $0x90] sm:$0x1] %v961
    %v963 = vld [vmem:[#allocation2 + $0x12] sm:$0x1]
    %964 = vst [vmem:[#allocation3 + $0x98] sm:$0x1] %v963
    %v965 = vld [vmem:[#allocation2 + $0x13] sm:$0x1]
    %966 = vst [vmem:[#allocation3 + $0xa0] sm:$0x1] %v965
    %v967 = vld [vmem:[#allocation2 + $0x14] sm:$0x1]
    %968 = vst [vmem:[#allocation3 + $0xa8] sm:$0x1] %v967
    %v969 = vld [vmem:[#allocation2 + $0x15] sm:$0x1]
    %970 = vst [vmem:[#allocation3 + $0xb0] sm:$0x1] %v969
    %v971 = vld [vmem:[#allocation2 + $0x16] sm:$0x1]
    %972 = vst [vmem:[#allocation3 + $0xb8] sm:$0x1] %v971
    %v973 = vld [vmem:[#allocation2 + $0x17] sm:$0x1]
    %974 = vst [vmem:[#allocation3 + $0xc0] sm:$0x1] %v973
    %v975 = vld [vmem:[#allocation2 + $0x18] sm:$0x1]
    %976 = vst [vmem:[#allocation3 + $0xc8] sm:$0x1] %v975
    %v977 = vld [vmem:[#allocation2 + $0x19] sm:$0x1]
    %978 = vst [vmem:[#allocation3 + $0x9] sm:$0x1] %v977
    %v979 = vld [vmem:[#allocation2 + $0x1a] sm:$0x1]
    %980 = vst [vmem:[#allocation3 + $0x11] sm:$0x1] %v979
    %v981 = vld [vmem:[#allocation2 + $0x1b] sm:$0x1]
    %982 = vst [vmem:[#allocation3 + $0x19] sm:$0x1] %v981
    %v983 = vld [vmem:[#allocation2 + $0x1c] sm:$0x1]
    %984 = vst [vmem:[#allocation3 + $0x21] sm:$0x1] %v983
    %v985 = vld [vmem:[#allocation2 + $0x1d] sm:$0x1]
    %986 = vst [vmem:[#allocation3 + $0x29] sm:$0x1] %v985
    %v987 = vld [vmem:[#allocation2 + $0x1e] sm:$0x1]
    %988 = vst [vmem:[#allocation3 + $0x31] sm:$0x1] %v987
    %v989 = vld [vmem:[#allocation2 + $0x1f] sm:$0x1]
    %990 = vst [vmem:[#allocation3 + $0x39] sm:$0x1] %v989
    %v991 = vld [vmem:[#allocation2 + $0x20] sm:$0x1]
    %992 = vst [vmem:[#allocation3 + $0x41] sm:$0x1] %v991
    %v993 = vld [vmem:[#allocation2 + $0x21] sm:$0x1]
    %994 = vst [vmem:[#allocation3 + $0x49] sm:$0x1] %v993
    %v995 = vld [vmem:[#allocation2 + $0x22] sm:$0x1]
    %996 = vst [vmem:[#allocation3 + $0x51] sm:$0x1] %v995
    %v997 = vld [vmem:[#allocation2 + $0x23] sm:$0x1]
    %998 = vst [vmem:[#allocation3 + $0x59] sm:$0x1] %v997
    %v999 = vld [vmem:[#allocation2 + $0x24] sm:$0x1]
    %1000 = vst [vmem:[#allocation3 + $0x61] sm:$0x1] %v999
    %v1001 = vld [vmem:[#allocation2 + $0x25] sm:$0x1]
    %1002 = vst [vmem:[#allocation3 + $0x69] sm:$0x1] %v1001
    %v1003 = vld [vmem:[#allocation2 + $0x26] sm:$0x1]
    %1004 = vst [vmem:[#allocation3 + $0x71] sm:$0x1] %v1003
    %v1005 = vld [vmem:[#allocation2 + $0x27] sm:$0x1]
    %1006 = vst [vmem:[#allocation3 + $0x79] sm:$0x1] %v1005
    %v1007 = vld [vmem:[#allocation2 + $0x28] sm:$0x1]
    %1008 = vst [vmem:[#allocation3 + $0x81] sm:$0x1] %v1007
    %v1009 = vld [vmem:[#allocation2 + $0x29] sm:$0x1]
    %1010 = vst [vmem:[#allocation3 + $0x89] sm:$0x1] %v1009
    %v1011 = vld [vmem:[#allocation2 + $0x2a] sm:$0x1]
    %1012 = vst [vmem:[#allocation3 + $0x91] sm:$0x1] %v1011
    %v1013 = vld [vmem:[#allocation2 + $0x2b] sm:$0x1]
    %1014 = vst [vmem:[#allocation3 + $0x99] sm:$0x1] %v1013
    %v1015 = vld [vmem:[#allocation2 + $0x2c] sm:$0x1]
    %1016 = vst [vmem:[#allocation3 + $0xa1] sm:$0x1] %v1015
    %v1017 = vld [vmem:[#allocation2 + $0x2d] sm:$0x1]
    %1018 = vst [vmem:[#allocation3 + $0xa9] sm:$0x1] %v1017
    %v1019 = vld [vmem:[#allocation2 + $0x2e] sm:$0x1]
    %1020 = vst [vmem:[#allocation3 + $0xb1] sm:$0x1] %v1019
    %v1021 = vld [vmem:[#allocation2 + $0x2f] sm:$0x1]
    %1022 = vst [vmem:[#allocation3 + $0xb9] sm:$0x1] %v1021
    %v1023 = vld [vmem:[#allocation2 + $0x30] sm:$0x1]
    %1024 = vst [vmem:[#allocation3 + $0xc1] sm:$0x1] %v1023
    %v1025 = vld [vmem:[#allocation2 + $0x31] sm:$0x1]
    %1026 = vst [vmem:[#allocation3 + $0xc9] sm:$0x1] %v1025
    %v1027 = vld [vmem:[#allocation2 + $0x32] sm:$0x1]
    %1028 = vst [vmem:[#allocation3 + $0xa] sm:$0x1] %v1027
    %v1029 = vld [vmem:[#allocation2 + $0x33] sm:$0x1]
    %1030 = vst [vmem:[#allocation3 + $0x12] sm:$0x1] %v1029
    %v1031 = vld [vmem:[#allocation2 + $0x34] sm:$0x1]
    %1032 = vst [vmem:[#allocation3 + $0x1a] sm:$0x1] %v1031
    %v1033 = vld [vmem:[#allocation2 + $0x35] sm:$0x1]
    %1034 = vst [vmem:[#allocation3 + $0x22] sm:$0x1] %v1033
    %v1035 = vld [vmem:[#allocation2 + $0x36] sm:$0x1]
    %1036 = vst [vmem:[#allocation3 + $0x2a] sm:$0x1] %v1035
    %v1037 = vld [vmem:[#allocation2 + $0x37] sm:$0x1]
    %1038 = vst [vmem:[#allocation3 + $0x32] sm:$0x1] %v1037
    %v1039 = vld [vmem:[#allocation2 + $0x38] sm:$0x1]
    %1040 = vst [vmem:[#allocation3 + $0x3a] sm:$0x1] %v1039
    %v1041 = vld [vmem:[#allocation2 + $0x39] sm:$0x1]
    %1042 = vst [vmem:[#allocation3 + $0x42] sm:$0x1] %v1041
    %v1043 = vld [vmem:[#allocation2 + $0x3a] sm:$0x1]
    %1044 = vst [vmem:[#allocation3 + $0x4a] sm:$0x1] %v1043
    %v1045 = vld [vmem:[#allocation2 + $0x3b] sm:$0x1]
    %1046 = vst [vmem:[#allocation3 + $0x52] sm:$0x1] %v1045
    %v1047 = vld [vmem:[#allocation2 + $0x3c] sm:$0x1]
    %1048 = vst [vmem:[#allocation3 + $0x5a] sm:$0x1] %v1047
    %v1049 = vld [vmem:[#allocation2 + $0x3d] sm:$0x1]
    %1050 = vst [vmem:[#allocation3 + $0x62] sm:$0x1] %v1049
    %v1051 = vld [vmem:[#allocation2 + $0x3e] sm:$0x1]
    %1052 = vst [vmem:[#allocation3 + $0x6a] sm:$0x1] %v1051
    %v1053 = vld [vmem:[#allocation2 + $0x3f] sm:$0x1]
    %1054 = vst [vmem:[#allocation3 + $0x72] sm:$0x1] %v1053
    %v1055 = vld [vmem:[#allocation2 + $0x40] sm:$0x1]
    %1056 = vst [vmem:[#allocation3 + $0x7a] sm:$0x1] %v1055
    %v1057 = vld [vmem:[#allocation2 + $0x41] sm:$0x1]
    %1058 = vst [vmem:[#allocation3 + $0x82] sm:$0x1] %v1057
    %v1059 = vld [vmem:[#allocation2 + $0x42] sm:$0x1]
    %1060 = vst [vmem:[#allocation3 + $0x8a] sm:$0x1] %v1059
    %v1061 = vld [vmem:[#allocation2 + $0x43] sm:$0x1]
    %1062 = vst [vmem:[#allocation3 + $0x92] sm:$0x1] %v1061
    %v1063 = vld [vmem:[#allocation2 + $0x44] sm:$0x1]
    %1064 = vst [vmem:[#allocation3 + $0x9a] sm:$0x1] %v1063
    %v1065 = vld [vmem:[#allocation2 + $0x45] sm:$0x1]
    %1066 = vst [vmem:[#allocation3 + $0xa2] sm:$0x1] %v1065
    %v1067 = vld [vmem:[#allocation2 + $0x46] sm:$0x1]
    %1068 = vst [vmem:[#allocation3 + $0xaa] sm:$0x1] %v1067
    %v1069 = vld [vmem:[#allocation2 + $0x47] sm:$0x1]
    %1070 = vst [vmem:[#allocation3 + $0xb2] sm:$0x1] %v1069
    %v1071 = vld [vmem:[#allocation2 + $0x48] sm:$0x1]
    %1072 = vst [vmem:[#allocation3 + $0xba] sm:$0x1] %v1071
    %v1073 = vld [vmem:[#allocation2 + $0x49] sm:$0x1]
    %1074 = vst [vmem:[#allocation3 + $0xc2] sm:$0x1] %v1073
    %v1075 = vld [vmem:[#allocation2 + $0x4a] sm:$0x1]
    %1076 = vst [vmem:[#allocation3 + $0xca] sm:$0x1] %v1075
    %v1077 = vld [vmem:[#allocation2 + $0x4b] sm:$0x1]
    %1078 = vst [vmem:[#allocation3 + $0xb] sm:$0x1] %v1077
    %v1079 = vld [vmem:[#allocation2 + $0x4c] sm:$0x1]
    %1080 = vst [vmem:[#allocation3 + $0x13] sm:$0x1] %v1079
    %v1081 = vld [vmem:[#allocation2 + $0x4d] sm:$0x1]
    %1082 = vst [vmem:[#allocation3 + $0x1b] sm:$0x1] %v1081
    %v1083 = vld [vmem:[#allocation2 + $0x4e] sm:$0x1]
    %1084 = vst [vmem:[#allocation3 + $0x23] sm:$0x1] %v1083
    %v1085 = vld [vmem:[#allocation2 + $0x4f] sm:$0x1]
    %1086 = vst [vmem:[#allocation3 + $0x2b] sm:$0x1] %v1085
    %v1087 = vld [vmem:[#allocation2 + $0x50] sm:$0x1]
    %1088 = vst [vmem:[#allocation3 + $0x33] sm:$0x1] %v1087
    %v1089 = vld [vmem:[#allocation2 + $0x51] sm:$0x1]
    %1090 = vst [vmem:[#allocation3 + $0x3b] sm:$0x1] %v1089
    %v1091 = vld [vmem:[#allocation2 + $0x52] sm:$0x1]
    %1092 = vst [vmem:[#allocation3 + $0x43] sm:$0x1] %v1091
    %v1093 = vld [vmem:[#allocation2 + $0x53] sm:$0x1]
    %1094 = vst [vmem:[#allocation3 + $0x4b] sm:$0x1] %v1093
    %v1095 = vld [vmem:[#allocation2 + $0x54] sm:$0x1]
    %1096 = vst [vmem:[#allocation3 + $0x53] sm:$0x1] %v1095
    %v1097 = vld [vmem:[#allocation2 + $0x55] sm:$0x1]
    %1098 = vst [vmem:[#allocation3 + $0x5b] sm:$0x1] %v1097
    %v1099 = vld [vmem:[#allocation2 + $0x56] sm:$0x1]
    %1100 = vst [vmem:[#allocation3 + $0x63] sm:$0x1] %v1099
    %v1101 = vld [vmem:[#allocation2 + $0x57] sm:$0x1]
    %1102 = vst [vmem:[#allocation3 + $0x6b] sm:$0x1] %v1101
    %v1103 = vld [vmem:[#allocation2 + $0x58] sm:$0x1]
    %1104 = vst [vmem:[#allocation3 + $0x73] sm:$0x1] %v1103
    %v1105 = vld [vmem:[#allocation2 + $0x59] sm:$0x1]
    %1106 = vst [vmem:[#allocation3 + $0x7b] sm:$0x1] %v1105
    %v1107 = vld [vmem:[#allocation2 + $0x5a] sm:$0x1]
    %1108 = vst [vmem:[#allocation3 + $0x83] sm:$0x1] %v1107
    %v1109 = vld [vmem:[#allocation2 + $0x5b] sm:$0x1]
    %1110 = vst [vmem:[#allocation3 + $0x8b] sm:$0x1] %v1109
    %v1111 = vld [vmem:[#allocation2 + $0x5c] sm:$0x1]
    %1112 = vst [vmem:[#allocation3 + $0x93] sm:$0x1] %v1111
    %v1113 = vld [vmem:[#allocation2 + $0x5d] sm:$0x1]
    %1114 = vst [vmem:[#allocation3 + $0x9b] sm:$0x1] %v1113
    %v1115 = vld [vmem:[#allocation2 + $0x5e] sm:$0x1]
    %1116 = vst [vmem:[#allocation3 + $0xa3] sm:$0x1] %v1115
    %v1117 = vld [vmem:[#allocation2 + $0x5f] sm:$0x1]
    %1118 = vst [vmem:[#allocation3 + $0xab] sm:$0x1] %v1117
    %v1119 = vld [vmem:[#allocation2 + $0x60] sm:$0x1]
    %1120 = vst [vmem:[#allocation3 + $0xb3] sm:$0x1] %v1119
    %v1121 = vld [vmem:[#allocation2 + $0x61] sm:$0x1]
    %1122 = vst [vmem:[#allocation3 + $0xbb] sm:$0x1] %v1121
    %v1123 = vld [vmem:[#allocation2 + $0x62] sm:$0x1]
    %1124 = vst [vmem:[#allocation3 + $0xc3] sm:$0x1] %v1123
    %v1125 = vld [vmem:[#allocation2 + $0x63] sm:$0x1]
    %1126 = vst [vmem:[#allocation3 + $0xcb] sm:$0x1] %v1125
    %v1127 = vld [vmem:[#allocation2 + $0x64] sm:$0x1]
    %1128 = vst [vmem:[#allocation3 + $0xc] sm:$0x1] %v1127
    %v1129 = vld [vmem:[#allocation2 + $0x65] sm:$0x1]
    %1130 = vst [vmem:[#allocation3 + $0x14] sm:$0x1] %v1129
    %v1131 = vld [vmem:[#allocation2 + $0x66] sm:$0x1]
    %1132 = vst [vmem:[#allocation3 + $0x1c] sm:$0x1] %v1131
    %v1133 = vld [vmem:[#allocation2 + $0x67] sm:$0x1]
    %1134 = vst [vmem:[#allocation3 + $0x24] sm:$0x1] %v1133
    %v1135 = vld [vmem:[#allocation2 + $0x68] sm:$0x1]
    %1136 = vst [vmem:[#allocation3 + $0x2c] sm:$0x1] %v1135
    %v1137 = vld [vmem:[#allocation2 + $0x69] sm:$0x1]
    %1138 = vst [vmem:[#allocation3 + $0x34] sm:$0x1] %v1137
    %v1139 = vld [vmem:[#allocation2 + $0x6a] sm:$0x1]
    %1140 = vst [vmem:[#allocation3 + $0x3c] sm:$0x1] %v1139
    %v1141 = vld [vmem:[#allocation2 + $0x6b] sm:$0x1]
    %1142 = vst [vmem:[#allocation3 + $0x44] sm:$0x1] %v1141
    %v1143 = vld [vmem:[#allocation2 + $0x6c] sm:$0x1]
    %1144 = vst [vmem:[#allocation3 + $0x4c] sm:$0x1] %v1143
    %v1145 = vld [vmem:[#allocation2 + $0x6d] sm:$0x1]
    %1146 = vst [vmem:[#allocation3 + $0x54] sm:$0x1] %v1145
    %v1147 = vld [vmem:[#allocation2 + $0x6e] sm:$0x1]
    %1148 = vst [vmem:[#allocation3 + $0x5c] sm:$0x1] %v1147
    %v1149 = vld [vmem:[#allocation2 + $0x6f] sm:$0x1]
    %1150 = vst [vmem:[#allocation3 + $0x64] sm:$0x1] %v1149
    %v1151 = vld [vmem:[#allocation2 + $0x70] sm:$0x1]
    %1152 = vst [vmem:[#allocation3 + $0x6c] sm:$0x1] %v1151
    %v1153 = vld [vmem:[#allocation2 + $0x71] sm:$0x1]
    %1154 = vst [vmem:[#allocation3 + $0x74] sm:$0x1] %v1153
    %v1155 = vld [vmem:[#allocation2 + $0x72] sm:$0x1]
    %1156 = vst [vmem:[#allocation3 + $0x7c] sm:$0x1] %v1155
    %v1157 = vld [vmem:[#allocation2 + $0x73] sm:$0x1]
    %1158 = vst [vmem:[#allocation3 + $0x84] sm:$0x1] %v1157
    %v1159 = vld [vmem:[#allocation2 + $0x74] sm:$0x1]
    %1160 = vst [vmem:[#allocation3 + $0x8c] sm:$0x1] %v1159
    %v1161 = vld [vmem:[#allocation2 + $0x75] sm:$0x1]
    %1162 = vst [vmem:[#allocation3 + $0x94] sm:$0x1] %v1161
    %v1163 = vld [vmem:[#allocation2 + $0x76] sm:$0x1]
    %1164 = vst [vmem:[#allocation3 + $0x9c] sm:$0x1] %v1163
    %v1165 = vld [vmem:[#allocation2 + $0x77] sm:$0x1]
    %1166 = vst [vmem:[#allocation3 + $0xa4] sm:$0x1] %v1165
    %v1167 = vld [vmem:[#allocation2 + $0x78] sm:$0x1]
    %1168 = vst [vmem:[#allocation3 + $0xac] sm:$0x1] %v1167
    %v1169 = vld [vmem:[#allocation2 + $0x79] sm:$0x1]
    %1170 = vst [vmem:[#allocation3 + $0xb4] sm:$0x1] %v1169
    %v1171 = vld [vmem:[#allocation2 + $0x7a] sm:$0x1]
    %1172 = vst [vmem:[#allocation3 + $0xbc] sm:$0x1] %v1171
    %v1173 = vld [vmem:[#allocation2 + $0x7b] sm:$0x1]
    %1174 = vst [vmem:[#allocation3 + $0xc4] sm:$0x1] %v1173
    %v1175 = vld [vmem:[#allocation2 + $0x7c] sm:$0x1]
    %1176 = vst [vmem:[#allocation3 + $0xcc] sm:$0x1] %v1175
    %v1177 = vld [vmem:[#allocation2 + $0x7d] sm:$0x1]
    %1178 = vst [vmem:[#allocation3 + $0xd] sm:$0x1] %v1177
    %v1179 = vld [vmem:[#allocation2 + $0x7e] sm:$0x1]
    %1180 = vst [vmem:[#allocation3 + $0x15] sm:$0x1] %v1179
    %v1181 = vld [vmem:[#allocation2 + $0x7f] sm:$0x1]
    %1182 = vst [vmem:[#allocation3 + $0x1d] sm:$0x1] %v1181
    %v1183 = vld [vmem:[#allocation2 + $0x80] sm:$0x1]
    %1184 = vst [vmem:[#allocation3 + $0x25] sm:$0x1] %v1183
    %v1185 = vld [vmem:[#allocation2 + $0x81] sm:$0x1]
    %1186 = vst [vmem:[#allocation3 + $0x2d] sm:$0x1] %v1185
    %v1187 = vld [vmem:[#allocation2 + $0x82] sm:$0x1]
    %1188 = vst [vmem:[#allocation3 + $0x35] sm:$0x1] %v1187
    %v1189 = vld [vmem:[#allocation2 + $0x83] sm:$0x1]
    %1190 = vst [vmem:[#allocation3 + $0x3d] sm:$0x1] %v1189
    %v1191 = vld [vmem:[#allocation2 + $0x84] sm:$0x1]
    %1192 = vst [vmem:[#allocation3 + $0x45] sm:$0x1] %v1191
    %v1193 = vld [vmem:[#allocation2 + $0x85] sm:$0x1]
    %1194 = vst [vmem:[#allocation3 + $0x4d] sm:$0x1] %v1193
    %v1195 = vld [vmem:[#allocation2 + $0x86] sm:$0x1]
    %1196 = vst [vmem:[#allocation3 + $0x55] sm:$0x1] %v1195
    %v1197 = vld [vmem:[#allocation2 + $0x87] sm:$0x1]
    %1198 = vst [vmem:[#allocation3 + $0x5d] sm:$0x1] %v1197
    %v1199 = vld [vmem:[#allocation2 + $0x88] sm:$0x1]
    %1200 = vst [vmem:[#allocation3 + $0x65] sm:$0x1] %v1199
    %v1201 = vld [vmem:[#allocation2 + $0x89] sm:$0x1]
    %1202 = vst [vmem:[#allocation3 + $0x6d] sm:$0x1] %v1201
    %v1203 = vld [vmem:[#allocation2 + $0x8a] sm:$0x1]
    %1204 = vst [vmem:[#allocation3 + $0x75] sm:$0x1] %v1203
    %v1205 = vld [vmem:[#allocation2 + $0x8b] sm:$0x1]
    %1206 = vst [vmem:[#allocation3 + $0x7d] sm:$0x1] %v1205
    %v1207 = vld [vmem:[#allocation2 + $0x8c] sm:$0x1]
    %1208 = vst [vmem:[#allocation3 + $0x85] sm:$0x1] %v1207
    %v1209 = vld [vmem:[#allocation2 + $0x8d] sm:$0x1]
    %1210 = vst [vmem:[#allocation3 + $0x8d] sm:$0x1] %v1209
    %v1211 = vld [vmem:[#allocation2 + $0x8e] sm:$0x1]
    %1212 = vst [vmem:[#allocation3 + $0x95] sm:$0x1] %v1211
    %v1213 = vld [vmem:[#allocation2 + $0x8f] sm:$0x1]
    %1214 = vst [vmem:[#allocation3 + $0x9d] sm:$0x1] %v1213
    %v1215 = vld [vmem:[#allocation2 + $0x90] sm:$0x1]
    %1216 = vst [vmem:[#allocation3 + $0xa5] sm:$0x1] %v1215
    %v1217 = vld [vmem:[#allocation2 + $0x91] sm:$0x1]
    %1218 = vst [vmem:[#allocation3 + $0xad] sm:$0x1] %v1217
    %v1219 = vld [vmem:[#allocation2 + $0x92] sm:$0x1]
    %1220 = vst [vmem:[#allocation3 + $0xb5] sm:$0x1] %v1219
    %v1221 = vld [vmem:[#allocation2 + $0x93] sm:$0x1]
    %1222 = vst [vmem:[#allocation3 + $0xbd] sm:$0x1] %v1221
    %v1223 = vld [vmem:[#allocation2 + $0x94] sm:$0x1]
    %1224 = vst [vmem:[#allocation3 + $0xc5] sm:$0x1] %v1223
    %v1225 = vld [vmem:[#allocation2 + $0x95] sm:$0x1]
    %1226 = vst [vmem:[#allocation3 + $0xcd] sm:$0x1] %v1225
    %v1227 = vld [vmem:[#allocation2 + $0x96] sm:$0x1]
    %1228 = vst [vmem:[#allocation3 + $0xe] sm:$0x1] %v1227
    %v1229 = vld [vmem:[#allocation2 + $0x97] sm:$0x1]
    %1230 = vst [vmem:[#allocation3 + $0x16] sm:$0x1] %v1229
    %v1231 = vld [vmem:[#allocation2 + $0x98] sm:$0x1]
    %1232 = vst [vmem:[#allocation3 + $0x1e] sm:$0x1] %v1231
    %v1233 = vld [vmem:[#allocation2 + $0x99] sm:$0x1]
    %1234 = vst [vmem:[#allocation3 + $0x26] sm:$0x1] %v1233
    %v1235 = vld [vmem:[#allocation2 + $0x9a] sm:$0x1]
    %1236 = vst [vmem:[#allocation3 + $0x2e] sm:$0x1] %v1235
    %v1237 = vld [vmem:[#allocation2 + $0x9b] sm:$0x1]
    %1238 = vst [vmem:[#allocation3 + $0x36] sm:$0x1] %v1237
    %v1239 = vld [vmem:[#allocation2 + $0x9c] sm:$0x1]
    %1240 = vst [vmem:[#allocation3 + $0x3e] sm:$0x1] %v1239
    %v1241 = vld [vmem:[#allocation2 + $0x9d] sm:$0x1]
    %1242 = vst [vmem:[#allocation3 + $0x46] sm:$0x1] %v1241
    %v1243 = vld [vmem:[#allocation2 + $0x9e] sm:$0x1]
    %1244 = vst [vmem:[#allocation3 + $0x4e] sm:$0x1] %v1243
    %v1245 = vld [vmem:[#allocation2 + $0x9f] sm:$0x1]
    %1246 = vst [vmem:[#allocation3 + $0x56] sm:$0x1] %v1245
    %v1247 = vld [vmem:[#allocation2 + $0xa0] sm:$0x1]
    %1248 = vst [vmem:[#allocation3 + $0x5e] sm:$0x1] %v1247
    %v1249 = vld [vmem:[#allocation2 + $0xa1] sm:$0x1]
    %1250 = vst [vmem:[#allocation3 + $0x66] sm:$0x1] %v1249
    %v1251 = vld [vmem:[#allocation2 + $0xa2] sm:$0x1]
    %1252 = vst [vmem:[#allocation3 + $0x6e] sm:$0x1] %v1251
    %v1253 = vld [vmem:[#allocation2 + $0xa3] sm:$0x1]
    %1254 = vst [vmem:[#allocation3 + $0x76] sm:$0x1] %v1253
    %v1255 = vld [vmem:[#allocation2 + $0xa4] sm:$0x1]
    %1256 = vst [vmem:[#allocation3 + $0x7e] sm:$0x1] %v1255
    %v1257 = vld [vmem:[#allocation2 + $0xa5] sm:$0x1]
    %1258 = vst [vmem:[#allocation3 + $0x86] sm:$0x1] %v1257
    %v1259 = vld [vmem:[#allocation2 + $0xa6] sm:$0x1]
    %1260 = vst [vmem:[#allocation3 + $0x8e] sm:$0x1] %v1259
    %v1261 = vld [vmem:[#allocation2 + $0xa7] sm:$0x1]
    %1262 = vst [vmem:[#allocation3 + $0x96] sm:$0x1] %v1261
    %v1263 = vld [vmem:[#allocation2 + $0xa8] sm:$0x1]
    %1264 = vst [vmem:[#allocation3 + $0x9e] sm:$0x1] %v1263
    %v1265 = vld [vmem:[#allocation2 + $0xa9] sm:$0x1]
    %1266 = vst [vmem:[#allocation3 + $0xa6] sm:$0x1] %v1265
    %v1267 = vld [vmem:[#allocation2 + $0xaa] sm:$0x1]
    %1268 = vst [vmem:[#allocation3 + $0xae] sm:$0x1] %v1267
    %v1269 = vld [vmem:[#allocation2 + $0xab] sm:$0x1]
    %1270 = vst [vmem:[#allocation3 + $0xb6] sm:$0x1] %v1269
    %v1271 = vld [vmem:[#allocation2 + $0xac] sm:$0x1]
    %1272 = vst [vmem:[#allocation3 + $0xbe] sm:$0x1] %v1271
    %v1273 = vld [vmem:[#allocation2 + $0xad] sm:$0x1]
    %1274 = vst [vmem:[#allocation3 + $0xc6] sm:$0x1] %v1273
    %v1275 = vld [vmem:[#allocation2 + $0xae] sm:$0x1]
    %1276 = vst [vmem:[#allocation3 + $0xce] sm:$0x1] %v1275
    %v1277 = vld [vmem:[#allocation2 + $0xaf] sm:$0x1]
    %1278 = vst [vmem:[#allocation3 + $0xf] sm:$0x1] %v1277
    %v1279 = vld [vmem:[#allocation2 + $0xb0] sm:$0x1]
    %1280 = vst [vmem:[#allocation3 + $0x17] sm:$0x1] %v1279
    %v1281 = vld [vmem:[#allocation2 + $0xb1] sm:$0x1]
    %1282 = vst [vmem:[#allocation3 + $0x1f] sm:$0x1] %v1281
    %v1283 = vld [vmem:[#allocation2 + $0xb2] sm:$0x1]
    %1284 = vst [vmem:[#allocation3 + $0x27] sm:$0x1] %v1283
    %v1285 = vld [vmem:[#allocation2 + $0xb3] sm:$0x1]
    %1286 = vst [vmem:[#allocation3 + $0x2f] sm:$0x1] %v1285
    %v1287 = vld [vmem:[#allocation2 + $0xb4] sm:$0x1]
    %1288 = vst [vmem:[#allocation3 + $0x37] sm:$0x1] %v1287
    %v1289 = vld [vmem:[#allocation2 + $0xb5] sm:$0x1]
    %1290 = vst [vmem:[#allocation3 + $0x3f] sm:$0x1] %v1289
    %v1291 = vld [vmem:[#allocation2 + $0xb6] sm:$0x1]
    %1292 = vst [vmem:[#allocation3 + $0x47] sm:$0x1] %v1291
    %v1293 = vld [vmem:[#allocation2 + $0xb7] sm:$0x1]
    %1294 = vst [vmem:[#allocation3 + $0x4f] sm:$0x1] %v1293
    %v1295 = vld [vmem:[#allocation2 + $0xb8] sm:$0x1]
    %1296 = vst [vmem:[#allocation3 + $0x57] sm:$0x1] %v1295
    %v1297 = vld [vmem:[#allocation2 + $0xb9] sm:$0x1]
    %1298 = vst [vmem:[#allocation3 + $0x5f] sm:$0x1] %v1297
    %v1299 = vld [vmem:[#allocation2 + $0xba] sm:$0x1]
    %1300 = vst [vmem:[#allocation3 + $0x67] sm:$0x1] %v1299
    %v1301 = vld [vmem:[#allocation2 + $0xbb] sm:$0x1]
    %1302 = vst [vmem:[#allocation3 + $0x6f] sm:$0x1] %v1301
    %v1303 = vld [vmem:[#allocation2 + $0xbc] sm:$0x1]
    %1304 = vst [vmem:[#allocation3 + $0x77] sm:$0x1] %v1303
    %v1305 = vld [vmem:[#allocation2 + $0xbd] sm:$0x1]
    %1306 = vst [vmem:[#allocation3 + $0x7f] sm:$0x1] %v1305
    %v1307 = vld [vmem:[#allocation2 + $0xbe] sm:$0x1]
    %1308 = vst [vmem:[#allocation3 + $0x87] sm:$0x1] %v1307
    %v1309 = vld [vmem:[#allocation2 + $0xbf] sm:$0x1]
    %1310 = vst [vmem:[#allocation3 + $0x8f] sm:$0x1] %v1309
    %v1311 = vld [vmem:[#allocation2 + $0xc0] sm:$0x1]
    %1312 = vst [vmem:[#allocation3 + $0x97] sm:$0x1] %v1311
    %v1313 = vld [vmem:[#allocation2 + $0xc1] sm:$0x1]
    %1314 = vst [vmem:[#allocation3 + $0x9f] sm:$0x1] %v1313
    %v1315 = vld [vmem:[#allocation2 + $0xc2] sm:$0x1]
    %1316 = vst [vmem:[#allocation3 + $0xa7] sm:$0x1] %v1315
    %v1317 = vld [vmem:[#allocation2 + $0xc3] sm:$0x1]
    %1318 = vst [vmem:[#allocation3 + $0xaf] sm:$0x1] %v1317
    %v1319 = vld [vmem:[#allocation2 + $0xc4] sm:$0x1]
    %1320 = vst [vmem:[#allocation3 + $0xb7] sm:$0x1] %v1319
    %v1321 = vld [vmem:[#allocation2 + $0xc5] sm:$0x1]
    %1322 = vst [vmem:[#allocation3 + $0xbf] sm:$0x1] %v1321
    %v1323 = vld [vmem:[#allocation2 + $0xc6] sm:$0x1]
    %1324 = vst [vmem:[#allocation3 + $0xc7] sm:$0x1] %v1323
    %v1325 = vld [vmem:[#allocation2 + $0xc7] sm:$0x1]
    %1326 = vst [vmem:[#allocation3 + $0xcf] sm:$0x1] %v1325
    %v1327 = vld [vmem:[#allocation3] sm:$0xff]
    %v1328 = vld [vmem:[#allocation3 + $0x8] sm:$0xff]
    %v1329 = vld [vmem:[#allocation3 + $0x10] sm:$0xff]
    %v1330 = vld [vmem:[#allocation3 + $0x18] sm:$0xff]
    %v1331 = vld [vmem:[#allocation3 + $0x20] sm:$0xff]
    %v1332 = vld [vmem:[#allocation3 + $0x28] sm:$0xff]
    %v1333 = vld [vmem:[#allocation3 + $0x30] sm:$0xff]
    %v1334 = vld [vmem:[#allocation3 + $0x38] sm:$0xff]
    %v1335 = vld [vmem:[#allocation3 + $0x40] sm:$0xff]
    %v1336 = vld [vmem:[#allocation3 + $0x48] sm:$0xff]
    %v1337 = vld [vmem:[#allocation3 + $0x50] sm:$0xff]
    %v1338 = vld [vmem:[#allocation3 + $0x58] sm:$0xff]
    %v1339 = vld [vmem:[#allocation3 + $0x60] sm:$0xff]
    %v1340 = vld [vmem:[#allocation3 + $0x68] sm:$0xff]
    %v1341 = vld [vmem:[#allocation3 + $0x70] sm:$0xff]
    %v1342 = vld [vmem:[#allocation3 + $0x78] sm:$0xff]
    %v1343 = vld [vmem:[#allocation3 + $0x80] sm:$0xff]
    %v1344 = vld [vmem:[#allocation3 + $0x88] sm:$0xff]
    %v1345 = vld [vmem:[#allocation3 + $0x90] sm:$0xff]
    %v1346 = vld [vmem:[#allocation3 + $0x98] sm:$0xff]
    %v1347 = vld [vmem:[#allocation3 + $0xa0] sm:$0xff]
    %v1348 = vld [vmem:[#allocation3 + $0xa8] sm:$0xff]
    %v1349 = vld [vmem:[#allocation3 + $0xb0] sm:$0xff]
    %v1350 = vpack.c.bf16 %v1328, %v1327
    %v1351 = vpack.c.bf16 %v1330, %v1329
    %v1352 = vpack.c.bf16 %v1332, %v1331
    %v1353 = vpack.c.bf16 %v1334, %v1333
    %v1354 = vpack.c.bf16 %v1336, %v1335
    %v1355 = vpack.c.bf16 %v1338, %v1337
    %v1356 = vpack.c.bf16 %v1340, %v1339
    %v1357 = vpack.c.bf16 %v1342, %v1341
    %v1358 = vpack.c.bf16 %v1344, %v1343
    %v1359 = vpack.c.bf16 %v1346, %v1345
    %v1360 = vpack.c.bf16 %v1348, %v1347
    %v1361 = vpack.c.bf16 %v1349, %v1349
    %v1374 = vunpack.c.l.b16 %v1350
    %v1375 = vunpack.c.h.b16 %v1350
    %v1376 = vunpack.c.l.b16 %v1351
    %v1377 = vunpack.c.h.b16 %v1351
    %v1378 = vunpack.c.l.b16 %v1352
    %v1379 = vunpack.c.h.b16 %v1352
    %v1380 = vunpack.c.l.b16 %v1353
    %v1381 = vunpack.c.h.b16 %v1353
    %v1382 = vunpack.c.l.b16 %v1354
    %v1383 = vunpack.c.h.b16 %v1354
    %v1384 = vunpack.c.l.b16 %v1355
    %v1385 = vunpack.c.h.b16 %v1355
    %v1386 = vunpack.c.l.b16 %v1356
    %v1387 = vunpack.c.h.b16 %v1356
    %v1388 = vunpack.c.l.b16 %v1357
    %v1389 = vunpack.c.h.b16 %v1357
    %v1390 = vunpack.c.l.b16 %v1358
    %v1391 = vunpack.c.h.b16 %v1358
    %v1392 = vunpack.c.l.b16 %v1359
    %v1393 = vunpack.c.h.b16 %v1359
    %v1394 = vunpack.c.l.b16 %v1360
    %v1395 = vunpack.c.h.b16 %v1360
    %v1396 = vunpack.c.l.b16 %v1361
    %v1397 = vpack.c.b16 %v1374, %v1374
    %v1398 = vpack.c.b16 %v1375, %v1375
    %v1399 = vpack.c.b16 %v1376, %v1376
    %v1400 = vpack.c.b16 %v1377, %v1377
    %v1401 = vpack.c.b16 %v1378, %v1378
    %v1402 = vpack.c.b16 %v1379, %v1379
    %v1403 = vpack.c.b16 %v1380, %v1380
    %v1404 = vpack.c.b16 %v1381, %v1381
    %v1405 = vpack.c.b16 %v1382, %v1382
    %v1406 = vpack.c.b16 %v1383, %v1383
    %v1407 = vpack.c.b16 %v1384, %v1384
    %v1408 = vpack.c.b16 %v1385, %v1385
    %v1409 = vpack.c.b16 %v1386, %v1386
    %v1410 = vpack.c.b16 %v1387, %v1387
    %v1411 = vpack.c.b16 %v1388, %v1388
    %v1412 = vpack.c.b16 %v1389, %v1389
    %v1413 = vpack.c.b16 %v1390, %v1390
    %v1414 = vpack.c.b16 %v1391, %v1391
    %v1415 = vpack.c.b16 %v1392, %v1392
    %v1416 = vpack.c.b16 %v1393, %v1393
    %v1417 = vpack.c.b16 %v1394, %v1394
    %v1418 = vpack.c.b16 %v1395, %v1395
    %v1419 = vpack.c.b16 %v1396, %v1396
    %1443 = vst [vmem:[#allocation5] sm:$0xf] %v1397
    %1444 = vst [vmem:[#allocation5 + $0x14] sm:$0xf] %v1398
    %1445 = vst [vmem:[#allocation5 + $0x28] sm:$0xf] %v1399
    %1446 = vst [vmem:[#allocation5 + $0x3c] sm:$0xf] %v1400
    %1447 = vst [vmem:[#allocation5 + $0x50] sm:$0xf] %v1401
    %1448 = vst [vmem:[#allocation5 + $0x64] sm:$0xf] %v1402
    %1449 = vst [vmem:[#allocation5 + $0x78] sm:$0xf] %v1403
    %1450 = vst [vmem:[#allocation5 + $0x8c] sm:$0xf] %v1404
    %1451 = vst [vmem:[#allocation5 + $0xa0] sm:$0xf] %v1405
    %1452 = vst [vmem:[#allocation5 + $0xb4] sm:$0xf] %v1406
    %1453 = vst [vmem:[#allocation5 + $0xc8] sm:$0xf] %v1407
    %1454 = vst [vmem:[#allocation5 + $0xdc] sm:$0xf] %v1408
    %1455 = vst [vmem:[#allocation5 + $0xf0] sm:$0xf] %v1409
    %1456 = vst [vmem:[#allocation5 + $0x104] sm:$0xf] %v1410
    %1457 = vst [vmem:[#allocation5 + $0x118] sm:$0xf] %v1411
    %1458 = vst [vmem:[#allocation5 + $0x12c] sm:$0xf] %v1412
    %1459 = vst [vmem:[#allocation5 + $0x140] sm:$0xf] %v1413
    %1460 = vst [vmem:[#allocation5 + $0x154] sm:$0xf] %v1414
    %1461 = vst [vmem:[#allocation5 + $0x168] sm:$0xf] %v1415
    %1462 = vst [vmem:[#allocation5 + $0x17c] sm:$0xf] %v1416
    %1463 = vst [vmem:[#allocation5 + $0x190] sm:$0xf] %v1417
    %1464 = vst [vmem:[#allocation5 + $0x1a4] sm:$0xf] %v1418
    %1465 = vst [vmem:[#allocation5 + $0x1b8] sm:$0xf] %v1419
    %v1466 = vld [vmem:[#allocation3 + $0x8] sm:$0xff]
    %v1467 = vld [vmem:[#allocation3 + $0x10] sm:$0xff]
    %v1468 = vld [vmem:[#allocation3 + $0x18] sm:$0xff]
    %v1469 = vld [vmem:[#allocation3 + $0x20] sm:$0xff]
    %v1470 = vld [vmem:[#allocation3 + $0x28] sm:$0xff]
    %v1471 = vld [vmem:[#allocation3 + $0x30] sm:$0xff]
    %v1472 = vld [vmem:[#allocation3 + $0x38] sm:$0xff]
    %v1473 = vld [vmem:[#allocation3 + $0x40] sm:$0xff]
    %v1474 = vld [vmem:[#allocation3 + $0x48] sm:$0xff]
    %v1475 = vld [vmem:[#allocation3 + $0x50] sm:$0xff]
    %v1476 = vld [vmem:[#allocation3 + $0x58] sm:$0xff]
    %v1477 = vld [vmem:[#allocation3 + $0x60] sm:$0xff]
    %v1478 = vld [vmem:[#allocation3 + $0x68] sm:$0xff]
    %v1479 = vld [vmem:[#allocation3 + $0x70] sm:$0xff]
    %v1480 = vld [vmem:[#allocation3 + $0x78] sm:$0xff]
    %v1481 = vld [vmem:[#allocation3 + $0x80] sm:$0xff]
    %v1482 = vld [vmem:[#allocation3 + $0x88] sm:$0xff]
    %v1483 = vld [vmem:[#allocation3 + $0x90] sm:$0xff]
    %v1484 = vld [vmem:[#allocation3 + $0x98] sm:$0xff]
    %v1485 = vld [vmem:[#allocation3 + $0xa0] sm:$0xff]
    %v1486 = vld [vmem:[#allocation3 + $0xa8] sm:$0xff]
    %v1487 = vld [vmem:[#allocation3 + $0xb0] sm:$0xff]
    %v1488 = vld [vmem:[#allocation3 + $0xb8] sm:$0xff]
    %v1489 = vpack.c.bf16 %v1467, %v1466
    %v1490 = vpack.c.bf16 %v1469, %v1468
    %v1491 = vpack.c.bf16 %v1471, %v1470
    %v1492 = vpack.c.bf16 %v1473, %v1472
    %v1493 = vpack.c.bf16 %v1475, %v1474
    %v1494 = vpack.c.bf16 %v1477, %v1476
    %v1495 = vpack.c.bf16 %v1479, %v1478
    %v1496 = vpack.c.bf16 %v1481, %v1480
    %v1497 = vpack.c.bf16 %v1483, %v1482
    %v1498 = vpack.c.bf16 %v1485, %v1484
    %v1499 = vpack.c.bf16 %v1487, %v1486
    %v1500 = vpack.c.bf16 %v1488, %v1488
    %v1513 = vunpack.c.l.b16 %v1489
    %v1514 = vunpack.c.h.b16 %v1489
    %v1515 = vunpack.c.l.b16 %v1490
    %v1516 = vunpack.c.h.b16 %v1490
    %v1517 = vunpack.c.l.b16 %v1491
    %v1518 = vunpack.c.h.b16 %v1491
    %v1519 = vunpack.c.l.b16 %v1492
    %v1520 = vunpack.c.h.b16 %v1492
    %v1521 = vunpack.c.l.b16 %v1493
    %v1522 = vunpack.c.h.b16 %v1493
    %v1523 = vunpack.c.l.b16 %v1494
    %v1524 = vunpack.c.h.b16 %v1494
    %v1525 = vunpack.c.l.b16 %v1495
    %v1526 = vunpack.c.h.b16 %v1495
    %v1527 = vunpack.c.l.b16 %v1496
    %v1528 = vunpack.c.h.b16 %v1496
    %v1529 = vunpack.c.l.b16 %v1497
    %v1530 = vunpack.c.h.b16 %v1497
    %v1531 = vunpack.c.l.b16 %v1498
    %v1532 = vunpack.c.h.b16 %v1498
    %v1533 = vunpack.c.l.b16 %v1499
    %v1534 = vunpack.c.h.b16 %v1499
    %v1535 = vunpack.c.l.b16 %v1500
    %v1536 = vpack.c.b16 %v1513, %v1513
    %v1537 = vpack.c.b16 %v1514, %v1514
    %v1538 = vpack.c.b16 %v1515, %v1515
    %v1539 = vpack.c.b16 %v1516, %v1516
    %v1540 = vpack.c.b16 %v1517, %v1517
    %v1541 = vpack.c.b16 %v1518, %v1518
    %v1542 = vpack.c.b16 %v1519, %v1519
    %v1543 = vpack.c.b16 %v1520, %v1520
    %v1544 = vpack.c.b16 %v1521, %v1521
    %v1545 = vpack.c.b16 %v1522, %v1522
    %v1546 = vpack.c.b16 %v1523, %v1523
    %v1547 = vpack.c.b16 %v1524, %v1524
    %v1548 = vpack.c.b16 %v1525, %v1525
    %v1549 = vpack.c.b16 %v1526, %v1526
    %v1550 = vpack.c.b16 %v1527, %v1527
    %v1551 = vpack.c.b16 %v1528, %v1528
    %v1552 = vpack.c.b16 %v1529, %v1529
    %v1553 = vpack.c.b16 %v1530, %v1530
    %v1554 = vpack.c.b16 %v1531, %v1531
    %v1555 = vpack.c.b16 %v1532, %v1532
    %v1556 = vpack.c.b16 %v1533, %v1533
    %v1557 = vpack.c.b16 %v1534, %v1534
    %v1558 = vpack.c.b16 %v1535, %v1535
    %1582 = vst [vmem:[#allocation5 + $0x4] sm:$0xf] %v1536
    %1583 = vst [vmem:[#allocation5 + $0x18] sm:$0xf] %v1537
    %1584 = vst [vmem:[#allocation5 + $0x2c] sm:$0xf] %v1538
    %1585 = vst [vmem:[#allocation5 + $0x40] sm:$0xf] %v1539
    %1586 = vst [vmem:[#allocation5 + $0x54] sm:$0xf] %v1540
    %1587 = vst [vmem:[#allocation5 + $0x68] sm:$0xf] %v1541
    %1588 = vst [vmem:[#allocation5 + $0x7c] sm:$0xf] %v1542
    %1589 = vst [vmem:[#allocation5 + $0x90] sm:$0xf] %v1543
    %1590 = vst [vmem:[#allocation5 + $0xa4] sm:$0xf] %v1544
    %1591 = vst [vmem:[#allocation5 + $0xb8] sm:$0xf] %v1545
    %1592 = vst [vmem:[#allocation5 + $0xcc] sm:$0xf] %v1546
    %1593 = vst [vmem:[#allocation5 + $0xe0] sm:$0xf] %v1547
    %1594 = vst [vmem:[#allocation5 + $0xf4] sm:$0xf] %v1548
    %1595 = vst [vmem:[#allocation5 + $0x108] sm:$0xf] %v1549
    %1596 = vst [vmem:[#allocation5 + $0x11c] sm:$0xf] %v1550
    %1597 = vst [vmem:[#allocation5 + $0x130] sm:$0xf] %v1551
    %1598 = vst [vmem:[#allocation5 + $0x144] sm:$0xf] %v1552
    %1599 = vst [vmem:[#allocation5 + $0x158] sm:$0xf] %v1553
    %1600 = vst [vmem:[#allocation5 + $0x16c] sm:$0xf] %v1554
    %1601 = vst [vmem:[#allocation5 + $0x180] sm:$0xf] %v1555
    %1602 = vst [vmem:[#allocation5 + $0x194] sm:$0xf] %v1556
    %1603 = vst [vmem:[#allocation5 + $0x1a8] sm:$0xf] %v1557
    %1604 = vst [vmem:[#allocation5 + $0x1bc] sm:$0xf] %v1558
    %v1605 = vld [vmem:[#allocation3 + $0x10] sm:$0xff]
    %v1606 = vld [vmem:[#allocation3 + $0x18] sm:$0xff]
    %v1607 = vld [vmem:[#allocation3 + $0x20] sm:$0xff]
    %v1608 = vld [vmem:[#allocation3 + $0x28] sm:$0xff]
    %v1609 = vld [vmem:[#allocation3 + $0x30] sm:$0xff]
    %v1610 = vld [vmem:[#allocation3 + $0x38] sm:$0xff]
    %v1611 = vld [vmem:[#allocation3 + $0x40] sm:$0xff]
    %v1612 = vld [vmem:[#allocation3 + $0x48] sm:$0xff]
    %v1613 = vld [vmem:[#allocation3 + $0x50] sm:$0xff]
    %v1614 = vld [vmem:[#allocation3 + $0x58] sm:$0xff]
    %v1615 = vld [vmem:[#allocation3 + $0x60] sm:$0xff]
    %v1616 = vld [vmem:[#allocation3 + $0x68] sm:$0xff]
    %v1617 = vld [vmem:[#allocation3 + $0x70] sm:$0xff]
    %v1618 = vld [vmem:[#allocation3 + $0x78] sm:$0xff]
    %v1619 = vld [vmem:[#allocation3 + $0x80] sm:$0xff]
    %v1620 = vld [vmem:[#allocation3 + $0x88] sm:$0xff]
    %v1621 = vld [vmem:[#allocation3 + $0x90] sm:$0xff]
    %v1622 = vld [vmem:[#allocation3 + $0x98] sm:$0xff]
    %v1623 = vld [vmem:[#allocation3 + $0xa0] sm:$0xff]
    %v1624 = vld [vmem:[#allocation3 + $0xa8] sm:$0xff]
    %v1625 = vld [vmem:[#allocation3 + $0xb0] sm:$0xff]
    %v1626 = vld [vmem:[#allocation3 + $0xb8] sm:$0xff]
    %v1627 = vld [vmem:[#allocation3 + $0xc0] sm:$0xff]
    %v1628 = vpack.c.bf16 %v1606, %v1605
    %v1629 = vpack.c.bf16 %v1608, %v1607
    %v1630 = vpack.c.bf16 %v1610, %v1609
    %v1631 = vpack.c.bf16 %v1612, %v1611
    %v1632 = vpack.c.bf16 %v1614, %v1613
    %v1633 = vpack.c.bf16 %v1616, %v1615
    %v1634 = vpack.c.bf16 %v1618, %v1617
    %v1635 = vpack.c.bf16 %v1620, %v1619
    %v1636 = vpack.c.bf16 %v1622, %v1621
    %v1637 = vpack.c.bf16 %v1624, %v1623
    %v1638 = vpack.c.bf16 %v1626, %v1625
    %v1639 = vpack.c.bf16 %v1627, %v1627
    %v1652 = vunpack.c.l.b16 %v1628
    %v1653 = vunpack.c.h.b16 %v1628
    %v1654 = vunpack.c.l.b16 %v1629
    %v1655 = vunpack.c.h.b16 %v1629
    %v1656 = vunpack.c.l.b16 %v1630
    %v1657 = vunpack.c.h.b16 %v1630
    %v1658 = vunpack.c.l.b16 %v1631
    %v1659 = vunpack.c.h.b16 %v1631
    %v1660 = vunpack.c.l.b16 %v1632
    %v1661 = vunpack.c.h.b16 %v1632
    %v1662 = vunpack.c.l.b16 %v1633
    %v1663 = vunpack.c.h.b16 %v1633
    %v1664 = vunpack.c.l.b16 %v1634
    %v1665 = vunpack.c.h.b16 %v1634
    %v1666 = vunpack.c.l.b16 %v1635
    %v1667 = vunpack.c.h.b16 %v1635
    %v1668 = vunpack.c.l.b16 %v1636
    %v1669 = vunpack.c.h.b16 %v1636
    %v1670 = vunpack.c.l.b16 %v1637
    %v1671 = vunpack.c.h.b16 %v1637
    %v1672 = vunpack.c.l.b16 %v1638
    %v1673 = vunpack.c.h.b16 %v1638
    %v1674 = vunpack.c.l.b16 %v1639
    %v1675 = vpack.c.b16 %v1652, %v1652
    %v1676 = vpack.c.b16 %v1653, %v1653
    %v1677 = vpack.c.b16 %v1654, %v1654
    %v1678 = vpack.c.b16 %v1655, %v1655
    %v1679 = vpack.c.b16 %v1656, %v1656
    %v1680 = vpack.c.b16 %v1657, %v1657
    %v1681 = vpack.c.b16 %v1658, %v1658
    %v1682 = vpack.c.b16 %v1659, %v1659
    %v1683 = vpack.c.b16 %v1660, %v1660
    %v1684 = vpack.c.b16 %v1661, %v1661
    %v1685 = vpack.c.b16 %v1662, %v1662
    %v1686 = vpack.c.b16 %v1663, %v1663
    %v1687 = vpack.c.b16 %v1664, %v1664
    %v1688 = vpack.c.b16 %v1665, %v1665
    %v1689 = vpack.c.b16 %v1666, %v1666
    %v1690 = vpack.c.b16 %v1667, %v1667
    %v1691 = vpack.c.b16 %v1668, %v1668
    %v1692 = vpack.c.b16 %v1669, %v1669
    %v1693 = vpack.c.b16 %v1670, %v1670
    %v1694 = vpack.c.b16 %v1671, %v1671
    %v1695 = vpack.c.b16 %v1672, %v1672
    %v1696 = vpack.c.b16 %v1673, %v1673
    %v1697 = vpack.c.b16 %v1674, %v1674
    %1721 = vst [vmem:[#allocation5 + $0x8] sm:$0xf] %v1675
    %1722 = vst [vmem:[#allocation5 + $0x1c] sm:$0xf] %v1676
    %1723 = vst [vmem:[#allocation5 + $0x30] sm:$0xf] %v1677
    %1724 = vst [vmem:[#allocation5 + $0x44] sm:$0xf] %v1678
    %1725 = vst [vmem:[#allocation5 + $0x58] sm:$0xf] %v1679
    %1726 = vst [vmem:[#allocation5 + $0x6c] sm:$0xf] %v1680
    %1727 = vst [vmem:[#allocation5 + $0x80] sm:$0xf] %v1681
    %1728 = vst [vmem:[#allocation5 + $0x94] sm:$0xf] %v1682
    %1729 = vst [vmem:[#allocation5 + $0xa8] sm:$0xf] %v1683
    %1730 = vst [vmem:[#allocation5 + $0xbc] sm:$0xf] %v1684
    %1731 = vst [vmem:[#allocation5 + $0xd0] sm:$0xf] %v1685
    %1732 = vst [vmem:[#allocation5 + $0xe4] sm:$0xf] %v1686
    %1733 = vst [vmem:[#allocation5 + $0xf8] sm:$0xf] %v1687
    %1734 = vst [vmem:[#allocation5 + $0x10c] sm:$0xf] %v1688
    %1735 = vst [vmem:[#allocation5 + $0x120] sm:$0xf] %v1689
    %1736 = vst [vmem:[#allocation5 + $0x134] sm:$0xf] %v1690
    %1737 = vst [vmem:[#allocation5 + $0x148] sm:$0xf] %v1691
    %1738 = vst [vmem:[#allocation5 + $0x15c] sm:$0xf] %v1692
    %1739 = vst [vmem:[#allocation5 + $0x170] sm:$0xf] %v1693
    %1740 = vst [vmem:[#allocation5 + $0x184] sm:$0xf] %v1694
    %1741 = vst [vmem:[#allocation5 + $0x198] sm:$0xf] %v1695
    %1742 = vst [vmem:[#allocation5 + $0x1ac] sm:$0xf] %v1696
    %1743 = vst [vmem:[#allocation5 + $0x1c0] sm:$0xf] %v1697
    %v1744 = vld [vmem:[#allocation3 + $0x18] sm:$0xff]
    %v1745 = vld [vmem:[#allocation3 + $0x20] sm:$0xff]
    %v1746 = vld [vmem:[#allocation3 + $0x28] sm:$0xff]
    %v1747 = vld [vmem:[#allocation3 + $0x30] sm:$0xff]
    %v1748 = vld [vmem:[#allocation3 + $0x38] sm:$0xff]
    %v1749 = vld [vmem:[#allocation3 + $0x40] sm:$0xff]
    %v1750 = vld [vmem:[#allocation3 + $0x48] sm:$0xff]
    %v1751 = vld [vmem:[#allocation3 + $0x50] sm:$0xff]
    %v1752 = vld [vmem:[#allocation3 + $0x58] sm:$0xff]
    %v1753 = vld [vmem:[#allocation3 + $0x60] sm:$0xff]
    %v1754 = vld [vmem:[#allocation3 + $0x68] sm:$0xff]
    %v1755 = vld [vmem:[#allocation3 + $0x70] sm:$0xff]
    %v1756 = vld [vmem:[#allocation3 + $0x78] sm:$0xff]
    %v1757 = vld [vmem:[#allocation3 + $0x80] sm:$0xff]
    %v1758 = vld [vmem:[#allocation3 + $0x88] sm:$0xff]
    %v1759 = vld [vmem:[#allocation3 + $0x90] sm:$0xff]
    %v1760 = vld [vmem:[#allocation3 + $0x98] sm:$0xff]
    %v1761 = vld [vmem:[#allocation3 + $0xa0] sm:$0xff]
    %v1762 = vld [vmem:[#allocation3 + $0xa8] sm:$0xff]
    %v1763 = vld [vmem:[#allocation3 + $0xb0] sm:$0xff]
    %v1764 = vld [vmem:[#allocation3 + $0xb8] sm:$0xff]
    %v1765 = vld [vmem:[#allocation3 + $0xc0] sm:$0xff]
    %v1766 = vld [vmem:[#allocation3 + $0xc8] sm:$0xff]
    %v1767 = vpack.c.bf16 %v1745, %v1744
    %v1768 = vpack.c.bf16 %v1747, %v1746
    %v1769 = vpack.c.bf16 %v1749, %v1748
    %v1770 = vpack.c.bf16 %v1751, %v1750
    %v1771 = vpack.c.bf16 %v1753, %v1752
    %v1772 = vpack.c.bf16 %v1755, %v1754
    %v1773 = vpack.c.bf16 %v1757, %v1756
    %v1774 = vpack.c.bf16 %v1759, %v1758
    %v1775 = vpack.c.bf16 %v1761, %v1760
    %v1776 = vpack.c.bf16 %v1763, %v1762
    %v1777 = vpack.c.bf16 %v1765, %v1764
    %v1778 = vpack.c.bf16 %v1766, %v1766
    %v1791 = vunpack.c.l.b16 %v1767
    %v1792 = vunpack.c.h.b16 %v1767
    %v1793 = vunpack.c.l.b16 %v1768
    %v1794 = vunpack.c.h.b16 %v1768
    %v1795 = vunpack.c.l.b16 %v1769
    %v1796 = vunpack.c.h.b16 %v1769
    %v1797 = vunpack.c.l.b16 %v1770
    %v1798 = vunpack.c.h.b16 %v1770
    %v1799 = vunpack.c.l.b16 %v1771
    %v1800 = vunpack.c.h.b16 %v1771
    %v1801 = vunpack.c.l.b16 %v1772
    %v1802 = vunpack.c.h.b16 %v1772
    %v1803 = vunpack.c.l.b16 %v1773
    %v1804 = vunpack.c.h.b16 %v1773
    %v1805 = vunpack.c.l.b16 %v1774
    %v1806 = vunpack.c.h.b16 %v1774
    %v1807 = vunpack.c.l.b16 %v1775
    %v1808 = vunpack.c.h.b16 %v1775
    %v1809 = vunpack.c.l.b16 %v1776
    %v1810 = vunpack.c.h.b16 %v1776
    %v1811 = vunpack.c.l.b16 %v1777
    %v1812 = vunpack.c.h.b16 %v1777
    %v1813 = vunpack.c.l.b16 %v1778
    %v1814 = vpack.c.b16 %v1791, %v1791
    %v1815 = vpack.c.b16 %v1792, %v1792
    %v1816 = vpack.c.b16 %v1793, %v1793
    %v1817 = vpack.c.b16 %v1794, %v1794
    %v1818 = vpack.c.b16 %v1795, %v1795
    %v1819 = vpack.c.b16 %v1796, %v1796
    %v1820 = vpack.c.b16 %v1797, %v1797
    %v1821 = vpack.c.b16 %v1798, %v1798
    %v1822 = vpack.c.b16 %v1799, %v1799
    %v1823 = vpack.c.b16 %v1800, %v1800
    %v1824 = vpack.c.b16 %v1801, %v1801
    %v1825 = vpack.c.b16 %v1802, %v1802
    %v1826 = vpack.c.b16 %v1803, %v1803
    %v1827 = vpack.c.b16 %v1804, %v1804
    %v1828 = vpack.c.b16 %v1805, %v1805
    %v1829 = vpack.c.b16 %v1806, %v1806
    %v1830 = vpack.c.b16 %v1807, %v1807
    %v1831 = vpack.c.b16 %v1808, %v1808
    %v1832 = vpack.c.b16 %v1809, %v1809
    %v1833 = vpack.c.b16 %v1810, %v1810
    %v1834 = vpack.c.b16 %v1811, %v1811
    %v1835 = vpack.c.b16 %v1812, %v1812
    %v1836 = vpack.c.b16 %v1813, %v1813
    %1860 = vst [vmem:[#allocation5 + $0xc] sm:$0xf] %v1814
    %1861 = vst [vmem:[#allocation5 + $0x20] sm:$0xf] %v1815
    %1862 = vst [vmem:[#allocation5 + $0x34] sm:$0xf] %v1816
    %1863 = vst [vmem:[#allocation5 + $0x48] sm:$0xf] %v1817
    %1864 = vst [vmem:[#allocation5 + $0x5c] sm:$0xf] %v1818
    %1865 = vst [vmem:[#allocation5 + $0x70] sm:$0xf] %v1819
    %1866 = vst [vmem:[#allocation5 + $0x84] sm:$0xf] %v1820
    %1867 = vst [vmem:[#allocation5 + $0x98] sm:$0xf] %v1821
    %1868 = vst [vmem:[#allocation5 + $0xac] sm:$0xf] %v1822
    %1869 = vst [vmem:[#allocation5 + $0xc0] sm:$0xf] %v1823
    %1870 = vst [vmem:[#allocation5 + $0xd4] sm:$0xf] %v1824
    %1871 = vst [vmem:[#allocation5 + $0xe8] sm:$0xf] %v1825
    %1872 = vst [vmem:[#allocation5 + $0xfc] sm:$0xf] %v1826
    %1873 = vst [vmem:[#allocation5 + $0x110] sm:$0xf] %v1827
    %1874 = vst [vmem:[#allocation5 + $0x124] sm:$0xf] %v1828
    %1875 = vst [vmem:[#allocation5 + $0x138] sm:$0xf] %v1829
    %1876 = vst [vmem:[#allocation5 + $0x14c] sm:$0xf] %v1830
    %1877 = vst [vmem:[#allocation5 + $0x160] sm:$0xf] %v1831
    %1878 = vst [vmem:[#allocation5 + $0x174] sm:$0xf] %v1832
    %1879 = vst [vmem:[#allocation5 + $0x188] sm:$0xf] %v1833
    %1880 = vst [vmem:[#allocation5 + $0x19c] sm:$0xf] %v1834
    %1881 = vst [vmem:[#allocation5 + $0x1b0] sm:$0xf] %v1835
    %1882 = vst [vmem:[#allocation5 + $0x1c4] sm:$0xf] %v1836
    %v1883 = vld [vmem:[#allocation3 + $0x20] sm:$0xff]
    %v1884 = vld [vmem:[#allocation3 + $0x28] sm:$0xff]
    %v1885 = vld [vmem:[#allocation3 + $0x30] sm:$0xff]
    %v1886 = vld [vmem:[#allocation3 + $0x38] sm:$0xff]
    %v1887 = vld [vmem:[#allocation3 + $0x40] sm:$0xff]
    %v1888 = vld [vmem:[#allocation3 + $0x48] sm:$0xff]
    %v1889 = vld [vmem:[#allocation3 + $0x50] sm:$0xff]
    %v1890 = vld [vmem:[#allocation3 + $0x58] sm:$0xff]
    %v1891 = vld [vmem:[#allocation3 + $0x60] sm:$0xff]
    %v1892 = vld [vmem:[#allocation3 + $0x68] sm:$0xff]
    %v1893 = vld [vmem:[#allocation3 + $0x70] sm:$0xff]
    %v1894 = vld [vmem:[#allocation3 + $0x78] sm:$0xff]
    %v1895 = vld [vmem:[#allocation3 + $0x80] sm:$0xff]
    %v1896 = vld [vmem:[#allocation3 + $0x88] sm:$0xff]
    %v1897 = vld [vmem:[#allocation3 + $0x90] sm:$0xff]
    %v1898 = vld [vmem:[#allocation3 + $0x98] sm:$0xff]
    %v1899 = vld [vmem:[#allocation3 + $0xa0] sm:$0xff]
    %v1900 = vld [vmem:[#allocation3 + $0xa8] sm:$0xff]
    %v1901 = vld [vmem:[#allocation3 + $0xb0] sm:$0xff]
    %v1902 = vld [vmem:[#allocation3 + $0xb8] sm:$0xff]
    %v1903 = vld [vmem:[#allocation3 + $0xc0] sm:$0xff]
    %v1904 = vld [vmem:[#allocation3 + $0xc8] sm:$0xff]
    %v1905 = vld [vmem:[#allocation3 + $0xd0] sm:$0xff]
    %v1906 = vpack.c.bf16 %v1884, %v1883
    %v1907 = vpack.c.bf16 %v1886, %v1885
    %v1908 = vpack.c.bf16 %v1888, %v1887
    %v1909 = vpack.c.bf16 %v1890, %v1889
    %v1910 = vpack.c.bf16 %v1892, %v1891
    %v1911 = vpack.c.bf16 %v1894, %v1893
    %v1912 = vpack.c.bf16 %v1896, %v1895
    %v1913 = vpack.c.bf16 %v1898, %v1897
    %v1914 = vpack.c.bf16 %v1900, %v1899
    %v1915 = vpack.c.bf16 %v1902, %v1901
    %v1916 = vpack.c.bf16 %v1904, %v1903
    %v1917 = vpack.c.bf16 %v1905, %v1905
    %v1930 = vunpack.c.l.b16 %v1906
    %v1931 = vunpack.c.h.b16 %v1906
    %v1932 = vunpack.c.l.b16 %v1907
    %v1933 = vunpack.c.h.b16 %v1907
    %v1934 = vunpack.c.l.b16 %v1908
    %v1935 = vunpack.c.h.b16 %v1908
    %v1936 = vunpack.c.l.b16 %v1909
    %v1937 = vunpack.c.h.b16 %v1909
    %v1938 = vunpack.c.l.b16 %v1910
    %v1939 = vunpack.c.h.b16 %v1910
    %v1940 = vunpack.c.l.b16 %v1911
    %v1941 = vunpack.c.h.b16 %v1911
    %v1942 = vunpack.c.l.b16 %v1912
    %v1943 = vunpack.c.h.b16 %v1912
    %v1944 = vunpack.c.l.b16 %v1913
    %v1945 = vunpack.c.h.b16 %v1913
    %v1946 = vunpack.c.l.b16 %v1914
    %v1947 = vunpack.c.h.b16 %v1914
    %v1948 = vunpack.c.l.b16 %v1915
    %v1949 = vunpack.c.h.b16 %v1915
    %v1950 = vunpack.c.l.b16 %v1916
    %v1951 = vunpack.c.h.b16 %v1916
    %v1952 = vunpack.c.l.b16 %v1917
    %v1953 = vpack.c.b16 %v1930, %v1930
    %v1954 = vpack.c.b16 %v1931, %v1931
    %v1955 = vpack.c.b16 %v1932, %v1932
    %v1956 = vpack.c.b16 %v1933, %v1933
    %v1957 = vpack.c.b16 %v1934, %v1934
    %v1958 = vpack.c.b16 %v1935, %v1935
    %v1959 = vpack.c.b16 %v1936, %v1936
    %v1960 = vpack.c.b16 %v1937, %v1937
    %v1961 = vpack.c.b16 %v1938, %v1938
    %v1962 = vpack.c.b16 %v1939, %v1939
    %v1963 = vpack.c.b16 %v1940, %v1940
    %v1964 = vpack.c.b16 %v1941, %v1941
    %v1965 = vpack.c.b16 %v1942, %v1942
    %v1966 = vpack.c.b16 %v1943, %v1943
    %v1967 = vpack.c.b16 %v1944, %v1944
    %v1968 = vpack.c.b16 %v1945, %v1945
    %v1969 = vpack.c.b16 %v1946, %v1946
    %v1970 = vpack.c.b16 %v1947, %v1947
    %v1971 = vpack.c.b16 %v1948, %v1948
    %v1972 = vpack.c.b16 %v1949, %v1949
    %v1973 = vpack.c.b16 %v1950, %v1950
    %v1974 = vpack.c.b16 %v1951, %v1951
    %v1975 = vpack.c.b16 %v1952, %v1952
    %1999 = vst [vmem:[#allocation5 + $0x10] sm:$0xf] %v1953
    %2000 = vst [vmem:[#allocation5 + $0x24] sm:$0xf] %v1954
    %2001 = vst [vmem:[#allocation5 + $0x38] sm:$0xf] %v1955
    %2002 = vst [vmem:[#allocation5 + $0x4c] sm:$0xf] %v1956
    %2003 = vst [vmem:[#allocation5 + $0x60] sm:$0xf] %v1957
    %2004 = vst [vmem:[#allocation5 + $0x74] sm:$0xf] %v1958
    %2005 = vst [vmem:[#allocation5 + $0x88] sm:$0xf] %v1959
    %2006 = vst [vmem:[#allocation5 + $0x9c] sm:$0xf] %v1960
    %2007 = vst [vmem:[#allocation5 + $0xb0] sm:$0xf] %v1961
    %2008 = vst [vmem:[#allocation5 + $0xc4] sm:$0xf] %v1962
    %2009 = vst [vmem:[#allocation5 + $0xd8] sm:$0xf] %v1963
    %2010 = vst [vmem:[#allocation5 + $0xec] sm:$0xf] %v1964
    %2011 = vst [vmem:[#allocation5 + $0x100] sm:$0xf] %v1965
    %2012 = vst [vmem:[#allocation5 + $0x114] sm:$0xf] %v1966
    %2013 = vst [vmem:[#allocation5 + $0x128] sm:$0xf] %v1967
    %2014 = vst [vmem:[#allocation5 + $0x13c] sm:$0xf] %v1968
    %2015 = vst [vmem:[#allocation5 + $0x150] sm:$0xf] %v1969
    %2016 = vst [vmem:[#allocation5 + $0x164] sm:$0xf] %v1970
    %2017 = vst [vmem:[#allocation5 + $0x178] sm:$0xf] %v1971
    %2018 = vst [vmem:[#allocation5 + $0x18c] sm:$0xf] %v1972
    %2019 = vst [vmem:[#allocation5 + $0x1a0] sm:$0xf] %v1973
    %2020 = vst [vmem:[#allocation5 + $0x1b4] sm:$0xf] %v1974
    %2021 = vst [vmem:[#allocation5 + $0x1c8] sm:$0xf] %v1975
    %v2022 = vld [vmem:[#allocation5] sm:$0xff]
    %v2023 = vld [vmem:[#allocation5 + $0x8] sm:$0xff]
    %v2024 = vld [vmem:[#allocation5 + $0x10] sm:$0xf]
    %v2025 = vld [vmem:[#allocation5 + $0x14] sm:$0xff]
    %v2026 = vld [vmem:[#allocation5 + $0x1c] sm:$0xff]
    %v2027 = vld [vmem:[#allocation5 + $0x24] sm:$0xf]
    %v2028 = vld [vmem:[#allocation5 + $0x28] sm:$0xff]
    %v2029 = vld [vmem:[#allocation5 + $0x30] sm:$0xff]
    %v2030 = vld [vmem:[#allocation5 + $0x38] sm:$0xf]
    %v2031 = vld [vmem:[#allocation5 + $0x3c] sm:$0xff]
    %v2032 = vld [vmem:[#allocation5 + $0x44] sm:$0xff]
    %v2033 = vld [vmem:[#allocation5 + $0x4c] sm:$0xf]
    %v2034 = vld [vmem:[#allocation5 + $0x50] sm:$0xff]
    %v2035 = vld [vmem:[#allocation5 + $0x58] sm:$0xff]
    %v2036 = vld [vmem:[#allocation5 + $0x60] sm:$0xf]
    %v2037 = vld [vmem:[#allocation5 + $0x64] sm:$0xff]
    %v2038 = vld [vmem:[#allocation5 + $0x6c] sm:$0xff]
    %v2039 = vld [vmem:[#allocation5 + $0x74] sm:$0xf]
    %v2040 = vld [vmem:[#allocation5 + $0x78] sm:$0xff]
    %v2041 = vld [vmem:[#allocation5 + $0x80] sm:$0xff]
    %v2042 = vld [vmem:[#allocation5 + $0x88] sm:$0xf]
    %v2043 = vld [vmem:[#allocation5 + $0x8c] sm:$0xff]
    %v2044 = vld [vmem:[#allocation5 + $0x94] sm:$0xff]
    %v2045 = vld [vmem:[#allocation5 + $0x9c] sm:$0xf]
    %v2046 = vld [vmem:[#allocation5 + $0xa0] sm:$0xff]
    %v2047 = vld [vmem:[#allocation5 + $0xa8] sm:$0xff]
    %v2048 = vld [vmem:[#allocation5 + $0xb0] sm:$0xf]
    %v2049 = vld [vmem:[#allocation5 + $0xb4] sm:$0xff]
    %v2050 = vld [vmem:[#allocation5 + $0xbc] sm:$0xff]
    %v2051 = vld [vmem:[#allocation5 + $0xc4] sm:$0xf]
    %v2052 = vld [vmem:[#allocation5 + $0xc8] sm:$0xff]
    %v2053 = vld [vmem:[#allocation5 + $0xd0] sm:$0xff]
    %v2054 = vld [vmem:[#allocation5 + $0xd8] sm:$0xf]
    %v2055 = vld [vmem:[#allocation5 + $0xdc] sm:$0xff]
    %v2056 = vld [vmem:[#allocation5 + $0xe4] sm:$0xff]
    %v2057 = vld [vmem:[#allocation5 + $0xec] sm:$0xf]
    %v2058 = vld [vmem:[#allocation5 + $0xf0] sm:$0xff]
    %v2059 = vld [vmem:[#allocation5 + $0xf8] sm:$0xff]
    %v2060 = vld [vmem:[#allocation5 + $0x100] sm:$0xf]
    %v2061 = vld [vmem:[#allocation5 + $0x104] sm:$0xff]
    %v2062 = vld [vmem:[#allocation5 + $0x10c] sm:$0xff]
    %v2063 = vld [vmem:[#allocation5 + $0x114] sm:$0xf]
    %v2064 = vld [vmem:[#allocation5 + $0x118] sm:$0xff]
    %v2065 = vld [vmem:[#allocation5 + $0x120] sm:$0xff]
    %v2066 = vld [vmem:[#allocation5 + $0x128] sm:$0xf]
    %v2067 = vld [vmem:[#allocation5 + $0x12c] sm:$0xff]
    %v2068 = vld [vmem:[#allocation5 + $0x134] sm:$0xff]
    %v2069 = vld [vmem:[#allocation5 + $0x13c] sm:$0xf]
    %v2070 = vld [vmem:[#allocation5 + $0x140] sm:$0xff]
    %v2071 = vld [vmem:[#allocation5 + $0x148] sm:$0xff]
    %v2072 = vld [vmem:[#allocation5 + $0x150] sm:$0xf]
    %v2073 = vld [vmem:[#allocation5 + $0x154] sm:$0xff]
    %v2074 = vld [vmem:[#allocation5 + $0x15c] sm:$0xff]
    %v2075 = vld [vmem:[#allocation5 + $0x164] sm:$0xf]
    %v2076 = vld [vmem:[#allocation5 + $0x168] sm:$0xff]
    %v2077 = vld [vmem:[#allocation5 + $0x170] sm:$0xff]
    %v2078 = vld [vmem:[#allocation5 + $0x178] sm:$0xf]
    %v2079 = vld [vmem:[#allocation5 + $0x17c] sm:$0xff]
    %v2080 = vld [vmem:[#allocation5 + $0x184] sm:$0xff]
    %v2081 = vld [vmem:[#allocation5 + $0x18c] sm:$0xf]
    %v2082 = vld [vmem:[#allocation5 + $0x190] sm:$0xff]
    %v2083 = vld [vmem:[#allocation5 + $0x198] sm:$0xff]
    %v2084 = vld [vmem:[#allocation5 + $0x1a0] sm:$0xf]
    %v2085 = vld [vmem:[#allocation5 + $0x1a4] sm:$0xff]
    %v2086 = vld [vmem:[#allocation5 + $0x1ac] sm:$0xff]
    %v2087 = vld [vmem:[#allocation5 + $0x1b4] sm:$0xf]
    %v2088 = vld [vmem:[#allocation5 + $0x1b8] sm:$0xff]
    %v2089 = vld [vmem:[#allocation5 + $0x1c0] sm:$0xff]
    %v2090 = vld [vmem:[#allocation5 + $0x1c8] sm:$0xf]
    %v2091 = vld [vmem:[%s7] sm:$0xf]
    %v2092 = vld [vmem:[%s7 + $0x4] sm:$0xf]
    %v2093 = vld [vmem:[%s7 + $0x8] sm:$0xf]
    %v2094 = vld [vmem:[%s7 + $0xc] sm:$0xf]
    %v2095 = vld [vmem:[%s7 + $0x10] sm:$0xf]
    %v2096 = vld [vmem:[%s7 + $0x14] sm:$0xf]
    %v2097 = vld [vmem:[%s7 + $0x18] sm:$0xf]
    %v2098 = vld [vmem:[%s7 + $0x1c] sm:$0xf]
    %v2099 = vld [vmem:[%s7 + $0x20] sm:$0xf]
    %v2100 = vld [vmem:[%s7 + $0x24] sm:$0xf]
    %v2101 = vld [vmem:[%s7 + $0x28] sm:$0xf]
    %v2102 = vld [vmem:[%s7 + $0x2c] sm:$0xf]
    %v2103 = vld [vmem:[%s7 + $0x30] sm:$0xf]
    %v2104 = vld [vmem:[%s7 + $0x34] sm:$0xf]
    %v2105 = vld [vmem:[%s7 + $0x38] sm:$0xf]
    %v2106 = vld [vmem:[%s7 + $0x3c] sm:$0xf]
    %v2107 = vld [vmem:[%s7 + $0x40] sm:$0xf]
    %v2108 = vld [vmem:[%s7 + $0x44] sm:$0xf]
    %v2109 = vld [vmem:[%s7 + $0x48] sm:$0xf]
    %v2110 = vld [vmem:[%s7 + $0x4c] sm:$0xf]
    %v2111 = vld [vmem:[%s7 + $0x50] sm:$0xf]
    %v2112 = vld [vmem:[%s7 + $0x54] sm:$0xf]
    %v2113 = vld [vmem:[%s7 + $0x58] sm:$0xf]
    %v2114 = vld [vmem:[%s7 + $0x5c] sm:$0xf]
    %v2115 = vld [vmem:[%s7 + $0x60] sm:$0xf]
    %v2116 = vld [vmem:[%s7 + $0x64] sm:$0xf]
    %v2117 = vld [vmem:[%s7 + $0x68] sm:$0xf]
    %v2118 = vld [vmem:[%s7 + $0x6c] sm:$0xf]
    %v2119 = vld [vmem:[%s7 + $0x70] sm:$0xf]
    %v2120 = vld [vmem:[%s7 + $0x74] sm:$0xf]
    %v2121 = vld [vmem:[%s7 + $0x78] sm:$0xf]
    %v2122 = vld [vmem:[%s7 + $0x7c] sm:$0xf]
    %v2123 = vld [vmem:[%s7 + $0x80] sm:$0xf]
    %v2124 = vld [vmem:[%s7 + $0x84] sm:$0xf]
    %v2125 = vld [vmem:[%s7 + $0x88] sm:$0xf]
    %v2126 = vld [vmem:[%s7 + $0x8c] sm:$0xf]
    %v2127 = vld [vmem:[%s7 + $0x90] sm:$0xf]
    %v2128 = vld [vmem:[%s7 + $0x94] sm:$0xf]
    %v2129 = vld [vmem:[%s7 + $0x98] sm:$0xf]
    %v2130 = vld [vmem:[%s7 + $0x9c] sm:$0xf]
    %v2131 = vld [vmem:[%s7 + $0xa0] sm:$0xf]
    %v2132 = vld [vmem:[%s7 + $0xa4] sm:$0xf]
    %v2133 = vld [vmem:[%s7 + $0xa8] sm:$0xf]
    %v2134 = vld [vmem:[%s7 + $0xac] sm:$0xf]
    %v2135 = vld [vmem:[%s7 + $0xb0] sm:$0xf]
    %v2136 = vld [vmem:[%s7 + $0xb4] sm:$0xf]
    %v2137 = vld [vmem:[%s7 + $0xb8] sm:$0xf]
    %v2138 = vld [vmem:[%s7 + $0xbc] sm:$0xf]
    %v2139 = vld [vmem:[%s7 + $0xc0] sm:$0xf]
    %v2140 = vld [vmem:[%s7 + $0xc4] sm:$0xf]
    %v2141 = vld [vmem:[%s7 + $0xc8] sm:$0xf]
    %v2142 = vld [vmem:[%s7 + $0xcc] sm:$0xf]
    %v2143 = vld [vmem:[%s7 + $0xd0] sm:$0xf]
    %v2144 = vld [vmem:[%s7 + $0xd4] sm:$0xf]
    %v2145 = vld [vmem:[%s7 + $0xd8] sm:$0xf]
    %v2146 = vld [vmem:[%s7 + $0xdc] sm:$0xf]
    %v2147 = vld [vmem:[%s7 + $0xe0] sm:$0xf]
    %v2148 = vld [vmem:[%s7 + $0xe4] sm:$0xf]
    %v2149 = vld [vmem:[%s7 + $0xe8] sm:$0xf]
    %v2150 = vld [vmem:[%s7 + $0xec] sm:$0xf]
    %v2151 = vld [vmem:[%s7 + $0xf0] sm:$0xf]
    %v2152 = vld [vmem:[%s7 + $0xf4] sm:$0xf]
    %v2153 = vld [vmem:[%s7 + $0xf8] sm:$0xf]
    %v2154 = vld [vmem:[%s7 + $0xfc] sm:$0xf]
    %v2155 = vld [vmem:[%s7 + $0x100] sm:$0xf]
    %v2156 = vld [vmem:[%s7 + $0x104] sm:$0xf]
    %v2157 = vld [vmem:[%s7 + $0x108] sm:$0xf]
    %v2158 = vld [vmem:[%s7 + $0x10c] sm:$0xf]
    %v2159 = vld [vmem:[%s7 + $0x110] sm:$0xf]
    %v2160 = vld [vmem:[%s7 + $0x114] sm:$0xf]
    %v2161 = vld [vmem:[%s7 + $0x118] sm:$0xf]
    %v2162 = vld [vmem:[%s7 + $0x11c] sm:$0xf]
    %v2163 = vld [vmem:[%s7 + $0x120] sm:$0xf]
    %v2164 = vld [vmem:[%s7 + $0x124] sm:$0xf]
    %v2165 = vld [vmem:[%s7 + $0x128] sm:$0xf]
    %v2166 = vld [vmem:[%s7 + $0x12c] sm:$0xf]
    %v2167 = vld [vmem:[%s7 + $0x130] sm:$0xf]
    %v2168 = vld [vmem:[%s7 + $0x134] sm:$0xf]
    %v2169 = vld [vmem:[%s7 + $0x138] sm:$0xf]
    %v2170 = vld [vmem:[%s7 + $0x13c] sm:$0xf]
    %v2171 = vld [vmem:[%s8] sm:$0x1]
    %v2173 = vlaneseq
    %v2174 = vshrl.u32 %v2173, 7
    %v2175 = vsub.s32 0, %v2174
    %v2176 = vrot.slane %v2171, %v2175
    %v2247 = vunpack.c.l.b16 %v2022
    %v2248 = vunpack.c.h.b16 %v2022
    %v2249 = vunpack.c.l.b16 %v2023
    %v2250 = vunpack.c.h.b16 %v2023
    %v2251 = vunpack.c.l.b16 %v2024
    %v2252 = vunpack.c.l.b16 %v2025
    %v2253 = vunpack.c.h.b16 %v2025
    %v2254 = vunpack.c.l.b16 %v2026
    %v2255 = vunpack.c.h.b16 %v2026
    %v2256 = vunpack.c.l.b16 %v2027
    %v2257 = vunpack.c.l.b16 %v2028
    %v2258 = vunpack.c.h.b16 %v2028
    %v2259 = vunpack.c.l.b16 %v2029
    %v2260 = vunpack.c.h.b16 %v2029
    %v2261 = vunpack.c.l.b16 %v2030
    %v2262 = vunpack.c.l.b16 %v2031
    %v2263 = vunpack.c.h.b16 %v2031
    %v2264 = vunpack.c.l.b16 %v2032
    %v2265 = vunpack.c.h.b16 %v2032
    %v2266 = vunpack.c.l.b16 %v2033
    %v2267 = vunpack.c.l.b16 %v2034
    %v2268 = vunpack.c.h.b16 %v2034
    %v2269 = vunpack.c.l.b16 %v2035
    %v2270 = vunpack.c.h.b16 %v2035
    %v2271 = vunpack.c.l.b16 %v2036
    %v2272 = vunpack.c.l.b16 %v2037
    %v2273 = vunpack.c.h.b16 %v2037
    %v2274 = vunpack.c.l.b16 %v2038
    %v2275 = vunpack.c.h.b16 %v2038
    %v2276 = vunpack.c.l.b16 %v2039
    %v2277 = vunpack.c.l.b16 %v2040
    %v2278 = vunpack.c.h.b16 %v2040
    %v2279 = vunpack.c.l.b16 %v2041
    %v2280 = vunpack.c.h.b16 %v2041
    %v2281 = vunpack.c.l.b16 %v2042
    %v2282 = vunpack.c.l.b16 %v2043
    %v2283 = vunpack.c.h.b16 %v2043
    %v2284 = vunpack.c.l.b16 %v2044
    %v2285 = vunpack.c.h.b16 %v2044
    %v2286 = vunpack.c.l.b16 %v2045
    %v2287 = vunpack.c.l.b16 %v2046
    %v2288 = vunpack.c.h.b16 %v2046
    %v2289 = vunpack.c.l.b16 %v2047
    %v2290 = vunpack.c.h.b16 %v2047
    %v2291 = vunpack.c.l.b16 %v2048
    %v2292 = vunpack.c.l.b16 %v2049
    %v2293 = vunpack.c.h.b16 %v2049
    %v2294 = vunpack.c.l.b16 %v2050
    %v2295 = vunpack.c.h.b16 %v2050
    %v2296 = vunpack.c.l.b16 %v2051
    %v2297 = vunpack.c.l.b16 %v2052
    %v2298 = vunpack.c.h.b16 %v2052
    %v2299 = vunpack.c.l.b16 %v2053
    %v2300 = vunpack.c.h.b16 %v2053
    %v2301 = vunpack.c.l.b16 %v2054
    %v2302 = vunpack.c.l.b16 %v2055
    %v2303 = vunpack.c.h.b16 %v2055
    %v2304 = vunpack.c.l.b16 %v2056
    %v2305 = vunpack.c.h.b16 %v2056
    %v2306 = vunpack.c.l.b16 %v2057
    %v2307 = vunpack.c.l.b16 %v2058
    %v2308 = vunpack.c.h.b16 %v2058
    %v2309 = vunpack.c.l.b16 %v2059
    %v2310 = vunpack.c.h.b16 %v2059
    %v2311 = vunpack.c.l.b16 %v2060
    %v2312 = vunpack.c.l.b16 %v2061
    %v2313 = vunpack.c.h.b16 %v2061
    %v2314 = vunpack.c.l.b16 %v2062
    %v2315 = vunpack.c.h.b16 %v2062
    %v2316 = vunpack.c.l.b16 %v2063
    %v2317 = vunpack.c.l.b16 %v2064
    %v2318 = vunpack.c.h.b16 %v2064
    %v2319 = vunpack.c.l.b16 %v2065
    %v2320 = vunpack.c.h.b16 %v2065
    %v2321 = vunpack.c.l.b16 %v2066
    %v2322 = vunpack.c.l.b16 %v2067
    %v2323 = vunpack.c.h.b16 %v2067
    %v2324 = vunpack.c.l.b16 %v2068
    %v2325 = vunpack.c.h.b16 %v2068
    %v2326 = vunpack.c.l.b16 %v2069
    %v2327 = vunpack.c.l.b16 %v2070
    %v2328 = vunpack.c.h.b16 %v2070
    %v2329 = vunpack.c.l.b16 %v2071
    %v2330 = vunpack.c.h.b16 %v2071
    %v2331 = vunpack.c.l.b16 %v2072
    %v2332 = vunpack.c.l.b16 %v2073
    %v2333 = vunpack.c.h.b16 %v2073
    %v2334 = vunpack.c.l.b16 %v2074
    %v2335 = vunpack.c.h.b16 %v2074
    %v2336 = vunpack.c.l.b16 %v2075
    %v2337 = vunpack.c.l.b16 %v2076
    %v2338 = vunpack.c.h.b16 %v2076
    %v2339 = vunpack.c.l.b16 %v2077
    %v2340 = vunpack.c.h.b16 %v2077
    %v2341 = vunpack.c.l.b16 %v2078
    %v2342 = vunpack.c.l.b16 %v2079
    %v2343 = vunpack.c.h.b16 %v2079
    %v2344 = vunpack.c.l.b16 %v2080
    %v2345 = vunpack.c.h.b16 %v2080
    %v2346 = vunpack.c.l.b16 %v2081
    %v2347 = vunpack.c.l.b16 %v2082
    %v2348 = vunpack.c.h.b16 %v2082
    %v2349 = vunpack.c.l.b16 %v2083
    %v2350 = vunpack.c.h.b16 %v2083
    %v2351 = vunpack.c.l.b16 %v2084
    %v2352 = vunpack.c.l.b16 %v2085
    %v2353 = vunpack.c.h.b16 %v2085
    %v2354 = vunpack.c.l.b16 %v2086
    %v2355 = vunpack.c.h.b16 %v2086
    %v2356 = vunpack.c.l.b16 %v2087
    %v2357 = vunpack.c.l.b16 %v2088
    %v2358 = vunpack.c.h.b16 %v2088
    %v2359 = vunpack.c.l.b16 %v2089
    %v2360 = vunpack.c.h.b16 %v2089
    %v2361 = vunpack.c.l.b16 %v2090
    %v2362 = vpack.c.b16 %v2252, %v2247
    %v2363 = vpack.c.b16 %v2253, %v2248
    %v2364 = vpack.c.b16 %v2254, %v2249
    %v2365 = vpack.c.b16 %v2255, %v2250
    %v2366 = vpack.c.b16 %v2256, %v2251
    %v2367 = vpack.c.b16 %v2262, %v2257
    %v2368 = vpack.c.b16 %v2263, %v2258
    %v2369 = vpack.c.b16 %v2264, %v2259
    %v2370 = vpack.c.b16 %v2265, %v2260
    %v2371 = vpack.c.b16 %v2266, %v2261
    %v2372 = vpack.c.b16 %v2272, %v2267
    %v2373 = vpack.c.b16 %v2273, %v2268
    %v2374 = vpack.c.b16 %v2274, %v2269
    %v2375 = vpack.c.b16 %v2275, %v2270
    %v2376 = vpack.c.b16 %v2276, %v2271
    %v2377 = vpack.c.b16 %v2282, %v2277
    %v2378 = vpack.c.b16 %v2283, %v2278
    %v2379 = vpack.c.b16 %v2284, %v2279
    %v2380 = vpack.c.b16 %v2285, %v2280
    %v2381 = vpack.c.b16 %v2286, %v2281
    %v2382 = vpack.c.b16 %v2292, %v2287
    %v2383 = vpack.c.b16 %v2293, %v2288
    %v2384 = vpack.c.b16 %v2294, %v2289
    %v2385 = vpack.c.b16 %v2295, %v2290
    %v2386 = vpack.c.b16 %v2296, %v2291
    %v2387 = vpack.c.b16 %v2302, %v2297
    %v2388 = vpack.c.b16 %v2303, %v2298
    %v2389 = vpack.c.b16 %v2304, %v2299
    %v2390 = vpack.c.b16 %v2305, %v2300
    %v2391 = vpack.c.b16 %v2306, %v2301
    %v2392 = vpack.c.b16 %v2312, %v2307
    %v2393 = vpack.c.b16 %v2313, %v2308
    %v2394 = vpack.c.b16 %v2314, %v2309
    %v2395 = vpack.c.b16 %v2315, %v2310
    %v2396 = vpack.c.b16 %v2316, %v2311
    %v2397 = vpack.c.b16 %v2322, %v2317
    %v2398 = vpack.c.b16 %v2323, %v2318
    %v2399 = vpack.c.b16 %v2324, %v2319
    %v2400 = vpack.c.b16 %v2325, %v2320
    %v2401 = vpack.c.b16 %v2326, %v2321
    %v2402 = vpack.c.b16 %v2332, %v2327
    %v2403 = vpack.c.b16 %v2333, %v2328
    %v2404 = vpack.c.b16 %v2334, %v2329
    %v2405 = vpack.c.b16 %v2335, %v2330
    %v2406 = vpack.c.b16 %v2336, %v2331
    %v2407 = vpack.c.b16 %v2342, %v2337
    %v2408 = vpack.c.b16 %v2343, %v2338
    %v2409 = vpack.c.b16 %v2344, %v2339
    %v2410 = vpack.c.b16 %v2345, %v2340
    %v2411 = vpack.c.b16 %v2346, %v2341
    %v2412 = vpack.c.b16 %v2352, %v2347
    %v2413 = vpack.c.b16 %v2353, %v2348
    %v2414 = vpack.c.b16 %v2354, %v2349
    %v2415 = vpack.c.b16 %v2355, %v2350
    %v2416 = vpack.c.b16 %v2356, %v2351
    %v2417 = vpack.c.b16 %v2357, %v2357
    %v2418 = vpack.c.b16 %v2358, %v2358
    %v2419 = vpack.c.b16 %v2359, %v2359
    %v2420 = vpack.c.b16 %v2360, %v2360
    %v2421 = vpack.c.b16 %v2361, %v2361
    %v2562 = vunpack.c.l.b16 %v2091
    %v2563 = vunpack.c.l.b16 %v2092
    %v2564 = vunpack.c.l.b16 %v2093
    %v2565 = vunpack.c.l.b16 %v2094
    %v2566 = vunpack.c.l.b16 %v2095
    %v2567 = vunpack.c.l.b16 %v2096
    %v2568 = vunpack.c.l.b16 %v2097
    %v2569 = vunpack.c.l.b16 %v2098
    %v2570 = vunpack.c.l.b16 %v2099
    %v2571 = vunpack.c.l.b16 %v2100
    %v2572 = vunpack.c.l.b16 %v2101
    %v2573 = vunpack.c.l.b16 %v2102
    %v2574 = vunpack.c.l.b16 %v2103
    %v2575 = vunpack.c.l.b16 %v2104
    %v2576 = vunpack.c.l.b16 %v2105
    %v2577 = vunpack.c.l.b16 %v2106
    %v2578 = vunpack.c.l.b16 %v2107
    %v2579 = vunpack.c.l.b16 %v2108
    %v2580 = vunpack.c.l.b16 %v2109
    %v2581 = vunpack.c.l.b16 %v2110
    %v2582 = vunpack.c.l.b16 %v2111
    %v2583 = vunpack.c.l.b16 %v2112
    %v2584 = vunpack.c.l.b16 %v2113
    %v2585 = vunpack.c.l.b16 %v2114
    %v2586 = vunpack.c.l.b16 %v2115
    %v2587 = vunpack.c.l.b16 %v2116
    %v2588 = vunpack.c.l.b16 %v2117
    %v2589 = vunpack.c.l.b16 %v2118
    %v2590 = vunpack.c.l.b16 %v2119
    %v2591 = vunpack.c.l.b16 %v2120
    %v2592 = vunpack.c.l.b16 %v2121
    %v2593 = vunpack.c.l.b16 %v2122
    %v2594 = vunpack.c.l.b16 %v2123
    %v2595 = vunpack.c.l.b16 %v2124
    %v2596 = vunpack.c.l.b16 %v2125
    %v2597 = vunpack.c.l.b16 %v2126
    %v2598 = vunpack.c.l.b16 %v2127
    %v2599 = vunpack.c.l.b16 %v2128
    %v2600 = vunpack.c.l.b16 %v2129
    %v2601 = vunpack.c.l.b16 %v2130
    %v2602 = vunpack.c.l.b16 %v2131
    %v2603 = vunpack.c.l.b16 %v2132
    %v2604 = vunpack.c.l.b16 %v2133
    %v2605 = vunpack.c.l.b16 %v2134
    %v2606 = vunpack.c.l.b16 %v2135
    %v2607 = vunpack.c.l.b16 %v2136
    %v2608 = vunpack.c.l.b16 %v2137
    %v2609 = vunpack.c.l.b16 %v2138
    %v2610 = vunpack.c.l.b16 %v2139
    %v2611 = vunpack.c.l.b16 %v2140
    %v2612 = vunpack.c.l.b16 %v2141
    %v2613 = vunpack.c.l.b16 %v2142
    %v2614 = vunpack.c.l.b16 %v2143
    %v2615 = vunpack.c.l.b16 %v2144
    %v2616 = vunpack.c.l.b16 %v2145
    %v2617 = vunpack.c.l.b16 %v2146
    %v2618 = vunpack.c.l.b16 %v2147
    %v2619 = vunpack.c.l.b16 %v2148
    %v2620 = vunpack.c.l.b16 %v2149
    %v2621 = vunpack.c.l.b16 %v2150
    %v2622 = vunpack.c.l.b16 %v2151
    %v2623 = vunpack.c.l.b16 %v2152
    %v2624 = vunpack.c.l.b16 %v2153
    %v2625 = vunpack.c.l.b16 %v2154
    %v2626 = vunpack.c.l.b16 %v2155
    %v2627 = vunpack.c.l.b16 %v2156
    %v2628 = vunpack.c.l.b16 %v2157
    %v2629 = vunpack.c.l.b16 %v2158
    %v2630 = vunpack.c.l.b16 %v2159
    %v2631 = vunpack.c.l.b16 %v2160
    %v2632 = vunpack.c.l.b16 %v2161
    %v2633 = vunpack.c.l.b16 %v2162
    %v2634 = vunpack.c.l.b16 %v2163
    %v2635 = vunpack.c.l.b16 %v2164
    %v2636 = vunpack.c.l.b16 %v2165
    %v2637 = vunpack.c.l.b16 %v2166
    %v2638 = vunpack.c.l.b16 %v2167
    %v2639 = vunpack.c.l.b16 %v2168
    %v2640 = vunpack.c.l.b16 %v2169
    %v2641 = vunpack.c.l.b16 %v2170
    %v2642 = vpack.c.b16 %v2563, %v2562
    %v2643 = vpack.c.b16 %v2565, %v2564
    %v2644 = vpack.c.b16 %v2567, %v2566
    %v2645 = vpack.c.b16 %v2569, %v2568
    %v2646 = vpack.c.b16 %v2571, %v2570
    %v2647 = vpack.c.b16 %v2573, %v2572
    %v2648 = vpack.c.b16 %v2575, %v2574
    %v2649 = vpack.c.b16 %v2577, %v2576
    %v2650 = vpack.c.b16 %v2579, %v2578
    %v2651 = vpack.c.b16 %v2581, %v2580
    %v2652 = vpack.c.b16 %v2583, %v2582
    %v2653 = vpack.c.b16 %v2585, %v2584
    %v2654 = vpack.c.b16 %v2587, %v2586
    %v2655 = vpack.c.b16 %v2589, %v2588
    %v2656 = vpack.c.b16 %v2591, %v2590
    %v2657 = vpack.c.b16 %v2593, %v2592
    %v2658 = vpack.c.b16 %v2595, %v2594
    %v2659 = vpack.c.b16 %v2597, %v2596
    %v2660 = vpack.c.b16 %v2599, %v2598
    %v2661 = vpack.c.b16 %v2601, %v2600
    %v2662 = vpack.c.b16 %v2603, %v2602
    %v2663 = vpack.c.b16 %v2605, %v2604
    %v2664 = vpack.c.b16 %v2607, %v2606
    %v2665 = vpack.c.b16 %v2609, %v2608
    %v2666 = vpack.c.b16 %v2611, %v2610
    %v2667 = vpack.c.b16 %v2613, %v2612
    %v2668 = vpack.c.b16 %v2615, %v2614
    %v2669 = vpack.c.b16 %v2617, %v2616
    %v2670 = vpack.c.b16 %v2619, %v2618
    %v2671 = vpack.c.b16 %v2621, %v2620
    %v2672 = vpack.c.b16 %v2623, %v2622
    %v2673 = vpack.c.b16 %v2625, %v2624
    %v2674 = vpack.c.b16 %v2627, %v2626
    %v2675 = vpack.c.b16 %v2629, %v2628
    %v2676 = vpack.c.b16 %v2631, %v2630
    %v2677 = vpack.c.b16 %v2633, %v2632
    %v2678 = vpack.c.b16 %v2635, %v2634
    %v2679 = vpack.c.b16 %v2637, %v2636
    %v2680 = vpack.c.b16 %v2639, %v2638
    %v2681 = vpack.c.b16 %v2641, %v2640
    %2722 = vmatprep.subr.bf16.mxu0 0
    %2723 = vmatpush1.bf16.msra.mxu0 %v2642
    %2724 = vmatprep.subr.bf16.mxu0 0
    %2725 = vmatpush1.bf16.msra.mxu0 %v2643
    %2726 = vmatprep.subr.bf16.mxu0 0
    %2727 = vmatpush1.bf16.msra.mxu0 %v2644
    %2728 = vmatprep.subr.bf16.mxu0 0
    %2729 = vmatpush1.bf16.msra.mxu0 %v2645
    %2730 = vmatprep.subr.bf16.mxu0 0
    %2731 = vmatpush1.bf16.msra.mxu0 %v2646
    %2732 = vmatprep.subr.bf16.mxu0 0
    %2733 = vmatpush1.bf16.msra.mxu0 %v2647
    %2734 = vmatprep.subr.bf16.mxu0 0
    %2735 = vmatpush1.bf16.msra.mxu0 %v2648
    %2736 = vmatprep.subr.bf16.mxu0 0
    %2737 = vmatpush1.bf16.msra.mxu0 %v2649
    %2738 = vmatprep.subr.bf16.mxu0 0
    %2739 = vmatpush1.bf16.msra.mxu0 %v2650
    %2740 = vmatprep.subr.bf16.mxu0 0
    %2741 = vmatpush1.bf16.msra.mxu0 %v2651
    %2742 = vmatprep.subr.bf16.mxu0 0
    %2743 = vmatpush1.bf16.msra.mxu0 %v2652
    %2744 = vmatprep.subr.bf16.mxu0 0
    %2745 = vmatpush1.bf16.msra.mxu0 %v2653
    %2746 = vmatprep.subr.bf16.mxu0 0
    %2747 = vmatpush1.bf16.msra.mxu0 %v2654
    %2748 = vmatprep.subr.bf16.mxu0 0
    %2749 = vmatpush1.bf16.msra.mxu0 %v2655
    %2750 = vmatprep.subr.bf16.mxu0 0
    %2751 = vmatpush1.bf16.msra.mxu0 %v2656
    %2752 = vmatprep.subr.bf16.mxu0 0
    %2753 = vmatpush1.bf16.msra.mxu0 %v2657
    %2754 = vmatprep.mubr.bf16.mxu0 %v2363
    %2755 = vmatmul.mubr.bf16.gmra.mrb[0].mxu0 %v2362
    %v2756 = vpop.f32.mrb[0].mxu0
    %v2757 = vadd.f32 %v2176, %v2756
    %v2758 = vpop.f32.mrb[0].mxu0
    %v2759 = vpop.f32.mrb[0].mxu0
    %v2760 = vadd.f32 %v2176, %v2759
    %v2761 = vpop.f32.mrb[0].mxu0
    %2762 = vmatprep.mubr.bf16.mxu0 %v2368
    %2763 = vmatmul.mubr.bf16.gmra.mrb[0].mxu0 %v2367
    %v2764 = vpop.f32.mrb[0].mxu0
    %v2765 = vadd.f32 %v2176, %v2764
    %v2766 = vpop.f32.mrb[0].mxu0
    %v2767 = vpop.f32.mrb[0].mxu0
    %v2768 = vadd.f32 %v2176, %v2767
    %v2769 = vpop.f32.mrb[0].mxu0
    %2770 = vmatprep.mubr.bf16.mxu0 %v2373
    %2771 = vmatmul.mubr.bf16.gmra.mrb[0].mxu0 %v2372
    %v2772 = vpop.f32.mrb[0].mxu0
    %v2773 = vadd.f32 %v2176, %v2772
    %v2774 = vpop.f32.mrb[0].mxu0
    %v2775 = vpop.f32.mrb[0].mxu0
    %v2776 = vadd.f32 %v2176, %v2775
    %v2777 = vpop.f32.mrb[0].mxu0
    %2778 = vmatprep.mubr.bf16.mxu0 %v2378
    %2779 = vmatmul.mubr.bf16.gmra.mrb[0].mxu0 %v2377
    %v2780 = vpop.f32.mrb[0].mxu0
    %v2781 = vadd.f32 %v2176, %v2780
    %v2782 = vpop.f32.mrb[0].mxu0
    %v2783 = vpop.f32.mrb[0].mxu0
    %v2784 = vadd.f32 %v2176, %v2783
    %v2785 = vpop.f32.mrb[0].mxu0
    %2786 = vmatprep.mubr.bf16.mxu0 %v2383
    %2787 = vmatmul.mubr.bf16.gmra.mrb[0].mxu0 %v2382
    %v2788 = vpop.f32.mrb[0].mxu0
    %v2789 = vadd.f32 %v2176, %v2788
    %v2790 = vpop.f32.mrb[0].mxu0
    %v2791 = vpop.f32.mrb[0].mxu0
    %v2792 = vadd.f32 %v2176, %v2791
    %v2793 = vpop.f32.mrb[0].mxu0
    %2794 = vmatprep.mubr.bf16.mxu0 %v2388
    %2795 = vmatmul.mubr.bf16.gmra.mrb[0].mxu0 %v2387
    %v2796 = vpop.f32.mrb[0].mxu0
    %v2797 = vadd.f32 %v2176, %v2796
    %v2798 = vpop.f32.mrb[0].mxu0
    %v2799 = vpop.f32.mrb[0].mxu0
    %v2800 = vadd.f32 %v2176, %v2799
    %v2801 = vpop.f32.mrb[0].mxu0
    %2802 = vmatprep.mubr.bf16.mxu0 %v2393
    %2803 = vmatmul.mubr.bf16.gmra.mrb[0].mxu0 %v2392
    %v2804 = vpop.f32.mrb[0].mxu0
    %v2805 = vadd.f32 %v2176, %v2804
    %v2806 = vpop.f32.mrb[0].mxu0
    %v2807 = vpop.f32.mrb[0].mxu0
    %v2808 = vadd.f32 %v2176, %v2807
    %v2809 = vpop.f32.mrb[0].mxu0
    %2810 = vmatprep.mubr.bf16.mxu0 %v2398
    %2811 = vmatmul.mubr.bf16.gmra.mrb[0].mxu0 %v2397
    %v2812 = vpop.f32.mrb[0].mxu0
    %v2813 = vadd.f32 %v2176, %v2812
    %v2814 = vpop.f32.mrb[0].mxu0
    %v2815 = vpop.f32.mrb[0].mxu0
    %v2816 = vadd.f32 %v2176, %v2815
    %v2817 = vpop.f32.mrb[0].mxu0
    %2818 = vmatprep.mubr.bf16.mxu0 %v2403
    %2819 = vmatmul.mubr.bf16.gmra.mrb[0].mxu0 %v2402
    %v2820 = vpop.f32.mrb[0].mxu0
    %v2821 = vadd.f32 %v2176, %v2820
    %v2822 = vpop.f32.mrb[0].mxu0
    %v2823 = vpop.f32.mrb[0].mxu0
    %v2824 = vadd.f32 %v2176, %v2823
    %v2825 = vpop.f32.mrb[0].mxu0
    %2826 = vmatprep.mubr.bf16.mxu0 %v2408
    %2827 = vmatmul.mubr.bf16.gmra.mrb[0].mxu0 %v2407
    %v2828 = vpop.f32.mrb[0].mxu0
    %v2829 = vadd.f32 %v2176, %v2828
    %v2830 = vpop.f32.mrb[0].mxu0
    %v2831 = vpop.f32.mrb[0].mxu0
    %v2832 = vadd.f32 %v2176, %v2831
    %v2833 = vpop.f32.mrb[0].mxu0
    %2834 = vmatprep.mubr.bf16.mxu0 %v2413
    %2835 = vmatmul.mubr.bf16.gmra.mrb[0].mxu0 %v2412
    %v2836 = vpop.f32.mrb[0].mxu0
    %v2837 = vadd.f32 %v2176, %v2836
    %v2838 = vpop.f32.mrb[0].mxu0
    %v2839 = vpop.f32.mrb[0].mxu0
    %v2840 = vadd.f32 %v2176, %v2839
    %v2841 = vpop.f32.mrb[0].mxu0
    %2842 = vmatprep.mubr.bf16.mxu0 %v2418
    %2843 = vmatmul.mubr.bf16.gmra.mrb[0].mxu0 %v2417
    %v2844 = vpop.f32.mrb[0].mxu0
    %v2845 = vpop.f32.mrb[0].mxu0
    %v2846 = vpop.f32.mrb[0].mxu0
    %v2847 = vpop.f32.mrb[0].mxu0
    %2848 = vdwg.mxu0
    %2849 = vmatprep.subr.bf16.mxu0 0
    %2850 = vmatpush1.bf16.msra.mxu0 %v2658
    %2851 = vmatprep.subr.bf16.mxu0 0
    %2852 = vmatpush1.bf16.msra.mxu0 %v2659
    %2853 = vmatprep.subr.bf16.mxu0 0
    %2854 = vmatpush1.bf16.msra.mxu0 %v2660
    %2855 = vmatprep.subr.bf16.mxu0 0
    %2856 = vmatpush1.bf16.msra.mxu0 %v2661
    %2857 = vmatprep.subr.bf16.mxu0 0
    %2858 = vmatpush1.bf16.msra.mxu0 %v2662
    %2859 = vmatprep.subr.bf16.mxu0 0
    %2860 = vmatpush1.bf16.msra.mxu0 %v2663
    %2861 = vmatprep.subr.bf16.mxu0 0
    %2862 = vmatpush1.bf16.msra.mxu0 %v2664
    %2863 = vmatprep.subr.bf16.mxu0 0
    %2864 = vmatpush1.bf16.msra.mxu0 %v2665
    %2865 = vmatprep.subr.bf16.mxu0 0
    %2866 = vmatpush1.bf16.msra.mxu0 %v2666
    %2867 = vmatprep.subr.bf16.mxu0 0
    %2868 = vmatpush1.bf16.msra.mxu0 %v2667
    %2869 = vmatprep.subr.bf16.mxu0 0
    %2870 = vmatpush1.bf16.msra.mxu0 %v2668
    %2871 = vmatprep.subr.bf16.mxu0 0
    %2872 = vmatpush1.bf16.msra.mxu0 %v2669
    %2873 = vmatprep.subr.bf16.mxu0 0
    %2874 = vmatpush1.bf16.msra.mxu0 %v2670
    %2875 = vmatprep.subr.bf16.mxu0 0
    %2876 = vmatpush1.bf16.msra.mxu0 %v2671
    %2877 = vmatprep.subr.bf16.mxu0 0
    %2878 = vmatpush1.bf16.msra.mxu0 %v2672
    %2879 = vmatprep.subr.bf16.mxu0 0
    %2880 = vmatpush1.bf16.msra.mxu0 %v2673
    %2881 = vmatprep.mubr.bf16.mxu0 %v2365
    %2882 = vmatmul.mubr.bf16.gmra.mrb[0].mxu0 %v2364
    %v2883 = vpop.f32.mrb[0].mxu0
    %v2884 = vadd.f32 %v2757, %v2883
    %v2885 = vpop.f32.mrb[0].mxu0
    %v2886 = vpop.f32.mrb[0].mxu0
    %v2887 = vadd.f32 %v2760, %v2886
    %v2888 = vpop.f32.mrb[0].mxu0
    %2889 = vmatprep.mubr.bf16.mxu0 %v2370
    %2890 = vmatmul.mubr.bf16.gmra.mrb[0].mxu0 %v2369
    %v2891 = vpop.f32.mrb[0].mxu0
    %v2892 = vadd.f32 %v2765, %v2891
    %v2893 = vpop.f32.mrb[0].mxu0
    %v2894 = vpop.f32.mrb[0].mxu0
    %v2895 = vadd.f32 %v2768, %v2894
    %v2896 = vpop.f32.mrb[0].mxu0
    %2897 = vmatprep.mubr.bf16.mxu0 %v2375
    %2898 = vmatmul.mubr.bf16.gmra.mrb[0].mxu0 %v2374
    %v2899 = vpop.f32.mrb[0].mxu0
    %v2900 = vadd.f32 %v2773, %v2899
    %v2901 = vpop.f32.mrb[0].mxu0
    %v2902 = vpop.f32.mrb[0].mxu0
    %v2903 = vadd.f32 %v2776, %v2902
    %v2904 = vpop.f32.mrb[0].mxu0
    %2905 = vmatprep.mubr.bf16.mxu0 %v2380
    %2906 = vmatmul.mubr.bf16.gmra.mrb[0].mxu0 %v2379
    %v2907 = vpop.f32.mrb[0].mxu0
    %v2908 = vadd.f32 %v2781, %v2907
    %v2909 = vpop.f32.mrb[0].mxu0
    %v2910 = vpop.f32.mrb[0].mxu0
    %v2911 = vadd.f32 %v2784, %v2910
    %v2912 = vpop.f32.mrb[0].mxu0
    %2913 = vmatprep.mubr.bf16.mxu0 %v2385
    %2914 = vmatmul.mubr.bf16.gmra.mrb[0].mxu0 %v2384
    %v2915 = vpop.f32.mrb[0].mxu0
    %v2916 = vadd.f32 %v2789, %v2915
    %v2917 = vpop.f32.mrb[0].mxu0
    %v2918 = vpop.f32.mrb[0].mxu0
    %v2919 = vadd.f32 %v2792, %v2918
    %v2920 = vpop.f32.mrb[0].mxu0
    %2921 = vmatprep.mubr.bf16.mxu0 %v2390
    %2922 = vmatmul.mubr.bf16.gmra.mrb[0].mxu0 %v2389
    %v2923 = vpop.f32.mrb[0].mxu0
    %v2924 = vadd.f32 %v2797, %v2923
    %v2925 = vpop.f32.mrb[0].mxu0
    %v2926 = vpop.f32.mrb[0].mxu0
    %v2927 = vadd.f32 %v2800, %v2926
    %v2928 = vpop.f32.mrb[0].mxu0
    %2929 = vmatprep.mubr.bf16.mxu0 %v2395
    %2930 = vmatmul.mubr.bf16.gmra.mrb[0].mxu0 %v2394
    %v2931 = vpop.f32.mrb[0].mxu0
    %v2932 = vadd.f32 %v2805, %v2931
    %v2933 = vpop.f32.mrb[0].mxu0
    %v2934 = vpop.f32.mrb[0].mxu0
    %v2935 = vadd.f32 %v2808, %v2934
    %v2936 = vpop.f32.mrb[0].mxu0
    %2937 = vmatprep.mubr.bf16.mxu0 %v2400
    %2938 = vmatmul.mubr.bf16.gmra.mrb[0].mxu0 %v2399
    %v2939 = vpop.f32.mrb[0].mxu0
    %v2940 = vadd.f32 %v2813, %v2939
    %v2941 = vpop.f32.mrb[0].mxu0
    %v2942 = vpop.f32.mrb[0].mxu0
    %v2943 = vadd.f32 %v2816, %v2942
    %v2944 = vpop.f32.mrb[0].mxu0
    %2945 = vmatprep.mubr.bf16.mxu0 %v2405
    %2946 = vmatmul.mubr.bf16.gmra.mrb[0].mxu0 %v2404
    %v2947 = vpop.f32.mrb[0].mxu0
    %v2948 = vadd.f32 %v2821, %v2947
    %v2949 = vpop.f32.mrb[0].mxu0
    %v2950 = vpop.f32.mrb[0].mxu0
    %v2951 = vadd.f32 %v2824, %v2950
    %v2952 = vpop.f32.mrb[0].mxu0
    %2953 = vmatprep.mubr.bf16.mxu0 %v2410
    %2954 = vmatmul.mubr.bf16.gmra.mrb[0].mxu0 %v2409
    %v2955 = vpop.f32.mrb[0].mxu0
    %v2956 = vadd.f32 %v2829, %v2955
    %v2957 = vpop.f32.mrb[0].mxu0
    %v2958 = vpop.f32.mrb[0].mxu0
    %v2959 = vadd.f32 %v2832, %v2958
    %v2960 = vpop.f32.mrb[0].mxu0
    %2961 = vmatprep.mubr.bf16.mxu0 %v2415
    %2962 = vmatmul.mubr.bf16.gmra.mrb[0].mxu0 %v2414
    %v2963 = vpop.f32.mrb[0].mxu0
    %v2964 = vadd.f32 %v2837, %v2963
    %v2965 = vpop.f32.mrb[0].mxu0
    %v2966 = vpop.f32.mrb[0].mxu0
    %v2967 = vadd.f32 %v2840, %v2966
    %v2968 = vpop.f32.mrb[0].mxu0
    %2969 = vmatprep.mubr.bf16.mxu0 %v2420
    %2970 = vmatmul.mubr.bf16.gmra.mrb[0].mxu0 %v2419
    %v2971 = vpop.f32.mrb[0].mxu0
    %v2972 = vpop.f32.mrb[0].mxu0
    %v2973 = vpop.f32.mrb[0].mxu0
    %v2974 = vpop.f32.mrb[0].mxu0
    %2975 = vdwg.mxu0
    %2976 = vmatprep.subr.bf16.mxu0 0
    %2977 = vmatpush1.bf16.msra.mxu0 %v2674
    %2978 = vmatprep.subr.bf16.mxu0 0
    %2979 = vmatpush1.bf16.msra.mxu0 %v2675
    %2980 = vmatprep.subr.bf16.mxu0 0
    %2981 = vmatpush1.bf16.msra.mxu0 %v2676
    %2982 = vmatprep.subr.bf16.mxu0 0
    %2983 = vmatpush1.bf16.msra.mxu0 %v2677
    %2984 = vmatprep.subr.bf16.mxu0 0
    %2985 = vmatpush1.bf16.msra.mxu0 %v2678
    %2986 = vmatprep.subr.bf16.mxu0 0
    %2987 = vmatpush1.bf16.msra.mxu0 %v2679
    %2988 = vmatprep.subr.bf16.mxu0 0
    %2989 = vmatpush1.bf16.msra.mxu0 %v2680
    %2990 = vmatprep.subr.bf16.mxu0 0
    %2991 = vmatpush1.bf16.msra.mxu0 %v2681
    %2992 = vmatprep.subr.bf16.mxu0 0
    %2993 = vmatpush1.bf16.msra.mxu0 0
    %2994 = vmatprep.subr.bf16.mxu0 0
    %2995 = vmatpush1.bf16.msra.mxu0 0
    %2996 = vmatprep.subr.bf16.mxu0 0
    %2997 = vmatpush1.bf16.msra.mxu0 0
    %2998 = vmatprep.subr.bf16.mxu0 0
    %2999 = vmatpush1.bf16.msra.mxu0 0
    %3000 = vmatprep.subr.bf16.mxu0 0
    %3001 = vmatpush1.bf16.msra.mxu0 0
    %3002 = vmatprep.subr.bf16.mxu0 0
    %3003 = vmatpush1.bf16.msra.mxu0 0
    %3004 = vmatprep.subr.bf16.mxu0 0
    %3005 = vmatpush1.bf16.msra.mxu0 0
    %3006 = vmatprep.subr.bf16.mxu0 0
    %3007 = vmatpush1.bf16.msra.mxu0 0
    %3008 = vmatprep.mubr.bf16.mxu0 0
    %3009 = vmatmul.mubr.bf16.gmra.mrb[0].mxu0 %v2366
    %v3010 = vpop.f32.mrb[0].mxu0
    %v3011 = vadd.f32 %v2884, %v3010
    %v3012 = vpop.f32.mrb[0].mxu0
    %v3013 = vpop.f32.mrb[0].mxu0
    %v3014 = vadd.f32 %v2887, %v3013
    %v3015 = vpop.f32.mrb[0].mxu0
    %3016 = vmatprep.mubr.bf16.mxu0 0
    %3017 = vmatmul.mubr.bf16.gmra.mrb[0].mxu0 %v2371
    %v3018 = vpop.f32.mrb[0].mxu0
    %v3019 = vadd.f32 %v2892, %v3018
    %v3020 = vpop.f32.mrb[0].mxu0
    %v3021 = vpop.f32.mrb[0].mxu0
    %v3022 = vadd.f32 %v2895, %v3021
    %v3023 = vpop.f32.mrb[0].mxu0
    %3024 = vmatprep.mubr.bf16.mxu0 0
    %3025 = vmatmul.mubr.bf16.gmra.mrb[0].mxu0 %v2376
    %v3026 = vpop.f32.mrb[0].mxu0
    %v3027 = vadd.f32 %v2900, %v3026
    %v3028 = vpop.f32.mrb[0].mxu0
    %v3029 = vpop.f32.mrb[0].mxu0
    %v3030 = vadd.f32 %v2903, %v3029
    %v3031 = vpop.f32.mrb[0].mxu0
    %3032 = vmatprep.mubr.bf16.mxu0 0
    %3033 = vmatmul.mubr.bf16.gmra.mrb[0].mxu0 %v2381
    %v3034 = vpop.f32.mrb[0].mxu0
    %v3035 = vadd.f32 %v2908, %v3034
    %v3036 = vpop.f32.mrb[0].mxu0
    %v3037 = vpop.f32.mrb[0].mxu0
    %v3038 = vadd.f32 %v2911, %v3037
    %v3039 = vpop.f32.mrb[0].mxu0
    %3040 = vmatprep.mubr.bf16.mxu0 0
    %3041 = vmatmul.mubr.bf16.gmra.mrb[0].mxu0 %v2386
    %v3042 = vpop.f32.mrb[0].mxu0
    %v3043 = vadd.f32 %v2916, %v3042
    %v3044 = vpop.f32.mrb[0].mxu0
    %v3045 = vpop.f32.mrb[0].mxu0
    %v3046 = vadd.f32 %v2919, %v3045
    %v3047 = vpop.f32.mrb[0].mxu0
    %3048 = vmatprep.mubr.bf16.mxu0 0
    %3049 = vmatmul.mubr.bf16.gmra.mrb[0].mxu0 %v2391
    %v3050 = vpop.f32.mrb[0].mxu0
    %v3051 = vadd.f32 %v2924, %v3050
    %v3052 = vpop.f32.mrb[0].mxu0
    %v3053 = vpop.f32.mrb[0].mxu0
    %v3054 = vadd.f32 %v2927, %v3053
    %v3055 = vpop.f32.mrb[0].mxu0
    %3056 = vmatprep.mubr.bf16.mxu0 0
    %3057 = vmatmul.mubr.bf16.gmra.mrb[0].mxu0 %v2396
    %v3058 = vpop.f32.mrb[0].mxu0
    %v3059 = vadd.f32 %v2932, %v3058
    %v3060 = vpop.f32.mrb[0].mxu0
    %v3061 = vpop.f32.mrb[0].mxu0
    %v3062 = vadd.f32 %v2935, %v3061
    %v3063 = vpop.f32.mrb[0].mxu0
    %3064 = vmatprep.mubr.bf16.mxu0 0
    %3065 = vmatmul.mubr.bf16.gmra.mrb[0].mxu0 %v2401
    %v3066 = vpop.f32.mrb[0].mxu0
    %v3067 = vadd.f32 %v2940, %v3066
    %v3068 = vpop.f32.mrb[0].mxu0
    %v3069 = vpop.f32.mrb[0].mxu0
    %v3070 = vadd.f32 %v2943, %v3069
    %v3071 = vpop.f32.mrb[0].mxu0
    %3072 = vmatprep.mubr.bf16.mxu0 0
    %3073 = vmatmul.mubr.bf16.gmra.mrb[0].mxu0 %v2406
    %v3074 = vpop.f32.mrb[0].mxu0
    %v3075 = vadd.f32 %v2948, %v3074
    %v3076 = vpop.f32.mrb[0].mxu0
    %v3077 = vpop.f32.mrb[0].mxu0
    %v3078 = vadd.f32 %v2951, %v3077
    %v3079 = vpop.f32.mrb[0].mxu0
    %3080 = vmatprep.mubr.bf16.mxu0 0
    %3081 = vmatmul.mubr.bf16.gmra.mrb[0].mxu0 %v2411
    %v3082 = vpop.f32.mrb[0].mxu0
    %v3083 = vadd.f32 %v2956, %v3082
    %v3084 = vpop.f32.mrb[0].mxu0
    %v3085 = vpop.f32.mrb[0].mxu0
    %v3086 = vadd.f32 %v2959, %v3085
    %v3087 = vpop.f32.mrb[0].mxu0
    %3088 = vmatprep.mubr.bf16.mxu0 0
    %3089 = vmatmul.mubr.bf16.gmra.mrb[0].mxu0 %v2416
    %v3090 = vpop.f32.mrb[0].mxu0
    %v3091 = vadd.f32 %v2964, %v3090
    %v3092 = vpop.f32.mrb[0].mxu0
    %v3093 = vpop.f32.mrb[0].mxu0
    %v3094 = vadd.f32 %v2967, %v3093
    %v3095 = vpop.f32.mrb[0].mxu0
    %3096 = vmatprep.mubr.bf16.mxu0 0
    %3097 = vmatmul.mubr.bf16.gmra.mrb[0].mxu0 %v2421
    %v3098 = vpop.f32.mrb[0].mxu0
    %v3099 = vpop.f32.mrb[0].mxu0
    %v3100 = vpop.f32.mrb[0].mxu0
    %v3101 = vpop.f32.mrb[0].mxu0
    %3102 = vdwg.mxu0
    %v3103 = vmax.f32 %v3011, 0.0
    %v3104 = vmax.f32 %v3014, 0.0
    %v3105 = vmax.f32 %v3019, 0.0
    %v3106 = vmax.f32 %v3022, 0.0
    %v3107 = vmax.f32 %v3027, 0.0
    %v3108 = vmax.f32 %v3030, 0.0
    %v3109 = vmax.f32 %v3035, 0.0
    %v3110 = vmax.f32 %v3038, 0.0
    %v3111 = vmax.f32 %v3043, 0.0
    %v3112 = vmax.f32 %v3046, 0.0
    %v3113 = vmax.f32 %v3051, 0.0
    %v3114 = vmax.f32 %v3054, 0.0
    %v3115 = vmax.f32 %v3059, 0.0
    %v3116 = vmax.f32 %v3062, 0.0
    %v3117 = vmax.f32 %v3067, 0.0
    %v3118 = vmax.f32 %v3070, 0.0
    %v3119 = vmax.f32 %v3075, 0.0
    %v3120 = vmax.f32 %v3078, 0.0
    %v3121 = vmax.f32 %v3083, 0.0
    %v3122 = vmax.f32 %v3086, 0.0
    %v3123 = vmax.f32 %v3091, 0.0
    %v3124 = vmax.f32 %v3094, 0.0
    %3125 = vst [vmem:[#allocation4] sm:$0xff] 0.0
    %3126 = vst [vmem:[#allocation4 + $0x8] sm:$0xff] 0.0
    %3127 = vst [vmem:[#allocation4 + $0x68] sm:$0xff] 0.0
    %3128 = vst [vmem:[#allocation4 + $0x70] sm:$0xff] 0.0
    %v3129 = vmax.f32 %v3103, %v3104
    %3130 = vst [vmem:[#allocation4 + $0x10] sm:$0xff] %v3129
    %v3131 = vmax.f32 %v3105, %v3106
    %3132 = vst [vmem:[#allocation4 + $0x18] sm:$0xff] %v3131
    %v3133 = vmax.f32 %v3107, %v3108
    %3134 = vst [vmem:[#allocation4 + $0x20] sm:$0xff] %v3133
    %v3135 = vmax.f32 %v3109, %v3110
    %3136 = vst [vmem:[#allocation4 + $0x28] sm:$0xff] %v3135
    %v3137 = vmax.f32 %v3111, %v3112
    %3138 = vst [vmem:[#allocation4 + $0x30] sm:$0xff] %v3137
    %v3139 = vmax.f32 %v3113, %v3114
    %3140 = vst [vmem:[#allocation4 + $0x38] sm:$0xff] %v3139
    %v3141 = vmax.f32 %v3115, %v3116
    %3142 = vst [vmem:[#allocation4 + $0x40] sm:$0xff] %v3141
    %v3143 = vmax.f32 %v3117, %v3118
    %3144 = vst [vmem:[#allocation4 + $0x48] sm:$0xff] %v3143
    %v3145 = vmax.f32 %v3119, %v3120
    %3146 = vst [vmem:[#allocation4 + $0x50] sm:$0xff] %v3145
    %v3147 = vmax.f32 %v3121, %v3122
    %3148 = vst [vmem:[#allocation4 + $0x58] sm:$0xff] %v3147
    %v3149 = vmax.f32 %v3123, %v3124
    %3150 = vst [vmem:[#allocation4 + $0x60] sm:$0xff] %v3149
    %v3151 = vld [vmem:[#allocation4] sm:$0xff]
    %v3152 = vld [vmem:[#allocation4 + $0x8] sm:$0xff]
    %v3153 = vld [vmem:[#allocation4 + $0x10] sm:$0xff]
    %v3154 = vld [vmem:[#allocation4 + $0x18] sm:$0xff]
    %v3155 = vld [vmem:[#allocation4 + $0x20] sm:$0xff]
    %v3156 = vld [vmem:[#allocation4 + $0x28] sm:$0xff]
    %v3157 = vld [vmem:[#allocation4 + $0x30] sm:$0xff]
    %v3158 = vld [vmem:[#allocation4 + $0x38] sm:$0xff]
    %v3159 = vld [vmem:[#allocation4 + $0x40] sm:$0xff]
    %v3160 = vld [vmem:[#allocation4 + $0x48] sm:$0xff]
    %v3161 = vld [vmem:[#allocation4 + $0x50] sm:$0xff]
    %v3162 = vpack.c.bf16 %v3152, %v3151
    %v3163 = vpack.c.bf16 %v3154, %v3153
    %v3164 = vpack.c.bf16 %v3156, %v3155
    %v3165 = vpack.c.bf16 %v3158, %v3157
    %v3166 = vpack.c.bf16 %v3160, %v3159
    %v3167 = vpack.c.bf16 %v3161, %v3161
    %v3174 = vunpack.c.l.b16 %v3162
    %v3175 = vunpack.c.h.b16 %v3162
    %v3176 = vunpack.c.l.b16 %v3163
    %v3177 = vunpack.c.h.b16 %v3163
    %v3178 = vunpack.c.l.b16 %v3164
    %v3179 = vunpack.c.h.b16 %v3164
    %v3180 = vunpack.c.l.b16 %v3165
    %v3181 = vunpack.c.h.b16 %v3165
    %v3182 = vunpack.c.l.b16 %v3166
    %v3183 = vunpack.c.h.b16 %v3166
    %v3184 = vunpack.c.l.b16 %v3167
    %v3185 = vpack.c.b16 %v3174, %v3174
    %v3186 = vpack.c.b16 %v3175, %v3175
    %v3187 = vpack.c.b16 %v3176, %v3176
    %v3188 = vpack.c.b16 %v3177, %v3177
    %v3189 = vpack.c.b16 %v3178, %v3178
    %v3190 = vpack.c.b16 %v3179, %v3179
    %v3191 = vpack.c.b16 %v3180, %v3180
    %v3192 = vpack.c.b16 %v3181, %v3181
    %v3193 = vpack.c.b16 %v3182, %v3182
    %v3194 = vpack.c.b16 %v3183, %v3183
    %v3195 = vpack.c.b16 %v3184, %v3184
    %3207 = vst [vmem:[#allocation5] sm:$0xf] %v3185
    %3208 = vst [vmem:[#allocation5 + $0x14] sm:$0xf] %v3186
    %3209 = vst [vmem:[#allocation5 + $0x28] sm:$0xf] %v3187
    %3210 = vst [vmem:[#allocation5 + $0x3c] sm:$0xf] %v3188
    %3211 = vst [vmem:[#allocation5 + $0x50] sm:$0xf] %v3189
    %3212 = vst [vmem:[#allocation5 + $0x64] sm:$0xf] %v3190
    %3213 = vst [vmem:[#allocation5 + $0x78] sm:$0xf] %v3191
    %3214 = vst [vmem:[#allocation5 + $0x8c] sm:$0xf] %v3192
    %3215 = vst [vmem:[#allocation5 + $0xa0] sm:$0xf] %v3193
    %3216 = vst [vmem:[#allocation5 + $0xb4] sm:$0xf] %v3194
    %3217 = vst [vmem:[#allocation5 + $0xc8] sm:$0xf] %v3195
    %v3218 = vld [vmem:[#allocation4 + $0x8] sm:$0xff]
    %v3219 = vld [vmem:[#allocation4 + $0x10] sm:$0xff]
    %v3220 = vld [vmem:[#allocation4 + $0x18] sm:$0xff]
    %v3221 = vld [vmem:[#allocation4 + $0x20] sm:$0xff]
    %v3222 = vld [vmem:[#allocation4 + $0x28] sm:$0xff]
    %v3223 = vld [vmem:[#allocation4 + $0x30] sm:$0xff]
    %v3224 = vld [vmem:[#allocation4 + $0x38] sm:$0xff]
    %v3225 = vld [vmem:[#allocation4 + $0x40] sm:$0xff]
    %v3226 = vld [vmem:[#allocation4 + $0x48] sm:$0xff]
    %v3227 = vld [vmem:[#allocation4 + $0x50] sm:$0xff]
    %v3228 = vld [vmem:[#allocation4 + $0x58] sm:$0xff]
    %v3229 = vpack.c.bf16 %v3219, %v3218
    %v3230 = vpack.c.bf16 %v3221, %v3220
    %v3231 = vpack.c.bf16 %v3223, %v3222
    %v3232 = vpack.c.bf16 %v3225, %v3224
    %v3233 = vpack.c.bf16 %v3227, %v3226
    %v3234 = vpack.c.bf16 %v3228, %v3228
    %v3241 = vunpack.c.l.b16 %v3229
    %v3242 = vunpack.c.h.b16 %v3229
    %v3243 = vunpack.c.l.b16 %v3230
    %v3244 = vunpack.c.h.b16 %v3230
    %v3245 = vunpack.c.l.b16 %v3231
    %v3246 = vunpack.c.h.b16 %v3231
    %v3247 = vunpack.c.l.b16 %v3232
    %v3248 = vunpack.c.h.b16 %v3232
    %v3249 = vunpack.c.l.b16 %v3233
    %v3250 = vunpack.c.h.b16 %v3233
    %v3251 = vunpack.c.l.b16 %v3234
    %v3252 = vpack.c.b16 %v3241, %v3241
    %v3253 = vpack.c.b16 %v3242, %v3242
    %v3254 = vpack.c.b16 %v3243, %v3243
    %v3255 = vpack.c.b16 %v3244, %v3244
    %v3256 = vpack.c.b16 %v3245, %v3245
    %v3257 = vpack.c.b16 %v3246, %v3246
    %v3258 = vpack.c.b16 %v3247, %v3247
    %v3259 = vpack.c.b16 %v3248, %v3248
    %v3260 = vpack.c.b16 %v3249, %v3249
    %v3261 = vpack.c.b16 %v3250, %v3250
    %v3262 = vpack.c.b16 %v3251, %v3251
    %3274 = vst [vmem:[#allocation5 + $0x4] sm:$0xf] %v3252
    %3275 = vst [vmem:[#allocation5 + $0x18] sm:$0xf] %v3253
    %3276 = vst [vmem:[#allocation5 + $0x2c] sm:$0xf] %v3254
    %3277 = vst [vmem:[#allocation5 + $0x40] sm:$0xf] %v3255
    %3278 = vst [vmem:[#allocation5 + $0x54] sm:$0xf] %v3256
    %3279 = vst [vmem:[#allocation5 + $0x68] sm:$0xf] %v3257
    %3280 = vst [vmem:[#allocation5 + $0x7c] sm:$0xf] %v3258
    %3281 = vst [vmem:[#allocation5 + $0x90] sm:$0xf] %v3259
    %3282 = vst [vmem:[#allocation5 + $0xa4] sm:$0xf] %v3260
    %3283 = vst [vmem:[#allocation5 + $0xb8] sm:$0xf] %v3261
    %3284 = vst [vmem:[#allocation5 + $0xcc] sm:$0xf] %v3262
    %v3285 = vld [vmem:[#allocation4 + $0x10] sm:$0xff]
    %v3286 = vld [vmem:[#allocation4 + $0x18] sm:$0xff]
    %v3287 = vld [vmem:[#allocation4 + $0x20] sm:$0xff]
    %v3288 = vld [vmem:[#allocation4 + $0x28] sm:$0xff]
    %v3289 = vld [vmem:[#allocation4 + $0x30] sm:$0xff]
    %v3290 = vld [vmem:[#allocation4 + $0x38] sm:$0xff]
    %v3291 = vld [vmem:[#allocation4 + $0x40] sm:$0xff]
    %v3292 = vld [vmem:[#allocation4 + $0x48] sm:$0xff]
    %v3293 = vld [vmem:[#allocation4 + $0x50] sm:$0xff]
    %v3294 = vld [vmem:[#allocation4 + $0x58] sm:$0xff]
    %v3295 = vld [vmem:[#allocation4 + $0x60] sm:$0xff]
    %v3296 = vpack.c.bf16 %v3286, %v3285
    %v3297 = vpack.c.bf16 %v3288, %v3287
    %v3298 = vpack.c.bf16 %v3290, %v3289
    %v3299 = vpack.c.bf16 %v3292, %v3291
    %v3300 = vpack.c.bf16 %v3294, %v3293
    %v3301 = vpack.c.bf16 %v3295, %v3295
    %v3308 = vunpack.c.l.b16 %v3296
    %v3309 = vunpack.c.h.b16 %v3296
    %v3310 = vunpack.c.l.b16 %v3297
    %v3311 = vunpack.c.h.b16 %v3297
    %v3312 = vunpack.c.l.b16 %v3298
    %v3313 = vunpack.c.h.b16 %v3298
    %v3314 = vunpack.c.l.b16 %v3299
    %v3315 = vunpack.c.h.b16 %v3299
    %v3316 = vunpack.c.l.b16 %v3300
    %v3317 = vunpack.c.h.b16 %v3300
    %v3318 = vunpack.c.l.b16 %v3301
    %v3319 = vpack.c.b16 %v3308, %v3308
    %v3320 = vpack.c.b16 %v3309, %v3309
    %v3321 = vpack.c.b16 %v3310, %v3310
    %v3322 = vpack.c.b16 %v3311, %v3311
    %v3323 = vpack.c.b16 %v3312, %v3312
    %v3324 = vpack.c.b16 %v3313, %v3313
    %v3325 = vpack.c.b16 %v3314, %v3314
    %v3326 = vpack.c.b16 %v3315, %v3315
    %v3327 = vpack.c.b16 %v3316, %v3316
    %v3328 = vpack.c.b16 %v3317, %v3317
    %v3329 = vpack.c.b16 %v3318, %v3318
    %3341 = vst [vmem:[#allocation5 + $0x8] sm:$0xf] %v3319
    %3342 = vst [vmem:[#allocation5 + $0x1c] sm:$0xf] %v3320
    %3343 = vst [vmem:[#allocation5 + $0x30] sm:$0xf] %v3321
    %3344 = vst [vmem:[#allocation5 + $0x44] sm:$0xf] %v3322
    %3345 = vst [vmem:[#allocation5 + $0x58] sm:$0xf] %v3323
    %3346 = vst [vmem:[#allocation5 + $0x6c] sm:$0xf] %v3324
    %3347 = vst [vmem:[#allocation5 + $0x80] sm:$0xf] %v3325
    %3348 = vst [vmem:[#allocation5 + $0x94] sm:$0xf] %v3326
    %3349 = vst [vmem:[#allocation5 + $0xa8] sm:$0xf] %v3327
    %3350 = vst [vmem:[#allocation5 + $0xbc] sm:$0xf] %v3328
    %3351 = vst [vmem:[#allocation5 + $0xd0] sm:$0xf] %v3329
    %v3352 = vld [vmem:[#allocation4 + $0x18] sm:$0xff]
    %v3353 = vld [vmem:[#allocation4 + $0x20] sm:$0xff]
    %v3354 = vld [vmem:[#allocation4 + $0x28] sm:$0xff]
    %v3355 = vld [vmem:[#allocation4 + $0x30] sm:$0xff]
    %v3356 = vld [vmem:[#allocation4 + $0x38] sm:$0xff]
    %v3357 = vld [vmem:[#allocation4 + $0x40] sm:$0xff]
    %v3358 = vld [vmem:[#allocation4 + $0x48] sm:$0xff]
    %v3359 = vld [vmem:[#allocation4 + $0x50] sm:$0xff]
    %v3360 = vld [vmem:[#allocation4 + $0x58] sm:$0xff]
    %v3361 = vld [vmem:[#allocation4 + $0x60] sm:$0xff]
    %v3362 = vld [vmem:[#allocation4 + $0x68] sm:$0xff]
    %v3363 = vpack.c.bf16 %v3353, %v3352
    %v3364 = vpack.c.bf16 %v3355, %v3354
    %v3365 = vpack.c.bf16 %v3357, %v3356
    %v3366 = vpack.c.bf16 %v3359, %v3358
    %v3367 = vpack.c.bf16 %v3361, %v3360
    %v3368 = vpack.c.bf16 %v3362, %v3362
    %v3375 = vunpack.c.l.b16 %v3363
    %v3376 = vunpack.c.h.b16 %v3363
    %v3377 = vunpack.c.l.b16 %v3364
    %v3378 = vunpack.c.h.b16 %v3364
    %v3379 = vunpack.c.l.b16 %v3365
    %v3380 = vunpack.c.h.b16 %v3365
    %v3381 = vunpack.c.l.b16 %v3366
    %v3382 = vunpack.c.h.b16 %v3366
    %v3383 = vunpack.c.l.b16 %v3367
    %v3384 = vunpack.c.h.b16 %v3367
    %v3385 = vunpack.c.l.b16 %v3368
    %v3386 = vpack.c.b16 %v3375, %v3375
    %v3387 = vpack.c.b16 %v3376, %v3376
    %v3388 = vpack.c.b16 %v3377, %v3377
    %v3389 = vpack.c.b16 %v3378, %v3378
    %v3390 = vpack.c.b16 %v3379, %v3379
    %v3391 = vpack.c.b16 %v3380, %v3380
    %v3392 = vpack.c.b16 %v3381, %v3381
    %v3393 = vpack.c.b16 %v3382, %v3382
    %v3394 = vpack.c.b16 %v3383, %v3383
    %v3395 = vpack.c.b16 %v3384, %v3384
    %v3396 = vpack.c.b16 %v3385, %v3385
    %3408 = vst [vmem:[#allocation5 + $0xc] sm:$0xf] %v3386
    %3409 = vst [vmem:[#allocation5 + $0x20] sm:$0xf] %v3387
    %3410 = vst [vmem:[#allocation5 + $0x34] sm:$0xf] %v3388
    %3411 = vst [vmem:[#allocation5 + $0x48] sm:$0xf] %v3389
    %3412 = vst [vmem:[#allocation5 + $0x5c] sm:$0xf] %v3390
    %3413 = vst [vmem:[#allocation5 + $0x70] sm:$0xf] %v3391
    %3414 = vst [vmem:[#allocation5 + $0x84] sm:$0xf] %v3392
    %3415 = vst [vmem:[#allocation5 + $0x98] sm:$0xf] %v3393
    %3416 = vst [vmem:[#allocation5 + $0xac] sm:$0xf] %v3394
    %3417 = vst [vmem:[#allocation5 + $0xc0] sm:$0xf] %v3395
    %3418 = vst [vmem:[#allocation5 + $0xd4] sm:$0xf] %v3396
    %v3419 = vld [vmem:[#allocation4 + $0x20] sm:$0xff]
    %v3420 = vld [vmem:[#allocation4 + $0x28] sm:$0xff]
    %v3421 = vld [vmem:[#allocation4 + $0x30] sm:$0xff]
    %v3422 = vld [vmem:[#allocation4 + $0x38] sm:$0xff]
    %v3423 = vld [vmem:[#allocation4 + $0x40] sm:$0xff]
    %v3424 = vld [vmem:[#allocation4 + $0x48] sm:$0xff]
    %v3425 = vld [vmem:[#allocation4 + $0x50] sm:$0xff]
    %v3426 = vld [vmem:[#allocation4 + $0x58] sm:$0xff]
    %v3427 = vld [vmem:[#allocation4 + $0x60] sm:$0xff]
    %v3428 = vld [vmem:[#allocation4 + $0x68] sm:$0xff]
    %v3429 = vld [vmem:[#allocation4 + $0x70] sm:$0xff]
    %v3430 = vpack.c.bf16 %v3420, %v3419
    %v3431 = vpack.c.bf16 %v3422, %v3421
    %v3432 = vpack.c.bf16 %v3424, %v3423
    %v3433 = vpack.c.bf16 %v3426, %v3425
    %v3434 = vpack.c.bf16 %v3428, %v3427
    %v3435 = vpack.c.bf16 %v3429, %v3429
    %v3442 = vunpack.c.l.b16 %v3430
    %v3443 = vunpack.c.h.b16 %v3430
    %v3444 = vunpack.c.l.b16 %v3431
    %v3445 = vunpack.c.h.b16 %v3431
    %v3446 = vunpack.c.l.b16 %v3432
    %v3447 = vunpack.c.h.b16 %v3432
    %v3448 = vunpack.c.l.b16 %v3433
    %v3449 = vunpack.c.h.b16 %v3433
    %v3450 = vunpack.c.l.b16 %v3434
    %v3451 = vunpack.c.h.b16 %v3434
    %v3452 = vunpack.c.l.b16 %v3435
    %v3453 = vpack.c.b16 %v3442, %v3442
    %v3454 = vpack.c.b16 %v3443, %v3443
    %v3455 = vpack.c.b16 %v3444, %v3444
    %v3456 = vpack.c.b16 %v3445, %v3445
    %v3457 = vpack.c.b16 %v3446, %v3446
    %v3458 = vpack.c.b16 %v3447, %v3447
    %v3459 = vpack.c.b16 %v3448, %v3448
    %v3460 = vpack.c.b16 %v3449, %v3449
    %v3461 = vpack.c.b16 %v3450, %v3450
    %v3462 = vpack.c.b16 %v3451, %v3451
    %v3463 = vpack.c.b16 %v3452, %v3452
    %3475 = vst [vmem:[#allocation5 + $0x10] sm:$0xf] %v3453
    %3476 = vst [vmem:[#allocation5 + $0x24] sm:$0xf] %v3454
    %3477 = vst [vmem:[#allocation5 + $0x38] sm:$0xf] %v3455
    %3478 = vst [vmem:[#allocation5 + $0x4c] sm:$0xf] %v3456
    %3479 = vst [vmem:[#allocation5 + $0x60] sm:$0xf] %v3457
    %3480 = vst [vmem:[#allocation5 + $0x74] sm:$0xf] %v3458
    %3481 = vst [vmem:[#allocation5 + $0x88] sm:$0xf] %v3459
    %3482 = vst [vmem:[#allocation5 + $0x9c] sm:$0xf] %v3460
    %3483 = vst [vmem:[#allocation5 + $0xb0] sm:$0xf] %v3461
    %3484 = vst [vmem:[#allocation5 + $0xc4] sm:$0xf] %v3462
    %3485 = vst [vmem:[#allocation5 + $0xd8] sm:$0xf] %v3463
    %v3486 = vld [vmem:[#allocation5] sm:$0xff]
    %v3487 = vld [vmem:[#allocation5 + $0x8] sm:$0xff]
    %v3488 = vld [vmem:[#allocation5 + $0x10] sm:$0xf]
    %v3489 = vld [vmem:[#allocation5 + $0x14] sm:$0xff]
    %v3490 = vld [vmem:[#allocation5 + $0x1c] sm:$0xff]
    %v3491 = vld [vmem:[#allocation5 + $0x24] sm:$0xf]
    %v3492 = vld [vmem:[#allocation5 + $0x28] sm:$0xff]
    %v3493 = vld [vmem:[#allocation5 + $0x30] sm:$0xff]
    %v3494 = vld [vmem:[#allocation5 + $0x38] sm:$0xf]
    %v3495 = vld [vmem:[#allocation5 + $0x3c] sm:$0xff]
    %v3496 = vld [vmem:[#allocation5 + $0x44] sm:$0xff]
    %v3497 = vld [vmem:[#allocation5 + $0x4c] sm:$0xf]
    %v3498 = vld [vmem:[#allocation5 + $0x50] sm:$0xff]
    %v3499 = vld [vmem:[#allocation5 + $0x58] sm:$0xff]
    %v3500 = vld [vmem:[#allocation5 + $0x60] sm:$0xf]
    %v3501 = vld [vmem:[#allocation5 + $0x64] sm:$0xff]
    %v3502 = vld [vmem:[#allocation5 + $0x6c] sm:$0xff]
    %v3503 = vld [vmem:[#allocation5 + $0x74] sm:$0xf]
    %v3504 = vld [vmem:[#allocation5 + $0x78] sm:$0xff]
    %v3505 = vld [vmem:[#allocation5 + $0x80] sm:$0xff]
    %v3506 = vld [vmem:[#allocation5 + $0x88] sm:$0xf]
    %v3507 = vld [vmem:[#allocation5 + $0x8c] sm:$0xff]
    %v3508 = vld [vmem:[#allocation5 + $0x94] sm:$0xff]
    %v3509 = vld [vmem:[#allocation5 + $0x9c] sm:$0xf]
    %v3510 = vld [vmem:[#allocation5 + $0xa0] sm:$0xff]
    %v3511 = vld [vmem:[#allocation5 + $0xa8] sm:$0xff]
    %v3512 = vld [vmem:[#allocation5 + $0xb0] sm:$0xf]
    %v3513 = vld [vmem:[#allocation5 + $0xb4] sm:$0xff]
    %v3514 = vld [vmem:[#allocation5 + $0xbc] sm:$0xff]
    %v3515 = vld [vmem:[#allocation5 + $0xc4] sm:$0xf]
    %v3516 = vld [vmem:[#allocation5 + $0xc8] sm:$0xff]
    %v3517 = vld [vmem:[#allocation5 + $0xd0] sm:$0xff]
    %v3518 = vld [vmem:[#allocation5 + $0xd8] sm:$0xf]
    %v3519 = vld [vmem:[%s9] sm:$0xf]
    %v3520 = vld [vmem:[%s9 + $0x4] sm:$0xf]
    %v3521 = vld [vmem:[%s9 + $0x8] sm:$0xf]
    %v3522 = vld [vmem:[%s9 + $0xc] sm:$0xf]
    %v3523 = vld [vmem:[%s9 + $0x10] sm:$0xf]
    %v3524 = vld [vmem:[%s9 + $0x14] sm:$0xf]
    %v3525 = vld [vmem:[%s9 + $0x18] sm:$0xf]
    %v3526 = vld [vmem:[%s9 + $0x1c] sm:$0xf]
    %v3527 = vld [vmem:[%s9 + $0x20] sm:$0xf]
    %v3528 = vld [vmem:[%s9 + $0x24] sm:$0xf]
    %v3529 = vld [vmem:[%s9 + $0x28] sm:$0xf]
    %v3530 = vld [vmem:[%s9 + $0x2c] sm:$0xf]
    %v3531 = vld [vmem:[%s9 + $0x30] sm:$0xf]
    %v3532 = vld [vmem:[%s9 + $0x34] sm:$0xf]
    %v3533 = vld [vmem:[%s9 + $0x38] sm:$0xf]
    %v3534 = vld [vmem:[%s9 + $0x3c] sm:$0xf]
    %v3535 = vld [vmem:[%s9 + $0x40] sm:$0xf]
    %v3536 = vld [vmem:[%s9 + $0x44] sm:$0xf]
    %v3537 = vld [vmem:[%s9 + $0x48] sm:$0xf]
    %v3538 = vld [vmem:[%s9 + $0x4c] sm:$0xf]
    %v3539 = vld [vmem:[%s9 + $0x50] sm:$0xf]
    %v3540 = vld [vmem:[%s9 + $0x54] sm:$0xf]
    %v3541 = vld [vmem:[%s9 + $0x58] sm:$0xf]
    %v3542 = vld [vmem:[%s9 + $0x5c] sm:$0xf]
    %v3543 = vld [vmem:[%s9 + $0x60] sm:$0xf]
    %v3544 = vld [vmem:[%s9 + $0x64] sm:$0xf]
    %v3545 = vld [vmem:[%s9 + $0x68] sm:$0xf]
    %v3546 = vld [vmem:[%s9 + $0x6c] sm:$0xf]
    %v3547 = vld [vmem:[%s9 + $0x70] sm:$0xf]
    %v3548 = vld [vmem:[%s9 + $0x74] sm:$0xf]
    %v3549 = vld [vmem:[%s9 + $0x78] sm:$0xf]
    %v3550 = vld [vmem:[%s9 + $0x7c] sm:$0xf]
    %v3551 = vld [vmem:[%s9 + $0x80] sm:$0xf]
    %v3552 = vld [vmem:[%s9 + $0x84] sm:$0xf]
    %v3553 = vld [vmem:[%s9 + $0x88] sm:$0xf]
    %v3554 = vld [vmem:[%s9 + $0x8c] sm:$0xf]
    %v3555 = vld [vmem:[%s9 + $0x90] sm:$0xf]
    %v3556 = vld [vmem:[%s9 + $0x94] sm:$0xf]
    %v3557 = vld [vmem:[%s9 + $0x98] sm:$0xf]
    %v3558 = vld [vmem:[%s9 + $0x9c] sm:$0xf]
    %v3559 = vld [vmem:[%s9 + $0xa0] sm:$0xf]
    %v3560 = vld [vmem:[%s9 + $0xa4] sm:$0xf]
    %v3561 = vld [vmem:[%s9 + $0xa8] sm:$0xf]
    %v3562 = vld [vmem:[%s9 + $0xac] sm:$0xf]
    %v3563 = vld [vmem:[%s9 + $0xb0] sm:$0xf]
    %v3564 = vld [vmem:[%s9 + $0xb4] sm:$0xf]
    %v3565 = vld [vmem:[%s9 + $0xb8] sm:$0xf]
    %v3566 = vld [vmem:[%s9 + $0xbc] sm:$0xf]
    %v3567 = vld [vmem:[%s9 + $0xc0] sm:$0xf]
    %v3568 = vld [vmem:[%s9 + $0xc4] sm:$0xf]
    %v3569 = vld [vmem:[%s9 + $0xc8] sm:$0xf]
    %v3570 = vld [vmem:[%s9 + $0xcc] sm:$0xf]
    %v3571 = vld [vmem:[%s9 + $0xd0] sm:$0xf]
    %v3572 = vld [vmem:[%s9 + $0xd4] sm:$0xf]
    %v3573 = vld [vmem:[%s9 + $0xd8] sm:$0xf]
    %v3574 = vld [vmem:[%s9 + $0xdc] sm:$0xf]
    %v3575 = vld [vmem:[%s9 + $0xe0] sm:$0xf]
    %v3576 = vld [vmem:[%s9 + $0xe4] sm:$0xf]
    %v3577 = vld [vmem:[%s9 + $0xe8] sm:$0xf]
    %v3578 = vld [vmem:[%s9 + $0xec] sm:$0xf]
    %v3579 = vld [vmem:[%s9 + $0xf0] sm:$0xf]
    %v3580 = vld [vmem:[%s9 + $0xf4] sm:$0xf]
    %v3581 = vld [vmem:[%s9 + $0xf8] sm:$0xf]
    %v3582 = vld [vmem:[%s9 + $0xfc] sm:$0xf]
    %v3583 = vld [vmem:[%s9 + $0x100] sm:$0xf]
    %v3584 = vld [vmem:[%s9 + $0x104] sm:$0xf]
    %v3585 = vld [vmem:[%s9 + $0x108] sm:$0xf]
    %v3586 = vld [vmem:[%s9 + $0x10c] sm:$0xf]
    %v3587 = vld [vmem:[%s9 + $0x110] sm:$0xf]
    %v3588 = vld [vmem:[%s9 + $0x114] sm:$0xf]
    %v3589 = vld [vmem:[%s9 + $0x118] sm:$0xf]
    %v3590 = vld [vmem:[%s9 + $0x11c] sm:$0xf]
    %v3591 = vld [vmem:[%s9 + $0x120] sm:$0xf]
    %v3592 = vld [vmem:[%s9 + $0x124] sm:$0xf]
    %v3593 = vld [vmem:[%s9 + $0x128] sm:$0xf]
    %v3594 = vld [vmem:[%s9 + $0x12c] sm:$0xf]
    %v3595 = vld [vmem:[%s9 + $0x130] sm:$0xf]
    %v3596 = vld [vmem:[%s9 + $0x134] sm:$0xf]
    %v3597 = vld [vmem:[%s9 + $0x138] sm:$0xf]
    %v3598 = vld [vmem:[%s9 + $0x13c] sm:$0xf]
    %v3599 = vld [vmem:[%s10] sm:$0x1]
    %v3601 = vlaneseq
    %v3602 = vshrl.u32 %v3601, 7
    %v3603 = vsub.s32 0, %v3602
    %v3604 = vrot.slane %v3599, %v3603
    %v3639 = vunpack.c.l.b16 %v3486
    %v3640 = vunpack.c.h.b16 %v3486
    %v3641 = vunpack.c.l.b16 %v3487
    %v3642 = vunpack.c.h.b16 %v3487
    %v3643 = vunpack.c.l.b16 %v3488
    %v3644 = vunpack.c.l.b16 %v3489
    %v3645 = vunpack.c.h.b16 %v3489
    %v3646 = vunpack.c.l.b16 %v3490
    %v3647 = vunpack.c.h.b16 %v3490
    %v3648 = vunpack.c.l.b16 %v3491
    %v3649 = vunpack.c.l.b16 %v3492
    %v3650 = vunpack.c.h.b16 %v3492
    %v3651 = vunpack.c.l.b16 %v3493
    %v3652 = vunpack.c.h.b16 %v3493
    %v3653 = vunpack.c.l.b16 %v3494
    %v3654 = vunpack.c.l.b16 %v3495
    %v3655 = vunpack.c.h.b16 %v3495
    %v3656 = vunpack.c.l.b16 %v3496
    %v3657 = vunpack.c.h.b16 %v3496
    %v3658 = vunpack.c.l.b16 %v3497
    %v3659 = vunpack.c.l.b16 %v3498
    %v3660 = vunpack.c.h.b16 %v3498
    %v3661 = vunpack.c.l.b16 %v3499
    %v3662 = vunpack.c.h.b16 %v3499
    %v3663 = vunpack.c.l.b16 %v3500
    %v3664 = vunpack.c.l.b16 %v3501
    %v3665 = vunpack.c.h.b16 %v3501
    %v3666 = vunpack.c.l.b16 %v3502
    %v3667 = vunpack.c.h.b16 %v3502
    %v3668 = vunpack.c.l.b16 %v3503
    %v3669 = vunpack.c.l.b16 %v3504
    %v3670 = vunpack.c.h.b16 %v3504
    %v3671 = vunpack.c.l.b16 %v3505
    %v3672 = vunpack.c.h.b16 %v3505
    %v3673 = vunpack.c.l.b16 %v3506
    %v3674 = vunpack.c.l.b16 %v3507
    %v3675 = vunpack.c.h.b16 %v3507
    %v3676 = vunpack.c.l.b16 %v3508
    %v3677 = vunpack.c.h.b16 %v3508
    %v3678 = vunpack.c.l.b16 %v3509
    %v3679 = vunpack.c.l.b16 %v3510
    %v3680 = vunpack.c.h.b16 %v3510
    %v3681 = vunpack.c.l.b16 %v3511
    %v3682 = vunpack.c.h.b16 %v3511
    %v3683 = vunpack.c.l.b16 %v3512
    %v3684 = vunpack.c.l.b16 %v3513
    %v3685 = vunpack.c.h.b16 %v3513
    %v3686 = vunpack.c.l.b16 %v3514
    %v3687 = vunpack.c.h.b16 %v3514
    %v3688 = vunpack.c.l.b16 %v3515
    %v3689 = vunpack.c.l.b16 %v3516
    %v3690 = vunpack.c.h.b16 %v3516
    %v3691 = vunpack.c.l.b16 %v3517
    %v3692 = vunpack.c.h.b16 %v3517
    %v3693 = vunpack.c.l.b16 %v3518
    %v3694 = vpack.c.b16 %v3644, %v3639
    %v3695 = vpack.c.b16 %v3645, %v3640
    %v3696 = vpack.c.b16 %v3646, %v3641
    %v3697 = vpack.c.b16 %v3647, %v3642
    %v3698 = vpack.c.b16 %v3648, %v3643
    %v3699 = vpack.c.b16 %v3654, %v3649
    %v3700 = vpack.c.b16 %v3655, %v3650
    %v3701 = vpack.c.b16 %v3656, %v3651
    %v3702 = vpack.c.b16 %v3657, %v3652
    %v3703 = vpack.c.b16 %v3658, %v3653
    %v3704 = vpack.c.b16 %v3664, %v3659
    %v3705 = vpack.c.b16 %v3665, %v3660
    %v3706 = vpack.c.b16 %v3666, %v3661
    %v3707 = vpack.c.b16 %v3667, %v3662
    %v3708 = vpack.c.b16 %v3668, %v3663
    %v3709 = vpack.c.b16 %v3674, %v3669
    %v3710 = vpack.c.b16 %v3675, %v3670
    %v3711 = vpack.c.b16 %v3676, %v3671
    %v3712 = vpack.c.b16 %v3677, %v3672
    %v3713 = vpack.c.b16 %v3678, %v3673
    %v3714 = vpack.c.b16 %v3684, %v3679
    %v3715 = vpack.c.b16 %v3685, %v3680
    %v3716 = vpack.c.b16 %v3686, %v3681
    %v3717 = vpack.c.b16 %v3687, %v3682
    %v3718 = vpack.c.b16 %v3688, %v3683
    %v3719 = vpack.c.b16 %v3689, %v3689
    %v3720 = vpack.c.b16 %v3690, %v3690
    %v3721 = vpack.c.b16 %v3691, %v3691
    %v3722 = vpack.c.b16 %v3692, %v3692
    %v3723 = vpack.c.b16 %v3693, %v3693
    %v3834 = vunpack.c.l.b16 %v3519
    %v3835 = vunpack.c.l.b16 %v3520
    %v3836 = vunpack.c.l.b16 %v3521
    %v3837 = vunpack.c.l.b16 %v3522
    %v3838 = vunpack.c.l.b16 %v3523
    %v3839 = vunpack.c.l.b16 %v3524
    %v3840 = vunpack.c.l.b16 %v3525
    %v3841 = vunpack.c.l.b16 %v3526
    %v3842 = vunpack.c.l.b16 %v3527
    %v3843 = vunpack.c.l.b16 %v3528
    %v3844 = vunpack.c.l.b16 %v3529
    %v3845 = vunpack.c.l.b16 %v3530
    %v3846 = vunpack.c.l.b16 %v3531
    %v3847 = vunpack.c.l.b16 %v3532
    %v3848 = vunpack.c.l.b16 %v3533
    %v3849 = vunpack.c.l.b16 %v3534
    %v3850 = vunpack.c.l.b16 %v3535
    %v3851 = vunpack.c.l.b16 %v3536
    %v3852 = vunpack.c.l.b16 %v3537
    %v3853 = vunpack.c.l.b16 %v3538
    %v3854 = vunpack.c.l.b16 %v3539
    %v3855 = vunpack.c.l.b16 %v3540
    %v3856 = vunpack.c.l.b16 %v3541
    %v3857 = vunpack.c.l.b16 %v3542
    %v3858 = vunpack.c.l.b16 %v3543
    %v3859 = vunpack.c.l.b16 %v3544
    %v3860 = vunpack.c.l.b16 %v3545
    %v3861 = vunpack.c.l.b16 %v3546
    %v3862 = vunpack.c.l.b16 %v3547
    %v3863 = vunpack.c.l.b16 %v3548
    %v3864 = vunpack.c.l.b16 %v3549
    %v3865 = vunpack.c.l.b16 %v3550
    %v3866 = vunpack.c.l.b16 %v3551
    %v3867 = vunpack.c.l.b16 %v3552
    %v3868 = vunpack.c.l.b16 %v3553
    %v3869 = vunpack.c.l.b16 %v3554
    %v3870 = vunpack.c.l.b16 %v3555
    %v3871 = vunpack.c.l.b16 %v3556
    %v3872 = vunpack.c.l.b16 %v3557
    %v3873 = vunpack.c.l.b16 %v3558
    %v3874 = vunpack.c.l.b16 %v3559
    %v3875 = vunpack.c.l.b16 %v3560
    %v3876 = vunpack.c.l.b16 %v3561
    %v3877 = vunpack.c.l.b16 %v3562
    %v3878 = vunpack.c.l.b16 %v3563
    %v3879 = vunpack.c.l.b16 %v3564
    %v3880 = vunpack.c.l.b16 %v3565
    %v3881 = vunpack.c.l.b16 %v3566
    %v3882 = vunpack.c.l.b16 %v3567
    %v3883 = vunpack.c.l.b16 %v3568
    %v3884 = vunpack.c.l.b16 %v3569
    %v3885 = vunpack.c.l.b16 %v3570
    %v3886 = vunpack.c.l.b16 %v3571
    %v3887 = vunpack.c.l.b16 %v3572
    %v3888 = vunpack.c.l.b16 %v3573
    %v3889 = vunpack.c.l.b16 %v3574
    %v3890 = vunpack.c.l.b16 %v3575
    %v3891 = vunpack.c.l.b16 %v3576
    %v3892 = vunpack.c.l.b16 %v3577
    %v3893 = vunpack.c.l.b16 %v3578
    %v3894 = vunpack.c.l.b16 %v3579
    %v3895 = vunpack.c.l.b16 %v3580
    %v3896 = vunpack.c.l.b16 %v3581
    %v3897 = vunpack.c.l.b16 %v3582
    %v3898 = vunpack.c.l.b16 %v3583
    %v3899 = vunpack.c.l.b16 %v3584
    %v3900 = vunpack.c.l.b16 %v3585
    %v3901 = vunpack.c.l.b16 %v3586
    %v3902 = vunpack.c.l.b16 %v3587
    %v3903 = vunpack.c.l.b16 %v3588
    %v3904 = vunpack.c.l.b16 %v3589
    %v3905 = vunpack.c.l.b16 %v3590
    %v3906 = vunpack.c.l.b16 %v3591
    %v3907 = vunpack.c.l.b16 %v3592
    %v3908 = vunpack.c.l.b16 %v3593
    %v3909 = vunpack.c.l.b16 %v3594
    %v3910 = vunpack.c.l.b16 %v3595
    %v3911 = vunpack.c.l.b16 %v3596
    %v3912 = vunpack.c.l.b16 %v3597
    %v3913 = vunpack.c.l.b16 %v3598
    %v3914 = vpack.c.b16 %v3835, %v3834
    %v3915 = vpack.c.b16 %v3837, %v3836
    %v3916 = vpack.c.b16 %v3839, %v3838
    %v3917 = vpack.c.b16 %v3841, %v3840
    %v3918 = vpack.c.b16 %v3843, %v3842
    %v3919 = vpack.c.b16 %v3845, %v3844
    %v3920 = vpack.c.b16 %v3847, %v3846
    %v3921 = vpack.c.b16 %v3849, %v3848
    %v3922 = vpack.c.b16 %v3851, %v3850
    %v3923 = vpack.c.b16 %v3853, %v3852
    %v3924 = vpack.c.b16 %v3855, %v3854
    %v3925 = vpack.c.b16 %v3857, %v3856
    %v3926 = vpack.c.b16 %v3859, %v3858
    %v3927 = vpack.c.b16 %v3861, %v3860
    %v3928 = vpack.c.b16 %v3863, %v3862
    %v3929 = vpack.c.b16 %v3865, %v3864
    %v3930 = vpack.c.b16 %v3867, %v3866
    %v3931 = vpack.c.b16 %v3869, %v3868
    %v3932 = vpack.c.b16 %v3871, %v3870
    %v3933 = vpack.c.b16 %v3873, %v3872
    %v3934 = vpack.c.b16 %v3875, %v3874
    %v3935 = vpack.c.b16 %v3877, %v3876
    %v3936 = vpack.c.b16 %v3879, %v3878
    %v3937 = vpack.c.b16 %v3881, %v3880
    %v3938 = vpack.c.b16 %v3883, %v3882
    %v3939 = vpack.c.b16 %v3885, %v3884
    %v3940 = vpack.c.b16 %v3887, %v3886
    %v3941 = vpack.c.b16 %v3889, %v3888
    %v3942 = vpack.c.b16 %v3891, %v3890
    %v3943 = vpack.c.b16 %v3893, %v3892
    %v3944 = vpack.c.b16 %v3895, %v3894
    %v3945 = vpack.c.b16 %v3897, %v3896
    %v3946 = vpack.c.b16 %v3899, %v3898
    %v3947 = vpack.c.b16 %v3901, %v3900
    %v3948 = vpack.c.b16 %v3903, %v3902
    %v3949 = vpack.c.b16 %v3905, %v3904
    %v3950 = vpack.c.b16 %v3907, %v3906
    %v3951 = vpack.c.b16 %v3909, %v3908
    %v3952 = vpack.c.b16 %v3911, %v3910
    %v3953 = vpack.c.b16 %v3913, %v3912
    %3994 = vmatprep.subr.bf16.mxu0 0
    %3995 = vmatpush1.bf16.msra.mxu0 %v3914
    %3996 = vmatprep.subr.bf16.mxu0 0
    %3997 = vmatpush1.bf16.msra.mxu0 %v3915
    %3998 = vmatprep.subr.bf16.mxu0 0
    %3999 = vmatpush1.bf16.msra.mxu0 %v3916
    %4000 = vmatprep.subr.bf16.mxu0 0
    %4001 = vmatpush1.bf16.msra.mxu0 %v3917
    %4002 = vmatprep.subr.bf16.mxu0 0
    %4003 = vmatpush1.bf16.msra.mxu0 %v3918
    %4004 = vmatprep.subr.bf16.mxu0 0
    %4005 = vmatpush1.bf16.msra.mxu0 %v3919
    %4006 = vmatprep.subr.bf16.mxu0 0
    %4007 = vmatpush1.bf16.msra.mxu0 %v3920
    %4008 = vmatprep.subr.bf16.mxu0 0
    %4009 = vmatpush1.bf16.msra.mxu0 %v3921
    %4010 = vmatprep.subr.bf16.mxu0 0
    %4011 = vmatpush1.bf16.msra.mxu0 %v3922
    %4012 = vmatprep.subr.bf16.mxu0 0
    %4013 = vmatpush1.bf16.msra.mxu0 %v3923
    %4014 = vmatprep.subr.bf16.mxu0 0
    %4015 = vmatpush1.bf16.msra.mxu0 %v3924
    %4016 = vmatprep.subr.bf16.mxu0 0
    %4017 = vmatpush1.bf16.msra.mxu0 %v3925
    %4018 = vmatprep.subr.bf16.mxu0 0
    %4019 = vmatpush1.bf16.msra.mxu0 %v3926
    %4020 = vmatprep.subr.bf16.mxu0 0
    %4021 = vmatpush1.bf16.msra.mxu0 %v3927
    %4022 = vmatprep.subr.bf16.mxu0 0
    %4023 = vmatpush1.bf16.msra.mxu0 %v3928
    %4024 = vmatprep.subr.bf16.mxu0 0
    %4025 = vmatpush1.bf16.msra.mxu0 %v3929
    %4026 = vmatprep.mubr.bf16.mxu0 %v3695
    %4027 = vmatmul.mubr.bf16.gmra.mrb[0].mxu0 %v3694
    %v4028 = vpop.f32.mrb[0].mxu0
    %v4029 = vadd.f32 %v3604, %v4028
    %v4030 = vpop.f32.mrb[0].mxu0
    %v4031 = vpop.f32.mrb[0].mxu0
    %v4032 = vadd.f32 %v3604, %v4031
    %v4033 = vpop.f32.mrb[0].mxu0
    %4034 = vmatprep.mubr.bf16.mxu0 %v3700
    %4035 = vmatmul.mubr.bf16.gmra.mrb[0].mxu0 %v3699
    %v4036 = vpop.f32.mrb[0].mxu0
    %v4037 = vadd.f32 %v3604, %v4036
    %v4038 = vpop.f32.mrb[0].mxu0
    %v4039 = vpop.f32.mrb[0].mxu0
    %v4040 = vadd.f32 %v3604, %v4039
    %v4041 = vpop.f32.mrb[0].mxu0
    %4042 = vmatprep.mubr.bf16.mxu0 %v3705
    %4043 = vmatmul.mubr.bf16.gmra.mrb[0].mxu0 %v3704
    %v4044 = vpop.f32.mrb[0].mxu0
    %v4045 = vadd.f32 %v3604, %v4044
    %v4046 = vpop.f32.mrb[0].mxu0
    %v4047 = vpop.f32.mrb[0].mxu0
    %v4048 = vadd.f32 %v3604, %v4047
    %v4049 = vpop.f32.mrb[0].mxu0
    %4050 = vmatprep.mubr.bf16.mxu0 %v3710
    %4051 = vmatmul.mubr.bf16.gmra.mrb[0].mxu0 %v3709
    %v4052 = vpop.f32.mrb[0].mxu0
    %v4053 = vadd.f32 %v3604, %v4052
    %v4054 = vpop.f32.mrb[0].mxu0
    %v4055 = vpop.f32.mrb[0].mxu0
    %v4056 = vadd.f32 %v3604, %v4055
    %v4057 = vpop.f32.mrb[0].mxu0
    %4058 = vmatprep.mubr.bf16.mxu0 %v3715
    %4059 = vmatmul.mubr.bf16.gmra.mrb[0].mxu0 %v3714
    %v4060 = vpop.f32.mrb[0].mxu0
    %v4061 = vadd.f32 %v3604, %v4060
    %v4062 = vpop.f32.mrb[0].mxu0
    %v4063 = vpop.f32.mrb[0].mxu0
    %v4064 = vadd.f32 %v3604, %v4063
    %v4065 = vpop.f32.mrb[0].mxu0
    %4066 = vmatprep.mubr.bf16.mxu0 %v3720
    %4067 = vmatmul.mubr.bf16.gmra.mrb[0].mxu0 %v3719
    %v4068 = vpop.f32.mrb[0].mxu0
    %v4069 = vadd.f32 %v3604, %v4068
    %v4070 = vpop.f32.mrb[0].mxu0
    %v4071 = vpop.f32.mrb[0].mxu0
    %v4072 = vpop.f32.mrb[0].mxu0
    %4073 = vdwg.mxu0
    %4074 = vmatprep.subr.bf16.mxu0 0
    %4075 = vmatpush1.bf16.msra.mxu0 %v3930
    %4076 = vmatprep.subr.bf16.mxu0 0
    %4077 = vmatpush1.bf16.msra.mxu0 %v3931
    %4078 = vmatprep.subr.bf16.mxu0 0
    %4079 = vmatpush1.bf16.msra.mxu0 %v3932
    %4080 = vmatprep.subr.bf16.mxu0 0
    %4081 = vmatpush1.bf16.msra.mxu0 %v3933
    %4082 = vmatprep.subr.bf16.mxu0 0
    %4083 = vmatpush1.bf16.msra.mxu0 %v3934
    %4084 = vmatprep.subr.bf16.mxu0 0
    %4085 = vmatpush1.bf16.msra.mxu0 %v3935
    %4086 = vmatprep.subr.bf16.mxu0 0
    %4087 = vmatpush1.bf16.msra.mxu0 %v3936
    %4088 = vmatprep.subr.bf16.mxu0 0
    %4089 = vmatpush1.bf16.msra.mxu0 %v3937
    %4090 = vmatprep.subr.bf16.mxu0 0
    %4091 = vmatpush1.bf16.msra.mxu0 %v3938
    %4092 = vmatprep.subr.bf16.mxu0 0
    %4093 = vmatpush1.bf16.msra.mxu0 %v3939
    %4094 = vmatprep.subr.bf16.mxu0 0
    %4095 = vmatpush1.bf16.msra.mxu0 %v3940
    %4096 = vmatprep.subr.bf16.mxu0 0
    %4097 = vmatpush1.bf16.msra.mxu0 %v3941
    %4098 = vmatprep.subr.bf16.mxu0 0
    %4099 = vmatpush1.bf16.msra.mxu0 %v3942
    %4100 = vmatprep.subr.bf16.mxu0 0
    %4101 = vmatpush1.bf16.msra.mxu0 %v3943
    %4102 = vmatprep.subr.bf16.mxu0 0
    %4103 = vmatpush1.bf16.msra.mxu0 %v3944
    %4104 = vmatprep.subr.bf16.mxu0 0
    %4105 = vmatpush1.bf16.msra.mxu0 %v3945
    %4106 = vmatprep.mubr.bf16.mxu0 %v3697
    %4107 = vmatmul.mubr.bf16.gmra.mrb[0].mxu0 %v3696
    %v4108 = vpop.f32.mrb[0].mxu0
    %v4109 = vadd.f32 %v4029, %v4108
    %v4110 = vpop.f32.mrb[0].mxu0
    %v4111 = vpop.f32.mrb[0].mxu0
    %v4112 = vadd.f32 %v4032, %v4111
    %v4113 = vpop.f32.mrb[0].mxu0
    %4114 = vmatprep.mubr.bf16.mxu0 %v3702
    %4115 = vmatmul.mubr.bf16.gmra.mrb[0].mxu0 %v3701
    %v4116 = vpop.f32.mrb[0].mxu0
    %v4117 = vadd.f32 %v4037, %v4116
    %v4118 = vpop.f32.mrb[0].mxu0
    %v4119 = vpop.f32.mrb[0].mxu0
    %v4120 = vadd.f32 %v4040, %v4119
    %v4121 = vpop.f32.mrb[0].mxu0
    %4122 = vmatprep.mubr.bf16.mxu0 %v3707
    %4123 = vmatmul.mubr.bf16.gmra.mrb[0].mxu0 %v3706
    %v4124 = vpop.f32.mrb[0].mxu0
    %v4125 = vadd.f32 %v4045, %v4124
    %v4126 = vpop.f32.mrb[0].mxu0
    %v4127 = vpop.f32.mrb[0].mxu0
    %v4128 = vadd.f32 %v4048, %v4127
    %v4129 = vpop.f32.mrb[0].mxu0
    %4130 = vmatprep.mubr.bf16.mxu0 %v3712
    %4131 = vmatmul.mubr.bf16.gmra.mrb[0].mxu0 %v3711
    %v4132 = vpop.f32.mrb[0].mxu0
    %v4133 = vadd.f32 %v4053, %v4132
    %v4134 = vpop.f32.mrb[0].mxu0
    %v4135 = vpop.f32.mrb[0].mxu0
    %v4136 = vadd.f32 %v4056, %v4135
    %v4137 = vpop.f32.mrb[0].mxu0
    %4138 = vmatprep.mubr.bf16.mxu0 %v3717
    %4139 = vmatmul.mubr.bf16.gmra.mrb[0].mxu0 %v3716
    %v4140 = vpop.f32.mrb[0].mxu0
    %v4141 = vadd.f32 %v4061, %v4140
    %v4142 = vpop.f32.mrb[0].mxu0
    %v4143 = vpop.f32.mrb[0].mxu0
    %v4144 = vadd.f32 %v4064, %v4143
    %v4145 = vpop.f32.mrb[0].mxu0
    %4146 = vmatprep.mubr.bf16.mxu0 %v3722
    %4147 = vmatmul.mubr.bf16.gmra.mrb[0].mxu0 %v3721
    %v4148 = vpop.f32.mrb[0].mxu0
    %v4149 = vadd.f32 %v4069, %v4148
    %v4150 = vpop.f32.mrb[0].mxu0
    %v4151 = vpop.f32.mrb[0].mxu0
    %v4152 = vpop.f32.mrb[0].mxu0
    %4153 = vdwg.mxu0
    %4154 = vmatprep.subr.bf16.mxu0 0
    %4155 = vmatpush1.bf16.msra.mxu0 %v3946
    %4156 = vmatprep.subr.bf16.mxu0 0
    %4157 = vmatpush1.bf16.msra.mxu0 %v3947
    %4158 = vmatprep.subr.bf16.mxu0 0
    %4159 = vmatpush1.bf16.msra.mxu0 %v3948
    %4160 = vmatprep.subr.bf16.mxu0 0
    %4161 = vmatpush1.bf16.msra.mxu0 %v3949
    %4162 = vmatprep.subr.bf16.mxu0 0
    %4163 = vmatpush1.bf16.msra.mxu0 %v3950
    %4164 = vmatprep.subr.bf16.mxu0 0
    %4165 = vmatpush1.bf16.msra.mxu0 %v3951
    %4166 = vmatprep.subr.bf16.mxu0 0
    %4167 = vmatpush1.bf16.msra.mxu0 %v3952
    %4168 = vmatprep.subr.bf16.mxu0 0
    %4169 = vmatpush1.bf16.msra.mxu0 %v3953
    %4170 = vmatprep.subr.bf16.mxu0 0
    %4171 = vmatpush1.bf16.msra.mxu0 0
    %4172 = vmatprep.subr.bf16.mxu0 0
    %4173 = vmatpush1.bf16.msra.mxu0 0
    %4174 = vmatprep.subr.bf16.mxu0 0
    %4175 = vmatpush1.bf16.msra.mxu0 0
    %4176 = vmatprep.subr.bf16.mxu0 0
    %4177 = vmatpush1.bf16.msra.mxu0 0
    %4178 = vmatprep.subr.bf16.mxu0 0
    %4179 = vmatpush1.bf16.msra.mxu0 0
    %4180 = vmatprep.subr.bf16.mxu0 0
    %4181 = vmatpush1.bf16.msra.mxu0 0
    %4182 = vmatprep.subr.bf16.mxu0 0
    %4183 = vmatpush1.bf16.msra.mxu0 0
    %4184 = vmatprep.subr.bf16.mxu0 0
    %4185 = vmatpush1.bf16.msra.mxu0 0
    %4186 = vmatprep.mubr.bf16.mxu0 0
    %4187 = vmatmul.mubr.bf16.gmra.mrb[0].mxu0 %v3698
    %v4188 = vpop.f32.mrb[0].mxu0
    %v4189 = vadd.f32 %v4109, %v4188
    %v4190 = vpop.f32.mrb[0].mxu0
    %v4191 = vpop.f32.mrb[0].mxu0
    %v4192 = vadd.f32 %v4112, %v4191
    %v4193 = vpop.f32.mrb[0].mxu0
    %4194 = vmatprep.mubr.bf16.mxu0 0
    %4195 = vmatmul.mubr.bf16.gmra.mrb[0].mxu0 %v3703
    %v4196 = vpop.f32.mrb[0].mxu0
    %v4197 = vadd.f32 %v4117, %v4196
    %v4198 = vpop.f32.mrb[0].mxu0
    %v4199 = vpop.f32.mrb[0].mxu0
    %v4200 = vadd.f32 %v4120, %v4199
    %v4201 = vpop.f32.mrb[0].mxu0
    %4202 = vmatprep.mubr.bf16.mxu0 0
    %4203 = vmatmul.mubr.bf16.gmra.mrb[0].mxu0 %v3708
    %v4204 = vpop.f32.mrb[0].mxu0
    %v4205 = vadd.f32 %v4125, %v4204
    %v4206 = vpop.f32.mrb[0].mxu0
    %v4207 = vpop.f32.mrb[0].mxu0
    %v4208 = vadd.f32 %v4128, %v4207
    %v4209 = vpop.f32.mrb[0].mxu0
    %4210 = vmatprep.mubr.bf16.mxu0 0
    %4211 = vmatmul.mubr.bf16.gmra.mrb[0].mxu0 %v3713
    %v4212 = vpop.f32.mrb[0].mxu0
    %v4213 = vadd.f32 %v4133, %v4212
    %v4214 = vpop.f32.mrb[0].mxu0
    %v4215 = vpop.f32.mrb[0].mxu0
    %v4216 = vadd.f32 %v4136, %v4215
    %v4217 = vpop.f32.mrb[0].mxu0
    %4218 = vmatprep.mubr.bf16.mxu0 0
    %4219 = vmatmul.mubr.bf16.gmra.mrb[0].mxu0 %v3718
    %v4220 = vpop.f32.mrb[0].mxu0
    %v4221 = vadd.f32 %v4141, %v4220
    %v4222 = vpop.f32.mrb[0].mxu0
    %v4223 = vpop.f32.mrb[0].mxu0
    %v4224 = vadd.f32 %v4144, %v4223
    %v4225 = vpop.f32.mrb[0].mxu0
    %4226 = vmatprep.mubr.bf16.mxu0 0
    %4227 = vmatmul.mubr.bf16.gmra.mrb[0].mxu0 %v3723
    %v4228 = vpop.f32.mrb[0].mxu0
    %v4229 = vadd.f32 %v4149, %v4228
    %v4230 = vpop.f32.mrb[0].mxu0
    %v4231 = vpop.f32.mrb[0].mxu0
    %v4232 = vpop.f32.mrb[0].mxu0
    %4233 = vdwg.mxu0
    %v4234 = vmax.f32 %v4189, 0.0
    %v4235 = vmax.f32 %v4192, 0.0
    %v4236 = vmax.f32 %v4197, 0.0
    %v4237 = vmax.f32 %v4200, 0.0
    %v4238 = vmax.f32 %v4205, 0.0
    %v4239 = vmax.f32 %v4208, 0.0
    %v4240 = vmax.f32 %v4213, 0.0
    %v4241 = vmax.f32 %v4216, 0.0
    %v4242 = vmax.f32 %v4221, 0.0
    %v4243 = vmax.f32 %v4224, 0.0
    %v4244 = vmax.f32 %v4229, 0.0
    %4245 = vst [vmem:[#allocation4 + $0x10] sm:$0xff] %v4234
    %4246 = vst [vmem:[#allocation4 + $0x18] sm:$0xff] %v4235
    %4247 = vst [vmem:[#allocation4 + $0x20] sm:$0xff] %v4236
    %4248 = vst [vmem:[#allocation4 + $0x28] sm:$0xff] %v4237
    %4249 = vst [vmem:[#allocation4 + $0x30] sm:$0xff] %v4238
    %4250 = vst [vmem:[#allocation4 + $0x38] sm:$0xff] %v4239
    %4251 = vst [vmem:[#allocation4 + $0x40] sm:$0xff] %v4240
    %4252 = vst [vmem:[#allocation4 + $0x48] sm:$0xff] %v4241
    %4253 = vst [vmem:[#allocation4 + $0x50] sm:$0xff] %v4242
    %4254 = vst [vmem:[#allocation4 + $0x58] sm:$0xff] %v4243
    %4255 = vst [vmem:[#allocation4 + $0x60] sm:$0xff] %v4244
    %v4256 = vld [vmem:[#allocation4] sm:$0xff]
    %v4257 = vld [vmem:[#allocation4 + $0x8] sm:$0xff]
    %v4258 = vld [vmem:[#allocation4 + $0x10] sm:$0xff]
    %v4259 = vld [vmem:[#allocation4 + $0x18] sm:$0xff]
    %v4260 = vld [vmem:[#allocation4 + $0x20] sm:$0xff]
    %v4261 = vld [vmem:[#allocation4 + $0x28] sm:$0xff]
    %v4262 = vld [vmem:[#allocation4 + $0x30] sm:$0xff]
    %v4263 = vld [vmem:[#allocation4 + $0x38] sm:$0xff]
    %v4264 = vld [vmem:[#allocation4 + $0x40] sm:$0xff]
    %v4265 = vld [vmem:[#allocation4 + $0x48] sm:$0xff]
    %v4266 = vld [vmem:[#allocation4 + $0x50] sm:$0xff]
    %v4267 = vpack.c.bf16 %v4257, %v4256
    %v4268 = vpack.c.bf16 %v4259, %v4258
    %v4269 = vpack.c.bf16 %v4261, %v4260
    %v4270 = vpack.c.bf16 %v4263, %v4262
    %v4271 = vpack.c.bf16 %v4265, %v4264
    %v4272 = vpack.c.bf16 %v4266, %v4266
    %v4279 = vunpack.c.l.b16 %v4267
    %v4280 = vunpack.c.h.b16 %v4267
    %v4281 = vunpack.c.l.b16 %v4268
    %v4282 = vunpack.c.h.b16 %v4268
    %v4283 = vunpack.c.l.b16 %v4269
    %v4284 = vunpack.c.h.b16 %v4269
    %v4285 = vunpack.c.l.b16 %v4270
    %v4286 = vunpack.c.h.b16 %v4270
    %v4287 = vunpack.c.l.b16 %v4271
    %v4288 = vunpack.c.h.b16 %v4271
    %v4289 = vunpack.c.l.b16 %v4272
    %v4290 = vpack.c.b16 %v4279, %v4279
    %v4291 = vpack.c.b16 %v4280, %v4280
    %v4292 = vpack.c.b16 %v4281, %v4281
    %v4293 = vpack.c.b16 %v4282, %v4282
    %v4294 = vpack.c.b16 %v4283, %v4283
    %v4295 = vpack.c.b16 %v4284, %v4284
    %v4296 = vpack.c.b16 %v4285, %v4285
    %v4297 = vpack.c.b16 %v4286, %v4286
    %v4298 = vpack.c.b16 %v4287, %v4287
    %v4299 = vpack.c.b16 %v4288, %v4288
    %v4300 = vpack.c.b16 %v4289, %v4289
    %4312 = vst [vmem:[#allocation5] sm:$0xf] %v4290
    %4313 = vst [vmem:[#allocation5 + $0x14] sm:$0xf] %v4291
    %4314 = vst [vmem:[#allocation5 + $0x28] sm:$0xf] %v4292
    %4315 = vst [vmem:[#allocation5 + $0x3c] sm:$0xf] %v4293
    %4316 = vst [vmem:[#allocation5 + $0x50] sm:$0xf] %v4294
    %4317 = vst [vmem:[#allocation5 + $0x64] sm:$0xf] %v4295
    %4318 = vst [vmem:[#allocation5 + $0x78] sm:$0xf] %v4296
    %4319 = vst [vmem:[#allocation5 + $0x8c] sm:$0xf] %v4297
    %4320 = vst [vmem:[#allocation5 + $0xa0] sm:$0xf] %v4298
    %4321 = vst [vmem:[#allocation5 + $0xb4] sm:$0xf] %v4299
    %4322 = vst [vmem:[#allocation5 + $0xc8] sm:$0xf] %v4300
    %v4323 = vld [vmem:[#allocation4 + $0x8] sm:$0xff]
    %v4324 = vld [vmem:[#allocation4 + $0x10] sm:$0xff]
    %v4325 = vld [vmem:[#allocation4 + $0x18] sm:$0xff]
    %v4326 = vld [vmem:[#allocation4 + $0x20] sm:$0xff]
    %v4327 = vld [vmem:[#allocation4 + $0x28] sm:$0xff]
    %v4328 = vld [vmem:[#allocation4 + $0x30] sm:$0xff]
    %v4329 = vld [vmem:[#allocation4 + $0x38] sm:$0xff]
    %v4330 = vld [vmem:[#allocation4 + $0x40] sm:$0xff]
    %v4331 = vld [vmem:[#allocation4 + $0x48] sm:$0xff]
    %v4332 = vld [vmem:[#allocation4 + $0x50] sm:$0xff]
    %v4333 = vld [vmem:[#allocation4 + $0x58] sm:$0xff]
    %v4334 = vpack.c.bf16 %v4324, %v4323
    %v4335 = vpack.c.bf16 %v4326, %v4325
    %v4336 = vpack.c.bf16 %v4328, %v4327
    %v4337 = vpack.c.bf16 %v4330, %v4329
    %v4338 = vpack.c.bf16 %v4332, %v4331
    %v4339 = vpack.c.bf16 %v4333, %v4333
    %v4346 = vunpack.c.l.b16 %v4334
    %v4347 = vunpack.c.h.b16 %v4334
    %v4348 = vunpack.c.l.b16 %v4335
    %v4349 = vunpack.c.h.b16 %v4335
    %v4350 = vunpack.c.l.b16 %v4336
    %v4351 = vunpack.c.h.b16 %v4336
    %v4352 = vunpack.c.l.b16 %v4337
    %v4353 = vunpack.c.h.b16 %v4337
    %v4354 = vunpack.c.l.b16 %v4338
    %v4355 = vunpack.c.h.b16 %v4338
    %v4356 = vunpack.c.l.b16 %v4339
    %v4357 = vpack.c.b16 %v4346, %v4346
    %v4358 = vpack.c.b16 %v4347, %v4347
    %v4359 = vpack.c.b16 %v4348, %v4348
    %v4360 = vpack.c.b16 %v4349, %v4349
    %v4361 = vpack.c.b16 %v4350, %v4350
    %v4362 = vpack.c.b16 %v4351, %v4351
    %v4363 = vpack.c.b16 %v4352, %v4352
    %v4364 = vpack.c.b16 %v4353, %v4353
    %v4365 = vpack.c.b16 %v4354, %v4354
    %v4366 = vpack.c.b16 %v4355, %v4355
    %v4367 = vpack.c.b16 %v4356, %v4356
    %4379 = vst [vmem:[#allocation5 + $0x4] sm:$0xf] %v4357
    %4380 = vst [vmem:[#allocation5 + $0x18] sm:$0xf] %v4358
    %4381 = vst [vmem:[#allocation5 + $0x2c] sm:$0xf] %v4359
    %4382 = vst [vmem:[#allocation5 + $0x40] sm:$0xf] %v4360
    %4383 = vst [vmem:[#allocation5 + $0x54] sm:$0xf] %v4361
    %4384 = vst [vmem:[#allocation5 + $0x68] sm:$0xf] %v4362
    %4385 = vst [vmem:[#allocation5 + $0x7c] sm:$0xf] %v4363
    %4386 = vst [vmem:[#allocation5 + $0x90] sm:$0xf] %v4364
    %4387 = vst [vmem:[#allocation5 + $0xa4] sm:$0xf] %v4365
    %4388 = vst [vmem:[#allocation5 + $0xb8] sm:$0xf] %v4366
    %4389 = vst [vmem:[#allocation5 + $0xcc] sm:$0xf] %v4367
    %v4390 = vld [vmem:[#allocation4 + $0x10] sm:$0xff]
    %v4391 = vld [vmem:[#allocation4 + $0x18] sm:$0xff]
    %v4392 = vld [vmem:[#allocation4 + $0x20] sm:$0xff]
    %v4393 = vld [vmem:[#allocation4 + $0x28] sm:$0xff]
    %v4394 = vld [vmem:[#allocation4 + $0x30] sm:$0xff]
    %v4395 = vld [vmem:[#allocation4 + $0x38] sm:$0xff]
    %v4396 = vld [vmem:[#allocation4 + $0x40] sm:$0xff]
    %v4397 = vld [vmem:[#allocation4 + $0x48] sm:$0xff]
    %v4398 = vld [vmem:[#allocation4 + $0x50] sm:$0xff]
    %v4399 = vld [vmem:[#allocation4 + $0x58] sm:$0xff]
    %v4400 = vld [vmem:[#allocation4 + $0x60] sm:$0xff]
    %v4401 = vpack.c.bf16 %v4391, %v4390
    %v4402 = vpack.c.bf16 %v4393, %v4392
    %v4403 = vpack.c.bf16 %v4395, %v4394
    %v4404 = vpack.c.bf16 %v4397, %v4396
    %v4405 = vpack.c.bf16 %v4399, %v4398
    %v4406 = vpack.c.bf16 %v4400, %v4400
    %v4413 = vunpack.c.l.b16 %v4401
    %v4414 = vunpack.c.h.b16 %v4401
    %v4415 = vunpack.c.l.b16 %v4402
    %v4416 = vunpack.c.h.b16 %v4402
    %v4417 = vunpack.c.l.b16 %v4403
    %v4418 = vunpack.c.h.b16 %v4403
    %v4419 = vunpack.c.l.b16 %v4404
    %v4420 = vunpack.c.h.b16 %v4404
    %v4421 = vunpack.c.l.b16 %v4405
    %v4422 = vunpack.c.h.b16 %v4405
    %v4423 = vunpack.c.l.b16 %v4406
    %v4424 = vpack.c.b16 %v4413, %v4413
    %v4425 = vpack.c.b16 %v4414, %v4414
    %v4426 = vpack.c.b16 %v4415, %v4415
    %v4427 = vpack.c.b16 %v4416, %v4416
    %v4428 = vpack.c.b16 %v4417, %v4417
    %v4429 = vpack.c.b16 %v4418, %v4418
    %v4430 = vpack.c.b16 %v4419, %v4419
    %v4431 = vpack.c.b16 %v4420, %v4420
    %v4432 = vpack.c.b16 %v4421, %v4421
    %v4433 = vpack.c.b16 %v4422, %v4422
    %v4434 = vpack.c.b16 %v4423, %v4423
    %4446 = vst [vmem:[#allocation5 + $0x8] sm:$0xf] %v4424
    %4447 = vst [vmem:[#allocation5 + $0x1c] sm:$0xf] %v4425
    %4448 = vst [vmem:[#allocation5 + $0x30] sm:$0xf] %v4426
    %4449 = vst [vmem:[#allocation5 + $0x44] sm:$0xf] %v4427
    %4450 = vst [vmem:[#allocation5 + $0x58] sm:$0xf] %v4428
    %4451 = vst [vmem:[#allocation5 + $0x6c] sm:$0xf] %v4429
    %4452 = vst [vmem:[#allocation5 + $0x80] sm:$0xf] %v4430
    %4453 = vst [vmem:[#allocation5 + $0x94] sm:$0xf] %v4431
    %4454 = vst [vmem:[#allocation5 + $0xa8] sm:$0xf] %v4432
    %4455 = vst [vmem:[#allocation5 + $0xbc] sm:$0xf] %v4433
    %4456 = vst [vmem:[#allocation5 + $0xd0] sm:$0xf] %v4434
    %v4457 = vld [vmem:[#allocation4 + $0x18] sm:$0xff]
    %v4458 = vld [vmem:[#allocation4 + $0x20] sm:$0xff]
    %v4459 = vld [vmem:[#allocation4 + $0x28] sm:$0xff]
    %v4460 = vld [vmem:[#allocation4 + $0x30] sm:$0xff]
    %v4461 = vld [vmem:[#allocation4 + $0x38] sm:$0xff]
    %v4462 = vld [vmem:[#allocation4 + $0x40] sm:$0xff]
    %v4463 = vld [vmem:[#allocation4 + $0x48] sm:$0xff]
    %v4464 = vld [vmem:[#allocation4 + $0x50] sm:$0xff]
    %v4465 = vld [vmem:[#allocation4 + $0x58] sm:$0xff]
    %v4466 = vld [vmem:[#allocation4 + $0x60] sm:$0xff]
    %v4467 = vld [vmem:[#allocation4 + $0x68] sm:$0xff]
    %v4468 = vpack.c.bf16 %v4458, %v4457
    %v4469 = vpack.c.bf16 %v4460, %v4459
    %v4470 = vpack.c.bf16 %v4462, %v4461
    %v4471 = vpack.c.bf16 %v4464, %v4463
    %v4472 = vpack.c.bf16 %v4466, %v4465
    %v4473 = vpack.c.bf16 %v4467, %v4467
    %v4480 = vunpack.c.l.b16 %v4468
    %v4481 = vunpack.c.h.b16 %v4468
    %v4482 = vunpack.c.l.b16 %v4469
    %v4483 = vunpack.c.h.b16 %v4469
    %v4484 = vunpack.c.l.b16 %v4470
    %v4485 = vunpack.c.h.b16 %v4470
    %v4486 = vunpack.c.l.b16 %v4471
    %v4487 = vunpack.c.h.b16 %v4471
    %v4488 = vunpack.c.l.b16 %v4472
    %v4489 = vunpack.c.h.b16 %v4472
    %v4490 = vunpack.c.l.b16 %v4473
    %v4491 = vpack.c.b16 %v4480, %v4480
    %v4492 = vpack.c.b16 %v4481, %v4481
    %v4493 = vpack.c.b16 %v4482, %v4482
    %v4494 = vpack.c.b16 %v4483, %v4483
    %v4495 = vpack.c.b16 %v4484, %v4484
    %v4496 = vpack.c.b16 %v4485, %v4485
    %v4497 = vpack.c.b16 %v4486, %v4486
    %v4498 = vpack.c.b16 %v4487, %v4487
    %v4499 = vpack.c.b16 %v4488, %v4488
    %v4500 = vpack.c.b16 %v4489, %v4489
    %v4501 = vpack.c.b16 %v4490, %v4490
    %4513 = vst [vmem:[#allocation5 + $0xc] sm:$0xf] %v4491
    %4514 = vst [vmem:[#allocation5 + $0x20] sm:$0xf] %v4492
    %4515 = vst [vmem:[#allocation5 + $0x34] sm:$0xf] %v4493
    %4516 = vst [vmem:[#allocation5 + $0x48] sm:$0xf] %v4494
    %4517 = vst [vmem:[#allocation5 + $0x5c] sm:$0xf] %v4495
    %4518 = vst [vmem:[#allocation5 + $0x70] sm:$0xf] %v4496
    %4519 = vst [vmem:[#allocation5 + $0x84] sm:$0xf] %v4497
    %4520 = vst [vmem:[#allocation5 + $0x98] sm:$0xf] %v4498
    %4521 = vst [vmem:[#allocation5 + $0xac] sm:$0xf] %v4499
    %4522 = vst [vmem:[#allocation5 + $0xc0] sm:$0xf] %v4500
    %4523 = vst [vmem:[#allocation5 + $0xd4] sm:$0xf] %v4501
    %v4524 = vld [vmem:[#allocation4 + $0x20] sm:$0xff]
    %v4525 = vld [vmem:[#allocation4 + $0x28] sm:$0xff]
    %v4526 = vld [vmem:[#allocation4 + $0x30] sm:$0xff]
    %v4527 = vld [vmem:[#allocation4 + $0x38] sm:$0xff]
    %v4528 = vld [vmem:[#allocation4 + $0x40] sm:$0xff]
    %v4529 = vld [vmem:[#allocation4 + $0x48] sm:$0xff]
    %v4530 = vld [vmem:[#allocation4 + $0x50] sm:$0xff]
    %v4531 = vld [vmem:[#allocation4 + $0x58] sm:$0xff]
    %v4532 = vld [vmem:[#allocation4 + $0x60] sm:$0xff]
    %v4533 = vld [vmem:[#allocation4 + $0x68] sm:$0xff]
    %v4534 = vld [vmem:[#allocation4 + $0x70] sm:$0xff]
    %v4535 = vpack.c.bf16 %v4525, %v4524
    %v4536 = vpack.c.bf16 %v4527, %v4526
    %v4537 = vpack.c.bf16 %v4529, %v4528
    %v4538 = vpack.c.bf16 %v4531, %v4530
    %v4539 = vpack.c.bf16 %v4533, %v4532
    %v4540 = vpack.c.bf16 %v4534, %v4534
    %v4547 = vunpack.c.l.b16 %v4535
    %v4548 = vunpack.c.h.b16 %v4535
    %v4549 = vunpack.c.l.b16 %v4536
    %v4550 = vunpack.c.h.b16 %v4536
    %v4551 = vunpack.c.l.b16 %v4537
    %v4552 = vunpack.c.h.b16 %v4537
    %v4553 = vunpack.c.l.b16 %v4538
    %v4554 = vunpack.c.h.b16 %v4538
    %v4555 = vunpack.c.l.b16 %v4539
    %v4556 = vunpack.c.h.b16 %v4539
    %v4557 = vunpack.c.l.b16 %v4540
    %v4558 = vpack.c.b16 %v4547, %v4547
    %v4559 = vpack.c.b16 %v4548, %v4548
    %v4560 = vpack.c.b16 %v4549, %v4549
    %v4561 = vpack.c.b16 %v4550, %v4550
    %v4562 = vpack.c.b16 %v4551, %v4551
    %v4563 = vpack.c.b16 %v4552, %v4552
    %v4564 = vpack.c.b16 %v4553, %v4553
    %v4565 = vpack.c.b16 %v4554, %v4554
    %v4566 = vpack.c.b16 %v4555, %v4555
    %v4567 = vpack.c.b16 %v4556, %v4556
    %v4568 = vpack.c.b16 %v4557, %v4557
    %4580 = vst [vmem:[#allocation5 + $0x10] sm:$0xf] %v4558
    %4581 = vst [vmem:[#allocation5 + $0x24] sm:$0xf] %v4559
    %4582 = vst [vmem:[#allocation5 + $0x38] sm:$0xf] %v4560
    %4583 = vst [vmem:[#allocation5 + $0x4c] sm:$0xf] %v4561
    %4584 = vst [vmem:[#allocation5 + $0x60] sm:$0xf] %v4562
    %4585 = vst [vmem:[#allocation5 + $0x74] sm:$0xf] %v4563
    %4586 = vst [vmem:[#allocation5 + $0x88] sm:$0xf] %v4564
    %4587 = vst [vmem:[#allocation5 + $0x9c] sm:$0xf] %v4565
    %4588 = vst [vmem:[#allocation5 + $0xb0] sm:$0xf] %v4566
    %4589 = vst [vmem:[#allocation5 + $0xc4] sm:$0xf] %v4567
    %4590 = vst [vmem:[#allocation5 + $0xd8] sm:$0xf] %v4568
    %v4591 = vld [vmem:[#allocation5] sm:$0xff]
    %v4592 = vld [vmem:[#allocation5 + $0x8] sm:$0xff]
    %v4593 = vld [vmem:[#allocation5 + $0x10] sm:$0xf]
    %v4594 = vld [vmem:[#allocation5 + $0x14] sm:$0xff]
    %v4595 = vld [vmem:[#allocation5 + $0x1c] sm:$0xff]
    %v4596 = vld [vmem:[#allocation5 + $0x24] sm:$0xf]
    %v4597 = vld [vmem:[#allocation5 + $0x28] sm:$0xff]
    %v4598 = vld [vmem:[#allocation5 + $0x30] sm:$0xff]
    %v4599 = vld [vmem:[#allocation5 + $0x38] sm:$0xf]
    %v4600 = vld [vmem:[#allocation5 + $0x3c] sm:$0xff]
    %v4601 = vld [vmem:[#allocation5 + $0x44] sm:$0xff]
    %v4602 = vld [vmem:[#allocation5 + $0x4c] sm:$0xf]
    %v4603 = vld [vmem:[#allocation5 + $0x50] sm:$0xff]
    %v4604 = vld [vmem:[#allocation5 + $0x58] sm:$0xff]
    %v4605 = vld [vmem:[#allocation5 + $0x60] sm:$0xf]
    %v4606 = vld [vmem:[#allocation5 + $0x64] sm:$0xff]
    %v4607 = vld [vmem:[#allocation5 + $0x6c] sm:$0xff]
    %v4608 = vld [vmem:[#allocation5 + $0x74] sm:$0xf]
    %v4609 = vld [vmem:[#allocation5 + $0x78] sm:$0xff]
    %v4610 = vld [vmem:[#allocation5 + $0x80] sm:$0xff]
    %v4611 = vld [vmem:[#allocation5 + $0x88] sm:$0xf]
    %v4612 = vld [vmem:[#allocation5 + $0x8c] sm:$0xff]
    %v4613 = vld [vmem:[#allocation5 + $0x94] sm:$0xff]
    %v4614 = vld [vmem:[#allocation5 + $0x9c] sm:$0xf]
    %v4615 = vld [vmem:[#allocation5 + $0xa0] sm:$0xff]
    %v4616 = vld [vmem:[#allocation5 + $0xa8] sm:$0xff]
    %v4617 = vld [vmem:[#allocation5 + $0xb0] sm:$0xf]
    %v4618 = vld [vmem:[#allocation5 + $0xb4] sm:$0xff]
    %v4619 = vld [vmem:[#allocation5 + $0xbc] sm:$0xff]
    %v4620 = vld [vmem:[#allocation5 + $0xc4] sm:$0xf]
    %v4621 = vld [vmem:[#allocation5 + $0xc8] sm:$0xff]
    %v4622 = vld [vmem:[#allocation5 + $0xd0] sm:$0xff]
    %v4623 = vld [vmem:[#allocation5 + $0xd8] sm:$0xf]
    %v4624 = vld [vmem:[#allocation15] sm:$0xf]
    %v4625 = vld [vmem:[#allocation15 + $0x4] sm:$0xf]
    %v4626 = vld [vmem:[#allocation15 + $0x8] sm:$0xf]
    %v4627 = vld [vmem:[#allocation15 + $0xc] sm:$0xf]
    %v4628 = vld [vmem:[#allocation15 + $0x10] sm:$0xf]
    %v4629 = vld [vmem:[#allocation15 + $0x14] sm:$0xf]
    %v4630 = vld [vmem:[#allocation15 + $0x18] sm:$0xf]
    %v4631 = vld [vmem:[#allocation15 + $0x1c] sm:$0xf]
    %v4632 = vld [vmem:[#allocation15 + $0x20] sm:$0xf]
    %v4633 = vld [vmem:[#allocation15 + $0x24] sm:$0xf]
    %v4634 = vld [vmem:[#allocation15 + $0x28] sm:$0xf]
    %v4635 = vld [vmem:[#allocation15 + $0x2c] sm:$0xf]
    %v4636 = vld [vmem:[#allocation15 + $0x30] sm:$0xf]
    %v4637 = vld [vmem:[#allocation15 + $0x34] sm:$0xf]
    %v4638 = vld [vmem:[#allocation15 + $0x38] sm:$0xf]
    %v4639 = vld [vmem:[#allocation15 + $0x3c] sm:$0xf]
    %v4640 = vld [vmem:[#allocation15 + $0x40] sm:$0xf]
    %v4641 = vld [vmem:[#allocation15 + $0x44] sm:$0xf]
    %v4642 = vld [vmem:[#allocation15 + $0x48] sm:$0xf]
    %v4643 = vld [vmem:[#allocation15 + $0x4c] sm:$0xf]
    %v4644 = vld [vmem:[#allocation15 + $0x50] sm:$0xf]
    %v4645 = vld [vmem:[#allocation15 + $0x54] sm:$0xf]
    %v4646 = vld [vmem:[#allocation15 + $0x58] sm:$0xf]
    %v4647 = vld [vmem:[#allocation15 + $0x5c] sm:$0xf]
    %v4648 = vld [vmem:[#allocation15 + $0x60] sm:$0xf]
    %v4649 = vld [vmem:[#allocation15 + $0x64] sm:$0xf]
    %v4650 = vld [vmem:[#allocation15 + $0x68] sm:$0xf]
    %v4651 = vld [vmem:[#allocation15 + $0x6c] sm:$0xf]
    %v4652 = vld [vmem:[#allocation15 + $0x70] sm:$0xf]
    %v4653 = vld [vmem:[#allocation15 + $0x74] sm:$0xf]
    %v4654 = vld [vmem:[#allocation15 + $0x78] sm:$0xf]
    %v4655 = vld [vmem:[#allocation15 + $0x7c] sm:$0xf]
    %v4656 = vld [vmem:[#allocation15 + $0x80] sm:$0xf]
    %v4657 = vld [vmem:[#allocation15 + $0x84] sm:$0xf]
    %v4658 = vld [vmem:[#allocation15 + $0x88] sm:$0xf]
    %v4659 = vld [vmem:[#allocation15 + $0x8c] sm:$0xf]
    %v4660 = vld [vmem:[#allocation15 + $0x90] sm:$0xf]
    %v4661 = vld [vmem:[#allocation15 + $0x94] sm:$0xf]
    %v4662 = vld [vmem:[#allocation15 + $0x98] sm:$0xf]
    %v4663 = vld [vmem:[#allocation15 + $0x9c] sm:$0xf]
    %v4664 = vld [vmem:[#allocation15 + $0xa0] sm:$0xf]
    %v4665 = vld [vmem:[#allocation15 + $0xa4] sm:$0xf]
    %v4666 = vld [vmem:[#allocation15 + $0xa8] sm:$0xf]
    %v4667 = vld [vmem:[#allocation15 + $0xac] sm:$0xf]
    %v4668 = vld [vmem:[#allocation15 + $0xb0] sm:$0xf]
    %v4669 = vld [vmem:[#allocation15 + $0xb4] sm:$0xf]
    %v4670 = vld [vmem:[#allocation15 + $0xb8] sm:$0xf]
    %v4671 = vld [vmem:[#allocation15 + $0xbc] sm:$0xf]
    %v4672 = vld [vmem:[#allocation15 + $0xc0] sm:$0xf]
    %v4673 = vld [vmem:[#allocation15 + $0xc4] sm:$0xf]
    %v4674 = vld [vmem:[#allocation15 + $0xc8] sm:$0xf]
    %v4675 = vld [vmem:[#allocation15 + $0xcc] sm:$0xf]
    %v4676 = vld [vmem:[#allocation15 + $0xd0] sm:$0xf]
    %v4677 = vld [vmem:[#allocation15 + $0xd4] sm:$0xf]
    %v4678 = vld [vmem:[#allocation15 + $0xd8] sm:$0xf]
    %v4679 = vld [vmem:[#allocation15 + $0xdc] sm:$0xf]
    %v4680 = vld [vmem:[#allocation15 + $0xe0] sm:$0xf]
    %v4681 = vld [vmem:[#allocation15 + $0xe4] sm:$0xf]
    %v4682 = vld [vmem:[#allocation15 + $0xe8] sm:$0xf]
    %v4683 = vld [vmem:[#allocation15 + $0xec] sm:$0xf]
    %v4684 = vld [vmem:[#allocation15 + $0xf0] sm:$0xf]
    %v4685 = vld [vmem:[#allocation15 + $0xf4] sm:$0xf]
    %v4686 = vld [vmem:[#allocation15 + $0xf8] sm:$0xf]
    %v4687 = vld [vmem:[#allocation15 + $0xfc] sm:$0xf]
    %v4688 = vld [vmem:[#allocation15 + $0x100] sm:$0xf]
    %v4689 = vld [vmem:[#allocation15 + $0x104] sm:$0xf]
    %v4690 = vld [vmem:[#allocation15 + $0x108] sm:$0xf]
    %v4691 = vld [vmem:[#allocation15 + $0x10c] sm:$0xf]
    %v4692 = vld [vmem:[#allocation15 + $0x110] sm:$0xf]
    %v4693 = vld [vmem:[#allocation15 + $0x114] sm:$0xf]
    %v4694 = vld [vmem:[#allocation15 + $0x118] sm:$0xf]
    %v4695 = vld [vmem:[#allocation15 + $0x11c] sm:$0xf]
    %v4696 = vld [vmem:[#allocation15 + $0x120] sm:$0xf]
    %v4697 = vld [vmem:[#allocation15 + $0x124] sm:$0xf]
    %v4698 = vld [vmem:[#allocation15 + $0x128] sm:$0xf]
    %v4699 = vld [vmem:[#allocation15 + $0x12c] sm:$0xf]
    %v4700 = vld [vmem:[#allocation15 + $0x130] sm:$0xf]
    %v4701 = vld [vmem:[#allocation15 + $0x134] sm:$0xf]
    %v4702 = vld [vmem:[#allocation15 + $0x138] sm:$0xf]
    %v4703 = vld [vmem:[#allocation15 + $0x13c] sm:$0xf]
    %v4704 = vld [vmem:[%s12] sm:$0x1]
    %v4706 = vlaneseq
    %v4707 = vshrl.u32 %v4706, 7
    %v4708 = vsub.s32 0, %v4707
    %v4709 = vrot.slane %v4704, %v4708
    %v4744 = vunpack.c.l.b16 %v4591
    %v4745 = vunpack.c.h.b16 %v4591
    %v4746 = vunpack.c.l.b16 %v4592
    %v4747 = vunpack.c.h.b16 %v4592
    %v4748 = vunpack.c.l.b16 %v4593
    %v4749 = vunpack.c.l.b16 %v4594
    %v4750 = vunpack.c.h.b16 %v4594
    %v4751 = vunpack.c.l.b16 %v4595
    %v4752 = vunpack.c.h.b16 %v4595
    %v4753 = vunpack.c.l.b16 %v4596
    %v4754 = vunpack.c.l.b16 %v4597
    %v4755 = vunpack.c.h.b16 %v4597
    %v4756 = vunpack.c.l.b16 %v4598
    %v4757 = vunpack.c.h.b16 %v4598
    %v4758 = vunpack.c.l.b16 %v4599
    %v4759 = vunpack.c.l.b16 %v4600
    %v4760 = vunpack.c.h.b16 %v4600
    %v4761 = vunpack.c.l.b16 %v4601
    %v4762 = vunpack.c.h.b16 %v4601
    %v4763 = vunpack.c.l.b16 %v4602
    %v4764 = vunpack.c.l.b16 %v4603
    %v4765 = vunpack.c.h.b16 %v4603
    %v4766 = vunpack.c.l.b16 %v4604
    %v4767 = vunpack.c.h.b16 %v4604
    %v4768 = vunpack.c.l.b16 %v4605
    %v4769 = vunpack.c.l.b16 %v4606
    %v4770 = vunpack.c.h.b16 %v4606
    %v4771 = vunpack.c.l.b16 %v4607
    %v4772 = vunpack.c.h.b16 %v4607
    %v4773 = vunpack.c.l.b16 %v4608
    %v4774 = vunpack.c.l.b16 %v4609
    %v4775 = vunpack.c.h.b16 %v4609
    %v4776 = vunpack.c.l.b16 %v4610
    %v4777 = vunpack.c.h.b16 %v4610
    %v4778 = vunpack.c.l.b16 %v4611
    %v4779 = vunpack.c.l.b16 %v4612
    %v4780 = vunpack.c.h.b16 %v4612
    %v4781 = vunpack.c.l.b16 %v4613
    %v4782 = vunpack.c.h.b16 %v4613
    %v4783 = vunpack.c.l.b16 %v4614
    %v4784 = vunpack.c.l.b16 %v4615
    %v4785 = vunpack.c.h.b16 %v4615
    %v4786 = vunpack.c.l.b16 %v4616
    %v4787 = vunpack.c.h.b16 %v4616
    %v4788 = vunpack.c.l.b16 %v4617
    %v4789 = vunpack.c.l.b16 %v4618
    %v4790 = vunpack.c.h.b16 %v4618
    %v4791 = vunpack.c.l.b16 %v4619
    %v4792 = vunpack.c.h.b16 %v4619
    %v4793 = vunpack.c.l.b16 %v4620
    %v4794 = vunpack.c.l.b16 %v4621
    %v4795 = vunpack.c.h.b16 %v4621
    %v4796 = vunpack.c.l.b16 %v4622
    %v4797 = vunpack.c.h.b16 %v4622
    %v4798 = vunpack.c.l.b16 %v4623
    %v4799 = vpack.c.b16 %v4749, %v4744
    %v4800 = vpack.c.b16 %v4750, %v4745
    %v4801 = vpack.c.b16 %v4751, %v4746
    %v4802 = vpack.c.b16 %v4752, %v4747
    %v4803 = vpack.c.b16 %v4753, %v4748
    %v4804 = vpack.c.b16 %v4759, %v4754
    %v4805 = vpack.c.b16 %v4760, %v4755
    %v4806 = vpack.c.b16 %v4761, %v4756
    %v4807 = vpack.c.b16 %v4762, %v4757
    %v4808 = vpack.c.b16 %v4763, %v4758
    %v4809 = vpack.c.b16 %v4769, %v4764
    %v4810 = vpack.c.b16 %v4770, %v4765
    %v4811 = vpack.c.b16 %v4771, %v4766
    %v4812 = vpack.c.b16 %v4772, %v4767
    %v4813 = vpack.c.b16 %v4773, %v4768
    %v4814 = vpack.c.b16 %v4779, %v4774
    %v4815 = vpack.c.b16 %v4780, %v4775
    %v4816 = vpack.c.b16 %v4781, %v4776
    %v4817 = vpack.c.b16 %v4782, %v4777
    %v4818 = vpack.c.b16 %v4783, %v4778
    %v4819 = vpack.c.b16 %v4789, %v4784
    %v4820 = vpack.c.b16 %v4790, %v4785
    %v4821 = vpack.c.b16 %v4791, %v4786
    %v4822 = vpack.c.b16 %v4792, %v4787
    %v4823 = vpack.c.b16 %v4793, %v4788
    %v4824 = vpack.c.b16 %v4794, %v4794
    %v4825 = vpack.c.b16 %v4795, %v4795
    %v4826 = vpack.c.b16 %v4796, %v4796
    %v4827 = vpack.c.b16 %v4797, %v4797
    %v4828 = vpack.c.b16 %v4798, %v4798
    %v4939 = vunpack.c.l.b16 %v4624
    %v4940 = vunpack.c.l.b16 %v4625
    %v4941 = vunpack.c.l.b16 %v4626
    %v4942 = vunpack.c.l.b16 %v4627
    %v4943 = vunpack.c.l.b16 %v4628
    %v4944 = vunpack.c.l.b16 %v4629
    %v4945 = vunpack.c.l.b16 %v4630
    %v4946 = vunpack.c.l.b16 %v4631
    %v4947 = vunpack.c.l.b16 %v4632
    %v4948 = vunpack.c.l.b16 %v4633
    %v4949 = vunpack.c.l.b16 %v4634
    %v4950 = vunpack.c.l.b16 %v4635
    %v4951 = vunpack.c.l.b16 %v4636
    %v4952 = vunpack.c.l.b16 %v4637
    %v4953 = vunpack.c.l.b16 %v4638
    %v4954 = vunpack.c.l.b16 %v4639
    %v4955 = vunpack.c.l.b16 %v4640
    %v4956 = vunpack.c.l.b16 %v4641
    %v4957 = vunpack.c.l.b16 %v4642
    %v4958 = vunpack.c.l.b16 %v4643
    %v4959 = vunpack.c.l.b16 %v4644
    %v4960 = vunpack.c.l.b16 %v4645
    %v4961 = vunpack.c.l.b16 %v4646
    %v4962 = vunpack.c.l.b16 %v4647
    %v4963 = vunpack.c.l.b16 %v4648
    %v4964 = vunpack.c.l.b16 %v4649
    %v4965 = vunpack.c.l.b16 %v4650
    %v4966 = vunpack.c.l.b16 %v4651
    %v4967 = vunpack.c.l.b16 %v4652
    %v4968 = vunpack.c.l.b16 %v4653
    %v4969 = vunpack.c.l.b16 %v4654
    %v4970 = vunpack.c.l.b16 %v4655
    %v4971 = vunpack.c.l.b16 %v4656
    %v4972 = vunpack.c.l.b16 %v4657
    %v4973 = vunpack.c.l.b16 %v4658
    %v4974 = vunpack.c.l.b16 %v4659
    %v4975 = vunpack.c.l.b16 %v4660
    %v4976 = vunpack.c.l.b16 %v4661
    %v4977 = vunpack.c.l.b16 %v4662
    %v4978 = vunpack.c.l.b16 %v4663
    %v4979 = vunpack.c.l.b16 %v4664
    %v4980 = vunpack.c.l.b16 %v4665
    %v4981 = vunpack.c.l.b16 %v4666
    %v4982 = vunpack.c.l.b16 %v4667
    %v4983 = vunpack.c.l.b16 %v4668
    %v4984 = vunpack.c.l.b16 %v4669
    %v4985 = vunpack.c.l.b16 %v4670
    %v4986 = vunpack.c.l.b16 %v4671
    %v4987 = vunpack.c.l.b16 %v4672
    %v4988 = vunpack.c.l.b16 %v4673
    %v4989 = vunpack.c.l.b16 %v4674
    %v4990 = vunpack.c.l.b16 %v4675
    %v4991 = vunpack.c.l.b16 %v4676
    %v4992 = vunpack.c.l.b16 %v4677
    %v4993 = vunpack.c.l.b16 %v4678
    %v4994 = vunpack.c.l.b16 %v4679
    %v4995 = vunpack.c.l.b16 %v4680
    %v4996 = vunpack.c.l.b16 %v4681
    %v4997 = vunpack.c.l.b16 %v4682
    %v4998 = vunpack.c.l.b16 %v4683
    %v4999 = vunpack.c.l.b16 %v4684
    %v5000 = vunpack.c.l.b16 %v4685
    %v5001 = vunpack.c.l.b16 %v4686
    %v5002 = vunpack.c.l.b16 %v4687
    %v5003 = vunpack.c.l.b16 %v4688
    %v5004 = vunpack.c.l.b16 %v4689
    %v5005 = vunpack.c.l.b16 %v4690
    %v5006 = vunpack.c.l.b16 %v4691
    %v5007 = vunpack.c.l.b16 %v4692
    %v5008 = vunpack.c.l.b16 %v4693
    %v5009 = vunpack.c.l.b16 %v4694
    %v5010 = vunpack.c.l.b16 %v4695
    %v5011 = vunpack.c.l.b16 %v4696
    %v5012 = vunpack.c.l.b16 %v4697
    %v5013 = vunpack.c.l.b16 %v4698
    %v5014 = vunpack.c.l.b16 %v4699
    %v5015 = vunpack.c.l.b16 %v4700
    %v5016 = vunpack.c.l.b16 %v4701
    %v5017 = vunpack.c.l.b16 %v4702
    %v5018 = vunpack.c.l.b16 %v4703
    %v5019 = vpack.c.b16 %v4940, %v4939
    %v5020 = vpack.c.b16 %v4942, %v4941
    %v5021 = vpack.c.b16 %v4944, %v4943
    %v5022 = vpack.c.b16 %v4946, %v4945
    %v5023 = vpack.c.b16 %v4948, %v4947
    %v5024 = vpack.c.b16 %v4950, %v4949
    %v5025 = vpack.c.b16 %v4952, %v4951
    %v5026 = vpack.c.b16 %v4954, %v4953
    %v5027 = vpack.c.b16 %v4956, %v4955
    %v5028 = vpack.c.b16 %v4958, %v4957
    %v5029 = vpack.c.b16 %v4960, %v4959
    %v5030 = vpack.c.b16 %v4962, %v4961
    %v5031 = vpack.c.b16 %v4964, %v4963
    %v5032 = vpack.c.b16 %v4966, %v4965
    %v5033 = vpack.c.b16 %v4968, %v4967
    %v5034 = vpack.c.b16 %v4970, %v4969
    %v5035 = vpack.c.b16 %v4972, %v4971
    %v5036 = vpack.c.b16 %v4974, %v4973
    %v5037 = vpack.c.b16 %v4976, %v4975
    %v5038 = vpack.c.b16 %v4978, %v4977
    %v5039 = vpack.c.b16 %v4980, %v4979
    %v5040 = vpack.c.b16 %v4982, %v4981
    %v5041 = vpack.c.b16 %v4984, %v4983
    %v5042 = vpack.c.b16 %v4986, %v4985
    %v5043 = vpack.c.b16 %v4988, %v4987
    %v5044 = vpack.c.b16 %v4990, %v4989
    %v5045 = vpack.c.b16 %v4992, %v4991
    %v5046 = vpack.c.b16 %v4994, %v4993
    %v5047 = vpack.c.b16 %v4996, %v4995
    %v5048 = vpack.c.b16 %v4998, %v4997
    %v5049 = vpack.c.b16 %v5000, %v4999
    %v5050 = vpack.c.b16 %v5002, %v5001
    %v5051 = vpack.c.b16 %v5004, %v5003
    %v5052 = vpack.c.b16 %v5006, %v5005
    %v5053 = vpack.c.b16 %v5008, %v5007
    %v5054 = vpack.c.b16 %v5010, %v5009
    %v5055 = vpack.c.b16 %v5012, %v5011
    %v5056 = vpack.c.b16 %v5014, %v5013
    %v5057 = vpack.c.b16 %v5016, %v5015
    %v5058 = vpack.c.b16 %v5018, %v5017
    %5099 = vmatprep.subr.bf16.mxu0 0
    %5100 = vmatpush1.bf16.msra.mxu0 %v5019
    %5101 = vmatprep.subr.bf16.mxu0 0
    %5102 = vmatpush1.bf16.msra.mxu0 %v5020
    %5103 = vmatprep.subr.bf16.mxu0 0
    %5104 = vmatpush1.bf16.msra.mxu0 %v5021
    %5105 = vmatprep.subr.bf16.mxu0 0
    %5106 = vmatpush1.bf16.msra.mxu0 %v5022
    %5107 = vmatprep.subr.bf16.mxu0 0
    %5108 = vmatpush1.bf16.msra.mxu0 %v5023
    %5109 = vmatprep.subr.bf16.mxu0 0
    %5110 = vmatpush1.bf16.msra.mxu0 %v5024
    %5111 = vmatprep.subr.bf16.mxu0 0
    %5112 = vmatpush1.bf16.msra.mxu0 %v5025
    %5113 = vmatprep.subr.bf16.mxu0 0
    %5114 = vmatpush1.bf16.msra.mxu0 %v5026
    %5115 = vmatprep.subr.bf16.mxu0 0
    %5116 = vmatpush1.bf16.msra.mxu0 %v5027
    %5117 = vmatprep.subr.bf16.mxu0 0
    %5118 = vmatpush1.bf16.msra.mxu0 %v5028
    %5119 = vmatprep.subr.bf16.mxu0 0
    %5120 = vmatpush1.bf16.msra.mxu0 %v5029
    %5121 = vmatprep.subr.bf16.mxu0 0
    %5122 = vmatpush1.bf16.msra.mxu0 %v5030
    %5123 = vmatprep.subr.bf16.mxu0 0
    %5124 = vmatpush1.bf16.msra.mxu0 %v5031
    %5125 = vmatprep.subr.bf16.mxu0 0
    %5126 = vmatpush1.bf16.msra.mxu0 %v5032
    %5127 = vmatprep.subr.bf16.mxu0 0
    %5128 = vmatpush1.bf16.msra.mxu0 %v5033
    %5129 = vmatprep.subr.bf16.mxu0 0
    %5130 = vmatpush1.bf16.msra.mxu0 %v5034
    %5131 = vmatprep.mubr.bf16.mxu0 %v4800
    %5132 = vmatmul.mubr.bf16.gmra.mrb[0].mxu0 %v4799
    %v5133 = vpop.f32.mrb[0].mxu0
    %v5134 = vadd.f32 %v4709, %v5133
    %v5135 = vpop.f32.mrb[0].mxu0
    %v5136 = vpop.f32.mrb[0].mxu0
    %v5137 = vadd.f32 %v4709, %v5136
    %v5138 = vpop.f32.mrb[0].mxu0
    %5139 = vmatprep.mubr.bf16.mxu0 %v4805
    %5140 = vmatmul.mubr.bf16.gmra.mrb[0].mxu0 %v4804
    %v5141 = vpop.f32.mrb[0].mxu0
    %v5142 = vadd.f32 %v4709, %v5141
    %v5143 = vpop.f32.mrb[0].mxu0
    %v5144 = vpop.f32.mrb[0].mxu0
    %v5145 = vadd.f32 %v4709, %v5144
    %v5146 = vpop.f32.mrb[0].mxu0
    %5147 = vmatprep.mubr.bf16.mxu0 %v4810
    %5148 = vmatmul.mubr.bf16.gmra.mrb[0].mxu0 %v4809
    %v5149 = vpop.f32.mrb[0].mxu0
    %v5150 = vadd.f32 %v4709, %v5149
    %v5151 = vpop.f32.mrb[0].mxu0
    %v5152 = vpop.f32.mrb[0].mxu0
    %v5153 = vadd.f32 %v4709, %v5152
    %v5154 = vpop.f32.mrb[0].mxu0
    %5155 = vmatprep.mubr.bf16.mxu0 %v4815
    %5156 = vmatmul.mubr.bf16.gmra.mrb[0].mxu0 %v4814
    %v5157 = vpop.f32.mrb[0].mxu0
    %v5158 = vadd.f32 %v4709, %v5157
    %v5159 = vpop.f32.mrb[0].mxu0
    %v5160 = vpop.f32.mrb[0].mxu0
    %v5161 = vadd.f32 %v4709, %v5160
    %v5162 = vpop.f32.mrb[0].mxu0
    %5163 = vmatprep.mubr.bf16.mxu0 %v4820
    %5164 = vmatmul.mubr.bf16.gmra.mrb[0].mxu0 %v4819
    %v5165 = vpop.f32.mrb[0].mxu0
    %v5166 = vadd.f32 %v4709, %v5165
    %v5167 = vpop.f32.mrb[0].mxu0
    %v5168 = vpop.f32.mrb[0].mxu0
    %v5169 = vadd.f32 %v4709, %v5168
    %v5170 = vpop.f32.mrb[0].mxu0
    %5171 = vmatprep.mubr.bf16.mxu0 %v4825
    %5172 = vmatmul.mubr.bf16.gmra.mrb[0].mxu0 %v4824
    %v5173 = vpop.f32.mrb[0].mxu0
    %v5174 = vpop.f32.mrb[0].mxu0
    %v5175 = vpop.f32.mrb[0].mxu0
    %v5176 = vpop.f32.mrb[0].mxu0
    %5177 = vdwg.mxu0
    %5178 = vmatprep.subr.bf16.mxu0 0
    %5179 = vmatpush1.bf16.msra.mxu0 %v5035
    %5180 = vmatprep.subr.bf16.mxu0 0
    %5181 = vmatpush1.bf16.msra.mxu0 %v5036
    %5182 = vmatprep.subr.bf16.mxu0 0
    %5183 = vmatpush1.bf16.msra.mxu0 %v5037
    %5184 = vmatprep.subr.bf16.mxu0 0
    %5185 = vmatpush1.bf16.msra.mxu0 %v5038
    %5186 = vmatprep.subr.bf16.mxu0 0
    %5187 = vmatpush1.bf16.msra.mxu0 %v5039
    %5188 = vmatprep.subr.bf16.mxu0 0
    %5189 = vmatpush1.bf16.msra.mxu0 %v5040
    %5190 = vmatprep.subr.bf16.mxu0 0
    %5191 = vmatpush1.bf16.msra.mxu0 %v5041
    %5192 = vmatprep.subr.bf16.mxu0 0
    %5193 = vmatpush1.bf16.msra.mxu0 %v5042
    %5194 = vmatprep.subr.bf16.mxu0 0
    %5195 = vmatpush1.bf16.msra.mxu0 %v5043
    %5196 = vmatprep.subr.bf16.mxu0 0
    %5197 = vmatpush1.bf16.msra.mxu0 %v5044
    %5198 = vmatprep.subr.bf16.mxu0 0
    %5199 = vmatpush1.bf16.msra.mxu0 %v5045
    %5200 = vmatprep.subr.bf16.mxu0 0
    %5201 = vmatpush1.bf16.msra.mxu0 %v5046
    %5202 = vmatprep.subr.bf16.mxu0 0
    %5203 = vmatpush1.bf16.msra.mxu0 %v5047
    %5204 = vmatprep.subr.bf16.mxu0 0
    %5205 = vmatpush1.bf16.msra.mxu0 %v5048
    %5206 = vmatprep.subr.bf16.mxu0 0
    %5207 = vmatpush1.bf16.msra.mxu0 %v5049
    %5208 = vmatprep.subr.bf16.mxu0 0
    %5209 = vmatpush1.bf16.msra.mxu0 %v5050
    %5210 = vmatprep.mubr.bf16.mxu0 %v4802
    %5211 = vmatmul.mubr.bf16.gmra.mrb[0].mxu0 %v4801
    %v5212 = vpop.f32.mrb[0].mxu0
    %v5213 = vadd.f32 %v5134, %v5212
    %v5214 = vpop.f32.mrb[0].mxu0
    %v5215 = vpop.f32.mrb[0].mxu0
    %v5216 = vadd.f32 %v5137, %v5215
    %v5217 = vpop.f32.mrb[0].mxu0
    %5218 = vmatprep.mubr.bf16.mxu0 %v4807
    %5219 = vmatmul.mubr.bf16.gmra.mrb[0].mxu0 %v4806
    %v5220 = vpop.f32.mrb[0].mxu0
    %v5221 = vadd.f32 %v5142, %v5220
    %v5222 = vpop.f32.mrb[0].mxu0
    %v5223 = vpop.f32.mrb[0].mxu0
    %v5224 = vadd.f32 %v5145, %v5223
    %v5225 = vpop.f32.mrb[0].mxu0
    %5226 = vmatprep.mubr.bf16.mxu0 %v4812
    %5227 = vmatmul.mubr.bf16.gmra.mrb[0].mxu0 %v4811
    %v5228 = vpop.f32.mrb[0].mxu0
    %v5229 = vadd.f32 %v5150, %v5228
    %v5230 = vpop.f32.mrb[0].mxu0
    %v5231 = vpop.f32.mrb[0].mxu0
    %v5232 = vadd.f32 %v5153, %v5231
    %v5233 = vpop.f32.mrb[0].mxu0
    %5234 = vmatprep.mubr.bf16.mxu0 %v4817
    %5235 = vmatmul.mubr.bf16.gmra.mrb[0].mxu0 %v4816
    %v5236 = vpop.f32.mrb[0].mxu0
    %v5237 = vadd.f32 %v5158, %v5236
    %v5238 = vpop.f32.mrb[0].mxu0
    %v5239 = vpop.f32.mrb[0].mxu0
    %v5240 = vadd.f32 %v5161, %v5239
    %v5241 = vpop.f32.mrb[0].mxu0
    %5242 = vmatprep.mubr.bf16.mxu0 %v4822
    %5243 = vmatmul.mubr.bf16.gmra.mrb[0].mxu0 %v4821
    %v5244 = vpop.f32.mrb[0].mxu0
    %v5245 = vadd.f32 %v5166, %v5244
    %v5246 = vpop.f32.mrb[0].mxu0
    %v5247 = vpop.f32.mrb[0].mxu0
    %v5248 = vadd.f32 %v5169, %v5247
    %v5249 = vpop.f32.mrb[0].mxu0
    %5250 = vmatprep.mubr.bf16.mxu0 %v4827
    %5251 = vmatmul.mubr.bf16.gmra.mrb[0].mxu0 %v4826
    %v5252 = vpop.f32.mrb[0].mxu0
    %v5253 = vpop.f32.mrb[0].mxu0
    %v5254 = vpop.f32.mrb[0].mxu0
    %v5255 = vpop.f32.mrb[0].mxu0
    %5256 = vdwg.mxu0
    %5257 = vmatprep.subr.bf16.mxu0 0
    %5258 = vmatpush1.bf16.msra.mxu0 %v5051
    %5259 = vmatprep.subr.bf16.mxu0 0
    %5260 = vmatpush1.bf16.msra.mxu0 %v5052
    %5261 = vmatprep.subr.bf16.mxu0 0
    %5262 = vmatpush1.bf16.msra.mxu0 %v5053
    %5263 = vmatprep.subr.bf16.mxu0 0
    %5264 = vmatpush1.bf16.msra.mxu0 %v5054
    %5265 = vmatprep.subr.bf16.mxu0 0
    %5266 = vmatpush1.bf16.msra.mxu0 %v5055
    %5267 = vmatprep.subr.bf16.mxu0 0
    %5268 = vmatpush1.bf16.msra.mxu0 %v5056
    %5269 = vmatprep.subr.bf16.mxu0 0
    %5270 = vmatpush1.bf16.msra.mxu0 %v5057
    %5271 = vmatprep.subr.bf16.mxu0 0
    %5272 = vmatpush1.bf16.msra.mxu0 %v5058
    %5273 = vmatprep.subr.bf16.mxu0 0
    %5274 = vmatpush1.bf16.msra.mxu0 0
    %5275 = vmatprep.subr.bf16.mxu0 0
    %5276 = vmatpush1.bf16.msra.mxu0 0
    %5277 = vmatprep.subr.bf16.mxu0 0
    %5278 = vmatpush1.bf16.msra.mxu0 0
    %5279 = vmatprep.subr.bf16.mxu0 0
    %5280 = vmatpush1.bf16.msra.mxu0 0
    %5281 = vmatprep.subr.bf16.mxu0 0
    %5282 = vmatpush1.bf16.msra.mxu0 0
    %5283 = vmatprep.subr.bf16.mxu0 0
    %5284 = vmatpush1.bf16.msra.mxu0 0
    %5285 = vmatprep.subr.bf16.mxu0 0
    %5286 = vmatpush1.bf16.msra.mxu0 0
    %5287 = vmatprep.subr.bf16.mxu0 0
    %5288 = vmatpush1.bf16.msra.mxu0 0
    %5289 = vmatprep.mubr.bf16.mxu0 0
    %5290 = vmatmul.mubr.bf16.gmra.mrb[0].mxu0 %v4803
    %v5291 = vpop.f32.mrb[0].mxu0
    %v5292 = vadd.f32 %v5213, %v5291
    %v5293 = vpop.f32.mrb[0].mxu0
    %v5294 = vpop.f32.mrb[0].mxu0
    %v5295 = vadd.f32 %v5216, %v5294
    %v5296 = vpop.f32.mrb[0].mxu0
    %5297 = vmatprep.mubr.bf16.mxu0 0
    %5298 = vmatmul.mubr.bf16.gmra.mrb[0].mxu0 %v4808
    %v5299 = vpop.f32.mrb[0].mxu0
    %v5300 = vadd.f32 %v5221, %v5299
    %v5301 = vpop.f32.mrb[0].mxu0
    %v5302 = vpop.f32.mrb[0].mxu0
    %v5303 = vadd.f32 %v5224, %v5302
    %v5304 = vpop.f32.mrb[0].mxu0
    %5305 = vmatprep.mubr.bf16.mxu0 0
    %5306 = vmatmul.mubr.bf16.gmra.mrb[0].mxu0 %v4813
    %v5307 = vpop.f32.mrb[0].mxu0
    %v5308 = vadd.f32 %v5229, %v5307
    %v5309 = vpop.f32.mrb[0].mxu0
    %v5310 = vpop.f32.mrb[0].mxu0
    %v5311 = vadd.f32 %v5232, %v5310
    %v5312 = vpop.f32.mrb[0].mxu0
    %5313 = vmatprep.mubr.bf16.mxu0 0
    %5314 = vmatmul.mubr.bf16.gmra.mrb[0].mxu0 %v4818
    %v5315 = vpop.f32.mrb[0].mxu0
    %v5316 = vadd.f32 %v5237, %v5315
    %v5317 = vpop.f32.mrb[0].mxu0
    %v5318 = vpop.f32.mrb[0].mxu0
    %v5319 = vadd.f32 %v5240, %v5318
    %v5320 = vpop.f32.mrb[0].mxu0
    %5321 = vmatprep.mubr.bf16.mxu0 0
    %5322 = vmatmul.mubr.bf16.gmra.mrb[0].mxu0 %v4823
    %v5323 = vpop.f32.mrb[0].mxu0
    %v5324 = vadd.f32 %v5245, %v5323
    %v5325 = vpop.f32.mrb[0].mxu0
    %v5326 = vpop.f32.mrb[0].mxu0
    %v5327 = vadd.f32 %v5248, %v5326
    %v5328 = vpop.f32.mrb[0].mxu0
    %5329 = vmatprep.mubr.bf16.mxu0 0
    %5330 = vmatmul.mubr.bf16.gmra.mrb[0].mxu0 %v4828
    %v5331 = vpop.f32.mrb[0].mxu0
    %v5332 = vpop.f32.mrb[0].mxu0
    %v5333 = vpop.f32.mrb[0].mxu0
    %v5334 = vpop.f32.mrb[0].mxu0
    %5335 = vdwg.mxu0
    %v5336 = vmax.f32 %v5292, 0.0
    %v5337 = vmax.f32 %v5295, 0.0
    %v5338 = vmax.f32 %v5300, 0.0
    %v5339 = vmax.f32 %v5303, 0.0
    %v5340 = vmax.f32 %v5308, 0.0
    %v5341 = vmax.f32 %v5311, 0.0
    %v5342 = vmax.f32 %v5316, 0.0
    %v5343 = vmax.f32 %v5319, 0.0
    %v5344 = vmax.f32 %v5324, 0.0
    %v5345 = vmax.f32 %v5327, 0.0
    %v5346 = vmax.f32 %v5336, %v5337
    %v5347 = vpack.c.bf16 %v5346, %v5346
    %5348 = vst [vmem:[#allocation5] sm:$0xf] %v5347
    %v5349 = vmax.f32 %v5338, %v5339
    %v5350 = vpack.c.bf16 %v5349, %v5349
    %5351 = vst [vmem:[#allocation5 + $0x4] sm:$0xf] %v5350
    %v5352 = vmax.f32 %v5340, %v5341
    %v5353 = vpack.c.bf16 %v5352, %v5352
    %5354 = vst [vmem:[#allocation5 + $0x8] sm:$0xf] %v5353
    %v5355 = vmax.f32 %v5342, %v5343
    %v5356 = vpack.c.bf16 %v5355, %v5355
    %5357 = vst [vmem:[#allocation5 + $0xc] sm:$0xf] %v5356
    %v5358 = vmax.f32 %v5344, %v5345
    %v5359 = vpack.c.bf16 %v5358, %v5358
    %5360 = vst [vmem:[#allocation5 + $0x10] sm:$0xf] %v5359
    %v5361 = vld [vmem:[#allocation5] sm:$0xff]
    %v5362 = vld [vmem:[#allocation5 + $0x8] sm:$0xff]
    %v5363 = vld [vmem:[#allocation5 + $0x10] sm:$0xf]
    %v5364 = vld [vmem:[#allocation16] sm:$0xf]
    %v5365 = vld [vmem:[#allocation16 + $0x4] sm:$0xf]
    %v5366 = vld [vmem:[#allocation16 + $0x8] sm:$0xf]
    %v5367 = vld [vmem:[#allocation16 + $0xc] sm:$0xf]
    %v5368 = vld [vmem:[#allocation16 + $0x10] sm:$0xf]
    %v5369 = vld [vmem:[#allocation16 + $0x14] sm:$0xf]
    %v5370 = vld [vmem:[#allocation16 + $0x18] sm:$0xf]
    %v5371 = vld [vmem:[#allocation16 + $0x1c] sm:$0xf]
    %v5372 = vld [vmem:[#allocation16 + $0x20] sm:$0xf]
    %v5373 = vld [vmem:[#allocation16 + $0x24] sm:$0xf]
    %v5374 = vld [vmem:[#allocation16 + $0x28] sm:$0xf]
    %v5375 = vld [vmem:[#allocation16 + $0x2c] sm:$0xf]
    %v5376 = vld [vmem:[#allocation16 + $0x30] sm:$0xf]
    %v5377 = vld [vmem:[#allocation16 + $0x34] sm:$0xf]
    %v5378 = vld [vmem:[#allocation16 + $0x38] sm:$0xf]
    %v5379 = vld [vmem:[#allocation16 + $0x3c] sm:$0xf]
    %v5380 = vld [vmem:[#allocation16 + $0x40] sm:$0xf]
    %v5381 = vld [vmem:[#allocation16 + $0x44] sm:$0xf]
    %v5382 = vld [vmem:[#allocation16 + $0x48] sm:$0xf]
    %v5383 = vld [vmem:[#allocation16 + $0x4c] sm:$0xf]
    %v5384 = vld [vmem:[#allocation16 + $0x50] sm:$0xf]
    %v5385 = vld [vmem:[#allocation16 + $0x54] sm:$0xf]
    %v5386 = vld [vmem:[#allocation16 + $0x58] sm:$0xf]
    %v5387 = vld [vmem:[#allocation16 + $0x5c] sm:$0xf]
    %v5388 = vld [vmem:[#allocation16 + $0x60] sm:$0xf]
    %v5389 = vld [vmem:[#allocation16 + $0x64] sm:$0xf]
    %v5390 = vld [vmem:[#allocation16 + $0x68] sm:$0xf]
    %v5391 = vld [vmem:[#allocation16 + $0x6c] sm:$0xf]
    %v5392 = vld [vmem:[#allocation16 + $0x70] sm:$0xf]
    %v5393 = vld [vmem:[#allocation16 + $0x74] sm:$0xf]
    %v5394 = vld [vmem:[#allocation16 + $0x78] sm:$0xf]
    %v5395 = vld [vmem:[#allocation16 + $0x7c] sm:$0xf]
    %v5396 = vld [vmem:[#allocation16 + $0x80] sm:$0xf]
    %v5397 = vld [vmem:[#allocation16 + $0x84] sm:$0xf]
    %v5398 = vld [vmem:[#allocation16 + $0x88] sm:$0xf]
    %v5399 = vld [vmem:[#allocation16 + $0x8c] sm:$0xf]
    %v5400 = vld [vmem:[#allocation16 + $0x90] sm:$0xf]
    %v5401 = vld [vmem:[#allocation16 + $0x94] sm:$0xf]
    %v5402 = vld [vmem:[#allocation16 + $0x98] sm:$0xf]
    %v5403 = vld [vmem:[#allocation16 + $0x9c] sm:$0xf]
    %v5404 = vld [vmem:[#allocation16 + $0xa0] sm:$0xf]
    %v5405 = vld [vmem:[#allocation16 + $0xa4] sm:$0xf]
    %v5406 = vld [vmem:[#allocation16 + $0xa8] sm:$0xf]
    %v5407 = vld [vmem:[#allocation16 + $0xac] sm:$0xf]
    %v5408 = vld [vmem:[#allocation16 + $0xb0] sm:$0xf]
    %v5409 = vld [vmem:[#allocation16 + $0xb4] sm:$0xf]
    %v5410 = vld [vmem:[#allocation16 + $0xb8] sm:$0xf]
    %v5411 = vld [vmem:[#allocation16 + $0xbc] sm:$0xf]
    %v5412 = vld [vmem:[#allocation16 + $0xc0] sm:$0xf]
    %v5413 = vld [vmem:[#allocation16 + $0xc4] sm:$0xf]
    %v5414 = vld [vmem:[#allocation16 + $0xc8] sm:$0xf]
    %v5415 = vld [vmem:[#allocation16 + $0xcc] sm:$0xf]
    %v5416 = vld [vmem:[#allocation16 + $0xd0] sm:$0xf]
    %v5417 = vld [vmem:[#allocation16 + $0xd4] sm:$0xf]
    %v5418 = vld [vmem:[#allocation16 + $0xd8] sm:$0xf]
    %v5419 = vld [vmem:[#allocation16 + $0xdc] sm:$0xf]
    %v5420 = vld [vmem:[#allocation16 + $0xe0] sm:$0xf]
    %v5421 = vld [vmem:[#allocation16 + $0xe4] sm:$0xf]
    %v5422 = vld [vmem:[#allocation16 + $0xe8] sm:$0xf]
    %v5423 = vld [vmem:[#allocation16 + $0xec] sm:$0xf]
    %v5424 = vld [vmem:[#allocation16 + $0xf0] sm:$0xf]
    %v5425 = vld [vmem:[#allocation16 + $0xf4] sm:$0xf]
    %v5426 = vld [vmem:[#allocation16 + $0xf8] sm:$0xf]
    %v5427 = vld [vmem:[#allocation16 + $0xfc] sm:$0xf]
    %v5428 = vld [vmem:[#allocation16 + $0x100] sm:$0xf]
    %v5429 = vld [vmem:[#allocation16 + $0x104] sm:$0xf]
    %v5430 = vld [vmem:[#allocation16 + $0x108] sm:$0xf]
    %v5431 = vld [vmem:[#allocation16 + $0x10c] sm:$0xf]
    %v5432 = vld [vmem:[#allocation16 + $0x110] sm:$0xf]
    %v5433 = vld [vmem:[#allocation16 + $0x114] sm:$0xf]
    %v5434 = vld [vmem:[#allocation16 + $0x118] sm:$0xf]
    %v5435 = vld [vmem:[#allocation16 + $0x11c] sm:$0xf]
    %v5436 = vld [vmem:[#allocation16 + $0x120] sm:$0xf]
    %v5437 = vld [vmem:[#allocation16 + $0x124] sm:$0xf]
    %v5438 = vld [vmem:[#allocation16 + $0x128] sm:$0xf]
    %v5439 = vld [vmem:[#allocation16 + $0x12c] sm:$0xf]
    %v5440 = vld [vmem:[#allocation16 + $0x130] sm:$0xf]
    %v5441 = vld [vmem:[#allocation16 + $0x134] sm:$0xf]
    %v5442 = vld [vmem:[#allocation16 + $0x138] sm:$0xf]
    %v5443 = vld [vmem:[#allocation16 + $0x13c] sm:$0xf]
    %v5444 = vld [vmem:[%s14] sm:$0x1]
    %v5446 = vlaneseq
    %v5447 = vshrl.u32 %v5446, 7
    %v5448 = vsub.s32 0, %v5447
    %v5449 = vrot.slane %v5444, %v5448
    %v5454 = vunpack.c.l.b16 %v5361
    %v5455 = vunpack.c.h.b16 %v5361
    %v5456 = vunpack.c.l.b16 %v5362
    %v5457 = vunpack.c.h.b16 %v5362
    %v5458 = vunpack.c.l.b16 %v5363
    %v5459 = vpack.c.b16 %v5454, %v5454
    %v5460 = vpack.c.b16 %v5455, %v5455
    %v5461 = vpack.c.b16 %v5456, %v5456
    %v5462 = vpack.c.b16 %v5457, %v5457
    %v5463 = vpack.c.b16 %v5458, %v5458
    %v5549 = vunpack.c.l.b16 %v5364
    %v5550 = vunpack.c.l.b16 %v5365
    %v5551 = vunpack.c.l.b16 %v5366
    %v5552 = vunpack.c.l.b16 %v5367
    %v5553 = vunpack.c.l.b16 %v5368
    %v5554 = vunpack.c.l.b16 %v5369
    %v5555 = vunpack.c.l.b16 %v5370
    %v5556 = vunpack.c.l.b16 %v5371
    %v5557 = vunpack.c.l.b16 %v5372
    %v5558 = vunpack.c.l.b16 %v5373
    %v5559 = vunpack.c.l.b16 %v5374
    %v5560 = vunpack.c.l.b16 %v5375
    %v5561 = vunpack.c.l.b16 %v5376
    %v5562 = vunpack.c.l.b16 %v5377
    %v5563 = vunpack.c.l.b16 %v5378
    %v5564 = vunpack.c.l.b16 %v5379
    %v5565 = vunpack.c.l.b16 %v5380
    %v5566 = vunpack.c.l.b16 %v5381
    %v5567 = vunpack.c.l.b16 %v5382
    %v5568 = vunpack.c.l.b16 %v5383
    %v5569 = vunpack.c.l.b16 %v5384
    %v5570 = vunpack.c.l.b16 %v5385
    %v5571 = vunpack.c.l.b16 %v5386
    %v5572 = vunpack.c.l.b16 %v5387
    %v5573 = vunpack.c.l.b16 %v5388
    %v5574 = vunpack.c.l.b16 %v5389
    %v5575 = vunpack.c.l.b16 %v5390
    %v5576 = vunpack.c.l.b16 %v5391
    %v5577 = vunpack.c.l.b16 %v5392
    %v5578 = vunpack.c.l.b16 %v5393
    %v5579 = vunpack.c.l.b16 %v5394
    %v5580 = vunpack.c.l.b16 %v5395
    %v5581 = vunpack.c.l.b16 %v5396
    %v5582 = vunpack.c.l.b16 %v5397
    %v5583 = vunpack.c.l.b16 %v5398
    %v5584 = vunpack.c.l.b16 %v5399
    %v5585 = vunpack.c.l.b16 %v5400
    %v5586 = vunpack.c.l.b16 %v5401
    %v5587 = vunpack.c.l.b16 %v5402
    %v5588 = vunpack.c.l.b16 %v5403
    %v5589 = vunpack.c.l.b16 %v5404
    %v5590 = vunpack.c.l.b16 %v5405
    %v5591 = vunpack.c.l.b16 %v5406
    %v5592 = vunpack.c.l.b16 %v5407
    %v5593 = vunpack.c.l.b16 %v5408
    %v5594 = vunpack.c.l.b16 %v5409
    %v5595 = vunpack.c.l.b16 %v5410
    %v5596 = vunpack.c.l.b16 %v5411
    %v5597 = vunpack.c.l.b16 %v5412
    %v5598 = vunpack.c.l.b16 %v5413
    %v5599 = vunpack.c.l.b16 %v5414
    %v5600 = vunpack.c.l.b16 %v5415
    %v5601 = vunpack.c.l.b16 %v5416
    %v5602 = vunpack.c.l.b16 %v5417
    %v5603 = vunpack.c.l.b16 %v5418
    %v5604 = vunpack.c.l.b16 %v5419
    %v5605 = vunpack.c.l.b16 %v5420
    %v5606 = vunpack.c.l.b16 %v5421
    %v5607 = vunpack.c.l.b16 %v5422
    %v5608 = vunpack.c.l.b16 %v5423
    %v5609 = vunpack.c.l.b16 %v5424
    %v5610 = vunpack.c.l.b16 %v5425
    %v5611 = vunpack.c.l.b16 %v5426
    %v5612 = vunpack.c.l.b16 %v5427
    %v5613 = vunpack.c.l.b16 %v5428
    %v5614 = vunpack.c.l.b16 %v5429
    %v5615 = vunpack.c.l.b16 %v5430
    %v5616 = vunpack.c.l.b16 %v5431
    %v5617 = vunpack.c.l.b16 %v5432
    %v5618 = vunpack.c.l.b16 %v5433
    %v5619 = vunpack.c.l.b16 %v5434
    %v5620 = vunpack.c.l.b16 %v5435
    %v5621 = vunpack.c.l.b16 %v5436
    %v5622 = vunpack.c.l.b16 %v5437
    %v5623 = vunpack.c.l.b16 %v5438
    %v5624 = vunpack.c.l.b16 %v5439
    %v5625 = vunpack.c.l.b16 %v5440
    %v5626 = vunpack.c.l.b16 %v5441
    %v5627 = vunpack.c.l.b16 %v5442
    %v5628 = vunpack.c.l.b16 %v5443
    %v5629 = vpack.c.b16 %v5550, %v5549
    %v5630 = vpack.c.b16 %v5552, %v5551
    %v5631 = vpack.c.b16 %v5554, %v5553
    %v5632 = vpack.c.b16 %v5556, %v5555
    %v5633 = vpack.c.b16 %v5558, %v5557
    %v5634 = vpack.c.b16 %v5560, %v5559
    %v5635 = vpack.c.b16 %v5562, %v5561
    %v5636 = vpack.c.b16 %v5564, %v5563
    %v5637 = vpack.c.b16 %v5566, %v5565
    %v5638 = vpack.c.b16 %v5568, %v5567
    %v5639 = vpack.c.b16 %v5570, %v5569
    %v5640 = vpack.c.b16 %v5572, %v5571
    %v5641 = vpack.c.b16 %v5574, %v5573
    %v5642 = vpack.c.b16 %v5576, %v5575
    %v5643 = vpack.c.b16 %v5578, %v5577
    %v5644 = vpack.c.b16 %v5580, %v5579
    %v5645 = vpack.c.b16 %v5582, %v5581
    %v5646 = vpack.c.b16 %v5584, %v5583
    %v5647 = vpack.c.b16 %v5586, %v5585
    %v5648 = vpack.c.b16 %v5588, %v5587
    %v5649 = vpack.c.b16 %v5590, %v5589
    %v5650 = vpack.c.b16 %v5592, %v5591
    %v5651 = vpack.c.b16 %v5594, %v5593
    %v5652 = vpack.c.b16 %v5596, %v5595
    %v5653 = vpack.c.b16 %v5598, %v5597
    %v5654 = vpack.c.b16 %v5600, %v5599
    %v5655 = vpack.c.b16 %v5602, %v5601
    %v5656 = vpack.c.b16 %v5604, %v5603
    %v5657 = vpack.c.b16 %v5606, %v5605
    %v5658 = vpack.c.b16 %v5608, %v5607
    %v5659 = vpack.c.b16 %v5610, %v5609
    %v5660 = vpack.c.b16 %v5612, %v5611
    %v5661 = vpack.c.b16 %v5614, %v5613
    %v5662 = vpack.c.b16 %v5616, %v5615
    %v5663 = vpack.c.b16 %v5618, %v5617
    %v5664 = vpack.c.b16 %v5620, %v5619
    %v5665 = vpack.c.b16 %v5622, %v5621
    %v5666 = vpack.c.b16 %v5624, %v5623
    %v5667 = vpack.c.b16 %v5626, %v5625
    %v5668 = vpack.c.b16 %v5628, %v5627
    %5709 = vmatprep.subr.bf16.mxu0 0
    %5710 = vmatpush1.bf16.msra.mxu0 %v5629
    %5711 = vmatprep.subr.bf16.mxu0 0
    %5712 = vmatpush1.bf16.msra.mxu0 %v5630
    %5713 = vmatprep.subr.bf16.mxu0 0
    %5714 = vmatpush1.bf16.msra.mxu0 %v5631
    %5715 = vmatprep.subr.bf16.mxu0 0
    %5716 = vmatpush1.bf16.msra.mxu0 %v5632
    %5717 = vmatprep.subr.bf16.mxu0 0
    %5718 = vmatpush1.bf16.msra.mxu0 %v5633
    %5719 = vmatprep.subr.bf16.mxu0 0
    %5720 = vmatpush1.bf16.msra.mxu0 %v5634
    %5721 = vmatprep.subr.bf16.mxu0 0
    %5722 = vmatpush1.bf16.msra.mxu0 %v5635
    %5723 = vmatprep.subr.bf16.mxu0 0
    %5724 = vmatpush1.bf16.msra.mxu0 %v5636
    %5725 = vmatprep.subr.bf16.mxu0 0
    %5726 = vmatpush1.bf16.msra.mxu0 %v5637
    %5727 = vmatprep.subr.bf16.mxu0 0
    %5728 = vmatpush1.bf16.msra.mxu0 %v5638
    %5729 = vmatprep.subr.bf16.mxu0 0
    %5730 = vmatpush1.bf16.msra.mxu0 %v5639
    %5731 = vmatprep.subr.bf16.mxu0 0
    %5732 = vmatpush1.bf16.msra.mxu0 %v5640
    %5733 = vmatprep.subr.bf16.mxu0 0
    %5734 = vmatpush1.bf16.msra.mxu0 %v5641
    %5735 = vmatprep.subr.bf16.mxu0 0
    %5736 = vmatpush1.bf16.msra.mxu0 %v5642
    %5737 = vmatprep.subr.bf16.mxu0 0
    %5738 = vmatpush1.bf16.msra.mxu0 %v5643
    %5739 = vmatprep.subr.bf16.mxu0 0
    %5740 = vmatpush1.bf16.msra.mxu0 %v5644
    %5741 = vmatprep.mubr.bf16.mxu0 %v5460
    %5742 = vmatmul.mubr.bf16.gmra.mrb[0].mxu0 %v5459
    %v5743 = vpop.f32.mrb[0].mxu0
    %v5744 = vadd.f32 %v5449, %v5743
    %v5745 = vpop.f32.mrb[0].mxu0
    %v5746 = vpop.f32.mrb[0].mxu0
    %v5747 = vpop.f32.mrb[0].mxu0
    %5748 = vdwg.mxu0
    %5749 = vmatprep.subr.bf16.mxu0 0
    %5750 = vmatpush1.bf16.msra.mxu0 %v5645
    %5751 = vmatprep.subr.bf16.mxu0 0
    %5752 = vmatpush1.bf16.msra.mxu0 %v5646
    %5753 = vmatprep.subr.bf16.mxu0 0
    %5754 = vmatpush1.bf16.msra.mxu0 %v5647
    %5755 = vmatprep.subr.bf16.mxu0 0
    %5756 = vmatpush1.bf16.msra.mxu0 %v5648
    %5757 = vmatprep.subr.bf16.mxu0 0
    %5758 = vmatpush1.bf16.msra.mxu0 %v5649
    %5759 = vmatprep.subr.bf16.mxu0 0
    %5760 = vmatpush1.bf16.msra.mxu0 %v5650
    %5761 = vmatprep.subr.bf16.mxu0 0
    %5762 = vmatpush1.bf16.msra.mxu0 %v5651
    %5763 = vmatprep.subr.bf16.mxu0 0
    %5764 = vmatpush1.bf16.msra.mxu0 %v5652
    %5765 = vmatprep.subr.bf16.mxu0 0
    %5766 = vmatpush1.bf16.msra.mxu0 %v5653
    %5767 = vmatprep.subr.bf16.mxu0 0
    %5768 = vmatpush1.bf16.msra.mxu0 %v5654
    %5769 = vmatprep.subr.bf16.mxu0 0
    %5770 = vmatpush1.bf16.msra.mxu0 %v5655
    %5771 = vmatprep.subr.bf16.mxu0 0
    %5772 = vmatpush1.bf16.msra.mxu0 %v5656
    %5773 = vmatprep.subr.bf16.mxu0 0
    %5774 = vmatpush1.bf16.msra.mxu0 %v5657
    %5775 = vmatprep.subr.bf16.mxu0 0
    %5776 = vmatpush1.bf16.msra.mxu0 %v5658
    %5777 = vmatprep.subr.bf16.mxu0 0
    %5778 = vmatpush1.bf16.msra.mxu0 %v5659
    %5779 = vmatprep.subr.bf16.mxu0 0
    %5780 = vmatpush1.bf16.msra.mxu0 %v5660
    %5781 = vmatprep.mubr.bf16.mxu0 %v5462
    %5782 = vmatmul.mubr.bf16.gmra.mrb[0].mxu0 %v5461
    %v5783 = vpop.f32.mrb[0].mxu0
    %v5784 = vadd.f32 %v5744, %v5783
    %v5785 = vpop.f32.mrb[0].mxu0
    %v5786 = vpop.f32.mrb[0].mxu0
    %v5787 = vpop.f32.mrb[0].mxu0
    %5788 = vdwg.mxu0
    %5789 = vmatprep.subr.bf16.mxu0 0
    %5790 = vmatpush1.bf16.msra.mxu0 %v5661
    %5791 = vmatprep.subr.bf16.mxu0 0
    %5792 = vmatpush1.bf16.msra.mxu0 %v5662
    %5793 = vmatprep.subr.bf16.mxu0 0
    %5794 = vmatpush1.bf16.msra.mxu0 %v5663
    %5795 = vmatprep.subr.bf16.mxu0 0
    %5796 = vmatpush1.bf16.msra.mxu0 %v5664
    %5797 = vmatprep.subr.bf16.mxu0 0
    %5798 = vmatpush1.bf16.msra.mxu0 %v5665
    %5799 = vmatprep.subr.bf16.mxu0 0
    %5800 = vmatpush1.bf16.msra.mxu0 %v5666
    %5801 = vmatprep.subr.bf16.mxu0 0
    %5802 = vmatpush1.bf16.msra.mxu0 %v5667
    %5803 = vmatprep.subr.bf16.mxu0 0
    %5804 = vmatpush1.bf16.msra.mxu0 %v5668
    %5805 = vmatprep.subr.bf16.mxu0 0
    %5806 = vmatpush1.bf16.msra.mxu0 0
    %5807 = vmatprep.subr.bf16.mxu0 0
    %5808 = vmatpush1.bf16.msra.mxu0 0
    %5809 = vmatprep.subr.bf16.mxu0 0
    %5810 = vmatpush1.bf16.msra.mxu0 0
    %5811 = vmatprep.subr.bf16.mxu0 0
    %5812 = vmatpush1.bf16.msra.mxu0 0
    %5813 = vmatprep.subr.bf16.mxu0 0
    %5814 = vmatpush1.bf16.msra.mxu0 0
    %5815 = vmatprep.subr.bf16.mxu0 0
    %5816 = vmatpush1.bf16.msra.mxu0 0
    %5817 = vmatprep.subr.bf16.mxu0 0
    %5818 = vmatpush1.bf16.msra.mxu0 0
    %5819 = vmatprep.subr.bf16.mxu0 0
    %5820 = vmatpush1.bf16.msra.mxu0 0
    %5821 = vmatprep.mubr.bf16.mxu0 0
    %5822 = vmatmul.mubr.bf16.gmra.mrb[0].mxu0 %v5463
    %v5823 = vpop.f32.mrb[0].mxu0
    %v5824 = vadd.f32 %v5784, %v5823
    %v5825 = vpop.f32.mrb[0].mxu0
    %v5826 = vpop.f32.mrb[0].mxu0
    %v5827 = vpop.f32.mrb[0].mxu0
    %5828 = vdwg.mxu0
    %v5829 = vmax.f32 %v5824, 0.0
    %5830 = vst [vmem:[#allocation6] sm:$0xff] 0.0
    %5831 = vst [vmem:[#allocation6 + $0x8] sm:$0xff] 0.0
    %5832 = vst [vmem:[#allocation6 + $0x10] sm:$0xff] 0.0
    %5833 = vst [vmem:[#allocation6 + $0x18] sm:$0xff] 0.0
    %5834 = vst [vmem:[#allocation6 + $0x20] sm:$0xff] 0.0
    %5835 = vst [vmem:[#allocation6 + $0x28] sm:$0xff] 0.0
    %5836 = vst [vmem:[#allocation6 + $0x30] sm:$0xff] 0.0
    %5837 = vst [vmem:[#allocation6 + $0x38] sm:$0xff] 0.0
    %5838 = vst [vmem:[#allocation6] sm:$0x1] %v5829
    %v5840 = vrot.slane %v5829, 1
    %5842 = vst [vmem:[#allocation6 + $0x8] sm:$0x1] %v5840
    %v5843 = vrot.slane %v5829, 2
    %5845 = vst [vmem:[#allocation6 + $0x10] sm:$0x1] %v5843
    %v5846 = vrot.slane %v5829, 3
    %5848 = vst [vmem:[#allocation6 + $0x18] sm:$0x1] %v5846
    %v5849 = vrot.slane %v5829, 4
    %5851 = vst [vmem:[#allocation6 + $0x20] sm:$0x1] %v5849
    %v5852 = vrot.slane %v5829, 5
    %5854 = vst [vmem:[#allocation6 + $0x28] sm:$0x1] %v5852
    %v5855 = vrot.slane %v5829, 6
    %5857 = vst [vmem:[#allocation6 + $0x30] sm:$0x1] %v5855
    %v5858 = vrot.slane %v5829, 7
    %5860 = vst [vmem:[#allocation6 + $0x38] sm:$0x1] %v5858
    %v5861 = vld [vmem:[#allocation6] sm:$0xff]
    %v5862 = vld [vmem:[#allocation6 + $0x8] sm:$0xff]
    %v5863 = vld [vmem:[#allocation6 + $0x10] sm:$0xff]
    %v5864 = vld [vmem:[#allocation6 + $0x18] sm:$0xff]
    %v5865 = vld [vmem:[#allocation6 + $0x20] sm:$0xff]
    %v5866 = vld [vmem:[#allocation6 + $0x28] sm:$0xff]
    %v5867 = vld [vmem:[#allocation6 + $0x30] sm:$0xff]
    %v5868 = vld [vmem:[#allocation6 + $0x38] sm:$0xff]
    %v5869 = vpack.c.bf16 %v5861, %v5861
    %v5870 = vpack.c.bf16 %v5862, %v5862
    %v5871 = vpack.c.bf16 %v5863, %v5863
    %v5872 = vpack.c.bf16 %v5864, %v5864
    %v5873 = vpack.c.bf16 %v5865, %v5865
    %v5874 = vpack.c.bf16 %v5866, %v5866
    %v5875 = vpack.c.bf16 %v5867, %v5867
    %v5876 = vpack.c.bf16 %v5868, %v5868
    %v5877 = vld [vmem:[%s15] sm:$0xf]
    %v5878 = vld [vmem:[%s15 + $0x4] sm:$0xf]
    %v5879 = vld [vmem:[%s15 + $0x8] sm:$0xf]
    %v5880 = vld [vmem:[%s15 + $0xc] sm:$0xf]
    %v5881 = vld [vmem:[%s15 + $0x10] sm:$0xf]
    %v5882 = vld [vmem:[%s15 + $0x14] sm:$0xf]
    %v5883 = vld [vmem:[%s15 + $0x18] sm:$0xf]
    %v5884 = vld [vmem:[%s15 + $0x1c] sm:$0xf]
    %v5885 = vld [vmem:[%s15 + $0x20] sm:$0xf]
    %v5886 = vld [vmem:[%s15 + $0x24] sm:$0xf]
    %v5887 = vld [vmem:[%s15 + $0x28] sm:$0xf]
    %v5888 = vld [vmem:[%s15 + $0x2c] sm:$0xf]
    %v5889 = vld [vmem:[%s15 + $0x30] sm:$0xf]
    %v5890 = vld [vmem:[%s15 + $0x34] sm:$0xf]
    %v5891 = vld [vmem:[%s15 + $0x38] sm:$0xf]
    %v5892 = vld [vmem:[%s15 + $0x3c] sm:$0xf]
    %v5893 = vld [vmem:[%s15 + $0x40] sm:$0xf]
    %v5894 = vld [vmem:[%s15 + $0x44] sm:$0xf]
    %v5895 = vld [vmem:[%s15 + $0x48] sm:$0xf]
    %v5896 = vld [vmem:[%s15 + $0x4c] sm:$0xf]
    %v5897 = vld [vmem:[%s15 + $0x50] sm:$0xf]
    %v5898 = vld [vmem:[%s15 + $0x54] sm:$0xf]
    %v5899 = vld [vmem:[%s15 + $0x58] sm:$0xf]
    %v5900 = vld [vmem:[%s15 + $0x5c] sm:$0xf]
    %v5901 = vld [vmem:[%s15 + $0x60] sm:$0xf]
    %v5902 = vld [vmem:[%s15 + $0x64] sm:$0xf]
    %v5903 = vld [vmem:[%s15 + $0x68] sm:$0xf]
    %v5904 = vld [vmem:[%s15 + $0x6c] sm:$0xf]
    %v5905 = vld [vmem:[%s15 + $0x70] sm:$0xf]
    %v5906 = vld [vmem:[%s15 + $0x74] sm:$0xf]
    %v5907 = vld [vmem:[%s15 + $0x78] sm:$0xf]
    %v5908 = vld [vmem:[%s15 + $0x7c] sm:$0xf]
    %v5909 = vld [vmem:[%s15 + $0x80] sm:$0xf]
    %v5910 = vld [vmem:[%s15 + $0x84] sm:$0xf]
    %v5911 = vld [vmem:[%s15 + $0x88] sm:$0xf]
    %v5912 = vld [vmem:[%s15 + $0x8c] sm:$0xf]
    %v5913 = vld [vmem:[%s15 + $0x90] sm:$0xf]
    %v5914 = vld [vmem:[%s15 + $0x94] sm:$0xf]
    %v5915 = vld [vmem:[%s15 + $0x98] sm:$0xf]
    %v5916 = vld [vmem:[%s15 + $0x9c] sm:$0xf]
    %v5917 = vld [vmem:[%s15 + $0xa0] sm:$0xf]
    %v5918 = vld [vmem:[%s15 + $0xa4] sm:$0xf]
    %v5919 = vld [vmem:[%s15 + $0xa8] sm:$0xf]
    %v5920 = vld [vmem:[%s15 + $0xac] sm:$0xf]
    %v5921 = vld [vmem:[%s15 + $0xb0] sm:$0xf]
    %v5922 = vld [vmem:[%s15 + $0xb4] sm:$0xf]
    %v5923 = vld [vmem:[%s15 + $0xb8] sm:$0xf]
    %v5924 = vld [vmem:[%s15 + $0xbc] sm:$0xf]
    %v5925 = vld [vmem:[%s15 + $0xc0] sm:$0xf]
    %v5926 = vld [vmem:[%s15 + $0xc4] sm:$0xf]
    %v5927 = vld [vmem:[%s15 + $0xc8] sm:$0xf]
    %v5928 = vld [vmem:[%s15 + $0xcc] sm:$0xf]
    %v5929 = vld [vmem:[%s15 + $0xd0] sm:$0xf]
    %v5930 = vld [vmem:[%s15 + $0xd4] sm:$0xf]
    %v5931 = vld [vmem:[%s15 + $0xd8] sm:$0xf]
    %v5932 = vld [vmem:[%s15 + $0xdc] sm:$0xf]
    %v5933 = vld [vmem:[%s15 + $0xe0] sm:$0xf]
    %v5934 = vld [vmem:[%s15 + $0xe4] sm:$0xf]
    %v5935 = vld [vmem:[%s15 + $0xe8] sm:$0xf]
    %v5936 = vld [vmem:[%s15 + $0xec] sm:$0xf]
    %v5937 = vld [vmem:[%s15 + $0xf0] sm:$0xf]
    %v5938 = vld [vmem:[%s15 + $0xf4] sm:$0xf]
    %v5939 = vld [vmem:[%s15 + $0xf8] sm:$0xf]
    %v5940 = vld [vmem:[%s15 + $0xfc] sm:$0xf]
    %v5941 = vld [vmem:[%s15 + $0x100] sm:$0xf]
    %v5942 = vld [vmem:[%s15 + $0x104] sm:$0xf]
    %v5943 = vld [vmem:[%s15 + $0x108] sm:$0xf]
    %v5944 = vld [vmem:[%s15 + $0x10c] sm:$0xf]
    %v5945 = vld [vmem:[%s15 + $0x110] sm:$0xf]
    %v5946 = vld [vmem:[%s15 + $0x114] sm:$0xf]
    %v5947 = vld [vmem:[%s15 + $0x118] sm:$0xf]
    %v5948 = vld [vmem:[%s15 + $0x11c] sm:$0xf]
    %v5949 = vld [vmem:[%s15 + $0x120] sm:$0xf]
    %v5950 = vld [vmem:[%s15 + $0x124] sm:$0xf]
    %v5951 = vld [vmem:[%s15 + $0x128] sm:$0xf]
    %v5952 = vld [vmem:[%s15 + $0x12c] sm:$0xf]
    %v5953 = vld [vmem:[%s15 + $0x130] sm:$0xf]
    %v5954 = vld [vmem:[%s15 + $0x134] sm:$0xf]
    %v5955 = vld [vmem:[%s15 + $0x138] sm:$0xf]
    %v5956 = vld [vmem:[%s15 + $0x13c] sm:$0xf]
    %v5957 = vld [vmem:[%s15 + $0x140] sm:$0xf]
    %v5958 = vld [vmem:[%s15 + $0x144] sm:$0xf]
    %v5959 = vld [vmem:[%s15 + $0x148] sm:$0xf]
    %v5960 = vld [vmem:[%s15 + $0x14c] sm:$0xf]
    %v5961 = vld [vmem:[%s15 + $0x150] sm:$0xf]
    %v5962 = vld [vmem:[%s15 + $0x154] sm:$0xf]
    %v5963 = vld [vmem:[%s15 + $0x158] sm:$0xf]
    %v5964 = vld [vmem:[%s15 + $0x15c] sm:$0xf]
    %v5965 = vld [vmem:[%s15 + $0x160] sm:$0xf]
    %v5966 = vld [vmem:[%s15 + $0x164] sm:$0xf]
    %v5967 = vld [vmem:[%s15 + $0x168] sm:$0xf]
    %v5968 = vld [vmem:[%s15 + $0x16c] sm:$0xf]
    %v5969 = vld [vmem:[%s15 + $0x170] sm:$0xf]
    %v5970 = vld [vmem:[%s15 + $0x174] sm:$0xf]
    %v5971 = vld [vmem:[%s15 + $0x178] sm:$0xf]
    %v5972 = vld [vmem:[%s15 + $0x17c] sm:$0xf]
    %v5973 = vld [vmem:[%s15 + $0x180] sm:$0xf]
    %v5974 = vld [vmem:[%s15 + $0x184] sm:$0xf]
    %v5975 = vld [vmem:[%s15 + $0x188] sm:$0xf]
    %v5976 = vld [vmem:[%s15 + $0x18c] sm:$0xf]
    %v5977 = vld [vmem:[%s15 + $0x190] sm:$0xf]
    %v5978 = vld [vmem:[%s15 + $0x194] sm:$0xf]
    %v5979 = vld [vmem:[%s15 + $0x198] sm:$0xf]
    %v5980 = vld [vmem:[%s15 + $0x19c] sm:$0xf]
    %v5981 = vld [vmem:[%s15 + $0x1a0] sm:$0xf]
    %v5982 = vld [vmem:[%s15 + $0x1a4] sm:$0xf]
    %v5983 = vld [vmem:[%s15 + $0x1a8] sm:$0xf]
    %v5984 = vld [vmem:[%s15 + $0x1ac] sm:$0xf]
    %v5985 = vld [vmem:[%s15 + $0x1b0] sm:$0xf]
    %v5986 = vld [vmem:[%s15 + $0x1b4] sm:$0xf]
    %v5987 = vld [vmem:[%s15 + $0x1b8] sm:$0xf]
    %v5988 = vld [vmem:[%s15 + $0x1bc] sm:$0xf]
    %v5989 = vld [vmem:[%s15 + $0x1c0] sm:$0xf]
    %v5990 = vld [vmem:[%s15 + $0x1c4] sm:$0xf]
    %v5991 = vld [vmem:[%s15 + $0x1c8] sm:$0xf]
    %v5992 = vld [vmem:[%s15 + $0x1cc] sm:$0xf]
    %v5993 = vld [vmem:[%s15 + $0x1d0] sm:$0xf]
    %v5994 = vld [vmem:[%s15 + $0x1d4] sm:$0xf]
    %v5995 = vld [vmem:[%s15 + $0x1d8] sm:$0xf]
    %v5996 = vld [vmem:[%s15 + $0x1dc] sm:$0xf]
    %v5997 = vld [vmem:[%s15 + $0x1e0] sm:$0xf]
    %v5998 = vld [vmem:[%s15 + $0x1e4] sm:$0xf]
    %v5999 = vld [vmem:[%s15 + $0x1e8] sm:$0xf]
    %v6000 = vld [vmem:[%s15 + $0x1ec] sm:$0xf]
    %v6001 = vld [vmem:[%s15 + $0x1f0] sm:$0xf]
    %v6002 = vld [vmem:[%s15 + $0x1f4] sm:$0xf]
    %v6003 = vld [vmem:[%s15 + $0x1f8] sm:$0xf]
    %v6004 = vld [vmem:[%s15 + $0x1fc] sm:$0xf]
    %v6133 = vunpack.c.l.b16 %v5877
    %v6134 = vunpack.c.l.b16 %v5878
    %v6135 = vunpack.c.l.b16 %v5879
    %v6136 = vunpack.c.l.b16 %v5880
    %v6137 = vunpack.c.l.b16 %v5881
    %v6138 = vunpack.c.l.b16 %v5882
    %v6139 = vunpack.c.l.b16 %v5883
    %v6140 = vunpack.c.l.b16 %v5884
    %v6141 = vunpack.c.l.b16 %v5885
    %v6142 = vunpack.c.l.b16 %v5886
    %v6143 = vunpack.c.l.b16 %v5887
    %v6144 = vunpack.c.l.b16 %v5888
    %v6145 = vunpack.c.l.b16 %v5889
    %v6146 = vunpack.c.l.b16 %v5890
    %v6147 = vunpack.c.l.b16 %v5891
    %v6148 = vunpack.c.l.b16 %v5892
    %v6149 = vunpack.c.l.b16 %v5893
    %v6150 = vunpack.c.l.b16 %v5894
    %v6151 = vunpack.c.l.b16 %v5895
    %v6152 = vunpack.c.l.b16 %v5896
    %v6153 = vunpack.c.l.b16 %v5897
    %v6154 = vunpack.c.l.b16 %v5898
    %v6155 = vunpack.c.l.b16 %v5899
    %v6156 = vunpack.c.l.b16 %v5900
    %v6157 = vunpack.c.l.b16 %v5901
    %v6158 = vunpack.c.l.b16 %v5902
    %v6159 = vunpack.c.l.b16 %v5903
    %v6160 = vunpack.c.l.b16 %v5904
    %v6161 = vunpack.c.l.b16 %v5905
    %v6162 = vunpack.c.l.b16 %v5906
    %v6163 = vunpack.c.l.b16 %v5907
    %v6164 = vunpack.c.l.b16 %v5908
    %v6165 = vunpack.c.l.b16 %v5909
    %v6166 = vunpack.c.l.b16 %v5910
    %v6167 = vunpack.c.l.b16 %v5911
    %v6168 = vunpack.c.l.b16 %v5912
    %v6169 = vunpack.c.l.b16 %v5913
    %v6170 = vunpack.c.l.b16 %v5914
    %v6171 = vunpack.c.l.b16 %v5915
    %v6172 = vunpack.c.l.b16 %v5916
    %v6173 = vunpack.c.l.b16 %v5917
    %v6174 = vunpack.c.l.b16 %v5918
    %v6175 = vunpack.c.l.b16 %v5919
    %v6176 = vunpack.c.l.b16 %v5920
    %v6177 = vunpack.c.l.b16 %v5921
    %v6178 = vunpack.c.l.b16 %v5922
    %v6179 = vunpack.c.l.b16 %v5923
    %v6180 = vunpack.c.l.b16 %v5924
    %v6181 = vunpack.c.l.b16 %v5925
    %v6182 = vunpack.c.l.b16 %v5926
    %v6183 = vunpack.c.l.b16 %v5927
    %v6184 = vunpack.c.l.b16 %v5928
    %v6185 = vunpack.c.l.b16 %v5929
    %v6186 = vunpack.c.l.b16 %v5930
    %v6187 = vunpack.c.l.b16 %v5931
    %v6188 = vunpack.c.l.b16 %v5932
    %v6189 = vunpack.c.l.b16 %v5933
    %v6190 = vunpack.c.l.b16 %v5934
    %v6191 = vunpack.c.l.b16 %v5935
    %v6192 = vunpack.c.l.b16 %v5936
    %v6193 = vunpack.c.l.b16 %v5937
    %v6194 = vunpack.c.l.b16 %v5938
    %v6195 = vunpack.c.l.b16 %v5939
    %v6196 = vunpack.c.l.b16 %v5940
    %v6197 = vunpack.c.l.b16 %v5941
    %v6198 = vunpack.c.l.b16 %v5942
    %v6199 = vunpack.c.l.b16 %v5943
    %v6200 = vunpack.c.l.b16 %v5944
    %v6201 = vunpack.c.l.b16 %v5945
    %v6202 = vunpack.c.l.b16 %v5946
    %v6203 = vunpack.c.l.b16 %v5947
    %v6204 = vunpack.c.l.b16 %v5948
    %v6205 = vunpack.c.l.b16 %v5949
    %v6206 = vunpack.c.l.b16 %v5950
    %v6207 = vunpack.c.l.b16 %v5951
    %v6208 = vunpack.c.l.b16 %v5952
    %v6209 = vunpack.c.l.b16 %v5953
    %v6210 = vunpack.c.l.b16 %v5954
    %v6211 = vunpack.c.l.b16 %v5955
    %v6212 = vunpack.c.l.b16 %v5956
    %v6213 = vunpack.c.l.b16 %v5957
    %v6214 = vunpack.c.l.b16 %v5958
    %v6215 = vunpack.c.l.b16 %v5959
    %v6216 = vunpack.c.l.b16 %v5960
    %v6217 = vunpack.c.l.b16 %v5961
    %v6218 = vunpack.c.l.b16 %v5962
    %v6219 = vunpack.c.l.b16 %v5963
    %v6220 = vunpack.c.l.b16 %v5964
    %v6221 = vunpack.c.l.b16 %v5965
    %v6222 = vunpack.c.l.b16 %v5966
    %v6223 = vunpack.c.l.b16 %v5967
    %v6224 = vunpack.c.l.b16 %v5968
    %v6225 = vunpack.c.l.b16 %v5969
    %v6226 = vunpack.c.l.b16 %v5970
    %v6227 = vunpack.c.l.b16 %v5971
    %v6228 = vunpack.c.l.b16 %v5972
    %v6229 = vunpack.c.l.b16 %v5973
    %v6230 = vunpack.c.l.b16 %v5974
    %v6231 = vunpack.c.l.b16 %v5975
    %v6232 = vunpack.c.l.b16 %v5976
    %v6233 = vunpack.c.l.b16 %v5977
    %v6234 = vunpack.c.l.b16 %v5978
    %v6235 = vunpack.c.l.b16 %v5979
    %v6236 = vunpack.c.l.b16 %v5980
    %v6237 = vunpack.c.l.b16 %v5981
    %v6238 = vunpack.c.l.b16 %v5982
    %v6239 = vunpack.c.l.b16 %v5983
    %v6240 = vunpack.c.l.b16 %v5984
    %v6241 = vunpack.c.l.b16 %v5985
    %v6242 = vunpack.c.l.b16 %v5986
    %v6243 = vunpack.c.l.b16 %v5987
    %v6244 = vunpack.c.l.b16 %v5988
    %v6245 = vunpack.c.l.b16 %v5989
    %v6246 = vunpack.c.l.b16 %v5990
    %v6247 = vunpack.c.l.b16 %v5991
    %v6248 = vunpack.c.l.b16 %v5992
    %v6249 = vunpack.c.l.b16 %v5993
    %v6250 = vunpack.c.l.b16 %v5994
    %v6251 = vunpack.c.l.b16 %v5995
    %v6252 = vunpack.c.l.b16 %v5996
    %v6253 = vunpack.c.l.b16 %v5997
    %v6254 = vunpack.c.l.b16 %v5998
    %v6255 = vunpack.c.l.b16 %v5999
    %v6256 = vunpack.c.l.b16 %v6000
    %v6257 = vunpack.c.l.b16 %v6001
    %v6258 = vunpack.c.l.b16 %v6002
    %v6259 = vunpack.c.l.b16 %v6003
    %v6260 = vunpack.c.l.b16 %v6004
    %v6261 = vpack.c.b16 %v6134, %v6133
    %v6262 = vpack.c.b16 %v6136, %v6135
    %v6263 = vpack.c.b16 %v6138, %v6137
    %v6264 = vpack.c.b16 %v6140, %v6139
    %v6265 = vpack.c.b16 %v6142, %v6141
    %v6266 = vpack.c.b16 %v6144, %v6143
    %v6267 = vpack.c.b16 %v6146, %v6145
    %v6268 = vpack.c.b16 %v6148, %v6147
    %v6269 = vpack.c.b16 %v6150, %v6149
    %v6270 = vpack.c.b16 %v6152, %v6151
    %v6271 = vpack.c.b16 %v6154, %v6153
    %v6272 = vpack.c.b16 %v6156, %v6155
    %v6273 = vpack.c.b16 %v6158, %v6157
    %v6274 = vpack.c.b16 %v6160, %v6159
    %v6275 = vpack.c.b16 %v6162, %v6161
    %v6276 = vpack.c.b16 %v6164, %v6163
    %v6277 = vpack.c.b16 %v6166, %v6165
    %v6278 = vpack.c.b16 %v6168, %v6167
    %v6279 = vpack.c.b16 %v6170, %v6169
    %v6280 = vpack.c.b16 %v6172, %v6171
    %v6281 = vpack.c.b16 %v6174, %v6173
    %v6282 = vpack.c.b16 %v6176, %v6175
    %v6283 = vpack.c.b16 %v6178, %v6177
    %v6284 = vpack.c.b16 %v6180, %v6179
    %v6285 = vpack.c.b16 %v6182, %v6181
    %v6286 = vpack.c.b16 %v6184, %v6183
    %v6287 = vpack.c.b16 %v6186, %v6185
    %v6288 = vpack.c.b16 %v6188, %v6187
    %v6289 = vpack.c.b16 %v6190, %v6189
    %v6290 = vpack.c.b16 %v6192, %v6191
    %v6291 = vpack.c.b16 %v6194, %v6193
    %v6292 = vpack.c.b16 %v6196, %v6195
    %v6293 = vpack.c.b16 %v6198, %v6197
    %v6294 = vpack.c.b16 %v6200, %v6199
    %v6295 = vpack.c.b16 %v6202, %v6201
    %v6296 = vpack.c.b16 %v6204, %v6203
    %v6297 = vpack.c.b16 %v6206, %v6205
    %v6298 = vpack.c.b16 %v6208, %v6207
    %v6299 = vpack.c.b16 %v6210, %v6209
    %v6300 = vpack.c.b16 %v6212, %v6211
    %v6301 = vpack.c.b16 %v6214, %v6213
    %v6302 = vpack.c.b16 %v6216, %v6215
    %v6303 = vpack.c.b16 %v6218, %v6217
    %v6304 = vpack.c.b16 %v6220, %v6219
    %v6305 = vpack.c.b16 %v6222, %v6221
    %v6306 = vpack.c.b16 %v6224, %v6223
    %v6307 = vpack.c.b16 %v6226, %v6225
    %v6308 = vpack.c.b16 %v6228, %v6227
    %v6309 = vpack.c.b16 %v6230, %v6229
    %v6310 = vpack.c.b16 %v6232, %v6231
    %v6311 = vpack.c.b16 %v6234, %v6233
    %v6312 = vpack.c.b16 %v6236, %v6235
    %v6313 = vpack.c.b16 %v6238, %v6237
    %v6314 = vpack.c.b16 %v6240, %v6239
    %v6315 = vpack.c.b16 %v6242, %v6241
    %v6316 = vpack.c.b16 %v6244, %v6243
    %v6317 = vpack.c.b16 %v6246, %v6245
    %v6318 = vpack.c.b16 %v6248, %v6247
    %v6319 = vpack.c.b16 %v6250, %v6249
    %v6320 = vpack.c.b16 %v6252, %v6251
    %v6321 = vpack.c.b16 %v6254, %v6253
    %v6322 = vpack.c.b16 %v6256, %v6255
    %v6323 = vpack.c.b16 %v6258, %v6257
    %v6324 = vpack.c.b16 %v6260, %v6259
    %6389 = vmatprep.subr.bf16.mxu0 0
    %6390 = vmatpush1.bf16.msra.mxu0 %v6261
    %6391 = vmatprep.subr.bf16.mxu0 0
    %6392 = vmatpush1.bf16.msra.mxu0 %v6262
    %6393 = vmatprep.subr.bf16.mxu0 0
    %6394 = vmatpush1.bf16.msra.mxu0 %v6263
    %6395 = vmatprep.subr.bf16.mxu0 0
    %6396 = vmatpush1.bf16.msra.mxu0 %v6264
    %6397 = vmatprep.subr.bf16.mxu0 0
    %6398 = vmatpush1.bf16.msra.mxu0 %v6265
    %6399 = vmatprep.subr.bf16.mxu0 0
    %6400 = vmatpush1.bf16.msra.mxu0 %v6266
    %6401 = vmatprep.subr.bf16.mxu0 0
    %6402 = vmatpush1.bf16.msra.mxu0 %v6267
    %6403 = vmatprep.subr.bf16.mxu0 0
    %6404 = vmatpush1.bf16.msra.mxu0 %v6268
    %6405 = vmatprep.subr.bf16.mxu0 0
    %6406 = vmatpush1.bf16.msra.mxu0 %v6269
    %6407 = vmatprep.subr.bf16.mxu0 0
    %6408 = vmatpush1.bf16.msra.mxu0 %v6270
    %6409 = vmatprep.subr.bf16.mxu0 0
    %6410 = vmatpush1.bf16.msra.mxu0 %v6271
    %6411 = vmatprep.subr.bf16.mxu0 0
    %6412 = vmatpush1.bf16.msra.mxu0 %v6272
    %6413 = vmatprep.subr.bf16.mxu0 0
    %6414 = vmatpush1.bf16.msra.mxu0 %v6273
    %6415 = vmatprep.subr.bf16.mxu0 0
    %6416 = vmatpush1.bf16.msra.mxu0 %v6274
    %6417 = vmatprep.subr.bf16.mxu0 0
    %6418 = vmatpush1.bf16.msra.mxu0 %v6275
    %6419 = vmatprep.subr.bf16.mxu0 0
    %6420 = vmatpush1.bf16.msra.mxu0 %v6276
    %6421 = vmatprep.mubr.bf16.mxu0 %v5870
    %6422 = vmatmul.mubr.bf16.gmra.mrb[0].mxu0 %v5869
    %v6423 = vpop.f32.mrb[0].mxu0
    %v6424 = vadd.f32 0.0, %v6423
    %v6425 = vpop.f32.mrb[0].mxu0
    %v6426 = vpop.f32.mrb[0].mxu0
    %v6427 = vpop.f32.mrb[0].mxu0
    %6428 = vdwg.mxu0
    %6429 = vmatprep.subr.bf16.mxu0 0
    %6430 = vmatpush1.bf16.msra.mxu0 %v6277
    %6431 = vmatprep.subr.bf16.mxu0 0
    %6432 = vmatpush1.bf16.msra.mxu0 %v6278
    %6433 = vmatprep.subr.bf16.mxu0 0
    %6434 = vmatpush1.bf16.msra.mxu0 %v6279
    %6435 = vmatprep.subr.bf16.mxu0 0
    %6436 = vmatpush1.bf16.msra.mxu0 %v6280
    %6437 = vmatprep.subr.bf16.mxu0 0
    %6438 = vmatpush1.bf16.msra.mxu0 %v6281
    %6439 = vmatprep.subr.bf16.mxu0 0
    %6440 = vmatpush1.bf16.msra.mxu0 %v6282
    %6441 = vmatprep.subr.bf16.mxu0 0
    %6442 = vmatpush1.bf16.msra.mxu0 %v6283
    %6443 = vmatprep.subr.bf16.mxu0 0
    %6444 = vmatpush1.bf16.msra.mxu0 %v6284
    %6445 = vmatprep.subr.bf16.mxu0 0
    %6446 = vmatpush1.bf16.msra.mxu0 %v6285
    %6447 = vmatprep.subr.bf16.mxu0 0
    %6448 = vmatpush1.bf16.msra.mxu0 %v6286
    %6449 = vmatprep.subr.bf16.mxu0 0
    %6450 = vmatpush1.bf16.msra.mxu0 %v6287
    %6451 = vmatprep.subr.bf16.mxu0 0
    %6452 = vmatpush1.bf16.msra.mxu0 %v6288
    %6453 = vmatprep.subr.bf16.mxu0 0
    %6454 = vmatpush1.bf16.msra.mxu0 %v6289
    %6455 = vmatprep.subr.bf16.mxu0 0
    %6456 = vmatpush1.bf16.msra.mxu0 %v6290
    %6457 = vmatprep.subr.bf16.mxu0 0
    %6458 = vmatpush1.bf16.msra.mxu0 %v6291
    %6459 = vmatprep.subr.bf16.mxu0 0
    %6460 = vmatpush1.bf16.msra.mxu0 %v6292
    %6461 = vmatprep.mubr.bf16.mxu0 %v5872
    %6462 = vmatmul.mubr.bf16.gmra.mrb[0].mxu0 %v5871
    %v6463 = vpop.f32.mrb[0].mxu0
    %v6464 = vadd.f32 %v6424, %v6463
    %v6465 = vpop.f32.mrb[0].mxu0
    %v6466 = vpop.f32.mrb[0].mxu0
    %v6467 = vpop.f32.mrb[0].mxu0
    %6468 = vdwg.mxu0
    %6469 = vmatprep.subr.bf16.mxu0 0
    %6470 = vmatpush1.bf16.msra.mxu0 %v6293
    %6471 = vmatprep.subr.bf16.mxu0 0
    %6472 = vmatpush1.bf16.msra.mxu0 %v6294
    %6473 = vmatprep.subr.bf16.mxu0 0
    %6474 = vmatpush1.bf16.msra.mxu0 %v6295
    %6475 = vmatprep.subr.bf16.mxu0 0
    %6476 = vmatpush1.bf16.msra.mxu0 %v6296
    %6477 = vmatprep.subr.bf16.mxu0 0
    %6478 = vmatpush1.bf16.msra.mxu0 %v6297
    %6479 = vmatprep.subr.bf16.mxu0 0
    %6480 = vmatpush1.bf16.msra.mxu0 %v6298
    %6481 = vmatprep.subr.bf16.mxu0 0
    %6482 = vmatpush1.bf16.msra.mxu0 %v6299
    %6483 = vmatprep.subr.bf16.mxu0 0
    %6484 = vmatpush1.bf16.msra.mxu0 %v6300
    %6485 = vmatprep.subr.bf16.mxu0 0
    %6486 = vmatpush1.bf16.msra.mxu0 %v6301
    %6487 = vmatprep.subr.bf16.mxu0 0
    %6488 = vmatpush1.bf16.msra.mxu0 %v6302
    %6489 = vmatprep.subr.bf16.mxu0 0
    %6490 = vmatpush1.bf16.msra.mxu0 %v6303
    %6491 = vmatprep.subr.bf16.mxu0 0
    %6492 = vmatpush1.bf16.msra.mxu0 %v6304
    %6493 = vmatprep.subr.bf16.mxu0 0
    %6494 = vmatpush1.bf16.msra.mxu0 %v6305
    %6495 = vmatprep.subr.bf16.mxu0 0
    %6496 = vmatpush1.bf16.msra.mxu0 %v6306
    %6497 = vmatprep.subr.bf16.mxu0 0
    %6498 = vmatpush1.bf16.msra.mxu0 %v6307
    %6499 = vmatprep.subr.bf16.mxu0 0
    %6500 = vmatpush1.bf16.msra.mxu0 %v6308
    %6501 = vmatprep.mubr.bf16.mxu0 %v5874
    %6502 = vmatmul.mubr.bf16.gmra.mrb[0].mxu0 %v5873
    %v6503 = vpop.f32.mrb[0].mxu0
    %v6504 = vadd.f32 %v6464, %v6503
    %v6505 = vpop.f32.mrb[0].mxu0
    %v6506 = vpop.f32.mrb[0].mxu0
    %v6507 = vpop.f32.mrb[0].mxu0
    %6508 = vdwg.mxu0
    %6509 = vmatprep.subr.bf16.mxu0 0
    %6510 = vmatpush1.bf16.msra.mxu0 %v6309
    %6511 = vmatprep.subr.bf16.mxu0 0
    %6512 = vmatpush1.bf16.msra.mxu0 %v6310
    %6513 = vmatprep.subr.bf16.mxu0 0
    %6514 = vmatpush1.bf16.msra.mxu0 %v6311
    %6515 = vmatprep.subr.bf16.mxu0 0
    %6516 = vmatpush1.bf16.msra.mxu0 %v6312
    %6517 = vmatprep.subr.bf16.mxu0 0
    %6518 = vmatpush1.bf16.msra.mxu0 %v6313
    %6519 = vmatprep.subr.bf16.mxu0 0
    %6520 = vmatpush1.bf16.msra.mxu0 %v6314
    %6521 = vmatprep.subr.bf16.mxu0 0
    %6522 = vmatpush1.bf16.msra.mxu0 %v6315
    %6523 = vmatprep.subr.bf16.mxu0 0
    %6524 = vmatpush1.bf16.msra.mxu0 %v6316
    %6525 = vmatprep.subr.bf16.mxu0 0
    %6526 = vmatpush1.bf16.msra.mxu0 %v6317
    %6527 = vmatprep.subr.bf16.mxu0 0
    %6528 = vmatpush1.bf16.msra.mxu0 %v6318
    %6529 = vmatprep.subr.bf16.mxu0 0
    %6530 = vmatpush1.bf16.msra.mxu0 %v6319
    %6531 = vmatprep.subr.bf16.mxu0 0
    %6532 = vmatpush1.bf16.msra.mxu0 %v6320
    %6533 = vmatprep.subr.bf16.mxu0 0
    %6534 = vmatpush1.bf16.msra.mxu0 %v6321
    %6535 = vmatprep.subr.bf16.mxu0 0
    %6536 = vmatpush1.bf16.msra.mxu0 %v6322
    %6537 = vmatprep.subr.bf16.mxu0 0
    %6538 = vmatpush1.bf16.msra.mxu0 %v6323
    %6539 = vmatprep.subr.bf16.mxu0 0
    %6540 = vmatpush1.bf16.msra.mxu0 %v6324
    %6541 = vmatprep.mubr.bf16.mxu0 %v5876
    %6542 = vmatmul.mubr.bf16.gmra.mrb[0].mxu0 %v5875
    %v6543 = vpop.f32.mrb[0].mxu0
    %v6544 = vadd.f32 %v6504, %v6543
    %v6545 = vpop.f32.mrb[0].mxu0
    %v6546 = vpop.f32.mrb[0].mxu0
    %v6547 = vpop.f32.mrb[0].mxu0
    %6548 = vdwg.mxu0
    %v6549 = vld [vmem:[%s16] sm:$0x1]
    %v6550 = vadd.f32 %v6544, %v6549
    %vm6551 = vcmask 253952
    %6552 = vst.msk [vmem:[#allocation18] sm:$0x1] %vm6551, %v6550
    // Predicated region
    $region94: #{latent_mlp_conv_forward.1} parent=1 // pred_check
      _
    $region95: #{latent_mlp_conv_forward.1} parent=1 // pred_check_branch
      %6554 = sbr.rel (0) target = $region97
    $region96: #{latent_mlp_conv_forward.1} parent=1 // pred_region
      %s6556 = ssub.s32 16, 16
      %6557 = vsyncadd [#allocation9], %s6556
      %s6559 = sshll.u32 [#allocation18], 4
      %s6560 = int_to_ptr.vmem [resolvable:$true] %s6559
      %6562 = dma.vmem_to_hbm [thread:$0]  %s6560, 16, %s17, [#allocation9]
    $region97: #{latent_mlp_conv_forward.1} parent=1 // pred_fallthru
      _
    // Predicated region
    $region98: #{latent_mlp_conv_forward.1} parent=1 // pred_check
      _
    $region99: #{latent_mlp_conv_forward.1} parent=1 // pred_check_branch
      %6564 = sbr.rel (0) target = $region101
    $region100: #{latent_mlp_conv_forward.1} parent=1 // pred_region
      %6565 = dma.done [#allocation9], 16
    $region101: #{latent_mlp_conv_forward.1} parent=1 // pred_fallthru
      _
    %6566 = vsyncpa [#allocation8], 1
    %6567 = vsyncpa [#allocation11], 1
    %6568 = vsyncpa [#allocation14], 1
    %6569 = vsyncpa [#allocation17], 1
    %6570 = vsyncpa [#allocation9], 1

</llo_original>
